<compile_context>
chip_gen: v5e
topology: v5e:2x2
jax: 0.10.0
libtpu: 0.0.40
codegen_flags: <defaults>
</compile_context>

<pallas_src>
import math

import jax
import jax.numpy as jnp
from jax.experimental import pallas as pl
from jax.experimental.pallas import tpu as pltpu

N0_SPLIT = 81  # hard-coded node split in HetSTGCNBlock.forward (t1[:, :81] / t1[:, 81:])


# --------------------------------------------------------------------------------------
# Weight preparation (tiny XLA ops, executed once per call on ~1 MB of parameters)
# --------------------------------------------------------------------------------------
def _toeplitz_weight(ws, t_in):
    """ws: (3, K, Cin, Cout) gate-stacked conv weights (order [p, conv1, q]).
    Returns W: (t_in*Cin, 3*T_out*Cout) so that  x_flat @ W  computes all three temporal
    convolutions for every output time step in one matmul.
    Column order: (gate, t_out, cout); row order: (t_in, cin)."""
    g, k, cin, cout = ws.shape
    t_out = t_in - k + 1
    ti = jnp.arange(t_in)[:, None]
    to = jnp.arange(t_out)[None, :]
    tap = ti - to                                             # (t_in, t_out)
    valid = ((tap >= 0) & (tap < k)).astype(ws.dtype)
    tap_c = jnp.clip(tap, 0, k - 1)
    blocks = ws[:, tap_c] * valid[None, :, :, None, None]     # (3, t_in, t_out, Cin, Cout)
    return jnp.transpose(blocks, (1, 3, 0, 2, 4)).reshape(t_in * cin, g * t_out * cout)


def _toeplitz_bias(bs, t_out):
    """bs: (3, Cout) gate-stacked biases -> (1, 3*t_out*Cout) matching _toeplitz_weight."""
    g, cout = bs.shape
    return jnp.tile(bs[:, None, :], (1, t_out, 1)).reshape(1, g * t_out * cout)


def _block_diag(th, t):
    """kron(I_t, th): (t*Cin, t*Cout).  Lets the channel matmul act on activations that
    stay packed as (nodes, t*channels) -- no relayout inside the kernel."""
    ci, co = th.shape
    eye = jnp.eye(t, dtype=th.dtype)
    return (eye[:, None, :, None] * th[None, :, None, :]).reshape(t * ci, t * co)


def _stack_block_diag(theta_layers, t):
    """theta_layers: list over layers of (th1, th2, th3) -> (3*L, t*C, t*C)."""
    mats = []
    for ths in theta_layers:
        for th in ths:
            mats.append(_block_diag(th, t))
    return jnp.stack(mats, 0)


# --------------------------------------------------------------------------------------
# Kernel 1: the fused block (per batch element).
# --------------------------------------------------------------------------------------
def fused_block_kernel(x0_ref, x1_ref, wt1_ref, bt1_ref,
                       a00_ref, ac0_ref, a01_ref,
                       a11_ref, ac1_ref, a10_ref,
                       bd1_ref, bd2_ref, bdth_ref,
                       wt2_ref, bt2_ref,
                       o0_ref, o1_ref):
    f32 = jnp.float32

    def tconv(x, w, b):
        # x: (rows, T_in*Cin);  one Toeplitz matmul gives all gates / time steps at once.
        y = jnp.dot(x, w, preferred_element_type=f32) + b
        g = y.shape[1] // 3
        return (y[:, :g] + y[:, g:2 * g]) * jax.nn.sigmoid(y[:, 2 * g:])

    wt1 = wt1_ref[...]
    bt1 = bt1_ref[...]
    X0 = tconv(x0_ref[0], wt1, bt1)          # (N0, T1*Cout)
    X1 = tconv(x1_ref[0], wt1, bt1)          # (N1, T1*Cout)

    A00 = a00_ref[...]
    Ac0 = ac0_ref[...]
    A01 = a01_ref[...]
    A11 = a11_ref[...]
    Ac1 = ac1_ref[...]
    A10 = a10_ref[...]

    def gconv(u_self, u_other, x_res, a_self, a_comb, a_cross, th1, th2, th3):
        v1 = jnp.dot(a_self, u_self, preferred_element_type=f32)
        v2 = jax.nn.relu(jnp.dot(v1, th1, preferred_element_type=f32))
        v3 = jnp.dot(a_comb, u_self, preferred_element_type=f32)
        v4 = jnp.dot(a_cross, u_other, preferred_element_type=f32)
        v5 = jax.nn.sigmoid(jnp.dot(v3, th2, preferred_element_type=f32)
                            + jnp.dot(v4, th3, preferred_element_type=f32))
        v6 = jax.nn.relu((v2 + v5) * 0.5)
        return jax.nn.relu(0.9 * v6 + 0.1 * x_res)

    num_layers = bd1_ref.shape[0] // 3
    ua, ub = X0, X1
    for i in range(num_layers):
        k = 3 * i
        ua = gconv(ua, ub, X0, A00, Ac0, A01,
                   bd1_ref[k], bd1_ref[k + 1], bd1_ref[k + 2])
        ub = gconv(ub, ua, X1, A11, Ac1, A10,
                   bd2_ref[k], bd2_ref[k + 1], bd2_ref[k + 2])

    bdth = bdth_ref[...]
    wt2 = wt2_ref[...]
    bt2 = bt2_ref[...]
    pa = jax.nn.relu(jnp.dot(ua, bdth, preferred_element_type=f32))   # (N0, T1*Cs)
    pb = jax.nn.relu(jnp.dot(ub, bdth, preferred_element_type=f32))   # (N1, T1*Cs)
    o0_ref[0] = tconv(pa, wt2, bt2)                                    # (N0, T2*Cout)
    o1_ref[0] = tconv(pb, wt2, bt2)                                    # (N1, T2*Cout)


# --------------------------------------------------------------------------------------
# Kernel 2: BatchNorm2d(num_nodes), training-mode batch statistics (needs all batches).
# Input layout (B, N, T2*Cout): per-node reduction over the batch slabs and the lane axis.
# --------------------------------------------------------------------------------------
def batchnorm_kernel(x_ref, o_ref):
    bsz = x_ref.shape[0]
    cnt = float(bsz * x_ref.shape[2])
    s = jnp.zeros((x_ref.shape[1], 1), jnp.float32)
    for b in range(bsz):
        s = s + jnp.sum(x_ref[b], axis=1, keepdims=True)
    mean = s * (1.0 / cnt)
    v = jnp.zeros((x_ref.shape[1], 1), jnp.float32)
    for b in range(bsz):
        d = x_ref[b] - mean
        v = v + jnp.sum(d * d, axis=1, keepdims=True)
    inv = jax.lax.rsqrt(v * (1.0 / cnt) + 1e-5)
    for b in range(bsz):
        o_ref[b] = (x_ref[b] - mean) * inv


# --------------------------------------------------------------------------------------
# Full block forward
# --------------------------------------------------------------------------------------
def het_stgcn_block_forward(X, params):
    X = X.astype(jnp.float32)
    B, N, T, Cin = X.shape
    N0 = N0_SPLIT
    N1 = N - N0

    # --- temporal-conv weights folded into single Toeplitz matmuls ---
    wp1, bp1, wq1, bq1, w11, b11 = params["temporal1"]
    K, _, Cout = wp1.shape
    T1 = T - K + 1
    Wt1 = _toeplitz_weight(jnp.stack([wp1, w11, wq1]), T)
    bt1 = _toeplitz_bias(jnp.stack([bp1.reshape(-1), b11.reshape(-1), bq1.reshape(-1)]), T1)

    wp2, bp2, wq2, bq2, w12, b12 = params["temporal2"]
    T2 = T1 - K + 1
    Wt2 = _toeplitz_weight(jnp.stack([wp2, w12, wq2]), T1)
    bt2 = _toeplitz_bias(jnp.stack([bp2.reshape(-1), b12.reshape(-1), bq2.reshape(-1)]), T2)

    # --- graph operators ---
    A00, A01, A10, A11 = params["A"]
    Ac0 = jnp.dot(A01, A10)                       # torch.mm(A01, A10)
    Ac1 = jnp.dot(A10, A01)                       # torch.mm(A10, A01)
    BD1 = _stack_block_diag(params["convs1"], T1)  # (3L, T1*C, T1*C)
    BD2 = _stack_block_diag(params["convs2"], T1)
    BDth = _block_diag(params["theta"], T1)        # (T1*Cout, T1*Cs)

    # --- pack input time/channel into lanes; split node groups in the wrapper ---
    x_flat = X.reshape(B, N, T * Cin)
    x0 = x_flat[:, :N0, :]
    x1 = x_flat[:, N0:, :]
    TCin = T * Cin
    T2C = T2 * Cout

    # NOTE: per-step VMEM footprint is ~1.4 MB, far below every generation's scoped
    # default; set vmem_limit_bytes explicitly only if the model is scaled up (v7x: 64 MiB).
    o0, o1 = pl.pallas_call(
        fused_block_kernel,
        out_shape=(jax.ShapeDtypeStruct((B, N0, T2C), jnp.float32),
                   jax.ShapeDtypeStruct((B, N1, T2C), jnp.float32)),
        grid=(B,),
        in_specs=[
            pl.BlockSpec((1, N0, TCin), lambda b: (b, 0, 0)),
            pl.BlockSpec((1, N1, TCin), lambda b: (b, 0, 0)),
            pl.BlockSpec(Wt1.shape, lambda b: (0, 0)),
            pl.BlockSpec(bt1.shape, lambda b: (0, 0)),
            pl.BlockSpec(A00.shape, lambda b: (0, 0)),
            pl.BlockSpec(Ac0.shape, lambda b: (0, 0)),
            pl.BlockSpec(A01.shape, lambda b: (0, 0)),
            pl.BlockSpec(A11.shape, lambda b: (0, 0)),
            pl.BlockSpec(Ac1.shape, lambda b: (0, 0)),
            pl.BlockSpec(A10.shape, lambda b: (0, 0)),
            pl.BlockSpec(BD1.shape, lambda b: (0, 0, 0)),
            pl.BlockSpec(BD2.shape, lambda b: (0, 0, 0)),
            pl.BlockSpec(BDth.shape, lambda b: (0, 0)),
            pl.BlockSpec(Wt2.shape, lambda b: (0, 0)),
            pl.BlockSpec(bt2.shape, lambda b: (0, 0)),
        ],
        out_specs=(
            pl.BlockSpec((1, N0, T2C), lambda b: (b, 0, 0)),
            pl.BlockSpec((1, N1, T2C), lambda b: (b, 0, 0)),
        ),
        compiler_params=pltpu.CompilerParams(dimension_semantics=("parallel",)),
    )(x0, x1, Wt1, bt1, A00, Ac0, A01, A11, Ac1, A10, BD1, BD2, BDth, Wt2, bt2)

    y = jnp.concatenate([o0, o1], axis=1)                # (B, N, T2*Cout)
    y = pl.pallas_call(
        batchnorm_kernel,
        out_shape=jax.ShapeDtypeStruct(y.shape, jnp.float32),
    )(y)
    return y.reshape(B, N, T2, Cout)


# --------------------------------------------------------------------------------------
# Deterministic parameter construction (shapes taken from the module __init__)
# --------------------------------------------------------------------------------------
def init_params(key, in_channels, out_channels, spatial_channels, num_nodes,
                num_layers=5, K=3):
    N0, N1 = N0_SPLIT, num_nodes - N0_SPLIT
    keys = iter(jax.random.split(key, 64))

    def unif(shape, bound):
        return jax.random.uniform(next(keys), shape, jnp.float32, -bound, bound)

    def conv_params(cin, cout):
        b = 1.0 / math.sqrt(cin * K)
        # causal-conv weights pre-split into p / q halves, layout (K, Cin, Cout)
        return tuple(unif(s, b) for s in [(K, cin, cout), (1, cout),
                                          (K, cin, cout), (1, cout),
                                          (K, cin, cout), (1, cout)])

    A00 = jax.random.uniform(next(keys), (N0, N0), jnp.float32) / N0
    A01 = jax.random.uniform(next(keys), (N0, N1), jnp.float32) / N1
    A10 = jax.random.uniform(next(keys), (N1, N0), jnp.float32) / N0
    A11 = jax.random.uniform(next(keys), (N1, N1), jnp.float32) / N1

    stdv_g = 1.0 / math.sqrt(out_channels)
    convs1 = [tuple(unif((out_channels, out_channels), stdv_g) for _ in range(3))
              for _ in range(num_layers)]
    convs2 = [tuple(unif((out_channels, out_channels), stdv_g) for _ in range(3))
              for _ in range(num_layers)]
    theta = unif((out_channels, spatial_channels), 1.0 / math.sqrt(spatial_channels))

    return dict(temporal1=conv_params(in_channels, out_channels),
                temporal2=conv_params(spatial_channels, out_channels),
                A=(A00, A01, A10, A11),
                convs1=convs1, convs2=convs2, theta=theta)


# --------------------------------------------------------------------------------------
# Pure-JAX reference (mirrors the PyTorch forward) for the correctness check.
# --------------------------------------------------------------------------------------
def _ref_temporal_conv(x, wp, bp, wq, bq, w1, b1):
    K = wp.shape[0]
    T_out = x.shape[2] - K + 1

    def conv(w, b):
        acc = jnp.zeros(x.shape[:2] + (T_out, w.shape[2]), jnp.float32) + b.reshape(1, 1, 1, -1)
        for k in range(K):
            acc = acc + jnp.einsum("bntc,co->bnto", x[:, :, k:k + T_out, :], w[k])
        return acc

    return (conv(wp, bp) + conv(w1, b1)) * jax.nn.sigmoid(conv(wq, bq))


def _ref_het_gconv(x0l, x1l, x00, a_self, a_comb, a_cross, th1, th2, th3):
    u1 = jnp.einsum("ij,bjtc->bitc", a_self, x0l)
    u2 = jax.nn.relu(u1 @ th1)
    u3 = jnp.einsum("ij,bjtc->bitc", a_comb, x0l)
    u4 = jnp.einsum("ij,bjtc->bitc", a_cross, x1l)
    u5 = jax.nn.sigmoid(u3 @ th2 + u4 @ th3)
    u6 = jax.nn.relu((u2 + u5) / 2.0)
    return jax.nn.relu(0.9 * u6 + 0.1 * x00)


def _ref_forward(X, params, num_layers=5):
    t1 = _ref_temporal_conv(X, *params["temporal1"])
    X0, X1 = t1[:, :N0_SPLIT], t1[:, N0_SPLIT:]
    A00, A01, A10, A11 = params["A"]
    u0, u1 = X0, X1
    for i in range(num_layers):
        u0 = _ref_het_gconv(u0, u1, X0, A00, A01 @ A10, A01, *params["convs1"][i])
        u1 = _ref_het_gconv(u1, u0, X1, A11, A10 @ A01, A10, *params["convs2"][i])
    tk = jnp.concatenate([u0, u1], axis=1)
    tk = jax.nn.relu(tk @ params["theta"])
    tk = _ref_temporal_conv(tk, *params["temporal2"])
    mean = tk.mean(axis=(0, 2, 3), keepdims=True)
    var = ((tk - mean) ** 2).mean(axis=(0, 2, 3), keepdims=True)
    return (tk - mean) / jnp.sqrt(var + 1e-5)


if __name__ == "__main__":
    B, num_nodes, T = 2, 96, 8          # 96 nodes = 81 type-0 + 15 type-1 (split hardcoded to 81)
    in_channels, spatial_channels, out_channels = 4, 16, 16

    key = jax.random.PRNGKey(0)
    kx, kp = jax.random.split(key)
    X = jax.random.normal(kx, (B, num_nodes, T, in_channels), jnp.float32)
    params = init_params(kp, in_channels, out_channels, spatial_channels, num_nodes)

    fwd = jax.jit(lambda x: het_stgcn_block_forward(x, params))
    out = jax.block_until_ready(fwd(X))

    assert out.shape == (B, num_nodes, T - 4, out_channels), out.shape
    ref = _ref_forward(X, params)
    max_err = float(jnp.max(jnp.abs(out - ref)))
    assert jnp.allclose(out, ref, atol=1e-3, rtol=1e-3), max_err
    print("KERNEL_OK")
</pallas_src>

<mosaic_0001>
module attributes {stable_mosaic.version = 11 : i64} {
  func.func @fused_block_kernel(%arg0: i32, %arg1: memref<1x81x32xf32, #tpu.memory_space<vmem>>, %arg2: memref<1x15x32xf32, #tpu.memory_space<vmem>>, %arg3: memref<32x288xf32, #tpu.memory_space<vmem>>, %arg4: memref<1x288xf32, #tpu.memory_space<vmem>>, %arg5: memref<81x81xf32, #tpu.memory_space<vmem>>, %arg6: memref<81x81xf32, #tpu.memory_space<vmem>>, %arg7: memref<81x15xf32, #tpu.memory_space<vmem>>, %arg8: memref<15x15xf32, #tpu.memory_space<vmem>>, %arg9: memref<15x15xf32, #tpu.memory_space<vmem>>, %arg10: memref<15x81xf32, #tpu.memory_space<vmem>>, %arg11: memref<15x96x96xf32, #tpu.memory_space<vmem>>, %arg12: memref<15x96x96xf32, #tpu.memory_space<vmem>>, %arg13: memref<96x96xf32, #tpu.memory_space<vmem>>, %arg14: memref<96x192xf32, #tpu.memory_space<vmem>>, %arg15: memref<1x192xf32, #tpu.memory_space<vmem>>, %arg16: memref<1x81x64xf32, #tpu.memory_space<vmem>>, %arg17: memref<1x15x64xf32, #tpu.memory_space<vmem>>) attributes {dimension_semantics = [#tpu.dimension_semantics<parallel>], iteration_bounds = array<i64: 2>, scalar_prefetch = 0 : i64, scratch_operands = 0 : i64, tpu.core_type = #tpu.core_type<tc>, window_params = [{transform_indices = @transform_0, window_bounds = array<i64: 1, 81, 32>}, {transform_indices = @transform_1, window_bounds = array<i64: 1, 15, 32>}, {pipeline_mode = #tpu.pipeline_mode<synchronous>, transform_indices = @transform_2, window_bounds = array<i64: 32, 288>}, {pipeline_mode = #tpu.pipeline_mode<synchronous>, transform_indices = @transform_3, window_bounds = array<i64: 1, 288>}, {pipeline_mode = #tpu.pipeline_mode<synchronous>, transform_indices = @transform_4, window_bounds = array<i64: 81, 81>}, {pipeline_mode = #tpu.pipeline_mode<synchronous>, transform_indices = @transform_5, window_bounds = array<i64: 81, 81>}, {pipeline_mode = #tpu.pipeline_mode<synchronous>, transform_indices = @transform_6, window_bounds = array<i64: 81, 15>}, {pipeline_mode = #tpu.pipeline_mode<synchronous>, transform_indices = @transform_7, window_bounds = array<i64: 15, 15>}, {pipeline_mode = #tpu.pipeline_mode<synchronous>, transform_indices = @transform_8, window_bounds = array<i64: 15, 15>}, {pipeline_mode = #tpu.pipeline_mode<synchronous>, transform_indices = @transform_9, window_bounds = array<i64: 15, 81>}, {pipeline_mode = #tpu.pipeline_mode<synchronous>, transform_indices = @transform_10, window_bounds = array<i64: 15, 96, 96>}, {pipeline_mode = #tpu.pipeline_mode<synchronous>, transform_indices = @transform_11, window_bounds = array<i64: 15, 96, 96>}, {pipeline_mode = #tpu.pipeline_mode<synchronous>, transform_indices = @transform_12, window_bounds = array<i64: 96, 96>}, {pipeline_mode = #tpu.pipeline_mode<synchronous>, transform_indices = @transform_13, window_bounds = array<i64: 96, 192>}, {pipeline_mode = #tpu.pipeline_mode<synchronous>, transform_indices = @transform_14, window_bounds = array<i64: 1, 192>}, {transform_indices = @transform_15, window_bounds = array<i64: 1, 81, 64>}, {transform_indices = @transform_16, window_bounds = array<i64: 1, 15, 64>}]} {
    %c0 = arith.constant 0 : index
    %c0_0 = arith.constant 0 : index
    %0 = vector.load %arg3[%c0, %c0_0] : memref<32x288xf32, #tpu.memory_space<vmem>>, vector<32x288xf32>
    %c0_1 = arith.constant 0 : index
    %c0_2 = arith.constant 0 : index
    %1 = vector.load %arg4[%c0_1, %c0_2] : memref<1x288xf32, #tpu.memory_space<vmem>>, vector<1x288xf32>
    %c0_3 = arith.constant 0 : index
    %c0_4 = arith.constant 0 : index
    %c0_5 = arith.constant 0 : index
    %2 = vector.load %arg1[%c0_3, %c0_4, %c0_5] : memref<1x81x32xf32, #tpu.memory_space<vmem>>, vector<1x81x32xf32>
    %3 = vector.shape_cast %2 : vector<1x81x32xf32> to vector<81x32xf32>
    %cst = arith.constant dense<0.000000e+00> : vector<81x288xf32>
    %4 = tpu.matmul %3, %0, %cst {dimension_numbers = #tpu.dot_dimension_numbers<[1], [0], [0], [1], [0, 0, 1, 1], [], []>} : vector<81x32xf32>, vector<32x288xf32>, vector<81x288xf32> -> vector<81x288xf32>
    %5 = vector.broadcast %1 : vector<1x288xf32> to vector<81x288xf32>
    %6 = arith.addf %4, %5 : vector<81x288xf32>
    %7 = vector.extract_strided_slice %6 {offsets = [0, 0], sizes = [81, 96], strides = [1, 1]} : vector<81x288xf32> to vector<81x96xf32>
    %8 = vector.extract_strided_slice %6 {offsets = [0, 96], sizes = [81, 96], strides = [1, 1]} : vector<81x288xf32> to vector<81x96xf32>
    %9 = arith.addf %7, %8 : vector<81x96xf32>
    %10 = vector.extract_strided_slice %6 {offsets = [0, 192], sizes = [81, 96], strides = [1, 1]} : vector<81x288xf32> to vector<81x96xf32>
    %11 = arith.negf %10 : vector<81x96xf32>
    %12 = math.exp %11 : vector<81x96xf32>
    %cst_6 = arith.constant 1.000000e+00 : f32
    %13 = vector.broadcast %cst_6 : f32 to vector<81x96xf32>
    %14 = arith.addf %13, %12 : vector<81x96xf32>
    %15 = arith.divf %13, %14 : vector<81x96xf32>
    %16 = arith.mulf %9, %15 : vector<81x96xf32>
    %c0_7 = arith.constant 0 : index
    %c0_8 = arith.constant 0 : index
    %c0_9 = arith.constant 0 : index
    %17 = vector.load %arg2[%c0_7, %c0_8, %c0_9] : memref<1x15x32xf32, #tpu.memory_space<vmem>>, vector<1x15x32xf32>
    %18 = vector.shape_cast %17 : vector<1x15x32xf32> to vector<15x32xf32>
    %cst_10 = arith.constant dense<0.000000e+00> : vector<15x288xf32>
    %19 = tpu.matmul %18, %0, %cst_10 {dimension_numbers = #tpu.dot_dimension_numbers<[1], [0], [0], [1], [0, 0, 1, 1], [], []>} : vector<15x32xf32>, vector<32x288xf32>, vector<15x288xf32> -> vector<15x288xf32>
    %20 = vector.broadcast %1 : vector<1x288xf32> to vector<15x288xf32>
    %21 = arith.addf %19, %20 : vector<15x288xf32>
    %22 = vector.extract_strided_slice %21 {offsets = [0, 0], sizes = [15, 96], strides = [1, 1]} : vector<15x288xf32> to vector<15x96xf32>
    %23 = vector.extract_strided_slice %21 {offsets = [0, 96], sizes = [15, 96], strides = [1, 1]} : vector<15x288xf32> to vector<15x96xf32>
    %24 = arith.addf %22, %23 : vector<15x96xf32>
    %25 = vector.extract_strided_slice %21 {offsets = [0, 192], sizes = [15, 96], strides = [1, 1]} : vector<15x288xf32> to vector<15x96xf32>
    %26 = arith.negf %25 : vector<15x96xf32>
    %27 = math.exp %26 : vector<15x96xf32>
    %cst_11 = arith.constant 1.000000e+00 : f32
    %28 = vector.broadcast %cst_11 : f32 to vector<15x96xf32>
    %29 = arith.addf %28, %27 : vector<15x96xf32>
    %30 = arith.divf %28, %29 : vector<15x96xf32>
    %31 = arith.mulf %24, %30 : vector<15x96xf32>
    %c0_12 = arith.constant 0 : index
    %c0_13 = arith.constant 0 : index
    %32 = vector.load %arg5[%c0_12, %c0_13] : memref<81x81xf32, #tpu.memory_space<vmem>>, vector<81x81xf32>
    %c0_14 = arith.constant 0 : index
    %c0_15 = arith.constant 0 : index
    %33 = vector.load %arg6[%c0_14, %c0_15] : memref<81x81xf32, #tpu.memory_space<vmem>>, vector<81x81xf32>
    %c0_16 = arith.constant 0 : index
    %c0_17 = arith.constant 0 : index
    %34 = vector.load %arg7[%c0_16, %c0_17] : memref<81x15xf32, #tpu.memory_space<vmem>>, vector<81x15xf32>
    %c0_18 = arith.constant 0 : index
    %c0_19 = arith.constant 0 : index
    %35 = vector.load %arg8[%c0_18, %c0_19] : memref<15x15xf32, #tpu.memory_space<vmem>>, vector<15x15xf32>
    %c0_20 = arith.constant 0 : index
    %c0_21 = arith.constant 0 : index
    %36 = vector.load %arg9[%c0_20, %c0_21] : memref<15x15xf32, #tpu.memory_space<vmem>>, vector<15x15xf32>
    %c0_22 = arith.constant 0 : index
    %c0_23 = arith.constant 0 : index
    %37 = vector.load %arg10[%c0_22, %c0_23] : memref<15x81xf32, #tpu.memory_space<vmem>>, vector<15x81xf32>
    %c0_24 = arith.constant 0 : index
    %c0_25 = arith.constant 0 : index
    %c0_26 = arith.constant 0 : index
    %38 = vector.load %arg11[%c0_24, %c0_25, %c0_26] : memref<15x96x96xf32, #tpu.memory_space<vmem>>, vector<1x96x96xf32>
    %39 = vector.shape_cast %38 : vector<1x96x96xf32> to vector<96x96xf32>
    %c1 = arith.constant 1 : index
    %c0_27 = arith.constant 0 : index
    %c0_28 = arith.constant 0 : index
    %40 = vector.load %arg11[%c1, %c0_27, %c0_28] : memref<15x96x96xf32, #tpu.memory_space<vmem>>, vector<1x96x96xf32>
    %41 = vector.shape_cast %40 : vector<1x96x96xf32> to vector<96x96xf32>
    %c2 = arith.constant 2 : index
    %c0_29 = arith.constant 0 : index
    %c0_30 = arith.constant 0 : index
    %42 = vector.load %arg11[%c2, %c0_29, %c0_30] : memref<15x96x96xf32, #tpu.memory_space<vmem>>, vector<1x96x96xf32>
    %43 = vector.shape_cast %42 : vector<1x96x96xf32> to vector<96x96xf32>
    %cst_31 = arith.constant dense<0.000000e+00> : vector<81x96xf32>
    %44 = tpu.matmul %32, %16, %cst_31 {dimension_numbers = #tpu.dot_dimension_numbers<[1], [0], [0], [1], [0, 0, 1, 1], [], []>} : vector<81x81xf32>, vector<81x96xf32>, vector<81x96xf32> -> vector<81x96xf32>
    %cst_32 = arith.constant dense<0.000000e+00> : vector<81x96xf32>
    %45 = tpu.matmul %44, %39, %cst_32 {dimension_numbers = #tpu.dot_dimension_numbers<[1], [0], [0], [1], [0, 0, 1, 1], [], []>} : vector<81x96xf32>, vector<96x96xf32>, vector<81x96xf32> -> vector<81x96xf32>
    %cst_33 = arith.constant 0.000000e+00 : f32
    %46 = vector.broadcast %cst_33 : f32 to vector<81x96xf32>
    %47 = arith.maximumf %45, %46 : vector<81x96xf32>
    %cst_34 = arith.constant dense<0.000000e+00> : vector<81x96xf32>
    %48 = tpu.matmul %33, %16, %cst_34 {dimension_numbers = #tpu.dot_dimension_numbers<[1], [0], [0], [1], [0, 0, 1, 1], [], []>} : vector<81x81xf32>, vector<81x96xf32>, vector<81x96xf32> -> vector<81x96xf32>
    %cst_35 = arith.constant dense<0.000000e+00> : vector<81x96xf32>
    %49 = tpu.matmul %34, %31, %cst_35 {dimension_numbers = #tpu.dot_dimension_numbers<[1], [0], [0], [1], [0, 0, 1, 1], [], []>} : vector<81x15xf32>, vector<15x96xf32>, vector<81x96xf32> -> vector<81x96xf32>
    %cst_36 = arith.constant dense<0.000000e+00> : vector<81x96xf32>
    %50 = tpu.matmul %48, %41, %cst_36 {dimension_numbers = #tpu.dot_dimension_numbers<[1], [0], [0], [1], [0, 0, 1, 1], [], []>} : vector<81x96xf32>, vector<96x96xf32>, vector<81x96xf32> -> vector<81x96xf32>
    %cst_37 = arith.constant dense<0.000000e+00> : vector<81x96xf32>
    %51 = tpu.matmul %49, %43, %cst_37 {dimension_numbers = #tpu.dot_dimension_numbers<[1], [0], [0], [1], [0, 0, 1, 1], [], []>} : vector<81x96xf32>, vector<96x96xf32>, vector<81x96xf32> -> vector<81x96xf32>
    %52 = arith.addf %50, %51 : vector<81x96xf32>
    %53 = arith.negf %52 : vector<81x96xf32>
    %54 = math.exp %53 : vector<81x96xf32>
    %cst_38 = arith.constant 1.000000e+00 : f32
    %55 = vector.broadcast %cst_38 : f32 to vector<81x96xf32>
    %56 = arith.addf %55, %54 : vector<81x96xf32>
    %57 = arith.divf %55, %56 : vector<81x96xf32>
    %58 = arith.addf %47, %57 : vector<81x96xf32>
    %cst_39 = arith.constant 5.000000e-01 : f32
    %59 = vector.broadcast %cst_39 : f32 to vector<81x96xf32>
    %60 = arith.mulf %58, %59 : vector<81x96xf32>
    %cst_40 = arith.constant 0.000000e+00 : f32
    %61 = vector.broadcast %cst_40 : f32 to vector<81x96xf32>
    %62 = arith.maximumf %60, %61 : vector<81x96xf32>
    %cst_41 = arith.constant 0.899999976 : f32
    %63 = vector.broadcast %cst_41 : f32 to vector<81x96xf32>
    %64 = arith.mulf %63, %62 : vector<81x96xf32>
    %cst_42 = arith.constant 1.000000e-01 : f32
    %65 = vector.broadcast %cst_42 : f32 to vector<81x96xf32>
    %66 = arith.mulf %65, %16 : vector<81x96xf32>
    %67 = arith.addf %64, %66 : vector<81x96xf32>
    %cst_43 = arith.constant 0.000000e+00 : f32
    %68 = vector.broadcast %cst_43 : f32 to vector<81x96xf32>
    %69 = arith.maximumf %67, %68 : vector<81x96xf32>
    %c0_44 = arith.constant 0 : index
    %c0_45 = arith.constant 0 : index
    %c0_46 = arith.constant 0 : index
    %70 = vector.load %arg12[%c0_44, %c0_45, %c0_46] : memref<15x96x96xf32, #tpu.memory_space<vmem>>, vector<1x96x96xf32>
    %71 = vector.shape_cast %70 : vector<1x96x96xf32> to vector<96x96xf32>
    %c1_47 = arith.constant 1 : index
    %c0_48 = arith.constant 0 : index
    %c0_49 = arith.constant 0 : index
    %72 = vector.load %arg12[%c1_47, %c0_48, %c0_49] : memref<15x96x96xf32, #tpu.memory_space<vmem>>, vector<1x96x96xf32>
    %73 = vector.shape_cast %72 : vector<1x96x96xf32> to vector<96x96xf32>
    %c2_50 = arith.constant 2 : index
    %c0_51 = arith.constant 0 : index
    %c0_52 = arith.constant 0 : index
    %74 = vector.load %arg12[%c2_50, %c0_51, %c0_52] : memref<15x96x96xf32, #tpu.memory_space<vmem>>, vector<1x96x96xf32>
    %75 = vector.shape_cast %74 : vector<1x96x96xf32> to vector<96x96xf32>
    %cst_53 = arith.constant dense<0.000000e+00> : vector<15x96xf32>
    %76 = tpu.matmul %35, %31, %cst_53 {dimension_numbers = #tpu.dot_dimension_numbers<[1], [0], [0], [1], [0, 0, 1, 1], [], []>} : vector<15x15xf32>, vector<15x96xf32>, vector<15x96xf32> -> vector<15x96xf32>
    %cst_54 = arith.constant dense<0.000000e+00> : vector<15x96xf32>
    %77 = tpu.matmul %76, %71, %cst_54 {dimension_numbers = #tpu.dot_dimension_numbers<[1], [0], [0], [1], [0, 0, 1, 1], [], []>} : vector<15x96xf32>, vector<96x96xf32>, vector<15x96xf32> -> vector<15x96xf32>
    %cst_55 = arith.constant 0.000000e+00 : f32
    %78 = vector.broadcast %cst_55 : f32 to vector<15x96xf32>
    %79 = arith.maximumf %77, %78 : vector<15x96xf32>
    %cst_56 = arith.constant dense<0.000000e+00> : vector<15x96xf32>
    %80 = tpu.matmul %36, %31, %cst_56 {dimension_numbers = #tpu.dot_dimension_numbers<[1], [0], [0], [1], [0, 0, 1, 1], [], []>} : vector<15x15xf32>, vector<15x96xf32>, vector<15x96xf32> -> vector<15x96xf32>
    %cst_57 = arith.constant dense<0.000000e+00> : vector<15x96xf32>
    %81 = tpu.matmul %37, %69, %cst_57 {dimension_numbers = #tpu.dot_dimension_numbers<[1], [0], [0], [1], [0, 0, 1, 1], [], []>} : vector<15x81xf32>, vector<81x96xf32>, vector<15x96xf32> -> vector<15x96xf32>
    %cst_58 = arith.constant dense<0.000000e+00> : vector<15x96xf32>
    %82 = tpu.matmul %80, %73, %cst_58 {dimension_numbers = #tpu.dot_dimension_numbers<[1], [0], [0], [1], [0, 0, 1, 1], [], []>} : vector<15x96xf32>, vector<96x96xf32>, vector<15x96xf32> -> vector<15x96xf32>
    %cst_59 = arith.constant dense<0.000000e+00> : vector<15x96xf32>
    %83 = tpu.matmul %81, %75, %cst_59 {dimension_numbers = #tpu.dot_dimension_numbers<[1], [0], [0], [1], [0, 0, 1, 1], [], []>} : vector<15x96xf32>, vector<96x96xf32>, vector<15x96xf32> -> vector<15x96xf32>
    %84 = arith.addf %82, %83 : vector<15x96xf32>
    %85 = arith.negf %84 : vector<15x96xf32>
    %86 = math.exp %85 : vector<15x96xf32>
    %cst_60 = arith.constant 1.000000e+00 : f32
    %87 = vector.broadcast %cst_60 : f32 to vector<15x96xf32>
    %88 = arith.addf %87, %86 : vector<15x96xf32>
    %89 = arith.divf %87, %88 : vector<15x96xf32>
    %90 = arith.addf %79, %89 : vector<15x96xf32>
    %cst_61 = arith.constant 5.000000e-01 : f32
    %91 = vector.broadcast %cst_61 : f32 to vector<15x96xf32>
    %92 = arith.mulf %90, %91 : vector<15x96xf32>
    %cst_62 = arith.constant 0.000000e+00 : f32
    %93 = vector.broadcast %cst_62 : f32 to vector<15x96xf32>
    %94 = arith.maximumf %92, %93 : vector<15x96xf32>
    %cst_63 = arith.constant 0.899999976 : f32
    %95 = vector.broadcast %cst_63 : f32 to vector<15x96xf32>
    %96 = arith.mulf %95, %94 : vector<15x96xf32>
    %cst_64 = arith.constant 1.000000e-01 : f32
    %97 = vector.broadcast %cst_64 : f32 to vector<15x96xf32>
    %98 = arith.mulf %97, %31 : vector<15x96xf32>
    %99 = arith.addf %96, %98 : vector<15x96xf32>
    %cst_65 = arith.constant 0.000000e+00 : f32
    %100 = vector.broadcast %cst_65 : f32 to vector<15x96xf32>
    %101 = arith.maximumf %99, %100 : vector<15x96xf32>
    %c3 = arith.constant 3 : index
    %c0_66 = arith.constant 0 : index
    %c0_67 = arith.constant 0 : index
    %102 = vector.load %arg11[%c3, %c0_66, %c0_67] : memref<15x96x96xf32, #tpu.memory_space<vmem>>, vector<1x96x96xf32>
    %103 = vector.shape_cast %102 : vector<1x96x96xf32> to vector<96x96xf32>
    %c4 = arith.constant 4 : index
    %c0_68 = arith.constant 0 : index
    %c0_69 = arith.constant 0 : index
    %104 = vector.load %arg11[%c4, %c0_68, %c0_69] : memref<15x96x96xf32, #tpu.memory_space<vmem>>, vector<1x96x96xf32>
    %105 = vector.shape_cast %104 : vector<1x96x96xf32> to vector<96x96xf32>
    %c5 = arith.constant 5 : index
    %c0_70 = arith.constant 0 : index
    %c0_71 = arith.constant 0 : index
    %106 = vector.load %arg11[%c5, %c0_70, %c0_71] : memref<15x96x96xf32, #tpu.memory_space<vmem>>, vector<1x96x96xf32>
    %107 = vector.shape_cast %106 : vector<1x96x96xf32> to vector<96x96xf32>
    %cst_72 = arith.constant dense<0.000000e+00> : vector<81x96xf32>
    %108 = tpu.matmul %32, %69, %cst_72 {dimension_numbers = #tpu.dot_dimension_numbers<[1], [0], [0], [1], [0, 0, 1, 1], [], []>} : vector<81x81xf32>, vector<81x96xf32>, vector<81x96xf32> -> vector<81x96xf32>
    %cst_73 = arith.constant dense<0.000000e+00> : vector<81x96xf32>
    %109 = tpu.matmul %108, %103, %cst_73 {dimension_numbers = #tpu.dot_dimension_numbers<[1], [0], [0], [1], [0, 0, 1, 1], [], []>} : vector<81x96xf32>, vector<96x96xf32>, vector<81x96xf32> -> vector<81x96xf32>
    %cst_74 = arith.constant 0.000000e+00 : f32
    %110 = vector.broadcast %cst_74 : f32 to vector<81x96xf32>
    %111 = arith.maximumf %109, %110 : vector<81x96xf32>
    %cst_75 = arith.constant dense<0.000000e+00> : vector<81x96xf32>
    %112 = tpu.matmul %33, %69, %cst_75 {dimension_numbers = #tpu.dot_dimension_numbers<[1], [0], [0], [1], [0, 0, 1, 1], [], []>} : vector<81x81xf32>, vector<81x96xf32>, vector<81x96xf32> -> vector<81x96xf32>
    %cst_76 = arith.constant dense<0.000000e+00> : vector<81x96xf32>
    %113 = tpu.matmul %34, %101, %cst_76 {dimension_numbers = #tpu.dot_dimension_numbers<[1], [0], [0], [1], [0, 0, 1, 1], [], []>} : vector<81x15xf32>, vector<15x96xf32>, vector<81x96xf32> -> vector<81x96xf32>
    %cst_77 = arith.constant dense<0.000000e+00> : vector<81x96xf32>
    %114 = tpu.matmul %112, %105, %cst_77 {dimension_numbers = #tpu.dot_dimension_numbers<[1], [0], [0], [1], [0, 0, 1, 1], [], []>} : vector<81x96xf32>, vector<96x96xf32>, vector<81x96xf32> -> vector<81x96xf32>
    %cst_78 = arith.constant dense<0.000000e+00> : vector<81x96xf32>
    %115 = tpu.matmul %113, %107, %cst_78 {dimension_numbers = #tpu.dot_dimension_numbers<[1], [0], [0], [1], [0, 0, 1, 1], [], []>} : vector<81x96xf32>, vector<96x96xf32>, vector<81x96xf32> -> vector<81x96xf32>
    %116 = arith.addf %114, %115 : vector<81x96xf32>
    %117 = arith.negf %116 : vector<81x96xf32>
    %118 = math.exp %117 : vector<81x96xf32>
    %cst_79 = arith.constant 1.000000e+00 : f32
    %119 = vector.broadcast %cst_79 : f32 to vector<81x96xf32>
    %120 = arith.addf %119, %118 : vector<81x96xf32>
    %121 = arith.divf %119, %120 : vector<81x96xf32>
    %122 = arith.addf %111, %121 : vector<81x96xf32>
    %cst_80 = arith.constant 5.000000e-01 : f32
    %123 = vector.broadcast %cst_80 : f32 to vector<81x96xf32>
    %124 = arith.mulf %122, %123 : vector<81x96xf32>
    %cst_81 = arith.constant 0.000000e+00 : f32
    %125 = vector.broadcast %cst_81 : f32 to vector<81x96xf32>
    %126 = arith.maximumf %124, %125 : vector<81x96xf32>
    %cst_82 = arith.constant 0.899999976 : f32
    %127 = vector.broadcast %cst_82 : f32 to vector<81x96xf32>
    %128 = arith.mulf %127, %126 : vector<81x96xf32>
    %cst_83 = arith.constant 1.000000e-01 : f32
    %129 = vector.broadcast %cst_83 : f32 to vector<81x96xf32>
    %130 = arith.mulf %129, %16 : vector<81x96xf32>
    %131 = arith.addf %128, %130 : vector<81x96xf32>
    %cst_84 = arith.constant 0.000000e+00 : f32
    %132 = vector.broadcast %cst_84 : f32 to vector<81x96xf32>
    %133 = arith.maximumf %131, %132 : vector<81x96xf32>
    %c3_85 = arith.constant 3 : index
    %c0_86 = arith.constant 0 : index
    %c0_87 = arith.constant 0 : index
    %134 = vector.load %arg12[%c3_85, %c0_86, %c0_87] : memref<15x96x96xf32, #tpu.memory_space<vmem>>, vector<1x96x96xf32>
    %135 = vector.shape_cast %134 : vector<1x96x96xf32> to vector<96x96xf32>
    %c4_88 = arith.constant 4 : index
    %c0_89 = arith.constant 0 : index
    %c0_90 = arith.constant 0 : index
    %136 = vector.load %arg12[%c4_88, %c0_89, %c0_90] : memref<15x96x96xf32, #tpu.memory_space<vmem>>, vector<1x96x96xf32>
    %137 = vector.shape_cast %136 : vector<1x96x96xf32> to vector<96x96xf32>
    %c5_91 = arith.constant 5 : index
    %c0_92 = arith.constant 0 : index
    %c0_93 = arith.constant 0 : index
    %138 = vector.load %arg12[%c5_91, %c0_92, %c0_93] : memref<15x96x96xf32, #tpu.memory_space<vmem>>, vector<1x96x96xf32>
    %139 = vector.shape_cast %138 : vector<1x96x96xf32> to vector<96x96xf32>
    %cst_94 = arith.constant dense<0.000000e+00> : vector<15x96xf32>
    %140 = tpu.matmul %35, %101, %cst_94 {dimension_numbers = #tpu.dot_dimension_numbers<[1], [0], [0], [1], [0, 0, 1, 1], [], []>} : vector<15x15xf32>, vector<15x96xf32>, vector<15x96xf32> -> vector<15x96xf32>
    %cst_95 = arith.constant dense<0.000000e+00> : vector<15x96xf32>
    %141 = tpu.matmul %140, %135, %cst_95 {dimension_numbers = #tpu.dot_dimension_numbers<[1], [0], [0], [1], [0, 0, 1, 1], [], []>} : vector<15x96xf32>, vector<96x96xf32>, vector<15x96xf32> -> vector<15x96xf32>
    %cst_96 = arith.constant 0.000000e+00 : f32
    %142 = vector.broadcast %cst_96 : f32 to vector<15x96xf32>
    %143 = arith.maximumf %141, %142 : vector<15x96xf32>
    %cst_97 = arith.constant dense<0.000000e+00> : vector<15x96xf32>
    %144 = tpu.matmul %36, %101, %cst_97 {dimension_numbers = #tpu.dot_dimension_numbers<[1], [0], [0], [1], [0, 0, 1, 1], [], []>} : vector<15x15xf32>, vector<15x96xf32>, vector<15x96xf32> -> vector<15x96xf32>
    %cst_98 = arith.constant dense<0.000000e+00> : vector<15x96xf32>
    %145 = tpu.matmul %37, %133, %cst_98 {dimension_numbers = #tpu.dot_dimension_numbers<[1], [0], [0], [1], [0, 0, 1, 1], [], []>} : vector<15x81xf32>, vector<81x96xf32>, vector<15x96xf32> -> vector<15x96xf32>
    %cst_99 = arith.constant dense<0.000000e+00> : vector<15x96xf32>
    %146 = tpu.matmul %144, %137, %cst_99 {dimension_numbers = #tpu.dot_dimension_numbers<[1], [0], [0], [1], [0, 0, 1, 1], [], []>} : vector<15x96xf32>, vector<96x96xf32>, vector<15x96xf32> -> vector<15x96xf32>
    %cst_100 = arith.constant dense<0.000000e+00> : vector<15x96xf32>
    %147 = tpu.matmul %145, %139, %cst_100 {dimension_numbers = #tpu.dot_dimension_numbers<[1], [0], [0], [1], [0, 0, 1, 1], [], []>} : vector<15x96xf32>, vector<96x96xf32>, vector<15x96xf32> -> vector<15x96xf32>
    %148 = arith.addf %146, %147 : vector<15x96xf32>
    %149 = arith.negf %148 : vector<15x96xf32>
    %150 = math.exp %149 : vector<15x96xf32>
    %cst_101 = arith.constant 1.000000e+00 : f32
    %151 = vector.broadcast %cst_101 : f32 to vector<15x96xf32>
    %152 = arith.addf %151, %150 : vector<15x96xf32>
    %153 = arith.divf %151, %152 : vector<15x96xf32>
    %154 = arith.addf %143, %153 : vector<15x96xf32>
    %cst_102 = arith.constant 5.000000e-01 : f32
    %155 = vector.broadcast %cst_102 : f32 to vector<15x96xf32>
    %156 = arith.mulf %154, %155 : vector<15x96xf32>
    %cst_103 = arith.constant 0.000000e+00 : f32
    %157 = vector.broadcast %cst_103 : f32 to vector<15x96xf32>
    %158 = arith.maximumf %156, %157 : vector<15x96xf32>
    %cst_104 = arith.constant 0.899999976 : f32
    %159 = vector.broadcast %cst_104 : f32 to vector<15x96xf32>
    %160 = arith.mulf %159, %158 : vector<15x96xf32>
    %cst_105 = arith.constant 1.000000e-01 : f32
    %161 = vector.broadcast %cst_105 : f32 to vector<15x96xf32>
    %162 = arith.mulf %161, %31 : vector<15x96xf32>
    %163 = arith.addf %160, %162 : vector<15x96xf32>
    %cst_106 = arith.constant 0.000000e+00 : f32
    %164 = vector.broadcast %cst_106 : f32 to vector<15x96xf32>
    %165 = arith.maximumf %163, %164 : vector<15x96xf32>
    %c6 = arith.constant 6 : index
    %c0_107 = arith.constant 0 : index
    %c0_108 = arith.constant 0 : index
    %166 = vector.load %arg11[%c6, %c0_107, %c0_108] : memref<15x96x96xf32, #tpu.memory_space<vmem>>, vector<1x96x96xf32>
    %167 = vector.shape_cast %166 : vector<1x96x96xf32> to vector<96x96xf32>
    %c7 = arith.constant 7 : index
    %c0_109 = arith.constant 0 : index
    %c0_110 = arith.constant 0 : index
    %168 = vector.load %arg11[%c7, %c0_109, %c0_110] : memref<15x96x96xf32, #tpu.memory_space<vmem>>, vector<1x96x96xf32>
    %169 = vector.shape_cast %168 : vector<1x96x96xf32> to vector<96x96xf32>
    %c8 = arith.constant 8 : index
    %c0_111 = arith.constant 0 : index
    %c0_112 = arith.constant 0 : index
    %170 = vector.load %arg11[%c8, %c0_111, %c0_112] : memref<15x96x96xf32, #tpu.memory_space<vmem>>, vector<1x96x96xf32>
    %171 = vector.shape_cast %170 : vector<1x96x96xf32> to vector<96x96xf32>
    %cst_113 = arith.constant dense<0.000000e+00> : vector<81x96xf32>
    %172 = tpu.matmul %32, %133, %cst_113 {dimension_numbers = #tpu.dot_dimension_numbers<[1], [0], [0], [1], [0, 0, 1, 1], [], []>} : vector<81x81xf32>, vector<81x96xf32>, vector<81x96xf32> -> vector<81x96xf32>
    %cst_114 = arith.constant dense<0.000000e+00> : vector<81x96xf32>
    %173 = tpu.matmul %172, %167, %cst_114 {dimension_numbers = #tpu.dot_dimension_numbers<[1], [0], [0], [1], [0, 0, 1, 1], [], []>} : vector<81x96xf32>, vector<96x96xf32>, vector<81x96xf32> -> vector<81x96xf32>
    %cst_115 = arith.constant 0.000000e+00 : f32
    %174 = vector.broadcast %cst_115 : f32 to vector<81x96xf32>
    %175 = arith.maximumf %173, %174 : vector<81x96xf32>
    %cst_116 = arith.constant dense<0.000000e+00> : vector<81x96xf32>
    %176 = tpu.matmul %33, %133, %cst_116 {dimension_numbers = #tpu.dot_dimension_numbers<[1], [0], [0], [1], [0, 0, 1, 1], [], []>} : vector<81x81xf32>, vector<81x96xf32>, vector<81x96xf32> -> vector<81x96xf32>
    %cst_117 = arith.constant dense<0.000000e+00> : vector<81x96xf32>
    %177 = tpu.matmul %34, %165, %cst_117 {dimension_numbers = #tpu.dot_dimension_numbers<[1], [0], [0], [1], [0, 0, 1, 1], [], []>} : vector<81x15xf32>, vector<15x96xf32>, vector<81x96xf32> -> vector<81x96xf32>
    %cst_118 = arith.constant dense<0.000000e+00> : vector<81x96xf32>
    %178 = tpu.matmul %176, %169, %cst_118 {dimension_numbers = #tpu.dot_dimension_numbers<[1], [0], [0], [1], [0, 0, 1, 1], [], []>} : vector<81x96xf32>, vector<96x96xf32>, vector<81x96xf32> -> vector<81x96xf32>
    %cst_119 = arith.constant dense<0.000000e+00> : vector<81x96xf32>
    %179 = tpu.matmul %177, %171, %cst_119 {dimension_numbers = #tpu.dot_dimension_numbers<[1], [0], [0], [1], [0, 0, 1, 1], [], []>} : vector<81x96xf32>, vector<96x96xf32>, vector<81x96xf32> -> vector<81x96xf32>
    %180 = arith.addf %178, %179 : vector<81x96xf32>
    %181 = arith.negf %180 : vector<81x96xf32>
    %182 = math.exp %181 : vector<81x96xf32>
    %cst_120 = arith.constant 1.000000e+00 : f32
    %183 = vector.broadcast %cst_120 : f32 to vector<81x96xf32>
    %184 = arith.addf %183, %182 : vector<81x96xf32>
    %185 = arith.divf %183, %184 : vector<81x96xf32>
    %186 = arith.addf %175, %185 : vector<81x96xf32>
    %cst_121 = arith.constant 5.000000e-01 : f32
    %187 = vector.broadcast %cst_121 : f32 to vector<81x96xf32>
    %188 = arith.mulf %186, %187 : vector<81x96xf32>
    %cst_122 = arith.constant 0.000000e+00 : f32
    %189 = vector.broadcast %cst_122 : f32 to vector<81x96xf32>
    %190 = arith.maximumf %188, %189 : vector<81x96xf32>
    %cst_123 = arith.constant 0.899999976 : f32
    %191 = vector.broadcast %cst_123 : f32 to vector<81x96xf32>
    %192 = arith.mulf %191, %190 : vector<81x96xf32>
    %cst_124 = arith.constant 1.000000e-01 : f32
    %193 = vector.broadcast %cst_124 : f32 to vector<81x96xf32>
    %194 = arith.mulf %193, %16 : vector<81x96xf32>
    %195 = arith.addf %192, %194 : vector<81x96xf32>
    %cst_125 = arith.constant 0.000000e+00 : f32
    %196 = vector.broadcast %cst_125 : f32 to vector<81x96xf32>
    %197 = arith.maximumf %195, %196 : vector<81x96xf32>
    %c6_126 = arith.constant 6 : index
    %c0_127 = arith.constant 0 : index
    %c0_128 = arith.constant 0 : index
    %198 = vector.load %arg12[%c6_126, %c0_127, %c0_128] : memref<15x96x96xf32, #tpu.memory_space<vmem>>, vector<1x96x96xf32>
    %199 = vector.shape_cast %198 : vector<1x96x96xf32> to vector<96x96xf32>
    %c7_129 = arith.constant 7 : index
    %c0_130 = arith.constant 0 : index
    %c0_131 = arith.constant 0 : index
    %200 = vector.load %arg12[%c7_129, %c0_130, %c0_131] : memref<15x96x96xf32, #tpu.memory_space<vmem>>, vector<1x96x96xf32>
    %201 = vector.shape_cast %200 : vector<1x96x96xf32> to vector<96x96xf32>
    %c8_132 = arith.constant 8 : index
    %c0_133 = arith.constant 0 : index
    %c0_134 = arith.constant 0 : index
    %202 = vector.load %arg12[%c8_132, %c0_133, %c0_134] : memref<15x96x96xf32, #tpu.memory_space<vmem>>, vector<1x96x96xf32>
    %203 = vector.shape_cast %202 : vector<1x96x96xf32> to vector<96x96xf32>
    %cst_135 = arith.constant dense<0.000000e+00> : vector<15x96xf32>
    %204 = tpu.matmul %35, %165, %cst_135 {dimension_numbers = #tpu.dot_dimension_numbers<[1], [0], [0], [1], [0, 0, 1, 1], [], []>} : vector<15x15xf32>, vector<15x96xf32>, vector<15x96xf32> -> vector<15x96xf32>
    %cst_136 = arith.constant dense<0.000000e+00> : vector<15x96xf32>
    %205 = tpu.matmul %204, %199, %cst_136 {dimension_numbers = #tpu.dot_dimension_numbers<[1], [0], [0], [1], [0, 0, 1, 1], [], []>} : vector<15x96xf32>, vector<96x96xf32>, vector<15x96xf32> -> vector<15x96xf32>
    %cst_137 = arith.constant 0.000000e+00 : f32
    %206 = vector.broadcast %cst_137 : f32 to vector<15x96xf32>
    %207 = arith.maximumf %205, %206 : vector<15x96xf32>
    %cst_138 = arith.constant dense<0.000000e+00> : vector<15x96xf32>
    %208 = tpu.matmul %36, %165, %cst_138 {dimension_numbers = #tpu.dot_dimension_numbers<[1], [0], [0], [1], [0, 0, 1, 1], [], []>} : vector<15x15xf32>, vector<15x96xf32>, vector<15x96xf32> -> vector<15x96xf32>
    %cst_139 = arith.constant dense<0.000000e+00> : vector<15x96xf32>
    %209 = tpu.matmul %37, %197, %cst_139 {dimension_numbers = #tpu.dot_dimension_numbers<[1], [0], [0], [1], [0, 0, 1, 1], [], []>} : vector<15x81xf32>, vector<81x96xf32>, vector<15x96xf32> -> vector<15x96xf32>
    %cst_140 = arith.constant dense<0.000000e+00> : vector<15x96xf32>
    %210 = tpu.matmul %208, %201, %cst_140 {dimension_numbers = #tpu.dot_dimension_numbers<[1], [0], [0], [1], [0, 0, 1, 1], [], []>} : vector<15x96xf32>, vector<96x96xf32>, vector<15x96xf32> -> vector<15x96xf32>
    %cst_141 = arith.constant dense<0.000000e+00> : vector<15x96xf32>
    %211 = tpu.matmul %209, %203, %cst_141 {dimension_numbers = #tpu.dot_dimension_numbers<[1], [0], [0], [1], [0, 0, 1, 1], [], []>} : vector<15x96xf32>, vector<96x96xf32>, vector<15x96xf32> -> vector<15x96xf32>
    %212 = arith.addf %210, %211 : vector<15x96xf32>
    %213 = arith.negf %212 : vector<15x96xf32>
    %214 = math.exp %213 : vector<15x96xf32>
    %cst_142 = arith.constant 1.000000e+00 : f32
    %215 = vector.broadcast %cst_142 : f32 to vector<15x96xf32>
    %216 = arith.addf %215, %214 : vector<15x96xf32>
    %217 = arith.divf %215, %216 : vector<15x96xf32>
    %218 = arith.addf %207, %217 : vector<15x96xf32>
    %cst_143 = arith.constant 5.000000e-01 : f32
    %219 = vector.broadcast %cst_143 : f32 to vector<15x96xf32>
    %220 = arith.mulf %218, %219 : vector<15x96xf32>
    %cst_144 = arith.constant 0.000000e+00 : f32
    %221 = vector.broadcast %cst_144 : f32 to vector<15x96xf32>
    %222 = arith.maximumf %220, %221 : vector<15x96xf32>
    %cst_145 = arith.constant 0.899999976 : f32
    %223 = vector.broadcast %cst_145 : f32 to vector<15x96xf32>
    %224 = arith.mulf %223, %222 : vector<15x96xf32>
    %cst_146 = arith.constant 1.000000e-01 : f32
    %225 = vector.broadcast %cst_146 : f32 to vector<15x96xf32>
    %226 = arith.mulf %225, %31 : vector<15x96xf32>
    %227 = arith.addf %224, %226 : vector<15x96xf32>
    %cst_147 = arith.constant 0.000000e+00 : f32
    %228 = vector.broadcast %cst_147 : f32 to vector<15x96xf32>
    %229 = arith.maximumf %227, %228 : vector<15x96xf32>
    %c9 = arith.constant 9 : index
    %c0_148 = arith.constant 0 : index
    %c0_149 = arith.constant 0 : index
    %230 = vector.load %arg11[%c9, %c0_148, %c0_149] : memref<15x96x96xf32, #tpu.memory_space<vmem>>, vector<1x96x96xf32>
    %231 = vector.shape_cast %230 : vector<1x96x96xf32> to vector<96x96xf32>
    %c10 = arith.constant 10 : index
    %c0_150 = arith.constant 0 : index
    %c0_151 = arith.constant 0 : index
    %232 = vector.load %arg11[%c10, %c0_150, %c0_151] : memref<15x96x96xf32, #tpu.memory_space<vmem>>, vector<1x96x96xf32>
    %233 = vector.shape_cast %232 : vector<1x96x96xf32> to vector<96x96xf32>
    %c11 = arith.constant 11 : index
    %c0_152 = arith.constant 0 : index
    %c0_153 = arith.constant 0 : index
    %234 = vector.load %arg11[%c11, %c0_152, %c0_153] : memref<15x96x96xf32, #tpu.memory_space<vmem>>, vector<1x96x96xf32>
    %235 = vector.shape_cast %234 : vector<1x96x96xf32> to vector<96x96xf32>
    %cst_154 = arith.constant dense<0.000000e+00> : vector<81x96xf32>
    %236 = tpu.matmul %32, %197, %cst_154 {dimension_numbers = #tpu.dot_dimension_numbers<[1], [0], [0], [1], [0, 0, 1, 1], [], []>} : vector<81x81xf32>, vector<81x96xf32>, vector<81x96xf32> -> vector<81x96xf32>
    %cst_155 = arith.constant dense<0.000000e+00> : vector<81x96xf32>
    %237 = tpu.matmul %236, %231, %cst_155 {dimension_numbers = #tpu.dot_dimension_numbers<[1], [0], [0], [1], [0, 0, 1, 1], [], []>} : vector<81x96xf32>, vector<96x96xf32>, vector<81x96xf32> -> vector<81x96xf32>
    %cst_156 = arith.constant 0.000000e+00 : f32
    %238 = vector.broadcast %cst_156 : f32 to vector<81x96xf32>
    %239 = arith.maximumf %237, %238 : vector<81x96xf32>
    %cst_157 = arith.constant dense<0.000000e+00> : vector<81x96xf32>
    %240 = tpu.matmul %33, %197, %cst_157 {dimension_numbers = #tpu.dot_dimension_numbers<[1], [0], [0], [1], [0, 0, 1, 1], [], []>} : vector<81x81xf32>, vector<81x96xf32>, vector<81x96xf32> -> vector<81x96xf32>
    %cst_158 = arith.constant dense<0.000000e+00> : vector<81x96xf32>
    %241 = tpu.matmul %34, %229, %cst_158 {dimension_numbers = #tpu.dot_dimension_numbers<[1], [0], [0], [1], [0, 0, 1, 1], [], []>} : vector<81x15xf32>, vector<15x96xf32>, vector<81x96xf32> -> vector<81x96xf32>
    %cst_159 = arith.constant dense<0.000000e+00> : vector<81x96xf32>
    %242 = tpu.matmul %240, %233, %cst_159 {dimension_numbers = #tpu.dot_dimension_numbers<[1], [0], [0], [1], [0, 0, 1, 1], [], []>} : vector<81x96xf32>, vector<96x96xf32>, vector<81x96xf32> -> vector<81x96xf32>
    %cst_160 = arith.constant dense<0.000000e+00> : vector<81x96xf32>
    %243 = tpu.matmul %241, %235, %cst_160 {dimension_numbers = #tpu.dot_dimension_numbers<[1], [0], [0], [1], [0, 0, 1, 1], [], []>} : vector<81x96xf32>, vector<96x96xf32>, vector<81x96xf32> -> vector<81x96xf32>
    %244 = arith.addf %242, %243 : vector<81x96xf32>
    %245 = arith.negf %244 : vector<81x96xf32>
    %246 = math.exp %245 : vector<81x96xf32>
    %cst_161 = arith.constant 1.000000e+00 : f32
    %247 = vector.broadcast %cst_161 : f32 to vector<81x96xf32>
    %248 = arith.addf %247, %246 : vector<81x96xf32>
    %249 = arith.divf %247, %248 : vector<81x96xf32>
    %250 = arith.addf %239, %249 : vector<81x96xf32>
    %cst_162 = arith.constant 5.000000e-01 : f32
    %251 = vector.broadcast %cst_162 : f32 to vector<81x96xf32>
    %252 = arith.mulf %250, %251 : vector<81x96xf32>
    %cst_163 = arith.constant 0.000000e+00 : f32
    %253 = vector.broadcast %cst_163 : f32 to vector<81x96xf32>
    %254 = arith.maximumf %252, %253 : vector<81x96xf32>
    %cst_164 = arith.constant 0.899999976 : f32
    %255 = vector.broadcast %cst_164 : f32 to vector<81x96xf32>
    %256 = arith.mulf %255, %254 : vector<81x96xf32>
    %cst_165 = arith.constant 1.000000e-01 : f32
    %257 = vector.broadcast %cst_165 : f32 to vector<81x96xf32>
    %258 = arith.mulf %257, %16 : vector<81x96xf32>
    %259 = arith.addf %256, %258 : vector<81x96xf32>
    %cst_166 = arith.constant 0.000000e+00 : f32
    %260 = vector.broadcast %cst_166 : f32 to vector<81x96xf32>
    %261 = arith.maximumf %259, %260 : vector<81x96xf32>
    %c9_167 = arith.constant 9 : index
    %c0_168 = arith.constant 0 : index
    %c0_169 = arith.constant 0 : index
    %262 = vector.load %arg12[%c9_167, %c0_168, %c0_169] : memref<15x96x96xf32, #tpu.memory_space<vmem>>, vector<1x96x96xf32>
    %263 = vector.shape_cast %262 : vector<1x96x96xf32> to vector<96x96xf32>
    %c10_170 = arith.constant 10 : index
    %c0_171 = arith.constant 0 : index
    %c0_172 = arith.constant 0 : index
    %264 = vector.load %arg12[%c10_170, %c0_171, %c0_172] : memref<15x96x96xf32, #tpu.memory_space<vmem>>, vector<1x96x96xf32>
    %265 = vector.shape_cast %264 : vector<1x96x96xf32> to vector<96x96xf32>
    %c11_173 = arith.constant 11 : index
    %c0_174 = arith.constant 0 : index
    %c0_175 = arith.constant 0 : index
    %266 = vector.load %arg12[%c11_173, %c0_174, %c0_175] : memref<15x96x96xf32, #tpu.memory_space<vmem>>, vector<1x96x96xf32>
    %267 = vector.shape_cast %266 : vector<1x96x96xf32> to vector<96x96xf32>
    %cst_176 = arith.constant dense<0.000000e+00> : vector<15x96xf32>
    %268 = tpu.matmul %35, %229, %cst_176 {dimension_numbers = #tpu.dot_dimension_numbers<[1], [0], [0], [1], [0, 0, 1, 1], [], []>} : vector<15x15xf32>, vector<15x96xf32>, vector<15x96xf32> -> vector<15x96xf32>
    %cst_177 = arith.constant dense<0.000000e+00> : vector<15x96xf32>
    %269 = tpu.matmul %268, %263, %cst_177 {dimension_numbers = #tpu.dot_dimension_numbers<[1], [0], [0], [1], [0, 0, 1, 1], [], []>} : vector<15x96xf32>, vector<96x96xf32>, vector<15x96xf32> -> vector<15x96xf32>
    %cst_178 = arith.constant 0.000000e+00 : f32
    %270 = vector.broadcast %cst_178 : f32 to vector<15x96xf32>
    %271 = arith.maximumf %269, %270 : vector<15x96xf32>
    %cst_179 = arith.constant dense<0.000000e+00> : vector<15x96xf32>
    %272 = tpu.matmul %36, %229, %cst_179 {dimension_numbers = #tpu.dot_dimension_numbers<[1], [0], [0], [1], [0, 0, 1, 1], [], []>} : vector<15x15xf32>, vector<15x96xf32>, vector<15x96xf32> -> vector<15x96xf32>
    %cst_180 = arith.constant dense<0.000000e+00> : vector<15x96xf32>
    %273 = tpu.matmul %37, %261, %cst_180 {dimension_numbers = #tpu.dot_dimension_numbers<[1], [0], [0], [1], [0, 0, 1, 1], [], []>} : vector<15x81xf32>, vector<81x96xf32>, vector<15x96xf32> -> vector<15x96xf32>
    %cst_181 = arith.constant dense<0.000000e+00> : vector<15x96xf32>
    %274 = tpu.matmul %272, %265, %cst_181 {dimension_numbers = #tpu.dot_dimension_numbers<[1], [0], [0], [1], [0, 0, 1, 1], [], []>} : vector<15x96xf32>, vector<96x96xf32>, vector<15x96xf32> -> vector<15x96xf32>
    %cst_182 = arith.constant dense<0.000000e+00> : vector<15x96xf32>
    %275 = tpu.matmul %273, %267, %cst_182 {dimension_numbers = #tpu.dot_dimension_numbers<[1], [0], [0], [1], [0, 0, 1, 1], [], []>} : vector<15x96xf32>, vector<96x96xf32>, vector<15x96xf32> -> vector<15x96xf32>
    %276 = arith.addf %274, %275 : vector<15x96xf32>
    %277 = arith.negf %276 : vector<15x96xf32>
    %278 = math.exp %277 : vector<15x96xf32>
    %cst_183 = arith.constant 1.000000e+00 : f32
    %279 = vector.broadcast %cst_183 : f32 to vector<15x96xf32>
    %280 = arith.addf %279, %278 : vector<15x96xf32>
    %281 = arith.divf %279, %280 : vector<15x96xf32>
    %282 = arith.addf %271, %281 : vector<15x96xf32>
    %cst_184 = arith.constant 5.000000e-01 : f32
    %283 = vector.broadcast %cst_184 : f32 to vector<15x96xf32>
    %284 = arith.mulf %282, %283 : vector<15x96xf32>
    %cst_185 = arith.constant 0.000000e+00 : f32
    %285 = vector.broadcast %cst_185 : f32 to vector<15x96xf32>
    %286 = arith.maximumf %284, %285 : vector<15x96xf32>
    %cst_186 = arith.constant 0.899999976 : f32
    %287 = vector.broadcast %cst_186 : f32 to vector<15x96xf32>
    %288 = arith.mulf %287, %286 : vector<15x96xf32>
    %cst_187 = arith.constant 1.000000e-01 : f32
    %289 = vector.broadcast %cst_187 : f32 to vector<15x96xf32>
    %290 = arith.mulf %289, %31 : vector<15x96xf32>
    %291 = arith.addf %288, %290 : vector<15x96xf32>
    %cst_188 = arith.constant 0.000000e+00 : f32
    %292 = vector.broadcast %cst_188 : f32 to vector<15x96xf32>
    %293 = arith.maximumf %291, %292 : vector<15x96xf32>
    %c12 = arith.constant 12 : index
    %c0_189 = arith.constant 0 : index
    %c0_190 = arith.constant 0 : index
    %294 = vector.load %arg11[%c12, %c0_189, %c0_190] : memref<15x96x96xf32, #tpu.memory_space<vmem>>, vector<1x96x96xf32>
    %295 = vector.shape_cast %294 : vector<1x96x96xf32> to vector<96x96xf32>
    %c13 = arith.constant 13 : index
    %c0_191 = arith.constant 0 : index
    %c0_192 = arith.constant 0 : index
    %296 = vector.load %arg11[%c13, %c0_191, %c0_192] : memref<15x96x96xf32, #tpu.memory_space<vmem>>, vector<1x96x96xf32>
    %297 = vector.shape_cast %296 : vector<1x96x96xf32> to vector<96x96xf32>
    %c14 = arith.constant 14 : index
    %c0_193 = arith.constant 0 : index
    %c0_194 = arith.constant 0 : index
    %298 = vector.load %arg11[%c14, %c0_193, %c0_194] : memref<15x96x96xf32, #tpu.memory_space<vmem>>, vector<1x96x96xf32>
    %299 = vector.shape_cast %298 : vector<1x96x96xf32> to vector<96x96xf32>
    %cst_195 = arith.constant dense<0.000000e+00> : vector<81x96xf32>
    %300 = tpu.matmul %32, %261, %cst_195 {dimension_numbers = #tpu.dot_dimension_numbers<[1], [0], [0], [1], [0, 0, 1, 1], [], []>} : vector<81x81xf32>, vector<81x96xf32>, vector<81x96xf32> -> vector<81x96xf32>
    %cst_196 = arith.constant dense<0.000000e+00> : vector<81x96xf32>
    %301 = tpu.matmul %300, %295, %cst_196 {dimension_numbers = #tpu.dot_dimension_numbers<[1], [0], [0], [1], [0, 0, 1, 1], [], []>} : vector<81x96xf32>, vector<96x96xf32>, vector<81x96xf32> -> vector<81x96xf32>
    %cst_197 = arith.constant 0.000000e+00 : f32
    %302 = vector.broadcast %cst_197 : f32 to vector<81x96xf32>
    %303 = arith.maximumf %301, %302 : vector<81x96xf32>
    %cst_198 = arith.constant dense<0.000000e+00> : vector<81x96xf32>
    %304 = tpu.matmul %33, %261, %cst_198 {dimension_numbers = #tpu.dot_dimension_numbers<[1], [0], [0], [1], [0, 0, 1, 1], [], []>} : vector<81x81xf32>, vector<81x96xf32>, vector<81x96xf32> -> vector<81x96xf32>
    %cst_199 = arith.constant dense<0.000000e+00> : vector<81x96xf32>
    %305 = tpu.matmul %34, %293, %cst_199 {dimension_numbers = #tpu.dot_dimension_numbers<[1], [0], [0], [1], [0, 0, 1, 1], [], []>} : vector<81x15xf32>, vector<15x96xf32>, vector<81x96xf32> -> vector<81x96xf32>
    %cst_200 = arith.constant dense<0.000000e+00> : vector<81x96xf32>
    %306 = tpu.matmul %304, %297, %cst_200 {dimension_numbers = #tpu.dot_dimension_numbers<[1], [0], [0], [1], [0, 0, 1, 1], [], []>} : vector<81x96xf32>, vector<96x96xf32>, vector<81x96xf32> -> vector<81x96xf32>
    %cst_201 = arith.constant dense<0.000000e+00> : vector<81x96xf32>
    %307 = tpu.matmul %305, %299, %cst_201 {dimension_numbers = #tpu.dot_dimension_numbers<[1], [0], [0], [1], [0, 0, 1, 1], [], []>} : vector<81x96xf32>, vector<96x96xf32>, vector<81x96xf32> -> vector<81x96xf32>
    %308 = arith.addf %306, %307 : vector<81x96xf32>
    %309 = arith.negf %308 : vector<81x96xf32>
    %310 = math.exp %309 : vector<81x96xf32>
    %cst_202 = arith.constant 1.000000e+00 : f32
    %311 = vector.broadcast %cst_202 : f32 to vector<81x96xf32>
    %312 = arith.addf %311, %310 : vector<81x96xf32>
    %313 = arith.divf %311, %312 : vector<81x96xf32>
    %314 = arith.addf %303, %313 : vector<81x96xf32>
    %cst_203 = arith.constant 5.000000e-01 : f32
    %315 = vector.broadcast %cst_203 : f32 to vector<81x96xf32>
    %316 = arith.mulf %314, %315 : vector<81x96xf32>
    %cst_204 = arith.constant 0.000000e+00 : f32
    %317 = vector.broadcast %cst_204 : f32 to vector<81x96xf32>
    %318 = arith.maximumf %316, %317 : vector<81x96xf32>
    %cst_205 = arith.constant 0.899999976 : f32
    %319 = vector.broadcast %cst_205 : f32 to vector<81x96xf32>
    %320 = arith.mulf %319, %318 : vector<81x96xf32>
    %cst_206 = arith.constant 1.000000e-01 : f32
    %321 = vector.broadcast %cst_206 : f32 to vector<81x96xf32>
    %322 = arith.mulf %321, %16 : vector<81x96xf32>
    %323 = arith.addf %320, %322 : vector<81x96xf32>
    %cst_207 = arith.constant 0.000000e+00 : f32
    %324 = vector.broadcast %cst_207 : f32 to vector<81x96xf32>
    %325 = arith.maximumf %323, %324 : vector<81x96xf32>
    %c12_208 = arith.constant 12 : index
    %c0_209 = arith.constant 0 : index
    %c0_210 = arith.constant 0 : index
    %326 = vector.load %arg12[%c12_208, %c0_209, %c0_210] : memref<15x96x96xf32, #tpu.memory_space<vmem>>, vector<1x96x96xf32>
    %327 = vector.shape_cast %326 : vector<1x96x96xf32> to vector<96x96xf32>
    %c13_211 = arith.constant 13 : index
    %c0_212 = arith.constant 0 : index
    %c0_213 = arith.constant 0 : index
    %328 = vector.load %arg12[%c13_211, %c0_212, %c0_213] : memref<15x96x96xf32, #tpu.memory_space<vmem>>, vector<1x96x96xf32>
    %329 = vector.shape_cast %328 : vector<1x96x96xf32> to vector<96x96xf32>
    %c14_214 = arith.constant 14 : index
    %c0_215 = arith.constant 0 : index
    %c0_216 = arith.constant 0 : index
    %330 = vector.load %arg12[%c14_214, %c0_215, %c0_216] : memref<15x96x96xf32, #tpu.memory_space<vmem>>, vector<1x96x96xf32>
    %331 = vector.shape_cast %330 : vector<1x96x96xf32> to vector<96x96xf32>
    %cst_217 = arith.constant dense<0.000000e+00> : vector<15x96xf32>
    %332 = tpu.matmul %35, %293, %cst_217 {dimension_numbers = #tpu.dot_dimension_numbers<[1], [0], [0], [1], [0, 0, 1, 1], [], []>} : vector<15x15xf32>, vector<15x96xf32>, vector<15x96xf32> -> vector<15x96xf32>
    %cst_218 = arith.constant dense<0.000000e+00> : vector<15x96xf32>
    %333 = tpu.matmul %332, %327, %cst_218 {dimension_numbers = #tpu.dot_dimension_numbers<[1], [0], [0], [1], [0, 0, 1, 1], [], []>} : vector<15x96xf32>, vector<96x96xf32>, vector<15x96xf32> -> vector<15x96xf32>
    %cst_219 = arith.constant 0.000000e+00 : f32
    %334 = vector.broadcast %cst_219 : f32 to vector<15x96xf32>
    %335 = arith.maximumf %333, %334 : vector<15x96xf32>
    %cst_220 = arith.constant dense<0.000000e+00> : vector<15x96xf32>
    %336 = tpu.matmul %36, %293, %cst_220 {dimension_numbers = #tpu.dot_dimension_numbers<[1], [0], [0], [1], [0, 0, 1, 1], [], []>} : vector<15x15xf32>, vector<15x96xf32>, vector<15x96xf32> -> vector<15x96xf32>
    %cst_221 = arith.constant dense<0.000000e+00> : vector<15x96xf32>
    %337 = tpu.matmul %37, %325, %cst_221 {dimension_numbers = #tpu.dot_dimension_numbers<[1], [0], [0], [1], [0, 0, 1, 1], [], []>} : vector<15x81xf32>, vector<81x96xf32>, vector<15x96xf32> -> vector<15x96xf32>
    %cst_222 = arith.constant dense<0.000000e+00> : vector<15x96xf32>
    %338 = tpu.matmul %336, %329, %cst_222 {dimension_numbers = #tpu.dot_dimension_numbers<[1], [0], [0], [1], [0, 0, 1, 1], [], []>} : vector<15x96xf32>, vector<96x96xf32>, vector<15x96xf32> -> vector<15x96xf32>
    %cst_223 = arith.constant dense<0.000000e+00> : vector<15x96xf32>
    %339 = tpu.matmul %337, %331, %cst_223 {dimension_numbers = #tpu.dot_dimension_numbers<[1], [0], [0], [1], [0, 0, 1, 1], [], []>} : vector<15x96xf32>, vector<96x96xf32>, vector<15x96xf32> -> vector<15x96xf32>
    %340 = arith.addf %338, %339 : vector<15x96xf32>
    %341 = arith.negf %340 : vector<15x96xf32>
    %342 = math.exp %341 : vector<15x96xf32>
    %cst_224 = arith.constant 1.000000e+00 : f32
    %343 = vector.broadcast %cst_224 : f32 to vector<15x96xf32>
    %344 = arith.addf %343, %342 : vector<15x96xf32>
    %345 = arith.divf %343, %344 : vector<15x96xf32>
    %346 = arith.addf %335, %345 : vector<15x96xf32>
    %cst_225 = arith.constant 5.000000e-01 : f32
    %347 = vector.broadcast %cst_225 : f32 to vector<15x96xf32>
    %348 = arith.mulf %346, %347 : vector<15x96xf32>
    %cst_226 = arith.constant 0.000000e+00 : f32
    %349 = vector.broadcast %cst_226 : f32 to vector<15x96xf32>
    %350 = arith.maximumf %348, %349 : vector<15x96xf32>
    %cst_227 = arith.constant 0.899999976 : f32
    %351 = vector.broadcast %cst_227 : f32 to vector<15x96xf32>
    %352 = arith.mulf %351, %350 : vector<15x96xf32>
    %cst_228 = arith.constant 1.000000e-01 : f32
    %353 = vector.broadcast %cst_228 : f32 to vector<15x96xf32>
    %354 = arith.mulf %353, %31 : vector<15x96xf32>
    %355 = arith.addf %352, %354 : vector<15x96xf32>
    %cst_229 = arith.constant 0.000000e+00 : f32
    %356 = vector.broadcast %cst_229 : f32 to vector<15x96xf32>
    %357 = arith.maximumf %355, %356 : vector<15x96xf32>
    %c0_230 = arith.constant 0 : index
    %c0_231 = arith.constant 0 : index
    %358 = vector.load %arg13[%c0_230, %c0_231] : memref<96x96xf32, #tpu.memory_space<vmem>>, vector<96x96xf32>
    %c0_232 = arith.constant 0 : index
    %c0_233 = arith.constant 0 : index
    %359 = vector.load %arg14[%c0_232, %c0_233] : memref<96x192xf32, #tpu.memory_space<vmem>>, vector<96x192xf32>
    %c0_234 = arith.constant 0 : index
    %c0_235 = arith.constant 0 : index
    %360 = vector.load %arg15[%c0_234, %c0_235] : memref<1x192xf32, #tpu.memory_space<vmem>>, vector<1x192xf32>
    %cst_236 = arith.constant dense<0.000000e+00> : vector<81x96xf32>
    %361 = tpu.matmul %325, %358, %cst_236 {dimension_numbers = #tpu.dot_dimension_numbers<[1], [0], [0], [1], [0, 0, 1, 1], [], []>} : vector<81x96xf32>, vector<96x96xf32>, vector<81x96xf32> -> vector<81x96xf32>
    %cst_237 = arith.constant 0.000000e+00 : f32
    %362 = vector.broadcast %cst_237 : f32 to vector<81x96xf32>
    %363 = arith.maximumf %361, %362 : vector<81x96xf32>
    %cst_238 = arith.constant dense<0.000000e+00> : vector<15x96xf32>
    %364 = tpu.matmul %357, %358, %cst_238 {dimension_numbers = #tpu.dot_dimension_numbers<[1], [0], [0], [1], [0, 0, 1, 1], [], []>} : vector<15x96xf32>, vector<96x96xf32>, vector<15x96xf32> -> vector<15x96xf32>
    %cst_239 = arith.constant 0.000000e+00 : f32
    %365 = vector.broadcast %cst_239 : f32 to vector<15x96xf32>
    %366 = arith.maximumf %364, %365 : vector<15x96xf32>
    %cst_240 = arith.constant dense<0.000000e+00> : vector<81x192xf32>
    %367 = tpu.matmul %363, %359, %cst_240 {dimension_numbers = #tpu.dot_dimension_numbers<[1], [0], [0], [1], [0, 0, 1, 1], [], []>} : vector<81x96xf32>, vector<96x192xf32>, vector<81x192xf32> -> vector<81x192xf32>
    %368 = vector.broadcast %360 : vector<1x192xf32> to vector<81x192xf32>
    %369 = arith.addf %367, %368 : vector<81x192xf32>
    %370 = vector.extract_strided_slice %369 {offsets = [0, 0], sizes = [81, 64], strides = [1, 1]} : vector<81x192xf32> to vector<81x64xf32>
    %371 = vector.extract_strided_slice %369 {offsets = [0, 64], sizes = [81, 64], strides = [1, 1]} : vector<81x192xf32> to vector<81x64xf32>
    %372 = arith.addf %370, %371 : vector<81x64xf32>
    %373 = vector.extract_strided_slice %369 {offsets = [0, 128], sizes = [81, 64], strides = [1, 1]} : vector<81x192xf32> to vector<81x64xf32>
    %374 = arith.negf %373 : vector<81x64xf32>
    %375 = math.exp %374 : vector<81x64xf32>
    %cst_241 = arith.constant 1.000000e+00 : f32
    %376 = vector.broadcast %cst_241 : f32 to vector<81x64xf32>
    %377 = arith.addf %376, %375 : vector<81x64xf32>
    %378 = arith.divf %376, %377 : vector<81x64xf32>
    %379 = arith.mulf %372, %378 : vector<81x64xf32>
    %c0_242 = arith.constant 0 : index
    %c0_243 = arith.constant 0 : index
    %c0_244 = arith.constant 0 : index
    %380 = vector.load %arg16[%c0_242, %c0_243, %c0_244] : memref<1x81x64xf32, #tpu.memory_space<vmem>>, vector<1x81x64xf32>
    %381 = vector.shape_cast %380 : vector<1x81x64xf32> to vector<81x64xf32>
    %382 = vector.shape_cast %379 : vector<81x64xf32> to vector<1x81x64xf32>
    tpu.vector_store %arg16[%c0_242, %c0_243, %c0_244], %382 {strides = array<i32>} : memref<1x81x64xf32, #tpu.memory_space<vmem>>, vector<1x81x64xf32>,
    %cst_245 = arith.constant dense<0.000000e+00> : vector<15x192xf32>
    %383 = tpu.matmul %366, %359, %cst_245 {dimension_numbers = #tpu.dot_dimension_numbers<[1], [0], [0], [1], [0, 0, 1, 1], [], []>} : vector<15x96xf32>, vector<96x192xf32>, vector<15x192xf32> -> vector<15x192xf32>
    %384 = vector.broadcast %360 : vector<1x192xf32> to vector<15x192xf32>
    %385 = arith.addf %383, %384 : vector<15x192xf32>
    %386 = vector.extract_strided_slice %385 {offsets = [0, 0], sizes = [15, 64], strides = [1, 1]} : vector<15x192xf32> to vector<15x64xf32>
    %387 = vector.extract_strided_slice %385 {offsets = [0, 64], sizes = [15, 64], strides = [1, 1]} : vector<15x192xf32> to vector<15x64xf32>
    %388 = arith.addf %386, %387 : vector<15x64xf32>
    %389 = vector.extract_strided_slice %385 {offsets = [0, 128], sizes = [15, 64], strides = [1, 1]} : vector<15x192xf32> to vector<15x64xf32>
    %390 = arith.negf %389 : vector<15x64xf32>
    %391 = math.exp %390 : vector<15x64xf32>
    %cst_246 = arith.constant 1.000000e+00 : f32
    %392 = vector.broadcast %cst_246 : f32 to vector<15x64xf32>
    %393 = arith.addf %392, %391 : vector<15x64xf32>
    %394 = arith.divf %392, %393 : vector<15x64xf32>
    %395 = arith.mulf %388, %394 : vector<15x64xf32>
    %c0_247 = arith.constant 0 : index
    %c0_248 = arith.constant 0 : index
    %c0_249 = arith.constant 0 : index
    %396 = vector.load %arg17[%c0_247, %c0_248, %c0_249] : memref<1x15x64xf32, #tpu.memory_space<vmem>>, vector<1x15x64xf32>
    %397 = vector.shape_cast %396 : vector<1x15x64xf32> to vector<15x64xf32>
    %398 = vector.shape_cast %395 : vector<15x64xf32> to vector<1x15x64xf32>
    tpu.vector_store %arg17[%c0_247, %c0_248, %c0_249], %398 {strides = array<i32>} : memref<1x15x64xf32, #tpu.memory_space<vmem>>, vector<1x15x64xf32>,
    return
  }
  func.func @transform_0(%arg0: i32) -> (i32, i32, i32) {
    %c0_i32 = arith.constant 0 : i32
    %c0_i32_0 = arith.constant 0 : i32
    %c0_i32_1 = arith.constant 0 : i32
    return %arg0, %c0_i32, %c0_i32_0 : i32, i32, i32
  }
  func.func @transform_1(%arg0: i32) -> (i32, i32, i32) {
    %c0_i32 = arith.constant 0 : i32
    %c0_i32_0 = arith.constant 0 : i32
    %c0_i32_1 = arith.constant 0 : i32
    return %arg0, %c0_i32, %c0_i32_0 : i32, i32, i32
  }
  func.func @transform_2(%arg0: i32) -> (i32, i32) {
    %c0_i32 = arith.constant 0 : i32
    %c0_i32_0 = arith.constant 0 : i32
    %c0_i32_1 = arith.constant 0 : i32
    return %c0_i32, %c0_i32_0 : i32, i32
  }
  func.func @transform_3(%arg0: i32) -> (i32, i32) {
    %c0_i32 = arith.constant 0 : i32
    %c0_i32_0 = arith.constant 0 : i32
    %c0_i32_1 = arith.constant 0 : i32
    return %c0_i32, %c0_i32_0 : i32, i32
  }
  func.func @transform_4(%arg0: i32) -> (i32, i32) {
    %c0_i32 = arith.constant 0 : i32
    %c0_i32_0 = arith.constant 0 : i32
    %c0_i32_1 = arith.constant 0 : i32
    return %c0_i32, %c0_i32_0 : i32, i32
  }
  func.func @transform_5(%arg0: i32) -> (i32, i32) {
    %c0_i32 = arith.constant 0 : i32
    %c0_i32_0 = arith.constant 0 : i32
    %c0_i32_1 = arith.constant 0 : i32
    return %c0_i32, %c0_i32_0 : i32, i32
  }
  func.func @transform_6(%arg0: i32) -> (i32, i32) {
    %c0_i32 = arith.constant 0 : i32
    %c0_i32_0 = arith.constant 0 : i32
    %c0_i32_1 = arith.constant 0 : i32
    return %c0_i32, %c0_i32_0 : i32, i32
  }
  func.func @transform_7(%arg0: i32) -> (i32, i32) {
    %c0_i32 = arith.constant 0 : i32
    %c0_i32_0 = arith.constant 0 : i32
    %c0_i32_1 = arith.constant 0 : i32
    return %c0_i32, %c0_i32_0 : i32, i32
  }
  func.func @transform_8(%arg0: i32) -> (i32, i32) {
    %c0_i32 = arith.constant 0 : i32
    %c0_i32_0 = arith.constant 0 : i32
    %c0_i32_1 = arith.constant 0 : i32
    return %c0_i32, %c0_i32_0 : i32, i32
  }
  func.func @transform_9(%arg0: i32) -> (i32, i32) {
    %c0_i32 = arith.constant 0 : i32
    %c0_i32_0 = arith.constant 0 : i32
    %c0_i32_1 = arith.constant 0 : i32
    return %c0_i32, %c0_i32_0 : i32, i32
  }
  func.func @transform_10(%arg0: i32) -> (i32, i32, i32) {
    %c0_i32 = arith.constant 0 : i32
    %c0_i32_0 = arith.constant 0 : i32
    %c0_i32_1 = arith.constant 0 : i32
    %c0_i32_2 = arith.constant 0 : i32
    return %c0_i32, %c0_i32_0, %c0_i32_1 : i32, i32, i32
  }
  func.func @transform_11(%arg0: i32) -> (i32, i32, i32) {
    %c0_i32 = arith.constant 0 : i32
    %c0_i32_0 = arith.constant 0 : i32
    %c0_i32_1 = arith.constant 0 : i32
    %c0_i32_2 = arith.constant 0 : i32
    return %c0_i32, %c0_i32_0, %c0_i32_1 : i32, i32, i32
  }
  func.func @transform_12(%arg0: i32) -> (i32, i32) {
    %c0_i32 = arith.constant 0 : i32
    %c0_i32_0 = arith.constant 0 : i32
    %c0_i32_1 = arith.constant 0 : i32
    return %c0_i32, %c0_i32_0 : i32, i32
  }
  func.func @transform_13(%arg0: i32) -> (i32, i32) {
    %c0_i32 = arith.constant 0 : i32
    %c0_i32_0 = arith.constant 0 : i32
    %c0_i32_1 = arith.constant 0 : i32
    return %c0_i32, %c0_i32_0 : i32, i32
  }
  func.func @transform_14(%arg0: i32) -> (i32, i32) {
    %c0_i32 = arith.constant 0 : i32
    %c0_i32_0 = arith.constant 0 : i32
    %c0_i32_1 = arith.constant 0 : i32
    return %c0_i32, %c0_i32_0 : i32, i32
  }
  func.func @transform_15(%arg0: i32) -> (i32, i32, i32) {
    %c0_i32 = arith.constant 0 : i32
    %c0_i32_0 = arith.constant 0 : i32
    %c0_i32_1 = arith.constant 0 : i32
    return %arg0, %c0_i32, %c0_i32_0 : i32, i32, i32
  }
  func.func @transform_16(%arg0: i32) -> (i32, i32, i32) {
    %c0_i32 = arith.constant 0 : i32
    %c0_i32_0 = arith.constant 0 : i32
    %c0_i32_1 = arith.constant 0 : i32
    return %arg0, %c0_i32, %c0_i32_0 : i32, i32, i32
  }
}

module attributes {stable_mosaic.version = 11 : i64} {
  func.func @batchnorm_kernel(%arg0: memref<2x96x64xf32, #tpu.memory_space<vmem>>, %arg1: memref<2x96x64xf32, #tpu.memory_space<vmem>>) attributes {dimension_semantics = [], scalar_prefetch = 0 : i64, scratch_operands = 0 : i64, tpu.core_type = #tpu.core_type<tc>} {
    %cst = arith.constant 0.000000e+00 : f32
    %0 = vector.broadcast %cst : f32 to vector<96x1xf32>
    %c0 = arith.constant 0 : index
    %c0_0 = arith.constant 0 : index
    %c0_1 = arith.constant 0 : index
    %1 = vector.load %arg0[%c0, %c0_0, %c0_1] : memref<2x96x64xf32, #tpu.memory_space<vmem>>, vector<1x96x64xf32>
    %2 = vector.shape_cast %1 : vector<1x96x64xf32> to vector<96x64xf32>
    %cst_2 = arith.constant dense<0.000000e+00> : vector<96xf32>
    %3 = vector.multi_reduction <add>, %2, %cst_2 [1] : vector<96x64xf32> to vector<96xf32>
    %4 = vector.shape_cast %3 : vector<96xf32> to vector<96x1xf32>
    %5 = arith.addf %0, %4 : vector<96x1xf32>
    %c1 = arith.constant 1 : index
    %c0_3 = arith.constant 0 : index
    %c0_4 = arith.constant 0 : index
    %6 = vector.load %arg0[%c1, %c0_3, %c0_4] : memref<2x96x64xf32, #tpu.memory_space<vmem>>, vector<1x96x64xf32>
    %7 = vector.shape_cast %6 : vector<1x96x64xf32> to vector<96x64xf32>
    %cst_5 = arith.constant dense<0.000000e+00> : vector<96xf32>
    %8 = vector.multi_reduction <add>, %7, %cst_5 [1] : vector<96x64xf32> to vector<96xf32>
    %9 = vector.shape_cast %8 : vector<96xf32> to vector<96x1xf32>
    %10 = arith.addf %5, %9 : vector<96x1xf32>
    %cst_6 = arith.constant 7.812500e-03 : f32
    %11 = vector.broadcast %cst_6 : f32 to vector<96x1xf32>
    %12 = arith.mulf %10, %11 : vector<96x1xf32>
    %cst_7 = arith.constant 0.000000e+00 : f32
    %13 = vector.broadcast %cst_7 : f32 to vector<96x1xf32>
    %c0_8 = arith.constant 0 : index
    %c0_9 = arith.constant 0 : index
    %c0_10 = arith.constant 0 : index
    %14 = vector.load %arg0[%c0_8, %c0_9, %c0_10] : memref<2x96x64xf32, #tpu.memory_space<vmem>>, vector<1x96x64xf32>
    %15 = vector.shape_cast %14 : vector<1x96x64xf32> to vector<96x64xf32>
    %16 = vector.broadcast %12 : vector<96x1xf32> to vector<96x64xf32>
    %17 = arith.subf %15, %16 : vector<96x64xf32>
    %18 = arith.mulf %17, %17 : vector<96x64xf32>
    %cst_11 = arith.constant dense<0.000000e+00> : vector<96xf32>
    %19 = vector.multi_reduction <add>, %18, %cst_11 [1] : vector<96x64xf32> to vector<96xf32>
    %20 = vector.shape_cast %19 : vector<96xf32> to vector<96x1xf32>
    %21 = arith.addf %13, %20 : vector<96x1xf32>
    %c1_12 = arith.constant 1 : index
    %c0_13 = arith.constant 0 : index
    %c0_14 = arith.constant 0 : index
    %22 = vector.load %arg0[%c1_12, %c0_13, %c0_14] : memref<2x96x64xf32, #tpu.memory_space<vmem>>, vector<1x96x64xf32>
    %23 = vector.shape_cast %22 : vector<1x96x64xf32> to vector<96x64xf32>
    %24 = vector.broadcast %12 : vector<96x1xf32> to vector<96x64xf32>
    %25 = arith.subf %23, %24 : vector<96x64xf32>
    %26 = arith.mulf %25, %25 : vector<96x64xf32>
    %cst_15 = arith.constant dense<0.000000e+00> : vector<96xf32>
    %27 = vector.multi_reduction <add>, %26, %cst_15 [1] : vector<96x64xf32> to vector<96xf32>
    %28 = vector.shape_cast %27 : vector<96xf32> to vector<96x1xf32>
    %29 = arith.addf %21, %28 : vector<96x1xf32>
    %cst_16 = arith.constant 7.812500e-03 : f32
    %30 = vector.broadcast %cst_16 : f32 to vector<96x1xf32>
    %31 = arith.mulf %29, %30 : vector<96x1xf32>
    %cst_17 = arith.constant 9.99999974E-6 : f32
    %32 = vector.broadcast %cst_17 : f32 to vector<96x1xf32>
    %33 = arith.addf %31, %32 : vector<96x1xf32>
    %34 = math.rsqrt %33 : vector<96x1xf32>
    %c0_18 = arith.constant 0 : index
    %c0_19 = arith.constant 0 : index
    %c0_20 = arith.constant 0 : index
    %35 = vector.load %arg0[%c0_18, %c0_19, %c0_20] : memref<2x96x64xf32, #tpu.memory_space<vmem>>, vector<1x96x64xf32>
    %36 = vector.shape_cast %35 : vector<1x96x64xf32> to vector<96x64xf32>
    %37 = vector.broadcast %12 : vector<96x1xf32> to vector<96x64xf32>
    %38 = arith.subf %36, %37 : vector<96x64xf32>
    %39 = vector.broadcast %34 : vector<96x1xf32> to vector<96x64xf32>
    %40 = arith.mulf %38, %39 : vector<96x64xf32>
    %c0_21 = arith.constant 0 : index
    %c0_22 = arith.constant 0 : index
    %c0_23 = arith.constant 0 : index
    %41 = vector.load %arg1[%c0_21, %c0_22, %c0_23] : memref<2x96x64xf32, #tpu.memory_space<vmem>>, vector<1x96x64xf32>
    %42 = vector.shape_cast %41 : vector<1x96x64xf32> to vector<96x64xf32>
    %43 = vector.shape_cast %40 : vector<96x64xf32> to vector<1x96x64xf32>
    tpu.vector_store %arg1[%c0_21, %c0_22, %c0_23], %43 {strides = array<i32>} : memref<2x96x64xf32, #tpu.memory_space<vmem>>, vector<1x96x64xf32>,
    %c1_24 = arith.constant 1 : index
    %c0_25 = arith.constant 0 : index
    %c0_26 = arith.constant 0 : index
    %44 = vector.load %arg0[%c1_24, %c0_25, %c0_26] : memref<2x96x64xf32, #tpu.memory_space<vmem>>, vector<1x96x64xf32>
    %45 = vector.shape_cast %44 : vector<1x96x64xf32> to vector<96x64xf32>
    %46 = vector.broadcast %12 : vector<96x1xf32> to vector<96x64xf32>
    %47 = arith.subf %45, %46 : vector<96x64xf32>
    %48 = vector.broadcast %34 : vector<96x1xf32> to vector<96x64xf32>
    %49 = arith.mulf %47, %48 : vector<96x64xf32>
    %c1_27 = arith.constant 1 : index
    %c0_28 = arith.constant 0 : index
    %c0_29 = arith.constant 0 : index
    %50 = vector.load %arg1[%c1_27, %c0_28, %c0_29] : memref<2x96x64xf32, #tpu.memory_space<vmem>>, vector<1x96x64xf32>
    %51 = vector.shape_cast %50 : vector<1x96x64xf32> to vector<96x64xf32>
    %52 = vector.shape_cast %49 : vector<96x64xf32> to vector<1x96x64xf32>
    tpu.vector_store %arg1[%c1_27, %c0_28, %c0_29], %52 {strides = array<i32>} : memref<2x96x64xf32, #tpu.memory_space<vmem>>, vector<1x96x64xf32>,
    return
  }
}

</mosaic_0001>

<llo_original>
// kernel: _lambda_.3
$region0: #{_lambda_.3}
  #allocation0 [shape = 'u32[]', space=smem, size = 0x4, offset = 0x4, fixed_abs, tag = 'smem constant byte address 0x4 - core index']
  #allocation1 [shape = 'u32[72,128]{1,0:T(1,128)}', space=vmem, size = 0x9000, scoped, tag = 'internal scratch']
  %s0 = inlined_call_operand.vmem [shape: f32[2,96,64], index: 0, kind: input, shape index: {}]
  %s1 = inlined_call_operand.vmem [shape: f32[2,96,64], index: 1, kind: output, shape index: {}]
  %s2 = sld [smem:[#allocation0]]
  $region14: #{_lambda_.3} parent=0
    _
  %s4 = ssub.s32 1, %s2
  %s5 = scalar_select 0, %s4, %s2
  // Predicated region
  $region2: #{_lambda_.3} parent=0 // pred_check
    _
  $region3: #{_lambda_.3} parent=0 // pred_check_branch
    %7 = sbr.rel (0) target = $region5
  $region4: #{_lambda_.3} parent=0 // pred_region
    _
  $region5: #{_lambda_.3} parent=0 // pred_fallthru
    _
  %v8 = vld [vmem:[%s0] sm:$0xff]
  %v9 = vld [vmem:[%s0 + $0x8] sm:$0xff]
  %v10 = vld [vmem:[%s0 + $0x10] sm:$0xff]
  %v11 = vld [vmem:[%s0 + $0x18] sm:$0xff]
  %v12 = vld [vmem:[%s0 + $0x20] sm:$0xff]
  %v13 = vld [vmem:[%s0 + $0x28] sm:$0xff]
  %v14 = vld [vmem:[%s0 + $0x30] sm:$0xff]
  %v15 = vld [vmem:[%s0 + $0x38] sm:$0xff]
  %v16 = vld [vmem:[%s0 + $0x40] sm:$0xff]
  %v17 = vld [vmem:[%s0 + $0x48] sm:$0xff]
  %v18 = vld [vmem:[%s0 + $0x50] sm:$0xff]
  %v19 = vld [vmem:[%s0 + $0x58] sm:$0xff]
  %vm20 = vcmask 523264
  %v21 = vsel %vm20, %v8, 0.0
  %22 = vadd.xlane.f32.xlu0 %v21
  %v23 = vpop.xlane.xlu0 %22
  %v24 = vsel %vm20, %v9, 0.0
  %25 = vadd.xlane.f32.xlu0 %v24
  %v26 = vpop.xlane.xlu0 %25
  %v27 = vsel %vm20, %v10, 0.0
  %28 = vadd.xlane.f32.xlu0 %v27
  %v29 = vpop.xlane.xlu0 %28
  %v30 = vsel %vm20, %v11, 0.0
  %31 = vadd.xlane.f32.xlu0 %v30
  %v32 = vpop.xlane.xlu0 %31
  %v33 = vsel %vm20, %v12, 0.0
  %34 = vadd.xlane.f32.xlu0 %v33
  %v35 = vpop.xlane.xlu0 %34
  %v36 = vsel %vm20, %v13, 0.0
  %37 = vadd.xlane.f32.xlu0 %v36
  %v38 = vpop.xlane.xlu0 %37
  %v39 = vsel %vm20, %v14, 0.0
  %40 = vadd.xlane.f32.xlu0 %v39
  %v41 = vpop.xlane.xlu0 %40
  %v42 = vsel %vm20, %v15, 0.0
  %43 = vadd.xlane.f32.xlu0 %v42
  %v44 = vpop.xlane.xlu0 %43
  %v45 = vsel %vm20, %v16, 0.0
  %46 = vadd.xlane.f32.xlu0 %v45
  %v47 = vpop.xlane.xlu0 %46
  %v48 = vsel %vm20, %v17, 0.0
  %49 = vadd.xlane.f32.xlu0 %v48
  %v50 = vpop.xlane.xlu0 %49
  %v51 = vsel %vm20, %v18, 0.0
  %52 = vadd.xlane.f32.xlu0 %v51
  %v53 = vpop.xlane.xlu0 %52
  %v54 = vsel %vm20, %v19, 0.0
  %55 = vadd.xlane.f32.xlu0 %v54
  %v56 = vpop.xlane.xlu0 %55
  %v57 = vadd.f32 %v23, 0.0
  %v58 = vadd.f32 %v26, 0.0
  %v59 = vadd.f32 %v29, 0.0
  %v60 = vadd.f32 %v32, 0.0
  %v61 = vadd.f32 %v35, 0.0
  %v62 = vadd.f32 %v38, 0.0
  %v63 = vadd.f32 %v41, 0.0
  %v64 = vadd.f32 %v44, 0.0
  %v65 = vadd.f32 %v47, 0.0
  %v66 = vadd.f32 %v50, 0.0
  %v67 = vadd.f32 %v53, 0.0
  %v68 = vadd.f32 %v56, 0.0
  %s69 = scalar_lea.vmem %s0, 96
  %v70 = vld [vmem:[%s69] sm:$0xff]
  %v71 = vld [vmem:[%s69 + $0x8] sm:$0xff]
  %v72 = vld [vmem:[%s69 + $0x10] sm:$0xff]
  %v73 = vld [vmem:[%s69 + $0x18] sm:$0xff]
  %v74 = vld [vmem:[%s69 + $0x20] sm:$0xff]
  %v75 = vld [vmem:[%s69 + $0x28] sm:$0xff]
  %v76 = vld [vmem:[%s69 + $0x30] sm:$0xff]
  %v77 = vld [vmem:[%s69 + $0x38] sm:$0xff]
  %v78 = vld [vmem:[%s69 + $0x40] sm:$0xff]
  %v79 = vld [vmem:[%s69 + $0x48] sm:$0xff]
  %v80 = vld [vmem:[%s69 + $0x50] sm:$0xff]
  %v81 = vld [vmem:[%s69 + $0x58] sm:$0xff]
  %v82 = vsel %vm20, %v70, 0.0
  %83 = vadd.xlane.f32.xlu0 %v82
  %v84 = vpop.xlane.xlu0 %83
  %v85 = vsel %vm20, %v71, 0.0
  %86 = vadd.xlane.f32.xlu0 %v85
  %v87 = vpop.xlane.xlu0 %86
  %v88 = vsel %vm20, %v72, 0.0
  %89 = vadd.xlane.f32.xlu0 %v88
  %v90 = vpop.xlane.xlu0 %89
  %v91 = vsel %vm20, %v73, 0.0
  %92 = vadd.xlane.f32.xlu0 %v91
  %v93 = vpop.xlane.xlu0 %92
  %v94 = vsel %vm20, %v74, 0.0
  %95 = vadd.xlane.f32.xlu0 %v94
  %v96 = vpop.xlane.xlu0 %95
  %v97 = vsel %vm20, %v75, 0.0
  %98 = vadd.xlane.f32.xlu0 %v97
  %v99 = vpop.xlane.xlu0 %98
  %v100 = vsel %vm20, %v76, 0.0
  %101 = vadd.xlane.f32.xlu0 %v100
  %v102 = vpop.xlane.xlu0 %101
  %v103 = vsel %vm20, %v77, 0.0
  %104 = vadd.xlane.f32.xlu0 %v103
  %v105 = vpop.xlane.xlu0 %104
  %v106 = vsel %vm20, %v78, 0.0
  %107 = vadd.xlane.f32.xlu0 %v106
  %v108 = vpop.xlane.xlu0 %107
  %v109 = vsel %vm20, %v79, 0.0
  %110 = vadd.xlane.f32.xlu0 %v109
  %v111 = vpop.xlane.xlu0 %110
  %v112 = vsel %vm20, %v80, 0.0
  %113 = vadd.xlane.f32.xlu0 %v112
  %v114 = vpop.xlane.xlu0 %113
  %v115 = vsel %vm20, %v81, 0.0
  %116 = vadd.xlane.f32.xlu0 %v115
  %v117 = vpop.xlane.xlu0 %116
  %v118 = vadd.f32 %v57, %v84
  %v119 = vadd.f32 %v58, %v87
  %v120 = vadd.f32 %v59, %v90
  %v121 = vadd.f32 %v60, %v93
  %v122 = vadd.f32 %v61, %v96
  %v123 = vadd.f32 %v62, %v99
  %v124 = vadd.f32 %v63, %v102
  %v125 = vadd.f32 %v64, %v105
  %v126 = vadd.f32 %v65, %v108
  %v127 = vadd.f32 %v66, %v111
  %v128 = vadd.f32 %v67, %v114
  %v129 = vadd.f32 %v68, %v117
  %v130 = vmul.f32 %v118, 0.0078125
  %v131 = vmul.f32 %v119, 0.0078125
  %v132 = vmul.f32 %v120, 0.0078125
  %v133 = vmul.f32 %v121, 0.0078125
  %v134 = vmul.f32 %v122, 0.0078125
  %v135 = vmul.f32 %v123, 0.0078125
  %v136 = vmul.f32 %v124, 0.0078125
  %v137 = vmul.f32 %v125, 0.0078125
  %v138 = vmul.f32 %v126, 0.0078125
  %v139 = vmul.f32 %v127, 0.0078125
  %v140 = vmul.f32 %v128, 0.0078125
  %v141 = vmul.f32 %v129, 0.0078125
  %v142 = vsub.f32 %v8, %v130
  %v143 = vsub.f32 %v9, %v131
  %v144 = vsub.f32 %v10, %v132
  %v145 = vsub.f32 %v11, %v133
  %v146 = vsub.f32 %v12, %v134
  %v147 = vsub.f32 %v13, %v135
  %v148 = vsub.f32 %v14, %v136
  %v149 = vsub.f32 %v15, %v137
  %v150 = vsub.f32 %v16, %v138
  %v151 = vsub.f32 %v17, %v139
  %v152 = vsub.f32 %v18, %v140
  %v153 = vsub.f32 %v19, %v141
  %v154 = vmul.f32 %v142, %v142
  %v155 = vmul.f32 %v143, %v143
  %v156 = vmul.f32 %v144, %v144
  %v157 = vmul.f32 %v145, %v145
  %v158 = vmul.f32 %v146, %v146
  %v159 = vmul.f32 %v147, %v147
  %v160 = vmul.f32 %v148, %v148
  %v161 = vmul.f32 %v149, %v149
  %v162 = vmul.f32 %v150, %v150
  %v163 = vmul.f32 %v151, %v151
  %v164 = vmul.f32 %v152, %v152
  %v165 = vmul.f32 %v153, %v153
  %v166 = vsel %vm20, %v154, 0.0
  %167 = vadd.xlane.f32.xlu0 %v166
  %v168 = vpop.xlane.xlu0 %167
  %v169 = vsel %vm20, %v155, 0.0
  %170 = vadd.xlane.f32.xlu0 %v169
  %v171 = vpop.xlane.xlu0 %170
  %v172 = vsel %vm20, %v156, 0.0
  %173 = vadd.xlane.f32.xlu0 %v172
  %v174 = vpop.xlane.xlu0 %173
  %v175 = vsel %vm20, %v157, 0.0
  %176 = vadd.xlane.f32.xlu0 %v175
  %v177 = vpop.xlane.xlu0 %176
  %v178 = vsel %vm20, %v158, 0.0
  %179 = vadd.xlane.f32.xlu0 %v178
  %v180 = vpop.xlane.xlu0 %179
  %v181 = vsel %vm20, %v159, 0.0
  %182 = vadd.xlane.f32.xlu0 %v181
  %v183 = vpop.xlane.xlu0 %182
  %v184 = vsel %vm20, %v160, 0.0
  %185 = vadd.xlane.f32.xlu0 %v184
  %v186 = vpop.xlane.xlu0 %185
  %v187 = vsel %vm20, %v161, 0.0
  %188 = vadd.xlane.f32.xlu0 %v187
  %v189 = vpop.xlane.xlu0 %188
  %v190 = vsel %vm20, %v162, 0.0
  %191 = vadd.xlane.f32.xlu0 %v190
  %v192 = vpop.xlane.xlu0 %191
  %v193 = vsel %vm20, %v163, 0.0
  %194 = vadd.xlane.f32.xlu0 %v193
  %v195 = vpop.xlane.xlu0 %194
  %v196 = vsel %vm20, %v164, 0.0
  %197 = vadd.xlane.f32.xlu0 %v196
  %v198 = vpop.xlane.xlu0 %197
  %v199 = vsel %vm20, %v165, 0.0
  %200 = vadd.xlane.f32.xlu0 %v199
  %v201 = vpop.xlane.xlu0 %200
  %v202 = vadd.f32 %v168, 0.0
  %v203 = vadd.f32 %v171, 0.0
  %v204 = vadd.f32 %v174, 0.0
  %v205 = vadd.f32 %v177, 0.0
  %v206 = vadd.f32 %v180, 0.0
  %v207 = vadd.f32 %v183, 0.0
  %v208 = vadd.f32 %v186, 0.0
  %v209 = vadd.f32 %v189, 0.0
  %v210 = vadd.f32 %v192, 0.0
  %v211 = vadd.f32 %v195, 0.0
  %v212 = vadd.f32 %v198, 0.0
  %v213 = vadd.f32 %v201, 0.0
  %v214 = vsub.f32 %v70, %v130
  %v215 = vsub.f32 %v71, %v131
  %v216 = vsub.f32 %v72, %v132
  %v217 = vsub.f32 %v73, %v133
  %v218 = vsub.f32 %v74, %v134
  %v219 = vsub.f32 %v75, %v135
  %v220 = vsub.f32 %v76, %v136
  %v221 = vsub.f32 %v77, %v137
  %v222 = vsub.f32 %v78, %v138
  %v223 = vsub.f32 %v79, %v139
  %v224 = vsub.f32 %v80, %v140
  %v225 = vsub.f32 %v81, %v141
  %v226 = vmul.f32 %v214, %v214
  %v227 = vmul.f32 %v215, %v215
  %v228 = vmul.f32 %v216, %v216
  %v229 = vmul.f32 %v217, %v217
  %v230 = vmul.f32 %v218, %v218
  %v231 = vmul.f32 %v219, %v219
  %v232 = vmul.f32 %v220, %v220
  %v233 = vmul.f32 %v221, %v221
  %v234 = vmul.f32 %v222, %v222
  %v235 = vmul.f32 %v223, %v223
  %v236 = vmul.f32 %v224, %v224
  %v237 = vmul.f32 %v225, %v225
  %v238 = vsel %vm20, %v226, 0.0
  %239 = vadd.xlane.f32.xlu0 %v238
  %v240 = vpop.xlane.xlu0 %239
  %v241 = vsel %vm20, %v227, 0.0
  %242 = vadd.xlane.f32.xlu0 %v241
  %v243 = vpop.xlane.xlu0 %242
  %v244 = vsel %vm20, %v228, 0.0
  %245 = vadd.xlane.f32.xlu0 %v244
  %v246 = vpop.xlane.xlu0 %245
  %v247 = vsel %vm20, %v229, 0.0
  %248 = vadd.xlane.f32.xlu0 %v247
  %v249 = vpop.xlane.xlu0 %248
  %v250 = vsel %vm20, %v230, 0.0
  %251 = vadd.xlane.f32.xlu0 %v250
  %v252 = vpop.xlane.xlu0 %251
  %v253 = vsel %vm20, %v231, 0.0
  %254 = vadd.xlane.f32.xlu0 %v253
  %v255 = vpop.xlane.xlu0 %254
  %v256 = vsel %vm20, %v232, 0.0
  %257 = vadd.xlane.f32.xlu0 %v256
  %v258 = vpop.xlane.xlu0 %257
  %v259 = vsel %vm20, %v233, 0.0
  %260 = vadd.xlane.f32.xlu0 %v259
  %v261 = vpop.xlane.xlu0 %260
  %v262 = vsel %vm20, %v234, 0.0
  %263 = vadd.xlane.f32.xlu0 %v262
  %v264 = vpop.xlane.xlu0 %263
  %v265 = vsel %vm20, %v235, 0.0
  %266 = vadd.xlane.f32.xlu0 %v265
  %v267 = vpop.xlane.xlu0 %266
  %v268 = vsel %vm20, %v236, 0.0
  %269 = vadd.xlane.f32.xlu0 %v268
  %v270 = vpop.xlane.xlu0 %269
  %v271 = vsel %vm20, %v237, 0.0
  %272 = vadd.xlane.f32.xlu0 %v271
  %v273 = vpop.xlane.xlu0 %272
  %v274 = vadd.f32 %v202, %v240
  %v275 = vadd.f32 %v203, %v243
  %v276 = vadd.f32 %v204, %v246
  %v277 = vadd.f32 %v205, %v249
  %v278 = vadd.f32 %v206, %v252
  %v279 = vadd.f32 %v207, %v255
  %v280 = vadd.f32 %v208, %v258
  %v281 = vadd.f32 %v209, %v261
  %v282 = vadd.f32 %v210, %v264
  %v283 = vadd.f32 %v211, %v267
  %v284 = vadd.f32 %v212, %v270
  %v285 = vadd.f32 %v213, %v273
  %v286 = vmul.f32 %v274, 0.0078125
  %v287 = vmul.f32 %v275, 0.0078125
  %v288 = vmul.f32 %v276, 0.0078125
  %v289 = vmul.f32 %v277, 0.0078125
  %v290 = vmul.f32 %v278, 0.0078125
  %v291 = vmul.f32 %v279, 0.0078125
  %v292 = vmul.f32 %v280, 0.0078125
  %v293 = vmul.f32 %v281, 0.0078125
  %v294 = vmul.f32 %v282, 0.0078125
  %v295 = vmul.f32 %v283, 0.0078125
  %v296 = vmul.f32 %v284, 0.0078125
  %v297 = vmul.f32 %v285, 0.0078125
  %v298 = vadd.f32 %v286, 1e-05
  %v299 = vadd.f32 %v287, 1e-05
  %v300 = vadd.f32 %v288, 1e-05
  %v301 = vadd.f32 %v289, 1e-05
  %v302 = vadd.f32 %v290, 1e-05
  %v303 = vadd.f32 %v291, 1e-05
  %v304 = vadd.f32 %v292, 1e-05
  %v305 = vadd.f32 %v293, 1e-05
  %v306 = vadd.f32 %v294, 1e-05
  %v307 = vadd.f32 %v295, 1e-05
  %v308 = vadd.f32 %v296, 1e-05
  %v309 = vadd.f32 %v297, 1e-05
  %v310 = vrsqrt.pop %v298
  %v311 = vmul.f32 %v310, %v298
  %v312 = vmul.f32 %v311, %v310
  %v313 = vmul.f32 0.5, %v312
  %v314 = vsub.f32 1.5, %v313
  %v315 = vmul.f32 %v310, %v314
  %vm316 = vweird.f32 %v298
  %vm317 = vweird.f32 %v310
  %vm318 = vmor %vm316, %vm317
  %v319 = vsel %vm318, %v310, %v315
  %v320 = vrsqrt.pop %v299
  %v321 = vmul.f32 %v320, %v299
  %v322 = vmul.f32 %v321, %v320
  %v323 = vmul.f32 0.5, %v322
  %v324 = vsub.f32 1.5, %v323
  %v325 = vmul.f32 %v320, %v324
  %vm326 = vweird.f32 %v299
  %vm327 = vweird.f32 %v320
  %vm328 = vmor %vm326, %vm327
  %v329 = vsel %vm328, %v320, %v325
  %v330 = vrsqrt.pop %v300
  %v331 = vmul.f32 %v330, %v300
  %v332 = vmul.f32 %v331, %v330
  %v333 = vmul.f32 0.5, %v332
  %v334 = vsub.f32 1.5, %v333
  %v335 = vmul.f32 %v330, %v334
  %vm336 = vweird.f32 %v300
  %vm337 = vweird.f32 %v330
  %vm338 = vmor %vm336, %vm337
  %v339 = vsel %vm338, %v330, %v335
  %v340 = vrsqrt.pop %v301
  %v341 = vmul.f32 %v340, %v301
  %v342 = vmul.f32 %v341, %v340
  %v343 = vmul.f32 0.5, %v342
  %v344 = vsub.f32 1.5, %v343
  %v345 = vmul.f32 %v340, %v344
  %vm346 = vweird.f32 %v301
  %vm347 = vweird.f32 %v340
  %vm348 = vmor %vm346, %vm347
  %v349 = vsel %vm348, %v340, %v345
  %v350 = vrsqrt.pop %v302
  %v351 = vmul.f32 %v350, %v302
  %v352 = vmul.f32 %v351, %v350
  %v353 = vmul.f32 0.5, %v352
  %v354 = vsub.f32 1.5, %v353
  %v355 = vmul.f32 %v350, %v354
  %vm356 = vweird.f32 %v302
  %vm357 = vweird.f32 %v350
  %vm358 = vmor %vm356, %vm357
  %v359 = vsel %vm358, %v350, %v355
  %v360 = vrsqrt.pop %v303
  %v361 = vmul.f32 %v360, %v303
  %v362 = vmul.f32 %v361, %v360
  %v363 = vmul.f32 0.5, %v362
  %v364 = vsub.f32 1.5, %v363
  %v365 = vmul.f32 %v360, %v364
  %vm366 = vweird.f32 %v303
  %vm367 = vweird.f32 %v360
  %vm368 = vmor %vm366, %vm367
  %v369 = vsel %vm368, %v360, %v365
  %v370 = vrsqrt.pop %v304
  %v371 = vmul.f32 %v370, %v304
  %v372 = vmul.f32 %v371, %v370
  %v373 = vmul.f32 0.5, %v372
  %v374 = vsub.f32 1.5, %v373
  %v375 = vmul.f32 %v370, %v374
  %vm376 = vweird.f32 %v304
  %vm377 = vweird.f32 %v370
  %vm378 = vmor %vm376, %vm377
  %v379 = vsel %vm378, %v370, %v375
  %v380 = vrsqrt.pop %v305
  %v381 = vmul.f32 %v380, %v305
  %v382 = vmul.f32 %v381, %v380
  %v383 = vmul.f32 0.5, %v382
  %v384 = vsub.f32 1.5, %v383
  %v385 = vmul.f32 %v380, %v384
  %vm386 = vweird.f32 %v305
  %vm387 = vweird.f32 %v380
  %vm388 = vmor %vm386, %vm387
  %v389 = vsel %vm388, %v380, %v385
  %v390 = vrsqrt.pop %v306
  %v391 = vmul.f32 %v390, %v306
  %v392 = vmul.f32 %v391, %v390
  %v393 = vmul.f32 0.5, %v392
  %v394 = vsub.f32 1.5, %v393
  %v395 = vmul.f32 %v390, %v394
  %vm396 = vweird.f32 %v306
  %vm397 = vweird.f32 %v390
  %vm398 = vmor %vm396, %vm397
  %v399 = vsel %vm398, %v390, %v395
  %v400 = vrsqrt.pop %v307
  %v401 = vmul.f32 %v400, %v307
  %v402 = vmul.f32 %v401, %v400
  %v403 = vmul.f32 0.5, %v402
  %v404 = vsub.f32 1.5, %v403
  %v405 = vmul.f32 %v400, %v404
  %vm406 = vweird.f32 %v307
  %vm407 = vweird.f32 %v400
  %vm408 = vmor %vm406, %vm407
  %v409 = vsel %vm408, %v400, %v405
  %v410 = vrsqrt.pop %v308
  %v411 = vmul.f32 %v410, %v308
  %v412 = vmul.f32 %v411, %v410
  %v413 = vmul.f32 0.5, %v412
  %v414 = vsub.f32 1.5, %v413
  %v415 = vmul.f32 %v410, %v414
  %vm416 = vweird.f32 %v308
  %vm417 = vweird.f32 %v410
  %vm418 = vmor %vm416, %vm417
  %v419 = vsel %vm418, %v410, %v415
  %v420 = vrsqrt.pop %v309
  %v421 = vmul.f32 %v420, %v309
  %v422 = vmul.f32 %v421, %v420
  %v423 = vmul.f32 0.5, %v422
  %v424 = vsub.f32 1.5, %v423
  %v425 = vmul.f32 %v420, %v424
  %vm426 = vweird.f32 %v309
  %vm427 = vweird.f32 %v420
  %vm428 = vmor %vm426, %vm427
  %v429 = vsel %vm428, %v420, %v425
  %v430 = vmul.f32 %v142, %v319
  %v431 = vmul.f32 %v143, %v329
  %v432 = vmul.f32 %v144, %v339
  %v433 = vmul.f32 %v145, %v349
  %v434 = vmul.f32 %v146, %v359
  %v435 = vmul.f32 %v147, %v369
  %v436 = vmul.f32 %v148, %v379
  %v437 = vmul.f32 %v149, %v389
  %v438 = vmul.f32 %v150, %v399
  %v439 = vmul.f32 %v151, %v409
  %v440 = vmul.f32 %v152, %v419
  %v441 = vmul.f32 %v153, %v429
  %442 = vst.msk [vmem:[%s1] sm:$0xff] %vm20, %v430
  %443 = vst.msk [vmem:[%s1 + $0x8] sm:$0xff] %vm20, %v431
  %444 = vst.msk [vmem:[%s1 + $0x10] sm:$0xff] %vm20, %v432
  %445 = vst.msk [vmem:[%s1 + $0x18] sm:$0xff] %vm20, %v433
  %446 = vst.msk [vmem:[%s1 + $0x20] sm:$0xff] %vm20, %v434
  %447 = vst.msk [vmem:[%s1 + $0x28] sm:$0xff] %vm20, %v435
  %448 = vst.msk [vmem:[%s1 + $0x30] sm:$0xff] %vm20, %v436
  %449 = vst.msk [vmem:[%s1 + $0x38] sm:$0xff] %vm20, %v437
  %450 = vst.msk [vmem:[%s1 + $0x40] sm:$0xff] %vm20, %v438
  %451 = vst.msk [vmem:[%s1 + $0x48] sm:$0xff] %vm20, %v439
  %452 = vst.msk [vmem:[%s1 + $0x50] sm:$0xff] %vm20, %v440
  %453 = vst.msk [vmem:[%s1 + $0x58] sm:$0xff] %vm20, %v441
  %v454 = vld [vmem:[%s69] sm:$0xff]
  %v455 = vld [vmem:[%s69 + $0x8] sm:$0xff]
  %v456 = vld [vmem:[%s69 + $0x10] sm:$0xff]
  %v457 = vld [vmem:[%s69 + $0x18] sm:$0xff]
  %v458 = vld [vmem:[%s69 + $0x20] sm:$0xff]
  %v459 = vld [vmem:[%s69 + $0x28] sm:$0xff]
  %v460 = vld [vmem:[%s69 + $0x30] sm:$0xff]
  %v461 = vld [vmem:[%s69 + $0x38] sm:$0xff]
  %v462 = vld [vmem:[%s69 + $0x40] sm:$0xff]
  %v463 = vld [vmem:[%s69 + $0x48] sm:$0xff]
  %v464 = vld [vmem:[%s69 + $0x50] sm:$0xff]
  %v465 = vld [vmem:[%s69 + $0x58] sm:$0xff]
  %v466 = vsub.f32 %v454, %v130
  %v467 = vsub.f32 %v455, %v131
  %v468 = vsub.f32 %v456, %v132
  %v469 = vsub.f32 %v457, %v133
  %v470 = vsub.f32 %v458, %v134
  %v471 = vsub.f32 %v459, %v135
  %v472 = vsub.f32 %v460, %v136
  %v473 = vsub.f32 %v461, %v137
  %v474 = vsub.f32 %v462, %v138
  %v475 = vsub.f32 %v463, %v139
  %v476 = vsub.f32 %v464, %v140
  %v477 = vsub.f32 %v465, %v141
  %v478 = vmul.f32 %v466, %v319
  %v479 = vmul.f32 %v467, %v329
  %v480 = vmul.f32 %v468, %v339
  %v481 = vmul.f32 %v469, %v349
  %v482 = vmul.f32 %v470, %v359
  %v483 = vmul.f32 %v471, %v369
  %v484 = vmul.f32 %v472, %v379
  %v485 = vmul.f32 %v473, %v389
  %v486 = vmul.f32 %v474, %v399
  %v487 = vmul.f32 %v475, %v409
  %v488 = vmul.f32 %v476, %v419
  %v489 = vmul.f32 %v477, %v429
  %s490 = scalar_lea.vmem %s1, 96
  %491 = vst.msk [vmem:[%s490] sm:$0xff] %vm20, %v478
  %492 = vst.msk [vmem:[%s490 + $0x8] sm:$0xff] %vm20, %v479
  %493 = vst.msk [vmem:[%s490 + $0x10] sm:$0xff] %vm20, %v480
  %494 = vst.msk [vmem:[%s490 + $0x18] sm:$0xff] %vm20, %v481
  %495 = vst.msk [vmem:[%s490 + $0x20] sm:$0xff] %vm20, %v482
  %496 = vst.msk [vmem:[%s490 + $0x28] sm:$0xff] %vm20, %v483
  %497 = vst.msk [vmem:[%s490 + $0x30] sm:$0xff] %vm20, %v484
  %498 = vst.msk [vmem:[%s490 + $0x38] sm:$0xff] %vm20, %v485
  %499 = vst.msk [vmem:[%s490 + $0x40] sm:$0xff] %vm20, %v486
  %500 = vst.msk [vmem:[%s490 + $0x48] sm:$0xff] %vm20, %v487
  %501 = vst.msk [vmem:[%s490 + $0x50] sm:$0xff] %vm20, %v488
  %502 = vst.msk [vmem:[%s490 + $0x58] sm:$0xff] %vm20, %v489
  // Predicated region
  $region6: #{_lambda_.3} parent=0 // pred_check
    _
  $region7: #{_lambda_.3} parent=0 // pred_check_branch
    %504 = sbr.rel (0) target = $region9
  $region8: #{_lambda_.3} parent=0 // pred_region
    _
  $region9: #{_lambda_.3} parent=0 // pred_fallthru
    _
  // Predicated region
  $region10: #{_lambda_.3} parent=0 // pred_check
    _
  $region11: #{_lambda_.3} parent=0 // pred_check_branch
    %506 = sbr.rel (0) target = $region13
  $region12: #{_lambda_.3} parent=0 // pred_region
    _
  $region13: #{_lambda_.3} parent=0 // pred_fallthru
    _

// kernel: _lambda_.2
$region0: #{_lambda_.2}
  #allocation0 [shape = 'u32[]', space=smem, size = 0x4, offset = 0x4, fixed_abs, tag = 'smem constant byte address 0x4 - core index']
  #allocation1 [shape = 'u32[72,128]{1,0:T(1,128)}', space=vmem, size = 0x9000, scoped, tag = 'internal scratch']
  %s0 = inlined_call_operand.vmem [shape: f32[2,81,32], index: 0, kind: input, shape index: {}]
  %s1 = inlined_call_operand.vmem [shape: f32[2,15,32], index: 1, kind: input, shape index: {}]
  %s2 = inlined_call_operand.vmem [shape: f32[32,288], index: 2, kind: input, shape index: {}]
  %s3 = inlined_call_operand.vmem [shape: f32[1,288], index: 3, kind: input, shape index: {}]
  %s4 = inlined_call_operand.vmem [shape: f32[81,81], index: 4, kind: input, shape index: {}]
  %s5 = inlined_call_operand.vmem [shape: f32[81,81], index: 5, kind: input, shape index: {}]
  %s6 = inlined_call_operand.vmem [shape: f32[81,15], index: 6, kind: input, shape index: {}]
  %s7 = inlined_call_operand.vmem [shape: f32[15,15], index: 7, kind: input, shape index: {}]
  %s8 = inlined_call_operand.vmem [shape: f32[15,15], index: 8, kind: input, shape index: {}]
  %s9 = inlined_call_operand.vmem [shape: f32[15,81], index: 9, kind: input, shape index: {}]
  %s10 = inlined_call_operand.vmem [shape: f32[15,96,96], index: 10, kind: input, shape index: {}]
  %s11 = inlined_call_operand.vmem [shape: f32[15,96,96], index: 11, kind: input, shape index: {}]
  %s12 = inlined_call_operand.vmem [shape: f32[96,96], index: 12, kind: input, shape index: {}]
  %s13 = inlined_call_operand.vmem [shape: f32[96,192], index: 13, kind: input, shape index: {}]
  %s14 = inlined_call_operand.vmem [shape: f32[1,192], index: 14, kind: input, shape index: {}]
  %s15 = inlined_call_operand.vmem [shape: f32[2,81,64], index: 15, kind: output, shape index: {0}]
  %s16 = inlined_call_operand.vmem [shape: f32[2,15,64], index: 16, kind: output, shape index: {1}]
  %17 = xla_tuple %s15, %s16
  %s18 = sld [smem:[#allocation0]]
  $region101: #{_lambda_.2} parent=0
    _
  %s20 = ssub.s32 1, %s18
  %s21 = scalar_select 0, %s20, %s18
  loop: start=0, step=1, limit=4
  $region2: #{_lambda_.2} parent=0 // loop_pre_header
    _
  $region3: #{_lambda_.2} parent=0 // loop_header
    %s23 = sphi 0, %s27
    %p24 = scmp.ge.s32.totalorder %s23, 4
    %s33 = sphi 0, %s35
    %s36 = sphi 0, %s33
    %s37 = sphi 0, %s36
    %s53 = sphi 0, %s37
    %s59 = sphi 0, %s61
    %s62 = sphi 0, %s59
    %s63 = sphi 0, %s62
    %s79 = sphi 0, %s63
    %s83 = sphi 0, %s83
    %s85 = sphi 0, %s83
    %s86 = sphi 0, %s85
    %s100 = sphi 0, %s86
    %s104 = sphi 0, %s104
    %s106 = sphi 0, %s104
    %s107 = sphi 0, %s106
    %s121 = sphi 0, %s107
    %s125 = sphi 0, %s125
    %s127 = sphi 0, %s125
    %s128 = sphi 0, %s127
    %s142 = sphi 0, %s128
    %s146 = sphi 0, %s146
    %s148 = sphi 0, %s146
    %s149 = sphi 0, %s148
    %s163 = sphi 0, %s149
    %s167 = sphi 0, %s167
    %s169 = sphi 0, %s167
    %s170 = sphi 0, %s169
    %s184 = sphi 0, %s170
    %s188 = sphi 0, %s188
    %s190 = sphi 0, %s188
    %s191 = sphi 0, %s190
    %s205 = sphi 0, %s191
    %s209 = sphi 0, %s209
    %s211 = sphi 0, %s209
    %s212 = sphi 0, %s211
    %s226 = sphi 0, %s212
    %s230 = sphi 0, %s230
    %s232 = sphi 0, %s230
    %s233 = sphi 0, %s232
    %s247 = sphi 0, %s233
    %s251 = sphi 0, %s251
    %s253 = sphi 0, %s251
    %s254 = sphi 0, %s253
    %s268 = sphi 0, %s254
    %s272 = sphi 0, %s272
    %s274 = sphi 0, %s272
    %s275 = sphi 0, %s274
    %s289 = sphi 0, %s275
    %s293 = sphi 0, %s293
    %s295 = sphi 0, %s293
    %s296 = sphi 0, %s295
    %s310 = sphi 0, %s296
    %s314 = sphi 0, %s314
    %s316 = sphi 0, %s314
    %s317 = sphi 0, %s316
    %s331 = sphi 0, %s317
    %s335 = sphi 0, %s335
    %s337 = sphi 0, %s335
    %s338 = sphi 0, %s337
    %s352 = sphi 0, %s338
    %s358 = sphi 0, %s360
    %s361 = sphi 0, %s358
    %s362 = sphi 0, %s361
    %s378 = sphi 0, %s362
    %s384 = sphi 0, %s386
    %s387 = sphi 0, %s384
    %s388 = sphi 0, %s387
    %s404 = sphi 0, %s388
  $region4: #{_lambda_.2} parent=0 // loop_header_branch
    %26 = sbr.rel (%p24) target = $region8
  $region5: #{_lambda_.2} parent=0 // loop_body
    %s28 = ssub.s32 %s23, 1
    %s29 = ssub.s32 %s23, 2
    %s30 = sadd.s32 %s23, 1
    %s31 = ssub.s32 %s23, %s30
    %p32 = scmp.eq.s32.totalorder %s31, 0
    %s34 = sadd.s32 %s33, 1
    %s35 = scalar_select %p32, %s33, %s34
    %p38 = pneg %p32
    %p39 = scmp.eq.s32.totalorder %s23, 1
    %p40 = por %p38, %p39
    %p41 = scmp.ne.s32.totalorder %s33, %s36
    %p42 = scmp.eq.s32.totalorder %s23, 0
    %p43 = por %p41, %p42
    %p44 = scmp.ne.s32.totalorder %s33, %s36
    %p45 = scmp.eq.s32.totalorder %s28, 1
    %p46 = por %p44, %p45
    %p47 = scmp.ne.s32.totalorder %s36, %s37
    %p48 = scmp.eq.s32.totalorder %s28, 0
    %p49 = por %p47, %p48
    %p50 = scmp.ne.s32.totalorder %s36, %s37
    %p51 = scmp.eq.s32.totalorder %s29, 1
    %p52 = por %p50, %p51
    %p54 = scmp.ne.s32.totalorder %s37, %s53
    %p55 = scmp.eq.s32.totalorder %s29, 0
    %p56 = por %p54, %p55
    %s57 = ssub.s32 %s23, %s30
    %p58 = scmp.eq.s32.totalorder %s57, 0
    %s60 = sadd.s32 %s59, 1
    %s61 = scalar_select %p58, %s59, %s60
    %p64 = pneg %p58
    %p65 = scmp.eq.s32.totalorder %s23, 1
    %p66 = por %p64, %p65
    %p67 = scmp.ne.s32.totalorder %s59, %s62
    %p68 = scmp.eq.s32.totalorder %s23, 0
    %p69 = por %p67, %p68
    %p70 = scmp.ne.s32.totalorder %s59, %s62
    %p71 = scmp.eq.s32.totalorder %s28, 1
    %p72 = por %p70, %p71
    %p73 = scmp.ne.s32.totalorder %s62, %s63
    %p74 = scmp.eq.s32.totalorder %s28, 0
    %p75 = por %p73, %p74
    %p76 = scmp.ne.s32.totalorder %s62, %s63
    %p77 = scmp.eq.s32.totalorder %s29, 1
    %p78 = por %p76, %p77
    %p80 = scmp.ne.s32.totalorder %s63, %s79
    %p81 = scmp.eq.s32.totalorder %s29, 0
    %p82 = por %p80, %p81
    %s84 = sadd.s32 %s83, 1
    %p87 = scmp.eq.s32.totalorder %s23, 1
    %p88 = scmp.ne.s32.totalorder %s83, %s85
    %p89 = scmp.eq.s32.totalorder %s23, 0
    %p90 = por %p88, %p89
    %p91 = scmp.ne.s32.totalorder %s83, %s85
    %p92 = scmp.eq.s32.totalorder %s28, 1
    %p93 = por %p91, %p92
    %p94 = scmp.ne.s32.totalorder %s85, %s86
    %p95 = scmp.eq.s32.totalorder %s28, 0
    %p96 = por %p94, %p95
    %p97 = scmp.ne.s32.totalorder %s85, %s86
    %p98 = scmp.eq.s32.totalorder %s29, 1
    %p99 = por %p97, %p98
    %p101 = scmp.ne.s32.totalorder %s86, %s100
    %p102 = scmp.eq.s32.totalorder %s29, 0
    %p103 = por %p101, %p102
    %s105 = sadd.s32 %s104, 1
    %p108 = scmp.eq.s32.totalorder %s23, 1
    %p109 = scmp.ne.s32.totalorder %s104, %s106
    %p110 = scmp.eq.s32.totalorder %s23, 0
    %p111 = por %p109, %p110
    %p112 = scmp.ne.s32.totalorder %s104, %s106
    %p113 = scmp.eq.s32.totalorder %s28, 1
    %p114 = por %p112, %p113
    %p115 = scmp.ne.s32.totalorder %s106, %s107
    %p116 = scmp.eq.s32.totalorder %s28, 0
    %p117 = por %p115, %p116
    %p118 = scmp.ne.s32.totalorder %s106, %s107
    %p119 = scmp.eq.s32.totalorder %s29, 1
    %p120 = por %p118, %p119
    %p122 = scmp.ne.s32.totalorder %s107, %s121
    %p123 = scmp.eq.s32.totalorder %s29, 0
    %p124 = por %p122, %p123
    %s126 = sadd.s32 %s125, 1
    %p129 = scmp.eq.s32.totalorder %s23, 1
    %p130 = scmp.ne.s32.totalorder %s125, %s127
    %p131 = scmp.eq.s32.totalorder %s23, 0
    %p132 = por %p130, %p131
    %p133 = scmp.ne.s32.totalorder %s125, %s127
    %p134 = scmp.eq.s32.totalorder %s28, 1
    %p135 = por %p133, %p134
    %p136 = scmp.ne.s32.totalorder %s127, %s128
    %p137 = scmp.eq.s32.totalorder %s28, 0
    %p138 = por %p136, %p137
    %p139 = scmp.ne.s32.totalorder %s127, %s128
    %p140 = scmp.eq.s32.totalorder %s29, 1
    %p141 = por %p139, %p140
    %p143 = scmp.ne.s32.totalorder %s128, %s142
    %p144 = scmp.eq.s32.totalorder %s29, 0
    %p145 = por %p143, %p144
    %s147 = sadd.s32 %s146, 1
    %p150 = scmp.eq.s32.totalorder %s23, 1
    %p151 = scmp.ne.s32.totalorder %s146, %s148
    %p152 = scmp.eq.s32.totalorder %s23, 0
    %p153 = por %p151, %p152
    %p154 = scmp.ne.s32.totalorder %s146, %s148
    %p155 = scmp.eq.s32.totalorder %s28, 1
    %p156 = por %p154, %p155
    %p157 = scmp.ne.s32.totalorder %s148, %s149
    %p158 = scmp.eq.s32.totalorder %s28, 0
    %p159 = por %p157, %p158
    %p160 = scmp.ne.s32.totalorder %s148, %s149
    %p161 = scmp.eq.s32.totalorder %s29, 1
    %p162 = por %p160, %p161
    %p164 = scmp.ne.s32.totalorder %s149, %s163
    %p165 = scmp.eq.s32.totalorder %s29, 0
    %p166 = por %p164, %p165
    %s168 = sadd.s32 %s167, 1
    %p171 = scmp.eq.s32.totalorder %s23, 1
    %p172 = scmp.ne.s32.totalorder %s167, %s169
    %p173 = scmp.eq.s32.totalorder %s23, 0
    %p174 = por %p172, %p173
    %p175 = scmp.ne.s32.totalorder %s167, %s169
    %p176 = scmp.eq.s32.totalorder %s28, 1
    %p177 = por %p175, %p176
    %p178 = scmp.ne.s32.totalorder %s169, %s170
    %p179 = scmp.eq.s32.totalorder %s28, 0
    %p180 = por %p178, %p179
    %p181 = scmp.ne.s32.totalorder %s169, %s170
    %p182 = scmp.eq.s32.totalorder %s29, 1
    %p183 = por %p181, %p182
    %p185 = scmp.ne.s32.totalorder %s170, %s184
    %p186 = scmp.eq.s32.totalorder %s29, 0
    %p187 = por %p185, %p186
    %s189 = sadd.s32 %s188, 1
    %p192 = scmp.eq.s32.totalorder %s23, 1
    %p193 = scmp.ne.s32.totalorder %s188, %s190
    %p194 = scmp.eq.s32.totalorder %s23, 0
    %p195 = por %p193, %p194
    %p196 = scmp.ne.s32.totalorder %s188, %s190
    %p197 = scmp.eq.s32.totalorder %s28, 1
    %p198 = por %p196, %p197
    %p199 = scmp.ne.s32.totalorder %s190, %s191
    %p200 = scmp.eq.s32.totalorder %s28, 0
    %p201 = por %p199, %p200
    %p202 = scmp.ne.s32.totalorder %s190, %s191
    %p203 = scmp.eq.s32.totalorder %s29, 1
    %p204 = por %p202, %p203
    %p206 = scmp.ne.s32.totalorder %s191, %s205
    %p207 = scmp.eq.s32.totalorder %s29, 0
    %p208 = por %p206, %p207
    %s210 = sadd.s32 %s209, 1
    %p213 = scmp.eq.s32.totalorder %s23, 1
    %p214 = scmp.ne.s32.totalorder %s209, %s211
    %p215 = scmp.eq.s32.totalorder %s23, 0
    %p216 = por %p214, %p215
    %p217 = scmp.ne.s32.totalorder %s209, %s211
    %p218 = scmp.eq.s32.totalorder %s28, 1
    %p219 = por %p217, %p218
    %p220 = scmp.ne.s32.totalorder %s211, %s212
    %p221 = scmp.eq.s32.totalorder %s28, 0
    %p222 = por %p220, %p221
    %p223 = scmp.ne.s32.totalorder %s211, %s212
    %p224 = scmp.eq.s32.totalorder %s29, 1
    %p225 = por %p223, %p224
    %p227 = scmp.ne.s32.totalorder %s212, %s226
    %p228 = scmp.eq.s32.totalorder %s29, 0
    %p229 = por %p227, %p228
    %s231 = sadd.s32 %s230, 1
    %p234 = scmp.eq.s32.totalorder %s23, 1
    %p235 = scmp.ne.s32.totalorder %s230, %s232
    %p236 = scmp.eq.s32.totalorder %s23, 0
    %p237 = por %p235, %p236
    %p238 = scmp.ne.s32.totalorder %s230, %s232
    %p239 = scmp.eq.s32.totalorder %s28, 1
    %p240 = por %p238, %p239
    %p241 = scmp.ne.s32.totalorder %s232, %s233
    %p242 = scmp.eq.s32.totalorder %s28, 0
    %p243 = por %p241, %p242
    %p244 = scmp.ne.s32.totalorder %s232, %s233
    %p245 = scmp.eq.s32.totalorder %s29, 1
    %p246 = por %p244, %p245
    %p248 = scmp.ne.s32.totalorder %s233, %s247
    %p249 = scmp.eq.s32.totalorder %s29, 0
    %p250 = por %p248, %p249
    %s252 = sadd.s32 %s251, 1
    %p255 = scmp.eq.s32.totalorder %s23, 1
    %p256 = scmp.ne.s32.totalorder %s251, %s253
    %p257 = scmp.eq.s32.totalorder %s23, 0
    %p258 = por %p256, %p257
    %p259 = scmp.ne.s32.totalorder %s251, %s253
    %p260 = scmp.eq.s32.totalorder %s28, 1
    %p261 = por %p259, %p260
    %p262 = scmp.ne.s32.totalorder %s253, %s254
    %p263 = scmp.eq.s32.totalorder %s28, 0
    %p264 = por %p262, %p263
    %p265 = scmp.ne.s32.totalorder %s253, %s254
    %p266 = scmp.eq.s32.totalorder %s29, 1
    %p267 = por %p265, %p266
    %p269 = scmp.ne.s32.totalorder %s254, %s268
    %p270 = scmp.eq.s32.totalorder %s29, 0
    %p271 = por %p269, %p270
    %s273 = sadd.s32 %s272, 1
    %p276 = scmp.eq.s32.totalorder %s23, 1
    %p277 = scmp.ne.s32.totalorder %s272, %s274
    %p278 = scmp.eq.s32.totalorder %s23, 0
    %p279 = por %p277, %p278
    %p280 = scmp.ne.s32.totalorder %s272, %s274
    %p281 = scmp.eq.s32.totalorder %s28, 1
    %p282 = por %p280, %p281
    %p283 = scmp.ne.s32.totalorder %s274, %s275
    %p284 = scmp.eq.s32.totalorder %s28, 0
    %p285 = por %p283, %p284
    %p286 = scmp.ne.s32.totalorder %s274, %s275
    %p287 = scmp.eq.s32.totalorder %s29, 1
    %p288 = por %p286, %p287
    %p290 = scmp.ne.s32.totalorder %s275, %s289
    %p291 = scmp.eq.s32.totalorder %s29, 0
    %p292 = por %p290, %p291
    %s294 = sadd.s32 %s293, 1
    %p297 = scmp.eq.s32.totalorder %s23, 1
    %p298 = scmp.ne.s32.totalorder %s293, %s295
    %p299 = scmp.eq.s32.totalorder %s23, 0
    %p300 = por %p298, %p299
    %p301 = scmp.ne.s32.totalorder %s293, %s295
    %p302 = scmp.eq.s32.totalorder %s28, 1
    %p303 = por %p301, %p302
    %p304 = scmp.ne.s32.totalorder %s295, %s296
    %p305 = scmp.eq.s32.totalorder %s28, 0
    %p306 = por %p304, %p305
    %p307 = scmp.ne.s32.totalorder %s295, %s296
    %p308 = scmp.eq.s32.totalorder %s29, 1
    %p309 = por %p307, %p308
    %p311 = scmp.ne.s32.totalorder %s296, %s310
    %p312 = scmp.eq.s32.totalorder %s29, 0
    %p313 = por %p311, %p312
    %s315 = sadd.s32 %s314, 1
    %p318 = scmp.eq.s32.totalorder %s23, 1
    %p319 = scmp.ne.s32.totalorder %s314, %s316
    %p320 = scmp.eq.s32.totalorder %s23, 0
    %p321 = por %p319, %p320
    %p322 = scmp.ne.s32.totalorder %s314, %s316
    %p323 = scmp.eq.s32.totalorder %s28, 1
    %p324 = por %p322, %p323
    %p325 = scmp.ne.s32.totalorder %s316, %s317
    %p326 = scmp.eq.s32.totalorder %s28, 0
    %p327 = por %p325, %p326
    %p328 = scmp.ne.s32.totalorder %s316, %s317
    %p329 = scmp.eq.s32.totalorder %s29, 1
    %p330 = por %p328, %p329
    %p332 = scmp.ne.s32.totalorder %s317, %s331
    %p333 = scmp.eq.s32.totalorder %s29, 0
    %p334 = por %p332, %p333
    %s336 = sadd.s32 %s335, 1
    %p339 = scmp.eq.s32.totalorder %s23, 1
    %p340 = scmp.ne.s32.totalorder %s335, %s337
    %p341 = scmp.eq.s32.totalorder %s23, 0
    %p342 = por %p340, %p341
    %p343 = scmp.ne.s32.totalorder %s335, %s337
    %p344 = scmp.eq.s32.totalorder %s28, 1
    %p345 = por %p343, %p344
    %p346 = scmp.ne.s32.totalorder %s337, %s338
    %p347 = scmp.eq.s32.totalorder %s28, 0
    %p348 = por %p346, %p347
    %p349 = scmp.ne.s32.totalorder %s337, %s338
    %p350 = scmp.eq.s32.totalorder %s29, 1
    %p351 = por %p349, %p350
    %p353 = scmp.ne.s32.totalorder %s338, %s352
    %p354 = scmp.eq.s32.totalorder %s29, 0
    %p355 = por %p353, %p354
    %s356 = ssub.s32 %s23, %s30
    %p357 = scmp.eq.s32.totalorder %s356, 0
    %s359 = sadd.s32 %s358, 1
    %s360 = scalar_select %p357, %s358, %s359
    %p363 = pneg %p357
    %p364 = scmp.eq.s32.totalorder %s23, 1
    %p365 = por %p363, %p364
    %p366 = scmp.ne.s32.totalorder %s358, %s361
    %p367 = scmp.eq.s32.totalorder %s23, 0
    %p368 = por %p366, %p367
    %p369 = scmp.ne.s32.totalorder %s358, %s361
    %p370 = scmp.eq.s32.totalorder %s28, 1
    %p371 = por %p369, %p370
    %p372 = scmp.ne.s32.totalorder %s361, %s362
    %p373 = scmp.eq.s32.totalorder %s28, 0
    %p374 = por %p372, %p373
    %p375 = scmp.ne.s32.totalorder %s361, %s362
    %p376 = scmp.eq.s32.totalorder %s29, 1
    %p377 = por %p375, %p376
    %p379 = scmp.ne.s32.totalorder %s362, %s378
    %p380 = scmp.eq.s32.totalorder %s29, 0
    %p381 = por %p379, %p380
    %s382 = ssub.s32 %s23, %s30
    %p383 = scmp.eq.s32.totalorder %s382, 0
    %s385 = sadd.s32 %s384, 1
    %s386 = scalar_select %p383, %s384, %s385
    %p389 = pneg %p383
    %p390 = scmp.eq.s32.totalorder %s23, 1
    %p391 = por %p389, %p390
    %p392 = scmp.ne.s32.totalorder %s384, %s387
    %p393 = scmp.eq.s32.totalorder %s23, 0
    %p394 = por %p392, %p393
    %p395 = scmp.ne.s32.totalorder %s384, %s387
    %p396 = scmp.eq.s32.totalorder %s28, 1
    %p397 = por %p395, %p396
    %p398 = scmp.ne.s32.totalorder %s387, %s388
    %p399 = scmp.eq.s32.totalorder %s28, 0
    %p400 = por %p398, %p399
    %p401 = scmp.ne.s32.totalorder %s387, %s388
    %p402 = scmp.eq.s32.totalorder %s29, 1
    %p403 = por %p401, %p402
    %p405 = scmp.ne.s32.totalorder %s388, %s404
    %p406 = scmp.eq.s32.totalorder %s29, 0
    %p407 = por %p405, %p406
    %p408 = scmp.le.s32.totalorder 1, %s23
    %p409 = scmp.lt.s32.totalorder %s23, 3
    %p410 = pnand %p408, %p409
    %p411 = pneg %p410
    // Predicated region
    $region9: #{_lambda_.2} parent=5 // pred_check
      _
    $region10: #{_lambda_.2} parent=5 // pred_check_branch
      %413 = sbr.rel (%p410) target = $region12
    $region11: #{_lambda_.2} parent=5 // pred_region
      %s414 = ssub.s32 %s23, 1
      // Predicated region
      $region13: #{_lambda_.2} parent=11 // pred_check
        %p415 = pneg %p96
      $region14: #{_lambda_.2} parent=11 // pred_check_branch
        %417 = sbr.rel (%p415) target = $region16
      $region15: #{_lambda_.2} parent=11 // pred_region
        _
      $region16: #{_lambda_.2} parent=11 // pred_fallthru
        _
      // Predicated region
      $region17: #{_lambda_.2} parent=11 // pred_check
        %p418 = pneg %p117
      $region18: #{_lambda_.2} parent=11 // pred_check_branch
        %420 = sbr.rel (%p418) target = $region20
      $region19: #{_lambda_.2} parent=11 // pred_region
        _
      $region20: #{_lambda_.2} parent=11 // pred_fallthru
        _
      // Predicated region
      $region21: #{_lambda_.2} parent=11 // pred_check
        %p421 = pneg %p138
      $region22: #{_lambda_.2} parent=11 // pred_check_branch
        %423 = sbr.rel (%p421) target = $region24
      $region23: #{_lambda_.2} parent=11 // pred_region
        _
      $region24: #{_lambda_.2} parent=11 // pred_fallthru
        _
      // Predicated region
      $region25: #{_lambda_.2} parent=11 // pred_check
        %p424 = pneg %p159
      $region26: #{_lambda_.2} parent=11 // pred_check_branch
        %426 = sbr.rel (%p424) target = $region28
      $region27: #{_lambda_.2} parent=11 // pred_region
        _
      $region28: #{_lambda_.2} parent=11 // pred_fallthru
        _
      // Predicated region
      $region29: #{_lambda_.2} parent=11 // pred_check
        %p427 = pneg %p180
      $region30: #{_lambda_.2} parent=11 // pred_check_branch
        %429 = sbr.rel (%p427) target = $region32
      $region31: #{_lambda_.2} parent=11 // pred_region
        _
      $region32: #{_lambda_.2} parent=11 // pred_fallthru
        _
      // Predicated region
      $region33: #{_lambda_.2} parent=11 // pred_check
        %p430 = pneg %p201
      $region34: #{_lambda_.2} parent=11 // pred_check_branch
        %432 = sbr.rel (%p430) target = $region36
      $region35: #{_lambda_.2} parent=11 // pred_region
        _
      $region36: #{_lambda_.2} parent=11 // pred_fallthru
        _
      // Predicated region
      $region37: #{_lambda_.2} parent=11 // pred_check
        %p433 = pneg %p222
      $region38: #{_lambda_.2} parent=11 // pred_check_branch
        %435 = sbr.rel (%p433) target = $region40
      $region39: #{_lambda_.2} parent=11 // pred_region
        _
      $region40: #{_lambda_.2} parent=11 // pred_fallthru
        _
      // Predicated region
      $region41: #{_lambda_.2} parent=11 // pred_check
        %p436 = pneg %p243
      $region42: #{_lambda_.2} parent=11 // pred_check_branch
        %438 = sbr.rel (%p436) target = $region44
      $region43: #{_lambda_.2} parent=11 // pred_region
        _
      $region44: #{_lambda_.2} parent=11 // pred_fallthru
        _
      // Predicated region
      $region45: #{_lambda_.2} parent=11 // pred_check
        %p439 = pneg %p264
      $region46: #{_lambda_.2} parent=11 // pred_check_branch
        %441 = sbr.rel (%p439) target = $region48
      $region47: #{_lambda_.2} parent=11 // pred_region
        _
      $region48: #{_lambda_.2} parent=11 // pred_fallthru
        _
      // Predicated region
      $region49: #{_lambda_.2} parent=11 // pred_check
        %p442 = pneg %p285
      $region50: #{_lambda_.2} parent=11 // pred_check_branch
        %444 = sbr.rel (%p442) target = $region52
      $region51: #{_lambda_.2} parent=11 // pred_region
        _
      $region52: #{_lambda_.2} parent=11 // pred_fallthru
        _
      // Predicated region
      $region53: #{_lambda_.2} parent=11 // pred_check
        %p445 = pneg %p306
      $region54: #{_lambda_.2} parent=11 // pred_check_branch
        %447 = sbr.rel (%p445) target = $region56
      $region55: #{_lambda_.2} parent=11 // pred_region
        _
      $region56: #{_lambda_.2} parent=11 // pred_fallthru
        _
      // Predicated region
      $region57: #{_lambda_.2} parent=11 // pred_check
        %p448 = pneg %p327
      $region58: #{_lambda_.2} parent=11 // pred_check_branch
        %450 = sbr.rel (%p448) target = $region60
      $region59: #{_lambda_.2} parent=11 // pred_region
        _
      $region60: #{_lambda_.2} parent=11 // pred_fallthru
        _
      // Predicated region
      $region61: #{_lambda_.2} parent=11 // pred_check
        %p451 = pneg %p348
      $region62: #{_lambda_.2} parent=11 // pred_check_branch
        %453 = sbr.rel (%p451) target = $region64
      $region63: #{_lambda_.2} parent=11 // pred_region
        _
      $region64: #{_lambda_.2} parent=11 // pred_fallthru
        _
    $region12: #{_lambda_.2} parent=5 // pred_fallthru
      _
    %p454 = scmp.lt.s32.totalorder %s23, 2
    // Predicated region
    $region65: #{_lambda_.2} parent=5 // pred_check
      %p455 = pneg %p454
    $region66: #{_lambda_.2} parent=5 // pred_check_branch
      %457 = sbr.rel (%p455) target = $region68
    $region67: #{_lambda_.2} parent=5 // pred_region
      // Predicated region
      $region69: #{_lambda_.2} parent=67 // pred_check
        %p458 = pneg %p43
      $region70: #{_lambda_.2} parent=67 // pred_check_branch
        %460 = sbr.rel (%p458) target = $region72
      $region71: #{_lambda_.2} parent=67 // pred_region
        %p461 = scmp.lt.s32.totalorder %s23, 1
        %s462 = scalar_select %p461, %s23, 1
        %s463 = smul.addr %s462, 11
        %s464 = smul.addr %s463, 8
        %s465 = scalar_lea.vmem %s0, %s464
      $region72: #{_lambda_.2} parent=67 // pred_fallthru
        _
      // Predicated region
      $region73: #{_lambda_.2} parent=67 // pred_check
        %p466 = pneg %p69
      $region74: #{_lambda_.2} parent=67 // pred_check_branch
        %468 = sbr.rel (%p466) target = $region76
      $region75: #{_lambda_.2} parent=67 // pred_region
        %p469 = scmp.lt.s32.totalorder %s23, 1
        %s470 = scalar_select %p469, %s23, 1
        %s471 = smul.addr %s470, 2
        %s472 = smul.addr %s471, 8
        %s473 = scalar_lea.vmem %s1, %s472
      $region76: #{_lambda_.2} parent=67 // pred_fallthru
        _
    $region68: #{_lambda_.2} parent=5 // pred_fallthru
      _
    %p474 = scmp.le.s32.totalorder 1, %s23
    %p475 = scmp.lt.s32.totalorder %s23, 3
    %p476 = pnand %p474, %p475
    %p477 = pneg %p476
    // Predicated region
    $region77: #{_lambda_.2} parent=5 // pred_check
      _
    $region78: #{_lambda_.2} parent=5 // pred_check_branch
      %479 = sbr.rel (%p476) target = $region80
    $region79: #{_lambda_.2} parent=5 // pred_region
      %s480 = ssub.s32 %s23, 1
      %p481 = scmp.lt.s32.totalorder %s28, 1
      %s482 = scalar_select %p481, %s28, 1
      %s483 = smul.addr %s482, 11
      %s484 = smul.addr %s483, 8
      %s485 = scalar_lea.vmem %s0, %s484
      %p486 = pneg %p49
      %p487 = pneg %p46
      %p488 = scmp.lt.s32.totalorder %s28, 1
      %s489 = scalar_select %p488, %s28, 1
      %s490 = smul.addr %s489, 2
      %s491 = smul.addr %s490, 8
      %s492 = scalar_lea.vmem %s1, %s491
      %p493 = pneg %p75
      %p494 = pneg %p72
      %p495 = pneg %p96
      %p496 = pneg %p93
      %p497 = pneg %p117
      %p498 = pneg %p114
      %p499 = pneg %p138
      %p500 = pneg %p135
      %p501 = pneg %p159
      %p502 = pneg %p156
      %p503 = pneg %p180
      %p504 = pneg %p177
      %p505 = pneg %p201
      %p506 = pneg %p198
      %p507 = pneg %p222
      %p508 = pneg %p219
      %p509 = pneg %p243
      %p510 = pneg %p240
      %p511 = pneg %p264
      %p512 = pneg %p261
      %p513 = pneg %p285
      %p514 = pneg %p282
      %p515 = pneg %p306
      %p516 = pneg %p303
      %p517 = pneg %p327
      %p518 = pneg %p324
      %p519 = pneg %p348
      %p520 = pneg %p345
      %p521 = pneg %p374
      %p522 = pneg %p371
      %p523 = scmp.lt.s32.totalorder %s28, 1
      %s524 = scalar_select %p523, %s28, 1
      %s525 = smul.addr %s524, 11
      %s526 = smul.addr %s525, 8
      %s527 = scalar_lea.vmem %s15, %s526
      %p528 = pneg %p400
      %p529 = pneg %p397
      %p530 = scmp.lt.s32.totalorder %s28, 1
      %s531 = scalar_select %p530, %s28, 1
      %s532 = smul.addr %s531, 2
      %s533 = smul.addr %s532, 8
      %s534 = scalar_lea.vmem %s16, %s533
      %p535 = scmp.lt.s32.totalorder %s28, 1
      %s536 = scalar_select %p535, %s28, 1
      %s537 = smul.addr %s536, 11
      %s538 = smul.addr %s537, 8
      %s539 = scalar_lea.vmem %s0, %s538
      %p540 = scmp.lt.s32.totalorder %s28, 1
      %s541 = scalar_select %p540, %s28, 1
      %s542 = smul.addr %s541, 2
      %s543 = smul.addr %s542, 8
      %s544 = scalar_lea.vmem %s1, %s543
      %p545 = scmp.lt.s32.totalorder %s28, 1
      %s546 = scalar_select %p545, %s28, 1
      %s547 = smul.addr %s546, 11
      %s548 = smul.addr %s547, 8
      %s549 = scalar_lea.vmem %s15, %s548
      %p550 = scmp.lt.s32.totalorder %s28, 1
      %s551 = scalar_select %p550, %s28, 1
      %s552 = smul.addr %s551, 2
      %s553 = smul.addr %s552, 8
      %s554 = scalar_lea.vmem %s16, %s553
      %v555 = vld [vmem:[%s2] sm:$0xff]
      %v556 = vld [vmem:[%s2 + $0x8] sm:$0xff]
      %v557 = vld [vmem:[%s2 + $0x10] sm:$0xff]
      %v558 = vld [vmem:[%s2 + $0x18] sm:$0xff]
      %v559 = vld [vmem:[%s2 + $0x20] sm:$0xff]
      %v560 = vld [vmem:[%s2 + $0x28] sm:$0xff]
      %v561 = vld [vmem:[%s2 + $0x30] sm:$0xff]
      %v562 = vld [vmem:[%s2 + $0x38] sm:$0xff]
      %v563 = vld [vmem:[%s2 + $0x40] sm:$0xff]
      %v564 = vld [vmem:[%s2 + $0x48] sm:$0xff]
      %v565 = vld [vmem:[%s2 + $0x50] sm:$0xff]
      %v566 = vld [vmem:[%s2 + $0x58] sm:$0xff]
      %v567 = vld [vmem:[%s3] sm:$0x7]
      %v568 = vld [vmem:[%s539] sm:$0xff]
      %v569 = vld [vmem:[%s539 + $0x8] sm:$0xff]
      %v570 = vld [vmem:[%s539 + $0x10] sm:$0xff]
      %v571 = vld [vmem:[%s539 + $0x18] sm:$0xff]
      %v572 = vld [vmem:[%s539 + $0x20] sm:$0xff]
      %v573 = vld [vmem:[%s539 + $0x28] sm:$0xff]
      %v574 = vld [vmem:[%s539 + $0x30] sm:$0xff]
      %v575 = vld [vmem:[%s539 + $0x38] sm:$0xff]
      %v576 = vld [vmem:[%s539 + $0x40] sm:$0xff]
      %v577 = vld [vmem:[%s539 + $0x48] sm:$0xff]
      %v578 = vld [vmem:[%s539 + $0x50] sm:$0x1]
      %v580 = vperm.slane %v567, 0
      %v581 = vperm.slane %v567, 1
      %v582 = vperm.slane %v567, 2
      %vm586 = vcmask 261120
      %v588 = vsel %vm586, %v568, 0
      %v591 = vsel %vm586, %v569, 0
      %v594 = vsel %vm586, %v570, 0
      %v597 = vsel %vm586, %v571, 0
      %v600 = vsel %vm586, %v572, 0
      %v603 = vsel %vm586, %v573, 0
      %v606 = vsel %vm586, %v574, 0
      %v609 = vsel %vm586, %v575, 0
      %v612 = vsel %vm586, %v576, 0
      %v615 = vsel %vm586, %v577, 0
      %v618 = vsel %vm586, %v578, 0
      %620 = vmatpush.msra.mxu0 0.0
      %621 = vmatpush.msra.mxu0 0.0
      %622 = vmatpush.msra.mxu0 0.0
      %623 = vmatpush.msra.mxu0 0.0
      %624 = vmatpush.msra.mxu0 0.0
      %625 = vmatpush.msra.mxu0 0.0
      %626 = vmatpush.msra.mxu0 0.0
      %627 = vmatpush.msra.mxu0 0.0
      %628 = vmatpush.msra.mxu0 0.0
      %629 = vmatpush.msra.mxu0 0.0
      %630 = vmatpush.msra.mxu0 0.0
      %631 = vmatpush.msra.mxu0 0.0
      %632 = vmatpush.msra.mxu0 %v564
      %633 = vmatpush.msra.mxu0 %v561
      %634 = vmatpush.msra.mxu0 %v558
      %635 = vmatpush.msra.mxu0 %v555
      %636 = vmatmul.f32.gmra.mxu0 %v588
      %v637 = vpop.f32.mrf.mxu0
      %v638 = vadd.f32 %v580, %v637
      %639 = vmatmul.f32.gmra.mxu0 %v591
      %v640 = vpop.f32.mrf.mxu0
      %v641 = vadd.f32 %v580, %v640
      %642 = vmatmul.f32.gmra.mxu0 %v594
      %v643 = vpop.f32.mrf.mxu0
      %v644 = vadd.f32 %v580, %v643
      %645 = vmatmul.f32.gmra.mxu0 %v597
      %v646 = vpop.f32.mrf.mxu0
      %v647 = vadd.f32 %v580, %v646
      %648 = vmatmul.f32.gmra.mxu0 %v600
      %v649 = vpop.f32.mrf.mxu0
      %v650 = vadd.f32 %v580, %v649
      %651 = vmatmul.f32.gmra.mxu0 %v603
      %v652 = vpop.f32.mrf.mxu0
      %v653 = vadd.f32 %v580, %v652
      %654 = vmatmul.f32.gmra.mxu0 %v606
      %v655 = vpop.f32.mrf.mxu0
      %v656 = vadd.f32 %v580, %v655
      %657 = vmatmul.f32.gmra.mxu0 %v609
      %v658 = vpop.f32.mrf.mxu0
      %v659 = vadd.f32 %v580, %v658
      %660 = vmatmul.f32.gmra.mxu0 %v612
      %v661 = vpop.f32.mrf.mxu0
      %v662 = vadd.f32 %v580, %v661
      %663 = vmatmul.f32.gmra.mxu0 %v615
      %v664 = vpop.f32.mrf.mxu0
      %v665 = vadd.f32 %v580, %v664
      %666 = vmatmul.f32.gmra.mxu0 %v618
      %v667 = vpop.f32.mrf.mxu0
      %v668 = vadd.f32 %v580, %v667
      %669 = vdwg.mxu0
      %670 = vmatpush.msra.mxu0 0.0
      %671 = vmatpush.msra.mxu0 0.0
      %672 = vmatpush.msra.mxu0 0.0
      %673 = vmatpush.msra.mxu0 0.0
      %674 = vmatpush.msra.mxu0 0.0
      %675 = vmatpush.msra.mxu0 0.0
      %676 = vmatpush.msra.mxu0 0.0
      %677 = vmatpush.msra.mxu0 0.0
      %678 = vmatpush.msra.mxu0 0.0
      %679 = vmatpush.msra.mxu0 0.0
      %680 = vmatpush.msra.mxu0 0.0
      %681 = vmatpush.msra.mxu0 0.0
      %682 = vmatpush.msra.mxu0 %v565
      %683 = vmatpush.msra.mxu0 %v562
      %684 = vmatpush.msra.mxu0 %v559
      %685 = vmatpush.msra.mxu0 %v556
      %686 = vmatmul.f32.gmra.mxu0 %v588
      %v687 = vpop.f32.mrf.mxu0
      %v688 = vadd.f32 %v581, %v687
      %689 = vmatmul.f32.gmra.mxu0 %v591
      %v690 = vpop.f32.mrf.mxu0
      %v691 = vadd.f32 %v581, %v690
      %692 = vmatmul.f32.gmra.mxu0 %v594
      %v693 = vpop.f32.mrf.mxu0
      %v694 = vadd.f32 %v581, %v693
      %695 = vmatmul.f32.gmra.mxu0 %v597
      %v696 = vpop.f32.mrf.mxu0
      %v697 = vadd.f32 %v581, %v696
      %698 = vmatmul.f32.gmra.mxu0 %v600
      %v699 = vpop.f32.mrf.mxu0
      %v700 = vadd.f32 %v581, %v699
      %701 = vmatmul.f32.gmra.mxu0 %v603
      %v702 = vpop.f32.mrf.mxu0
      %v703 = vadd.f32 %v581, %v702
      %704 = vmatmul.f32.gmra.mxu0 %v606
      %v705 = vpop.f32.mrf.mxu0
      %v706 = vadd.f32 %v581, %v705
      %707 = vmatmul.f32.gmra.mxu0 %v609
      %v708 = vpop.f32.mrf.mxu0
      %v709 = vadd.f32 %v581, %v708
      %710 = vmatmul.f32.gmra.mxu0 %v612
      %v711 = vpop.f32.mrf.mxu0
      %v712 = vadd.f32 %v581, %v711
      %713 = vmatmul.f32.gmra.mxu0 %v615
      %v714 = vpop.f32.mrf.mxu0
      %v715 = vadd.f32 %v581, %v714
      %716 = vmatmul.f32.gmra.mxu0 %v618
      %v717 = vpop.f32.mrf.mxu0
      %v718 = vadd.f32 %v581, %v717
      %719 = vdwg.mxu0
      %720 = vmatpush.msra.mxu0 0.0
      %721 = vmatpush.msra.mxu0 0.0
      %722 = vmatpush.msra.mxu0 0.0
      %723 = vmatpush.msra.mxu0 0.0
      %724 = vmatpush.msra.mxu0 0.0
      %725 = vmatpush.msra.mxu0 0.0
      %726 = vmatpush.msra.mxu0 0.0
      %727 = vmatpush.msra.mxu0 0.0
      %728 = vmatpush.msra.mxu0 0.0
      %729 = vmatpush.msra.mxu0 0.0
      %730 = vmatpush.msra.mxu0 0.0
      %731 = vmatpush.msra.mxu0 0.0
      %732 = vmatpush.msra.mxu0 %v566
      %733 = vmatpush.msra.mxu0 %v563
      %734 = vmatpush.msra.mxu0 %v560
      %735 = vmatpush.msra.mxu0 %v557
      %736 = vmatmul.f32.gmra.mxu0 %v588
      %v737 = vpop.f32.mrf.mxu0
      %v738 = vadd.f32 %v582, %v737
      %739 = vmatmul.f32.gmra.mxu0 %v591
      %v740 = vpop.f32.mrf.mxu0
      %v741 = vadd.f32 %v582, %v740
      %742 = vmatmul.f32.gmra.mxu0 %v594
      %v743 = vpop.f32.mrf.mxu0
      %v744 = vadd.f32 %v582, %v743
      %745 = vmatmul.f32.gmra.mxu0 %v597
      %v746 = vpop.f32.mrf.mxu0
      %v747 = vadd.f32 %v582, %v746
      %748 = vmatmul.f32.gmra.mxu0 %v600
      %v749 = vpop.f32.mrf.mxu0
      %v750 = vadd.f32 %v582, %v749
      %751 = vmatmul.f32.gmra.mxu0 %v603
      %v752 = vpop.f32.mrf.mxu0
      %v753 = vadd.f32 %v582, %v752
      %754 = vmatmul.f32.gmra.mxu0 %v606
      %v755 = vpop.f32.mrf.mxu0
      %v756 = vadd.f32 %v582, %v755
      %757 = vmatmul.f32.gmra.mxu0 %v609
      %v758 = vpop.f32.mrf.mxu0
      %v759 = vadd.f32 %v582, %v758
      %760 = vmatmul.f32.gmra.mxu0 %v612
      %v761 = vpop.f32.mrf.mxu0
      %v762 = vadd.f32 %v582, %v761
      %763 = vmatmul.f32.gmra.mxu0 %v615
      %v764 = vpop.f32.mrf.mxu0
      %v765 = vadd.f32 %v582, %v764
      %766 = vmatmul.f32.gmra.mxu0 %v618
      %v767 = vpop.f32.mrf.mxu0
      %v768 = vadd.f32 %v582, %v767
      %769 = vdwg.mxu0
      %792 = vrot.lane.b32.xlu0 %v638, 32
      %v793 = vpop.permute.xlu0 %792
      %794 = vrot.lane.b32.xlu0 %v688, 32
      %v795 = vpop.permute.xlu0 %794
      %796 = vrot.lane.b32.xlu0 %v641, 32
      %v797 = vpop.permute.xlu0 %796
      %798 = vrot.lane.b32.xlu0 %v691, 32
      %v799 = vpop.permute.xlu0 %798
      %800 = vrot.lane.b32.xlu0 %v644, 32
      %v801 = vpop.permute.xlu0 %800
      %802 = vrot.lane.b32.xlu0 %v694, 32
      %v803 = vpop.permute.xlu0 %802
      %804 = vrot.lane.b32.xlu0 %v647, 32
      %v805 = vpop.permute.xlu0 %804
      %806 = vrot.lane.b32.xlu0 %v697, 32
      %v807 = vpop.permute.xlu0 %806
      %808 = vrot.lane.b32.xlu0 %v650, 32
      %v809 = vpop.permute.xlu0 %808
      %810 = vrot.lane.b32.xlu0 %v700, 32
      %v811 = vpop.permute.xlu0 %810
      %812 = vrot.lane.b32.xlu0 %v653, 32
      %v813 = vpop.permute.xlu0 %812
      %814 = vrot.lane.b32.xlu0 %v703, 32
      %v815 = vpop.permute.xlu0 %814
      %816 = vrot.lane.b32.xlu0 %v656, 32
      %v817 = vpop.permute.xlu0 %816
      %818 = vrot.lane.b32.xlu0 %v706, 32
      %v819 = vpop.permute.xlu0 %818
      %820 = vrot.lane.b32.xlu0 %v659, 32
      %v821 = vpop.permute.xlu0 %820
      %822 = vrot.lane.b32.xlu0 %v709, 32
      %v823 = vpop.permute.xlu0 %822
      %824 = vrot.lane.b32.xlu0 %v662, 32
      %v825 = vpop.permute.xlu0 %824
      %826 = vrot.lane.b32.xlu0 %v712, 32
      %v827 = vpop.permute.xlu0 %826
      %828 = vrot.lane.b32.xlu0 %v665, 32
      %v829 = vpop.permute.xlu0 %828
      %830 = vrot.lane.b32.xlu0 %v715, 32
      %v831 = vpop.permute.xlu0 %830
      %832 = vrot.lane.b32.xlu0 %v668, 32
      %v833 = vpop.permute.xlu0 %832
      %834 = vrot.lane.b32.xlu0 %v718, 32
      %v835 = vpop.permute.xlu0 %834
      %v836 = vsel %vm586, %v793, %v795
      %v837 = vsel %vm586, %v797, %v799
      %v838 = vsel %vm586, %v801, %v803
      %v839 = vsel %vm586, %v805, %v807
      %v840 = vsel %vm586, %v809, %v811
      %v841 = vsel %vm586, %v813, %v815
      %v842 = vsel %vm586, %v817, %v819
      %v843 = vsel %vm586, %v821, %v823
      %v844 = vsel %vm586, %v825, %v827
      %v845 = vsel %vm586, %v829, %v831
      %v846 = vsel %vm586, %v833, %v835
      %v858 = vadd.f32 %v638, %v836
      %v859 = vadd.f32 %v641, %v837
      %v860 = vadd.f32 %v644, %v838
      %v861 = vadd.f32 %v647, %v839
      %v862 = vadd.f32 %v650, %v840
      %v863 = vadd.f32 %v653, %v841
      %v864 = vadd.f32 %v656, %v842
      %v865 = vadd.f32 %v659, %v843
      %v866 = vadd.f32 %v662, %v844
      %v867 = vadd.f32 %v665, %v845
      %v868 = vadd.f32 %v668, %v846
      %v869 = vxor.u32 %v688, 2147483648
      %v870 = vxor.u32 %v738, 2147483648
      %v871 = vxor.u32 %v691, 2147483648
      %v872 = vxor.u32 %v741, 2147483648
      %v873 = vxor.u32 %v694, 2147483648
      %v874 = vxor.u32 %v744, 2147483648
      %v875 = vxor.u32 %v697, 2147483648
      %v876 = vxor.u32 %v747, 2147483648
      %v877 = vxor.u32 %v700, 2147483648
      %v878 = vxor.u32 %v750, 2147483648
      %v879 = vxor.u32 %v703, 2147483648
      %v880 = vxor.u32 %v753, 2147483648
      %v881 = vxor.u32 %v706, 2147483648
      %v882 = vxor.u32 %v756, 2147483648
      %v883 = vxor.u32 %v709, 2147483648
      %v884 = vxor.u32 %v759, 2147483648
      %v885 = vxor.u32 %v712, 2147483648
      %v886 = vxor.u32 %v762, 2147483648
      %v887 = vxor.u32 %v715, 2147483648
      %v888 = vxor.u32 %v765, 2147483648
      %v889 = vxor.u32 %v718, 2147483648
      %v890 = vxor.u32 %v768, 2147483648
      %v891 = vmul.f32 %v869, 1.442695
      %v892 = vpow.pop %v891
      %v893 = vmul.f32 %v870, 1.442695
      %v894 = vpow.pop %v893
      %v895 = vmul.f32 %v871, 1.442695
      %v896 = vpow.pop %v895
      %v897 = vmul.f32 %v872, 1.442695
      %v898 = vpow.pop %v897
      %v899 = vmul.f32 %v873, 1.442695
      %v900 = vpow.pop %v899
      %v901 = vmul.f32 %v874, 1.442695
      %v902 = vpow.pop %v901
      %v903 = vmul.f32 %v875, 1.442695
      %v904 = vpow.pop %v903
      %v905 = vmul.f32 %v876, 1.442695
      %v906 = vpow.pop %v905
      %v907 = vmul.f32 %v877, 1.442695
      %v908 = vpow.pop %v907
      %v909 = vmul.f32 %v878, 1.442695
      %v910 = vpow.pop %v909
      %v911 = vmul.f32 %v879, 1.442695
      %v912 = vpow.pop %v911
      %v913 = vmul.f32 %v880, 1.442695
      %v914 = vpow.pop %v913
      %v915 = vmul.f32 %v881, 1.442695
      %v916 = vpow.pop %v915
      %v917 = vmul.f32 %v882, 1.442695
      %v918 = vpow.pop %v917
      %v919 = vmul.f32 %v883, 1.442695
      %v920 = vpow.pop %v919
      %v921 = vmul.f32 %v884, 1.442695
      %v922 = vpow.pop %v921
      %v923 = vmul.f32 %v885, 1.442695
      %v924 = vpow.pop %v923
      %v925 = vmul.f32 %v886, 1.442695
      %v926 = vpow.pop %v925
      %v927 = vmul.f32 %v887, 1.442695
      %v928 = vpow.pop %v927
      %v929 = vmul.f32 %v888, 1.442695
      %v930 = vpow.pop %v929
      %v931 = vmul.f32 %v889, 1.442695
      %v932 = vpow.pop %v931
      %v933 = vmul.f32 %v890, 1.442695
      %v934 = vpow.pop %v933
      %v935 = vadd.f32 %v892, 1.0
      %v936 = vadd.f32 %v894, 1.0
      %v937 = vadd.f32 %v896, 1.0
      %v938 = vadd.f32 %v898, 1.0
      %v939 = vadd.f32 %v900, 1.0
      %v940 = vadd.f32 %v902, 1.0
      %v941 = vadd.f32 %v904, 1.0
      %v942 = vadd.f32 %v906, 1.0
      %v943 = vadd.f32 %v908, 1.0
      %v944 = vadd.f32 %v910, 1.0
      %v945 = vadd.f32 %v912, 1.0
      %v946 = vadd.f32 %v914, 1.0
      %v947 = vadd.f32 %v916, 1.0
      %v948 = vadd.f32 %v918, 1.0
      %v949 = vadd.f32 %v920, 1.0
      %v950 = vadd.f32 %v922, 1.0
      %v951 = vadd.f32 %v924, 1.0
      %v952 = vadd.f32 %v926, 1.0
      %v953 = vadd.f32 %v928, 1.0
      %v954 = vadd.f32 %v930, 1.0
      %v955 = vadd.f32 %v932, 1.0
      %v956 = vadd.f32 %v934, 1.0
      %v957 = vrcp.pop %v935
      %v958 = vmul.f32 %v935, %v957
      %v959 = vsub.f32 1.0, %v958
      %v960 = vmul.f32 %v957, %v959
      %v961 = vadd.f32 %v957, %v960
      %vm962 = vweird.f32 %v935
      %vm963 = vweird.f32 %v957
      %vm964 = vmor %vm962, %vm963
      %v965 = vsel %vm964, %v957, %v961
      %v966 = vand.u32 2147483647, %v935
      %vm967 = vcmp.eq.f32.partialorder %v966, 8.507059e+37
      %v968 = vand.u32 %v935, 2147483648
      %v969 = vor.u32 1.1754944e-38, %v968
      %v970 = vsel %vm967, %v969, %v965
      %v971 = vmul.f32 1.0, %v970
      %v972 = vrcp.pop %v936
      %v973 = vmul.f32 %v936, %v972
      %v974 = vsub.f32 1.0, %v973
      %v975 = vmul.f32 %v972, %v974
      %v976 = vadd.f32 %v972, %v975
      %vm977 = vweird.f32 %v936
      %vm978 = vweird.f32 %v972
      %vm979 = vmor %vm977, %vm978
      %v980 = vsel %vm979, %v972, %v976
      %v981 = vand.u32 2147483647, %v936
      %vm982 = vcmp.eq.f32.partialorder %v981, 8.507059e+37
      %v983 = vand.u32 %v936, 2147483648
      %v984 = vor.u32 1.1754944e-38, %v983
      %v985 = vsel %vm982, %v984, %v980
      %v986 = vmul.f32 1.0, %v985
      %v987 = vrcp.pop %v937
      %v988 = vmul.f32 %v937, %v987
      %v989 = vsub.f32 1.0, %v988
      %v990 = vmul.f32 %v987, %v989
      %v991 = vadd.f32 %v987, %v990
      %vm992 = vweird.f32 %v937
      %vm993 = vweird.f32 %v987
      %vm994 = vmor %vm992, %vm993
      %v995 = vsel %vm994, %v987, %v991
      %v996 = vand.u32 2147483647, %v937
      %vm997 = vcmp.eq.f32.partialorder %v996, 8.507059e+37
      %v998 = vand.u32 %v937, 2147483648
      %v999 = vor.u32 1.1754944e-38, %v998
      %v1000 = vsel %vm997, %v999, %v995
      %v1001 = vmul.f32 1.0, %v1000
      %v1002 = vrcp.pop %v938
      %v1003 = vmul.f32 %v938, %v1002
      %v1004 = vsub.f32 1.0, %v1003
      %v1005 = vmul.f32 %v1002, %v1004
      %v1006 = vadd.f32 %v1002, %v1005
      %vm1007 = vweird.f32 %v938
      %vm1008 = vweird.f32 %v1002
      %vm1009 = vmor %vm1007, %vm1008
      %v1010 = vsel %vm1009, %v1002, %v1006
      %v1011 = vand.u32 2147483647, %v938
      %vm1012 = vcmp.eq.f32.partialorder %v1011, 8.507059e+37
      %v1013 = vand.u32 %v938, 2147483648
      %v1014 = vor.u32 1.1754944e-38, %v1013
      %v1015 = vsel %vm1012, %v1014, %v1010
      %v1016 = vmul.f32 1.0, %v1015
      %v1017 = vrcp.pop %v939
      %v1018 = vmul.f32 %v939, %v1017
      %v1019 = vsub.f32 1.0, %v1018
      %v1020 = vmul.f32 %v1017, %v1019
      %v1021 = vadd.f32 %v1017, %v1020
      %vm1022 = vweird.f32 %v939
      %vm1023 = vweird.f32 %v1017
      %vm1024 = vmor %vm1022, %vm1023
      %v1025 = vsel %vm1024, %v1017, %v1021
      %v1026 = vand.u32 2147483647, %v939
      %vm1027 = vcmp.eq.f32.partialorder %v1026, 8.507059e+37
      %v1028 = vand.u32 %v939, 2147483648
      %v1029 = vor.u32 1.1754944e-38, %v1028
      %v1030 = vsel %vm1027, %v1029, %v1025
      %v1031 = vmul.f32 1.0, %v1030
      %v1032 = vrcp.pop %v940
      %v1033 = vmul.f32 %v940, %v1032
      %v1034 = vsub.f32 1.0, %v1033
      %v1035 = vmul.f32 %v1032, %v1034
      %v1036 = vadd.f32 %v1032, %v1035
      %vm1037 = vweird.f32 %v940
      %vm1038 = vweird.f32 %v1032
      %vm1039 = vmor %vm1037, %vm1038
      %v1040 = vsel %vm1039, %v1032, %v1036
      %v1041 = vand.u32 2147483647, %v940
      %vm1042 = vcmp.eq.f32.partialorder %v1041, 8.507059e+37
      %v1043 = vand.u32 %v940, 2147483648
      %v1044 = vor.u32 1.1754944e-38, %v1043
      %v1045 = vsel %vm1042, %v1044, %v1040
      %v1046 = vmul.f32 1.0, %v1045
      %v1047 = vrcp.pop %v941
      %v1048 = vmul.f32 %v941, %v1047
      %v1049 = vsub.f32 1.0, %v1048
      %v1050 = vmul.f32 %v1047, %v1049
      %v1051 = vadd.f32 %v1047, %v1050
      %vm1052 = vweird.f32 %v941
      %vm1053 = vweird.f32 %v1047
      %vm1054 = vmor %vm1052, %vm1053
      %v1055 = vsel %vm1054, %v1047, %v1051
      %v1056 = vand.u32 2147483647, %v941
      %vm1057 = vcmp.eq.f32.partialorder %v1056, 8.507059e+37
      %v1058 = vand.u32 %v941, 2147483648
      %v1059 = vor.u32 1.1754944e-38, %v1058
      %v1060 = vsel %vm1057, %v1059, %v1055
      %v1061 = vmul.f32 1.0, %v1060
      %v1062 = vrcp.pop %v942
      %v1063 = vmul.f32 %v942, %v1062
      %v1064 = vsub.f32 1.0, %v1063
      %v1065 = vmul.f32 %v1062, %v1064
      %v1066 = vadd.f32 %v1062, %v1065
      %vm1067 = vweird.f32 %v942
      %vm1068 = vweird.f32 %v1062
      %vm1069 = vmor %vm1067, %vm1068
      %v1070 = vsel %vm1069, %v1062, %v1066
      %v1071 = vand.u32 2147483647, %v942
      %vm1072 = vcmp.eq.f32.partialorder %v1071, 8.507059e+37
      %v1073 = vand.u32 %v942, 2147483648
      %v1074 = vor.u32 1.1754944e-38, %v1073
      %v1075 = vsel %vm1072, %v1074, %v1070
      %v1076 = vmul.f32 1.0, %v1075
      %v1077 = vrcp.pop %v943
      %v1078 = vmul.f32 %v943, %v1077
      %v1079 = vsub.f32 1.0, %v1078
      %v1080 = vmul.f32 %v1077, %v1079
      %v1081 = vadd.f32 %v1077, %v1080
      %vm1082 = vweird.f32 %v943
      %vm1083 = vweird.f32 %v1077
      %vm1084 = vmor %vm1082, %vm1083
      %v1085 = vsel %vm1084, %v1077, %v1081
      %v1086 = vand.u32 2147483647, %v943
      %vm1087 = vcmp.eq.f32.partialorder %v1086, 8.507059e+37
      %v1088 = vand.u32 %v943, 2147483648
      %v1089 = vor.u32 1.1754944e-38, %v1088
      %v1090 = vsel %vm1087, %v1089, %v1085
      %v1091 = vmul.f32 1.0, %v1090
      %v1092 = vrcp.pop %v944
      %v1093 = vmul.f32 %v944, %v1092
      %v1094 = vsub.f32 1.0, %v1093
      %v1095 = vmul.f32 %v1092, %v1094
      %v1096 = vadd.f32 %v1092, %v1095
      %vm1097 = vweird.f32 %v944
      %vm1098 = vweird.f32 %v1092
      %vm1099 = vmor %vm1097, %vm1098
      %v1100 = vsel %vm1099, %v1092, %v1096
      %v1101 = vand.u32 2147483647, %v944
      %vm1102 = vcmp.eq.f32.partialorder %v1101, 8.507059e+37
      %v1103 = vand.u32 %v944, 2147483648
      %v1104 = vor.u32 1.1754944e-38, %v1103
      %v1105 = vsel %vm1102, %v1104, %v1100
      %v1106 = vmul.f32 1.0, %v1105
      %v1107 = vrcp.pop %v945
      %v1108 = vmul.f32 %v945, %v1107
      %v1109 = vsub.f32 1.0, %v1108
      %v1110 = vmul.f32 %v1107, %v1109
      %v1111 = vadd.f32 %v1107, %v1110
      %vm1112 = vweird.f32 %v945
      %vm1113 = vweird.f32 %v1107
      %vm1114 = vmor %vm1112, %vm1113
      %v1115 = vsel %vm1114, %v1107, %v1111
      %v1116 = vand.u32 2147483647, %v945
      %vm1117 = vcmp.eq.f32.partialorder %v1116, 8.507059e+37
      %v1118 = vand.u32 %v945, 2147483648
      %v1119 = vor.u32 1.1754944e-38, %v1118
      %v1120 = vsel %vm1117, %v1119, %v1115
      %v1121 = vmul.f32 1.0, %v1120
      %v1122 = vrcp.pop %v946
      %v1123 = vmul.f32 %v946, %v1122
      %v1124 = vsub.f32 1.0, %v1123
      %v1125 = vmul.f32 %v1122, %v1124
      %v1126 = vadd.f32 %v1122, %v1125
      %vm1127 = vweird.f32 %v946
      %vm1128 = vweird.f32 %v1122
      %vm1129 = vmor %vm1127, %vm1128
      %v1130 = vsel %vm1129, %v1122, %v1126
      %v1131 = vand.u32 2147483647, %v946
      %vm1132 = vcmp.eq.f32.partialorder %v1131, 8.507059e+37
      %v1133 = vand.u32 %v946, 2147483648
      %v1134 = vor.u32 1.1754944e-38, %v1133
      %v1135 = vsel %vm1132, %v1134, %v1130
      %v1136 = vmul.f32 1.0, %v1135
      %v1137 = vrcp.pop %v947
      %v1138 = vmul.f32 %v947, %v1137
      %v1139 = vsub.f32 1.0, %v1138
      %v1140 = vmul.f32 %v1137, %v1139
      %v1141 = vadd.f32 %v1137, %v1140
      %vm1142 = vweird.f32 %v947
      %vm1143 = vweird.f32 %v1137
      %vm1144 = vmor %vm1142, %vm1143
      %v1145 = vsel %vm1144, %v1137, %v1141
      %v1146 = vand.u32 2147483647, %v947
      %vm1147 = vcmp.eq.f32.partialorder %v1146, 8.507059e+37
      %v1148 = vand.u32 %v947, 2147483648
      %v1149 = vor.u32 1.1754944e-38, %v1148
      %v1150 = vsel %vm1147, %v1149, %v1145
      %v1151 = vmul.f32 1.0, %v1150
      %v1152 = vrcp.pop %v948
      %v1153 = vmul.f32 %v948, %v1152
      %v1154 = vsub.f32 1.0, %v1153
      %v1155 = vmul.f32 %v1152, %v1154
      %v1156 = vadd.f32 %v1152, %v1155
      %vm1157 = vweird.f32 %v948
      %vm1158 = vweird.f32 %v1152
      %vm1159 = vmor %vm1157, %vm1158
      %v1160 = vsel %vm1159, %v1152, %v1156
      %v1161 = vand.u32 2147483647, %v948
      %vm1162 = vcmp.eq.f32.partialorder %v1161, 8.507059e+37
      %v1163 = vand.u32 %v948, 2147483648
      %v1164 = vor.u32 1.1754944e-38, %v1163
      %v1165 = vsel %vm1162, %v1164, %v1160
      %v1166 = vmul.f32 1.0, %v1165
      %v1167 = vrcp.pop %v949
      %v1168 = vmul.f32 %v949, %v1167
      %v1169 = vsub.f32 1.0, %v1168
      %v1170 = vmul.f32 %v1167, %v1169
      %v1171 = vadd.f32 %v1167, %v1170
      %vm1172 = vweird.f32 %v949
      %vm1173 = vweird.f32 %v1167
      %vm1174 = vmor %vm1172, %vm1173
      %v1175 = vsel %vm1174, %v1167, %v1171
      %v1176 = vand.u32 2147483647, %v949
      %vm1177 = vcmp.eq.f32.partialorder %v1176, 8.507059e+37
      %v1178 = vand.u32 %v949, 2147483648
      %v1179 = vor.u32 1.1754944e-38, %v1178
      %v1180 = vsel %vm1177, %v1179, %v1175
      %v1181 = vmul.f32 1.0, %v1180
      %v1182 = vrcp.pop %v950
      %v1183 = vmul.f32 %v950, %v1182
      %v1184 = vsub.f32 1.0, %v1183
      %v1185 = vmul.f32 %v1182, %v1184
      %v1186 = vadd.f32 %v1182, %v1185
      %vm1187 = vweird.f32 %v950
      %vm1188 = vweird.f32 %v1182
      %vm1189 = vmor %vm1187, %vm1188
      %v1190 = vsel %vm1189, %v1182, %v1186
      %v1191 = vand.u32 2147483647, %v950
      %vm1192 = vcmp.eq.f32.partialorder %v1191, 8.507059e+37
      %v1193 = vand.u32 %v950, 2147483648
      %v1194 = vor.u32 1.1754944e-38, %v1193
      %v1195 = vsel %vm1192, %v1194, %v1190
      %v1196 = vmul.f32 1.0, %v1195
      %v1197 = vrcp.pop %v951
      %v1198 = vmul.f32 %v951, %v1197
      %v1199 = vsub.f32 1.0, %v1198
      %v1200 = vmul.f32 %v1197, %v1199
      %v1201 = vadd.f32 %v1197, %v1200
      %vm1202 = vweird.f32 %v951
      %vm1203 = vweird.f32 %v1197
      %vm1204 = vmor %vm1202, %vm1203
      %v1205 = vsel %vm1204, %v1197, %v1201
      %v1206 = vand.u32 2147483647, %v951
      %vm1207 = vcmp.eq.f32.partialorder %v1206, 8.507059e+37
      %v1208 = vand.u32 %v951, 2147483648
      %v1209 = vor.u32 1.1754944e-38, %v1208
      %v1210 = vsel %vm1207, %v1209, %v1205
      %v1211 = vmul.f32 1.0, %v1210
      %v1212 = vrcp.pop %v952
      %v1213 = vmul.f32 %v952, %v1212
      %v1214 = vsub.f32 1.0, %v1213
      %v1215 = vmul.f32 %v1212, %v1214
      %v1216 = vadd.f32 %v1212, %v1215
      %vm1217 = vweird.f32 %v952
      %vm1218 = vweird.f32 %v1212
      %vm1219 = vmor %vm1217, %vm1218
      %v1220 = vsel %vm1219, %v1212, %v1216
      %v1221 = vand.u32 2147483647, %v952
      %vm1222 = vcmp.eq.f32.partialorder %v1221, 8.507059e+37
      %v1223 = vand.u32 %v952, 2147483648
      %v1224 = vor.u32 1.1754944e-38, %v1223
      %v1225 = vsel %vm1222, %v1224, %v1220
      %v1226 = vmul.f32 1.0, %v1225
      %v1227 = vrcp.pop %v953
      %v1228 = vmul.f32 %v953, %v1227
      %v1229 = vsub.f32 1.0, %v1228
      %v1230 = vmul.f32 %v1227, %v1229
      %v1231 = vadd.f32 %v1227, %v1230
      %vm1232 = vweird.f32 %v953
      %vm1233 = vweird.f32 %v1227
      %vm1234 = vmor %vm1232, %vm1233
      %v1235 = vsel %vm1234, %v1227, %v1231
      %v1236 = vand.u32 2147483647, %v953
      %vm1237 = vcmp.eq.f32.partialorder %v1236, 8.507059e+37
      %v1238 = vand.u32 %v953, 2147483648
      %v1239 = vor.u32 1.1754944e-38, %v1238
      %v1240 = vsel %vm1237, %v1239, %v1235
      %v1241 = vmul.f32 1.0, %v1240
      %v1242 = vrcp.pop %v954
      %v1243 = vmul.f32 %v954, %v1242
      %v1244 = vsub.f32 1.0, %v1243
      %v1245 = vmul.f32 %v1242, %v1244
      %v1246 = vadd.f32 %v1242, %v1245
      %vm1247 = vweird.f32 %v954
      %vm1248 = vweird.f32 %v1242
      %vm1249 = vmor %vm1247, %vm1248
      %v1250 = vsel %vm1249, %v1242, %v1246
      %v1251 = vand.u32 2147483647, %v954
      %vm1252 = vcmp.eq.f32.partialorder %v1251, 8.507059e+37
      %v1253 = vand.u32 %v954, 2147483648
      %v1254 = vor.u32 1.1754944e-38, %v1253
      %v1255 = vsel %vm1252, %v1254, %v1250
      %v1256 = vmul.f32 1.0, %v1255
      %v1257 = vrcp.pop %v955
      %v1258 = vmul.f32 %v955, %v1257
      %v1259 = vsub.f32 1.0, %v1258
      %v1260 = vmul.f32 %v1257, %v1259
      %v1261 = vadd.f32 %v1257, %v1260
      %vm1262 = vweird.f32 %v955
      %vm1263 = vweird.f32 %v1257
      %vm1264 = vmor %vm1262, %vm1263
      %v1265 = vsel %vm1264, %v1257, %v1261
      %v1266 = vand.u32 2147483647, %v955
      %vm1267 = vcmp.eq.f32.partialorder %v1266, 8.507059e+37
      %v1268 = vand.u32 %v955, 2147483648
      %v1269 = vor.u32 1.1754944e-38, %v1268
      %v1270 = vsel %vm1267, %v1269, %v1265
      %v1271 = vmul.f32 1.0, %v1270
      %v1272 = vrcp.pop %v956
      %v1273 = vmul.f32 %v956, %v1272
      %v1274 = vsub.f32 1.0, %v1273
      %v1275 = vmul.f32 %v1272, %v1274
      %v1276 = vadd.f32 %v1272, %v1275
      %vm1277 = vweird.f32 %v956
      %vm1278 = vweird.f32 %v1272
      %vm1279 = vmor %vm1277, %vm1278
      %v1280 = vsel %vm1279, %v1272, %v1276
      %v1281 = vand.u32 2147483647, %v956
      %vm1282 = vcmp.eq.f32.partialorder %v1281, 8.507059e+37
      %v1283 = vand.u32 %v956, 2147483648
      %v1284 = vor.u32 1.1754944e-38, %v1283
      %v1285 = vsel %vm1282, %v1284, %v1280
      %v1286 = vmul.f32 1.0, %v1285
      %1309 = vrot.lane.b32.xlu0 %v971, 64
      %v1310 = vpop.permute.xlu0 %1309
      %1311 = vrot.lane.b32.xlu0 %v986, 64
      %v1312 = vpop.permute.xlu0 %1311
      %1313 = vrot.lane.b32.xlu0 %v1001, 64
      %v1314 = vpop.permute.xlu0 %1313
      %1315 = vrot.lane.b32.xlu0 %v1016, 64
      %v1316 = vpop.permute.xlu0 %1315
      %1317 = vrot.lane.b32.xlu0 %v1031, 64
      %v1318 = vpop.permute.xlu0 %1317
      %1319 = vrot.lane.b32.xlu0 %v1046, 64
      %v1320 = vpop.permute.xlu0 %1319
      %1321 = vrot.lane.b32.xlu0 %v1061, 64
      %v1322 = vpop.permute.xlu0 %1321
      %1323 = vrot.lane.b32.xlu0 %v1076, 64
      %v1324 = vpop.permute.xlu0 %1323
      %1325 = vrot.lane.b32.xlu0 %v1091, 64
      %v1326 = vpop.permute.xlu0 %1325
      %1327 = vrot.lane.b32.xlu0 %v1106, 64
      %v1328 = vpop.permute.xlu0 %1327
      %1329 = vrot.lane.b32.xlu0 %v1121, 64
      %v1330 = vpop.permute.xlu0 %1329
      %1331 = vrot.lane.b32.xlu0 %v1136, 64
      %v1332 = vpop.permute.xlu0 %1331
      %1333 = vrot.lane.b32.xlu0 %v1151, 64
      %v1334 = vpop.permute.xlu0 %1333
      %1335 = vrot.lane.b32.xlu0 %v1166, 64
      %v1336 = vpop.permute.xlu0 %1335
      %1337 = vrot.lane.b32.xlu0 %v1181, 64
      %v1338 = vpop.permute.xlu0 %1337
      %1339 = vrot.lane.b32.xlu0 %v1196, 64
      %v1340 = vpop.permute.xlu0 %1339
      %1341 = vrot.lane.b32.xlu0 %v1211, 64
      %v1342 = vpop.permute.xlu0 %1341
      %1343 = vrot.lane.b32.xlu0 %v1226, 64
      %v1344 = vpop.permute.xlu0 %1343
      %1345 = vrot.lane.b32.xlu0 %v1241, 64
      %v1346 = vpop.permute.xlu0 %1345
      %1347 = vrot.lane.b32.xlu0 %v1256, 64
      %v1348 = vpop.permute.xlu0 %1347
      %1349 = vrot.lane.b32.xlu0 %v1271, 64
      %v1350 = vpop.permute.xlu0 %1349
      %1351 = vrot.lane.b32.xlu0 %v1286, 64
      %v1352 = vpop.permute.xlu0 %1351
      %vm1353 = vcmask 523264
      %v1354 = vsel %vm1353, %v1310, %v1312
      %v1355 = vsel %vm1353, %v1314, %v1316
      %v1356 = vsel %vm1353, %v1318, %v1320
      %v1357 = vsel %vm1353, %v1322, %v1324
      %v1358 = vsel %vm1353, %v1326, %v1328
      %v1359 = vsel %vm1353, %v1330, %v1332
      %v1360 = vsel %vm1353, %v1334, %v1336
      %v1361 = vsel %vm1353, %v1338, %v1340
      %v1362 = vsel %vm1353, %v1342, %v1344
      %v1363 = vsel %vm1353, %v1346, %v1348
      %v1364 = vsel %vm1353, %v1350, %v1352
      %v1376 = vmul.f32 %v858, %v1354
      %v1377 = vmul.f32 %v859, %v1355
      %v1378 = vmul.f32 %v860, %v1356
      %v1379 = vmul.f32 %v861, %v1357
      %v1380 = vmul.f32 %v862, %v1358
      %v1381 = vmul.f32 %v863, %v1359
      %v1382 = vmul.f32 %v864, %v1360
      %v1383 = vmul.f32 %v865, %v1361
      %v1384 = vmul.f32 %v866, %v1362
      %v1385 = vmul.f32 %v867, %v1363
      %v1386 = vmul.f32 %v868, %v1364
      %v1387 = vld [vmem:[%s544] sm:$0xff]
      %v1388 = vld [vmem:[%s544 + $0x8] sm:$0x7f]
      %v1390 = vsel %vm586, %v1387, 0
      %v1393 = vsel %vm586, %v1388, 0
      %1395 = vmatpush.msra.mxu0 0.0
      %1396 = vmatpush.msra.mxu0 0.0
      %1397 = vmatpush.msra.mxu0 0.0
      %1398 = vmatpush.msra.mxu0 0.0
      %1399 = vmatpush.msra.mxu0 0.0
      %1400 = vmatpush.msra.mxu0 0.0
      %1401 = vmatpush.msra.mxu0 0.0
      %1402 = vmatpush.msra.mxu0 0.0
      %1403 = vmatpush.msra.mxu0 0.0
      %1404 = vmatpush.msra.mxu0 0.0
      %1405 = vmatpush.msra.mxu0 0.0
      %1406 = vmatpush.msra.mxu0 0.0
      %1407 = vmatpush.msra.mxu0 %v564
      %1408 = vmatpush.msra.mxu0 %v561
      %1409 = vmatpush.msra.mxu0 %v558
      %1410 = vmatpush.msra.mxu0 %v555
      %1411 = vmatmul.f32.gmra.mxu0 %v1390
      %v1412 = vpop.f32.mrf.mxu0
      %v1413 = vadd.f32 %v580, %v1412
      %1414 = vmatmul.f32.gmra.mxu0 %v1393
      %v1415 = vpop.f32.mrf.mxu0
      %v1416 = vadd.f32 %v580, %v1415
      %1417 = vdwg.mxu0
      %1418 = vmatpush.msra.mxu0 0.0
      %1419 = vmatpush.msra.mxu0 0.0
      %1420 = vmatpush.msra.mxu0 0.0
      %1421 = vmatpush.msra.mxu0 0.0
      %1422 = vmatpush.msra.mxu0 0.0
      %1423 = vmatpush.msra.mxu0 0.0
      %1424 = vmatpush.msra.mxu0 0.0
      %1425 = vmatpush.msra.mxu0 0.0
      %1426 = vmatpush.msra.mxu0 0.0
      %1427 = vmatpush.msra.mxu0 0.0
      %1428 = vmatpush.msra.mxu0 0.0
      %1429 = vmatpush.msra.mxu0 0.0
      %1430 = vmatpush.msra.mxu0 %v565
      %1431 = vmatpush.msra.mxu0 %v562
      %1432 = vmatpush.msra.mxu0 %v559
      %1433 = vmatpush.msra.mxu0 %v556
      %1434 = vmatmul.f32.gmra.mxu0 %v1390
      %v1435 = vpop.f32.mrf.mxu0
      %v1436 = vadd.f32 %v581, %v1435
      %1437 = vmatmul.f32.gmra.mxu0 %v1393
      %v1438 = vpop.f32.mrf.mxu0
      %v1439 = vadd.f32 %v581, %v1438
      %1440 = vdwg.mxu0
      %1441 = vmatpush.msra.mxu0 0.0
      %1442 = vmatpush.msra.mxu0 0.0
      %1443 = vmatpush.msra.mxu0 0.0
      %1444 = vmatpush.msra.mxu0 0.0
      %1445 = vmatpush.msra.mxu0 0.0
      %1446 = vmatpush.msra.mxu0 0.0
      %1447 = vmatpush.msra.mxu0 0.0
      %1448 = vmatpush.msra.mxu0 0.0
      %1449 = vmatpush.msra.mxu0 0.0
      %1450 = vmatpush.msra.mxu0 0.0
      %1451 = vmatpush.msra.mxu0 0.0
      %1452 = vmatpush.msra.mxu0 0.0
      %1453 = vmatpush.msra.mxu0 %v566
      %1454 = vmatpush.msra.mxu0 %v563
      %1455 = vmatpush.msra.mxu0 %v560
      %1456 = vmatpush.msra.mxu0 %v557
      %1457 = vmatmul.f32.gmra.mxu0 %v1390
      %v1458 = vpop.f32.mrf.mxu0
      %v1459 = vadd.f32 %v582, %v1458
      %1460 = vmatmul.f32.gmra.mxu0 %v1393
      %v1461 = vpop.f32.mrf.mxu0
      %v1462 = vadd.f32 %v582, %v1461
      %1463 = vdwg.mxu0
      %1468 = vrot.lane.b32.xlu0 %v1413, 32
      %v1469 = vpop.permute.xlu0 %1468
      %1470 = vrot.lane.b32.xlu0 %v1436, 32
      %v1471 = vpop.permute.xlu0 %1470
      %1472 = vrot.lane.b32.xlu0 %v1416, 32
      %v1473 = vpop.permute.xlu0 %1472
      %1474 = vrot.lane.b32.xlu0 %v1439, 32
      %v1475 = vpop.permute.xlu0 %1474
      %v1476 = vsel %vm586, %v1469, %v1471
      %v1477 = vsel %vm586, %v1473, %v1475
      %v1480 = vadd.f32 %v1413, %v1476
      %v1481 = vadd.f32 %v1416, %v1477
      %v1482 = vxor.u32 %v1436, 2147483648
      %v1483 = vxor.u32 %v1459, 2147483648
      %v1484 = vxor.u32 %v1439, 2147483648
      %v1485 = vxor.u32 %v1462, 2147483648
      %v1486 = vmul.f32 %v1482, 1.442695
      %v1487 = vpow.pop %v1486
      %v1488 = vmul.f32 %v1483, 1.442695
      %v1489 = vpow.pop %v1488
      %v1490 = vmul.f32 %v1484, 1.442695
      %v1491 = vpow.pop %v1490
      %v1492 = vmul.f32 %v1485, 1.442695
      %v1493 = vpow.pop %v1492
      %v1494 = vadd.f32 %v1487, 1.0
      %v1495 = vadd.f32 %v1489, 1.0
      %v1496 = vadd.f32 %v1491, 1.0
      %v1497 = vadd.f32 %v1493, 1.0
      %v1498 = vrcp.pop %v1494
      %v1499 = vmul.f32 %v1494, %v1498
      %v1500 = vsub.f32 1.0, %v1499
      %v1501 = vmul.f32 %v1498, %v1500
      %v1502 = vadd.f32 %v1498, %v1501
      %vm1503 = vweird.f32 %v1494
      %vm1504 = vweird.f32 %v1498
      %vm1505 = vmor %vm1503, %vm1504
      %v1506 = vsel %vm1505, %v1498, %v1502
      %v1507 = vand.u32 2147483647, %v1494
      %vm1508 = vcmp.eq.f32.partialorder %v1507, 8.507059e+37
      %v1509 = vand.u32 %v1494, 2147483648
      %v1510 = vor.u32 1.1754944e-38, %v1509
      %v1511 = vsel %vm1508, %v1510, %v1506
      %v1512 = vmul.f32 1.0, %v1511
      %v1513 = vrcp.pop %v1495
      %v1514 = vmul.f32 %v1495, %v1513
      %v1515 = vsub.f32 1.0, %v1514
      %v1516 = vmul.f32 %v1513, %v1515
      %v1517 = vadd.f32 %v1513, %v1516
      %vm1518 = vweird.f32 %v1495
      %vm1519 = vweird.f32 %v1513
      %vm1520 = vmor %vm1518, %vm1519
      %v1521 = vsel %vm1520, %v1513, %v1517
      %v1522 = vand.u32 2147483647, %v1495
      %vm1523 = vcmp.eq.f32.partialorder %v1522, 8.507059e+37
      %v1524 = vand.u32 %v1495, 2147483648
      %v1525 = vor.u32 1.1754944e-38, %v1524
      %v1526 = vsel %vm1523, %v1525, %v1521
      %v1527 = vmul.f32 1.0, %v1526
      %v1528 = vrcp.pop %v1496
      %v1529 = vmul.f32 %v1496, %v1528
      %v1530 = vsub.f32 1.0, %v1529
      %v1531 = vmul.f32 %v1528, %v1530
      %v1532 = vadd.f32 %v1528, %v1531
      %vm1533 = vweird.f32 %v1496
      %vm1534 = vweird.f32 %v1528
      %vm1535 = vmor %vm1533, %vm1534
      %v1536 = vsel %vm1535, %v1528, %v1532
      %v1537 = vand.u32 2147483647, %v1496
      %vm1538 = vcmp.eq.f32.partialorder %v1537, 8.507059e+37
      %v1539 = vand.u32 %v1496, 2147483648
      %v1540 = vor.u32 1.1754944e-38, %v1539
      %v1541 = vsel %vm1538, %v1540, %v1536
      %v1542 = vmul.f32 1.0, %v1541
      %v1543 = vrcp.pop %v1497
      %v1544 = vmul.f32 %v1497, %v1543
      %v1545 = vsub.f32 1.0, %v1544
      %v1546 = vmul.f32 %v1543, %v1545
      %v1547 = vadd.f32 %v1543, %v1546
      %vm1548 = vweird.f32 %v1497
      %vm1549 = vweird.f32 %v1543
      %vm1550 = vmor %vm1548, %vm1549
      %v1551 = vsel %vm1550, %v1543, %v1547
      %v1552 = vand.u32 2147483647, %v1497
      %vm1553 = vcmp.eq.f32.partialorder %v1552, 8.507059e+37
      %v1554 = vand.u32 %v1497, 2147483648
      %v1555 = vor.u32 1.1754944e-38, %v1554
      %v1556 = vsel %vm1553, %v1555, %v1551
      %v1557 = vmul.f32 1.0, %v1556
      %1562 = vrot.lane.b32.xlu0 %v1512, 64
      %v1563 = vpop.permute.xlu0 %1562
      %1564 = vrot.lane.b32.xlu0 %v1527, 64
      %v1565 = vpop.permute.xlu0 %1564
      %1566 = vrot.lane.b32.xlu0 %v1542, 64
      %v1567 = vpop.permute.xlu0 %1566
      %1568 = vrot.lane.b32.xlu0 %v1557, 64
      %v1569 = vpop.permute.xlu0 %1568
      %v1570 = vsel %vm1353, %v1563, %v1565
      %v1571 = vsel %vm1353, %v1567, %v1569
      %v1574 = vmul.f32 %v1480, %v1570
      %v1575 = vmul.f32 %v1481, %v1571
      %v1576 = vld [vmem:[%s4] sm:$0xff]
      %v1577 = vld [vmem:[%s4 + $0x8] sm:$0xff]
      %v1578 = vld [vmem:[%s4 + $0x10] sm:$0xff]
      %v1579 = vld [vmem:[%s4 + $0x18] sm:$0xff]
      %v1580 = vld [vmem:[%s4 + $0x20] sm:$0xff]
      %v1581 = vld [vmem:[%s4 + $0x28] sm:$0xff]
      %v1582 = vld [vmem:[%s4 + $0x30] sm:$0xff]
      %v1583 = vld [vmem:[%s4 + $0x38] sm:$0xff]
      %v1584 = vld [vmem:[%s4 + $0x40] sm:$0xff]
      %v1585 = vld [vmem:[%s4 + $0x48] sm:$0xff]
      %v1586 = vld [vmem:[%s4 + $0x50] sm:$0x1]
      %v1587 = vld [vmem:[%s5] sm:$0xff]
      %v1588 = vld [vmem:[%s5 + $0x8] sm:$0xff]
      %v1589 = vld [vmem:[%s5 + $0x10] sm:$0xff]
      %v1590 = vld [vmem:[%s5 + $0x18] sm:$0xff]
      %v1591 = vld [vmem:[%s5 + $0x20] sm:$0xff]
      %v1592 = vld [vmem:[%s5 + $0x28] sm:$0xff]
      %v1593 = vld [vmem:[%s5 + $0x30] sm:$0xff]
      %v1594 = vld [vmem:[%s5 + $0x38] sm:$0xff]
      %v1595 = vld [vmem:[%s5 + $0x40] sm:$0xff]
      %v1596 = vld [vmem:[%s5 + $0x48] sm:$0xff]
      %v1597 = vld [vmem:[%s5 + $0x50] sm:$0x1]
      %v1598 = vld [vmem:[%s6] sm:$0xff]
      %v1599 = vld [vmem:[%s6 + $0x8] sm:$0xff]
      %v1600 = vld [vmem:[%s6 + $0x10] sm:$0xff]
      %v1601 = vld [vmem:[%s6 + $0x18] sm:$0xff]
      %v1602 = vld [vmem:[%s6 + $0x20] sm:$0xff]
      %v1603 = vld [vmem:[%s6 + $0x28] sm:$0xff]
      %v1604 = vld [vmem:[%s6 + $0x30] sm:$0xff]
      %v1605 = vld [vmem:[%s6 + $0x38] sm:$0xff]
      %v1606 = vld [vmem:[%s6 + $0x40] sm:$0xff]
      %v1607 = vld [vmem:[%s6 + $0x48] sm:$0xff]
      %v1608 = vld [vmem:[%s6 + $0x50] sm:$0x1]
      %v1609 = vld [vmem:[%s7] sm:$0xff]
      %v1610 = vld [vmem:[%s7 + $0x8] sm:$0x7f]
      %v1611 = vld [vmem:[%s8] sm:$0xff]
      %v1612 = vld [vmem:[%s8 + $0x8] sm:$0x7f]
      %v1613 = vld [vmem:[%s9] sm:$0xff]
      %v1614 = vld [vmem:[%s9 + $0x8] sm:$0x7f]
      %v1615 = vld [vmem:[%s10] sm:$0xff]
      %v1616 = vld [vmem:[%s10 + $0x8] sm:$0xff]
      %v1617 = vld [vmem:[%s10 + $0x10] sm:$0xff]
      %v1618 = vld [vmem:[%s10 + $0x18] sm:$0xff]
      %v1619 = vld [vmem:[%s10 + $0x20] sm:$0xff]
      %v1620 = vld [vmem:[%s10 + $0x28] sm:$0xff]
      %v1621 = vld [vmem:[%s10 + $0x30] sm:$0xff]
      %v1622 = vld [vmem:[%s10 + $0x38] sm:$0xff]
      %v1623 = vld [vmem:[%s10 + $0x40] sm:$0xff]
      %v1624 = vld [vmem:[%s10 + $0x48] sm:$0xff]
      %v1625 = vld [vmem:[%s10 + $0x50] sm:$0xff]
      %v1626 = vld [vmem:[%s10 + $0x58] sm:$0xff]
      %s1627 = scalar_lea.vmem %s10, 96
      %v1628 = vld [vmem:[%s1627] sm:$0xff]
      %v1629 = vld [vmem:[%s1627 + $0x8] sm:$0xff]
      %v1630 = vld [vmem:[%s1627 + $0x10] sm:$0xff]
      %v1631 = vld [vmem:[%s1627 + $0x18] sm:$0xff]
      %v1632 = vld [vmem:[%s1627 + $0x20] sm:$0xff]
      %v1633 = vld [vmem:[%s1627 + $0x28] sm:$0xff]
      %v1634 = vld [vmem:[%s1627 + $0x30] sm:$0xff]
      %v1635 = vld [vmem:[%s1627 + $0x38] sm:$0xff]
      %v1636 = vld [vmem:[%s1627 + $0x40] sm:$0xff]
      %v1637 = vld [vmem:[%s1627 + $0x48] sm:$0xff]
      %v1638 = vld [vmem:[%s1627 + $0x50] sm:$0xff]
      %v1639 = vld [vmem:[%s1627 + $0x58] sm:$0xff]
      %s1640 = scalar_lea.vmem %s10, 192
      %v1641 = vld [vmem:[%s1640] sm:$0xff]
      %v1642 = vld [vmem:[%s1640 + $0x8] sm:$0xff]
      %v1643 = vld [vmem:[%s1640 + $0x10] sm:$0xff]
      %v1644 = vld [vmem:[%s1640 + $0x18] sm:$0xff]
      %v1645 = vld [vmem:[%s1640 + $0x20] sm:$0xff]
      %v1646 = vld [vmem:[%s1640 + $0x28] sm:$0xff]
      %v1647 = vld [vmem:[%s1640 + $0x30] sm:$0xff]
      %v1648 = vld [vmem:[%s1640 + $0x38] sm:$0xff]
      %v1649 = vld [vmem:[%s1640 + $0x40] sm:$0xff]
      %v1650 = vld [vmem:[%s1640 + $0x48] sm:$0xff]
      %v1651 = vld [vmem:[%s1640 + $0x50] sm:$0xff]
      %v1652 = vld [vmem:[%s1640 + $0x58] sm:$0xff]
      %vm1653 = vcmask 662528
      %v1655 = vsel %vm1653, %v1576, 0
      %v1658 = vsel %vm1653, %v1577, 0
      %v1661 = vsel %vm1653, %v1578, 0
      %v1664 = vsel %vm1653, %v1579, 0
      %v1667 = vsel %vm1653, %v1580, 0
      %v1670 = vsel %vm1653, %v1581, 0
      %v1673 = vsel %vm1653, %v1582, 0
      %v1676 = vsel %vm1653, %v1583, 0
      %v1679 = vsel %vm1653, %v1584, 0
      %v1682 = vsel %vm1653, %v1585, 0
      %v1685 = vsel %vm1653, %v1586, 0
      %vm1687 = vcmask 1040384
      %v1689 = vsel %vm1687, %v1386, 0
      %1691 = vmatpush.msra.mxu0 0.0
      %1692 = vmatpush.msra.mxu0 0.0
      %1693 = vmatpush.msra.mxu0 0.0
      %1694 = vmatpush.msra.mxu0 0.0
      %1695 = vmatpush.msra.mxu0 0.0
      %1696 = vmatpush.msra.mxu0 %v1689
      %1697 = vmatpush.msra.mxu0 %v1385
      %1698 = vmatpush.msra.mxu0 %v1384
      %1699 = vmatpush.msra.mxu0 %v1383
      %1700 = vmatpush.msra.mxu0 %v1382
      %1701 = vmatpush.msra.mxu0 %v1381
      %1702 = vmatpush.msra.mxu0 %v1380
      %1703 = vmatpush.msra.mxu0 %v1379
      %1704 = vmatpush.msra.mxu0 %v1378
      %1705 = vmatpush.msra.mxu0 %v1377
      %1706 = vmatpush.msra.mxu0 %v1376
      %1707 = vmatmul.f32.gmra.mxu0 %v1655
      %v1708 = vpop.f32.mrf.mxu0
      %v1709 = vadd.f32 0.0, %v1708
      %1710 = vmatmul.f32.gmra.mxu0 %v1658
      %v1711 = vpop.f32.mrf.mxu0
      %v1712 = vadd.f32 0.0, %v1711
      %1713 = vmatmul.f32.gmra.mxu0 %v1661
      %v1714 = vpop.f32.mrf.mxu0
      %v1715 = vadd.f32 0.0, %v1714
      %1716 = vmatmul.f32.gmra.mxu0 %v1664
      %v1717 = vpop.f32.mrf.mxu0
      %v1718 = vadd.f32 0.0, %v1717
      %1719 = vmatmul.f32.gmra.mxu0 %v1667
      %v1720 = vpop.f32.mrf.mxu0
      %v1721 = vadd.f32 0.0, %v1720
      %1722 = vmatmul.f32.gmra.mxu0 %v1670
      %v1723 = vpop.f32.mrf.mxu0
      %v1724 = vadd.f32 0.0, %v1723
      %1725 = vmatmul.f32.gmra.mxu0 %v1673
      %v1726 = vpop.f32.mrf.mxu0
      %v1727 = vadd.f32 0.0, %v1726
      %1728 = vmatmul.f32.gmra.mxu0 %v1676
      %v1729 = vpop.f32.mrf.mxu0
      %v1730 = vadd.f32 0.0, %v1729
      %1731 = vmatmul.f32.gmra.mxu0 %v1679
      %v1732 = vpop.f32.mrf.mxu0
      %v1733 = vadd.f32 0.0, %v1732
      %1734 = vmatmul.f32.gmra.mxu0 %v1682
      %v1735 = vpop.f32.mrf.mxu0
      %v1736 = vadd.f32 0.0, %v1735
      %1737 = vmatmul.f32.gmra.mxu0 %v1685
      %v1738 = vpop.f32.mrf.mxu0
      %v1739 = vadd.f32 0.0, %v1738
      %1740 = vdwg.mxu0
      %vm1741 = vcmask 785408
      %v1743 = vsel %vm1741, %v1709, 0
      %v1746 = vsel %vm1741, %v1712, 0
      %v1749 = vsel %vm1741, %v1715, 0
      %v1752 = vsel %vm1741, %v1718, 0
      %v1755 = vsel %vm1741, %v1721, 0
      %v1758 = vsel %vm1741, %v1724, 0
      %v1761 = vsel %vm1741, %v1727, 0
      %v1764 = vsel %vm1741, %v1730, 0
      %v1767 = vsel %vm1741, %v1733, 0
      %v1770 = vsel %vm1741, %v1736, 0
      %v1773 = vsel %vm1741, %v1739, 0
      %1775 = vmatpush.msra.mxu0 0.0
      %1776 = vmatpush.msra.mxu0 0.0
      %1777 = vmatpush.msra.mxu0 0.0
      %1778 = vmatpush.msra.mxu0 0.0
      %1779 = vmatpush.msra.mxu0 %v1626
      %1780 = vmatpush.msra.mxu0 %v1625
      %1781 = vmatpush.msra.mxu0 %v1624
      %1782 = vmatpush.msra.mxu0 %v1623
      %1783 = vmatpush.msra.mxu0 %v1622
      %1784 = vmatpush.msra.mxu0 %v1621
      %1785 = vmatpush.msra.mxu0 %v1620
      %1786 = vmatpush.msra.mxu0 %v1619
      %1787 = vmatpush.msra.mxu0 %v1618
      %1788 = vmatpush.msra.mxu0 %v1617
      %1789 = vmatpush.msra.mxu0 %v1616
      %1790 = vmatpush.msra.mxu0 %v1615
      %1791 = vmatmul.f32.gmra.mxu0 %v1743
      %v1792 = vpop.f32.mrf.mxu0
      %v1793 = vadd.f32 0.0, %v1792
      %1794 = vmatmul.f32.gmra.mxu0 %v1746
      %v1795 = vpop.f32.mrf.mxu0
      %v1796 = vadd.f32 0.0, %v1795
      %1797 = vmatmul.f32.gmra.mxu0 %v1749
      %v1798 = vpop.f32.mrf.mxu0
      %v1799 = vadd.f32 0.0, %v1798
      %1800 = vmatmul.f32.gmra.mxu0 %v1752
      %v1801 = vpop.f32.mrf.mxu0
      %v1802 = vadd.f32 0.0, %v1801
      %1803 = vmatmul.f32.gmra.mxu0 %v1755
      %v1804 = vpop.f32.mrf.mxu0
      %v1805 = vadd.f32 0.0, %v1804
      %1806 = vmatmul.f32.gmra.mxu0 %v1758
      %v1807 = vpop.f32.mrf.mxu0
      %v1808 = vadd.f32 0.0, %v1807
      %1809 = vmatmul.f32.gmra.mxu0 %v1761
      %v1810 = vpop.f32.mrf.mxu0
      %v1811 = vadd.f32 0.0, %v1810
      %1812 = vmatmul.f32.gmra.mxu0 %v1764
      %v1813 = vpop.f32.mrf.mxu0
      %v1814 = vadd.f32 0.0, %v1813
      %1815 = vmatmul.f32.gmra.mxu0 %v1767
      %v1816 = vpop.f32.mrf.mxu0
      %v1817 = vadd.f32 0.0, %v1816
      %1818 = vmatmul.f32.gmra.mxu0 %v1770
      %v1819 = vpop.f32.mrf.mxu0
      %v1820 = vadd.f32 0.0, %v1819
      %1821 = vmatmul.f32.gmra.mxu0 %v1773
      %v1822 = vpop.f32.mrf.mxu0
      %v1823 = vadd.f32 0.0, %v1822
      %1824 = vdwg.mxu0
      %v1825 = vmax.f32 %v1793, 0.0
      %v1826 = vmax.f32 %v1796, 0.0
      %v1827 = vmax.f32 %v1799, 0.0
      %v1828 = vmax.f32 %v1802, 0.0
      %v1829 = vmax.f32 %v1805, 0.0
      %v1830 = vmax.f32 %v1808, 0.0
      %v1831 = vmax.f32 %v1811, 0.0
      %v1832 = vmax.f32 %v1814, 0.0
      %v1833 = vmax.f32 %v1817, 0.0
      %v1834 = vmax.f32 %v1820, 0.0
      %v1835 = vmax.f32 %v1823, 0.0
      %v1837 = vsel %vm1653, %v1587, 0
      %v1840 = vsel %vm1653, %v1588, 0
      %v1843 = vsel %vm1653, %v1589, 0
      %v1846 = vsel %vm1653, %v1590, 0
      %v1849 = vsel %vm1653, %v1591, 0
      %v1852 = vsel %vm1653, %v1592, 0
      %v1855 = vsel %vm1653, %v1593, 0
      %v1858 = vsel %vm1653, %v1594, 0
      %v1861 = vsel %vm1653, %v1595, 0
      %v1864 = vsel %vm1653, %v1596, 0
      %v1867 = vsel %vm1653, %v1597, 0
      %1869 = vmatpush.msra.mxu0 0.0
      %1870 = vmatpush.msra.mxu0 0.0
      %1871 = vmatpush.msra.mxu0 0.0
      %1872 = vmatpush.msra.mxu0 0.0
      %1873 = vmatpush.msra.mxu0 0.0
      %1874 = vmatpush.msra.mxu0 %v1689
      %1875 = vmatpush.msra.mxu0 %v1385
      %1876 = vmatpush.msra.mxu0 %v1384
      %1877 = vmatpush.msra.mxu0 %v1383
      %1878 = vmatpush.msra.mxu0 %v1382
      %1879 = vmatpush.msra.mxu0 %v1381
      %1880 = vmatpush.msra.mxu0 %v1380
      %1881 = vmatpush.msra.mxu0 %v1379
      %1882 = vmatpush.msra.mxu0 %v1378
      %1883 = vmatpush.msra.mxu0 %v1377
      %1884 = vmatpush.msra.mxu0 %v1376
      %1885 = vmatmul.f32.gmra.mxu0 %v1837
      %v1886 = vpop.f32.mrf.mxu0
      %v1887 = vadd.f32 0.0, %v1886
      %1888 = vmatmul.f32.gmra.mxu0 %v1840
      %v1889 = vpop.f32.mrf.mxu0
      %v1890 = vadd.f32 0.0, %v1889
      %1891 = vmatmul.f32.gmra.mxu0 %v1843
      %v1892 = vpop.f32.mrf.mxu0
      %v1893 = vadd.f32 0.0, %v1892
      %1894 = vmatmul.f32.gmra.mxu0 %v1846
      %v1895 = vpop.f32.mrf.mxu0
      %v1896 = vadd.f32 0.0, %v1895
      %1897 = vmatmul.f32.gmra.mxu0 %v1849
      %v1898 = vpop.f32.mrf.mxu0
      %v1899 = vadd.f32 0.0, %v1898
      %1900 = vmatmul.f32.gmra.mxu0 %v1852
      %v1901 = vpop.f32.mrf.mxu0
      %v1902 = vadd.f32 0.0, %v1901
      %1903 = vmatmul.f32.gmra.mxu0 %v1855
      %v1904 = vpop.f32.mrf.mxu0
      %v1905 = vadd.f32 0.0, %v1904
      %1906 = vmatmul.f32.gmra.mxu0 %v1858
      %v1907 = vpop.f32.mrf.mxu0
      %v1908 = vadd.f32 0.0, %v1907
      %1909 = vmatmul.f32.gmra.mxu0 %v1861
      %v1910 = vpop.f32.mrf.mxu0
      %v1911 = vadd.f32 0.0, %v1910
      %1912 = vmatmul.f32.gmra.mxu0 %v1864
      %v1913 = vpop.f32.mrf.mxu0
      %v1914 = vadd.f32 0.0, %v1913
      %1915 = vmatmul.f32.gmra.mxu0 %v1867
      %v1916 = vpop.f32.mrf.mxu0
      %v1917 = vadd.f32 0.0, %v1916
      %1918 = vdwg.mxu0
      %vm1919 = vcmask 121856
      %v1921 = vsel %vm1919, %v1598, 0
      %v1924 = vsel %vm1919, %v1599, 0
      %v1927 = vsel %vm1919, %v1600, 0
      %v1930 = vsel %vm1919, %v1601, 0
      %v1933 = vsel %vm1919, %v1602, 0
      %v1936 = vsel %vm1919, %v1603, 0
      %v1939 = vsel %vm1919, %v1604, 0
      %v1942 = vsel %vm1919, %v1605, 0
      %v1945 = vsel %vm1919, %v1606, 0
      %v1948 = vsel %vm1919, %v1607, 0
      %v1951 = vsel %vm1919, %v1608, 0
      %vm1953 = vcmask 1046528
      %v1955 = vsel %vm1953, %v1575, 0
      %1957 = vmatpush.msra.mxu0 0.0
      %1958 = vmatpush.msra.mxu0 0.0
      %1959 = vmatpush.msra.mxu0 0.0
      %1960 = vmatpush.msra.mxu0 0.0
      %1961 = vmatpush.msra.mxu0 0.0
      %1962 = vmatpush.msra.mxu0 0.0
      %1963 = vmatpush.msra.mxu0 0.0
      %1964 = vmatpush.msra.mxu0 0.0
      %1965 = vmatpush.msra.mxu0 0.0
      %1966 = vmatpush.msra.mxu0 0.0
      %1967 = vmatpush.msra.mxu0 0.0
      %1968 = vmatpush.msra.mxu0 0.0
      %1969 = vmatpush.msra.mxu0 0.0
      %1970 = vmatpush.msra.mxu0 0.0
      %1971 = vmatpush.msra.mxu0 %v1955
      %1972 = vmatpush.msra.mxu0 %v1574
      %1973 = vmatmul.f32.gmra.mxu0 %v1921
      %v1974 = vpop.f32.mrf.mxu0
      %v1975 = vadd.f32 0.0, %v1974
      %1976 = vmatmul.f32.gmra.mxu0 %v1924
      %v1977 = vpop.f32.mrf.mxu0
      %v1978 = vadd.f32 0.0, %v1977
      %1979 = vmatmul.f32.gmra.mxu0 %v1927
      %v1980 = vpop.f32.mrf.mxu0
      %v1981 = vadd.f32 0.0, %v1980
      %1982 = vmatmul.f32.gmra.mxu0 %v1930
      %v1983 = vpop.f32.mrf.mxu0
      %v1984 = vadd.f32 0.0, %v1983
      %1985 = vmatmul.f32.gmra.mxu0 %v1933
      %v1986 = vpop.f32.mrf.mxu0
      %v1987 = vadd.f32 0.0, %v1986
      %1988 = vmatmul.f32.gmra.mxu0 %v1936
      %v1989 = vpop.f32.mrf.mxu0
      %v1990 = vadd.f32 0.0, %v1989
      %1991 = vmatmul.f32.gmra.mxu0 %v1939
      %v1992 = vpop.f32.mrf.mxu0
      %v1993 = vadd.f32 0.0, %v1992
      %1994 = vmatmul.f32.gmra.mxu0 %v1942
      %v1995 = vpop.f32.mrf.mxu0
      %v1996 = vadd.f32 0.0, %v1995
      %1997 = vmatmul.f32.gmra.mxu0 %v1945
      %v1998 = vpop.f32.mrf.mxu0
      %v1999 = vadd.f32 0.0, %v1998
      %2000 = vmatmul.f32.gmra.mxu0 %v1948
      %v2001 = vpop.f32.mrf.mxu0
      %v2002 = vadd.f32 0.0, %v2001
      %2003 = vmatmul.f32.gmra.mxu0 %v1951
      %v2004 = vpop.f32.mrf.mxu0
      %v2005 = vadd.f32 0.0, %v2004
      %2006 = vdwg.mxu0
      %v2008 = vsel %vm1741, %v1975, 0
      %v2011 = vsel %vm1741, %v1978, 0
      %v2014 = vsel %vm1741, %v1981, 0
      %v2017 = vsel %vm1741, %v1984, 0
      %v2020 = vsel %vm1741, %v1987, 0
      %v2023 = vsel %vm1741, %v1990, 0
      %v2026 = vsel %vm1741, %v1993, 0
      %v2029 = vsel %vm1741, %v1996, 0
      %v2032 = vsel %vm1741, %v1999, 0
      %v2035 = vsel %vm1741, %v2002, 0
      %v2038 = vsel %vm1741, %v2005, 0
      %2040 = vmatpush.msra.mxu0 0.0
      %2041 = vmatpush.msra.mxu0 0.0
      %2042 = vmatpush.msra.mxu0 0.0
      %2043 = vmatpush.msra.mxu0 0.0
      %2044 = vmatpush.msra.mxu0 %v1652
      %2045 = vmatpush.msra.mxu0 %v1651
      %2046 = vmatpush.msra.mxu0 %v1650
      %2047 = vmatpush.msra.mxu0 %v1649
      %2048 = vmatpush.msra.mxu0 %v1648
      %2049 = vmatpush.msra.mxu0 %v1647
      %2050 = vmatpush.msra.mxu0 %v1646
      %2051 = vmatpush.msra.mxu0 %v1645
      %2052 = vmatpush.msra.mxu0 %v1644
      %2053 = vmatpush.msra.mxu0 %v1643
      %2054 = vmatpush.msra.mxu0 %v1642
      %2055 = vmatpush.msra.mxu0 %v1641
      %2056 = vmatmul.f32.gmra.mxu0 %v2008
      %v2057 = vpop.f32.mrf.mxu0
      %v2058 = vadd.f32 0.0, %v2057
      %2059 = vmatmul.f32.gmra.mxu0 %v2011
      %v2060 = vpop.f32.mrf.mxu0
      %v2061 = vadd.f32 0.0, %v2060
      %2062 = vmatmul.f32.gmra.mxu0 %v2014
      %v2063 = vpop.f32.mrf.mxu0
      %v2064 = vadd.f32 0.0, %v2063
      %2065 = vmatmul.f32.gmra.mxu0 %v2017
      %v2066 = vpop.f32.mrf.mxu0
      %v2067 = vadd.f32 0.0, %v2066
      %2068 = vmatmul.f32.gmra.mxu0 %v2020
      %v2069 = vpop.f32.mrf.mxu0
      %v2070 = vadd.f32 0.0, %v2069
      %2071 = vmatmul.f32.gmra.mxu0 %v2023
      %v2072 = vpop.f32.mrf.mxu0
      %v2073 = vadd.f32 0.0, %v2072
      %2074 = vmatmul.f32.gmra.mxu0 %v2026
      %v2075 = vpop.f32.mrf.mxu0
      %v2076 = vadd.f32 0.0, %v2075
      %2077 = vmatmul.f32.gmra.mxu0 %v2029
      %v2078 = vpop.f32.mrf.mxu0
      %v2079 = vadd.f32 0.0, %v2078
      %2080 = vmatmul.f32.gmra.mxu0 %v2032
      %v2081 = vpop.f32.mrf.mxu0
      %v2082 = vadd.f32 0.0, %v2081
      %2083 = vmatmul.f32.gmra.mxu0 %v2035
      %v2084 = vpop.f32.mrf.mxu0
      %v2085 = vadd.f32 0.0, %v2084
      %2086 = vmatmul.f32.gmra.mxu0 %v2038
      %v2087 = vpop.f32.mrf.mxu0
      %v2088 = vadd.f32 0.0, %v2087
      %2089 = vdwg.mxu0
      %v2091 = vsel %vm1741, %v1887, 0
      %v2094 = vsel %vm1741, %v1890, 0
      %v2097 = vsel %vm1741, %v1893, 0
      %v2100 = vsel %vm1741, %v1896, 0
      %v2103 = vsel %vm1741, %v1899, 0
      %v2106 = vsel %vm1741, %v1902, 0
      %v2109 = vsel %vm1741, %v1905, 0
      %v2112 = vsel %vm1741, %v1908, 0
      %v2115 = vsel %vm1741, %v1911, 0
      %v2118 = vsel %vm1741, %v1914, 0
      %v2121 = vsel %vm1741, %v1917, 0
      %2123 = vmatpush.msra.mxu0 0.0
      %2124 = vmatpush.msra.mxu0 0.0
      %2125 = vmatpush.msra.mxu0 0.0
      %2126 = vmatpush.msra.mxu0 0.0
      %2127 = vmatpush.msra.mxu0 %v1639
      %2128 = vmatpush.msra.mxu0 %v1638
      %2129 = vmatpush.msra.mxu0 %v1637
      %2130 = vmatpush.msra.mxu0 %v1636
      %2131 = vmatpush.msra.mxu0 %v1635
      %2132 = vmatpush.msra.mxu0 %v1634
      %2133 = vmatpush.msra.mxu0 %v1633
      %2134 = vmatpush.msra.mxu0 %v1632
      %2135 = vmatpush.msra.mxu0 %v1631
      %2136 = vmatpush.msra.mxu0 %v1630
      %2137 = vmatpush.msra.mxu0 %v1629
      %2138 = vmatpush.msra.mxu0 %v1628
      %2139 = vmatmul.f32.gmra.mxu0 %v2091
      %v2140 = vpop.f32.mrf.mxu0
      %v2141 = vadd.f32 %v2058, %v2140
      %2142 = vmatmul.f32.gmra.mxu0 %v2094
      %v2143 = vpop.f32.mrf.mxu0
      %v2144 = vadd.f32 %v2061, %v2143
      %2145 = vmatmul.f32.gmra.mxu0 %v2097
      %v2146 = vpop.f32.mrf.mxu0
      %v2147 = vadd.f32 %v2064, %v2146
      %2148 = vmatmul.f32.gmra.mxu0 %v2100
      %v2149 = vpop.f32.mrf.mxu0
      %v2150 = vadd.f32 %v2067, %v2149
      %2151 = vmatmul.f32.gmra.mxu0 %v2103
      %v2152 = vpop.f32.mrf.mxu0
      %v2153 = vadd.f32 %v2070, %v2152
      %2154 = vmatmul.f32.gmra.mxu0 %v2106
      %v2155 = vpop.f32.mrf.mxu0
      %v2156 = vadd.f32 %v2073, %v2155
      %2157 = vmatmul.f32.gmra.mxu0 %v2109
      %v2158 = vpop.f32.mrf.mxu0
      %v2159 = vadd.f32 %v2076, %v2158
      %2160 = vmatmul.f32.gmra.mxu0 %v2112
      %v2161 = vpop.f32.mrf.mxu0
      %v2162 = vadd.f32 %v2079, %v2161
      %2163 = vmatmul.f32.gmra.mxu0 %v2115
      %v2164 = vpop.f32.mrf.mxu0
      %v2165 = vadd.f32 %v2082, %v2164
      %2166 = vmatmul.f32.gmra.mxu0 %v2118
      %v2167 = vpop.f32.mrf.mxu0
      %v2168 = vadd.f32 %v2085, %v2167
      %2169 = vmatmul.f32.gmra.mxu0 %v2121
      %v2170 = vpop.f32.mrf.mxu0
      %v2171 = vadd.f32 %v2088, %v2170
      %2172 = vdwg.mxu0
      %v2173 = vxor.u32 %v2141, 2147483648
      %v2174 = vxor.u32 %v2144, 2147483648
      %v2175 = vxor.u32 %v2147, 2147483648
      %v2176 = vxor.u32 %v2150, 2147483648
      %v2177 = vxor.u32 %v2153, 2147483648
      %v2178 = vxor.u32 %v2156, 2147483648
      %v2179 = vxor.u32 %v2159, 2147483648
      %v2180 = vxor.u32 %v2162, 2147483648
      %v2181 = vxor.u32 %v2165, 2147483648
      %v2182 = vxor.u32 %v2168, 2147483648
      %v2183 = vxor.u32 %v2171, 2147483648
      %v2184 = vmul.f32 %v2173, 1.442695
      %v2185 = vpow.pop %v2184
      %v2186 = vmul.f32 %v2174, 1.442695
      %v2187 = vpow.pop %v2186
      %v2188 = vmul.f32 %v2175, 1.442695
      %v2189 = vpow.pop %v2188
      %v2190 = vmul.f32 %v2176, 1.442695
      %v2191 = vpow.pop %v2190
      %v2192 = vmul.f32 %v2177, 1.442695
      %v2193 = vpow.pop %v2192
      %v2194 = vmul.f32 %v2178, 1.442695
      %v2195 = vpow.pop %v2194
      %v2196 = vmul.f32 %v2179, 1.442695
      %v2197 = vpow.pop %v2196
      %v2198 = vmul.f32 %v2180, 1.442695
      %v2199 = vpow.pop %v2198
      %v2200 = vmul.f32 %v2181, 1.442695
      %v2201 = vpow.pop %v2200
      %v2202 = vmul.f32 %v2182, 1.442695
      %v2203 = vpow.pop %v2202
      %v2204 = vmul.f32 %v2183, 1.442695
      %v2205 = vpow.pop %v2204
      %v2206 = vadd.f32 %v2185, 1.0
      %v2207 = vadd.f32 %v2187, 1.0
      %v2208 = vadd.f32 %v2189, 1.0
      %v2209 = vadd.f32 %v2191, 1.0
      %v2210 = vadd.f32 %v2193, 1.0
      %v2211 = vadd.f32 %v2195, 1.0
      %v2212 = vadd.f32 %v2197, 1.0
      %v2213 = vadd.f32 %v2199, 1.0
      %v2214 = vadd.f32 %v2201, 1.0
      %v2215 = vadd.f32 %v2203, 1.0
      %v2216 = vadd.f32 %v2205, 1.0
      %v2217 = vrcp.pop %v2206
      %v2218 = vmul.f32 %v2206, %v2217
      %v2219 = vsub.f32 1.0, %v2218
      %v2220 = vmul.f32 %v2217, %v2219
      %v2221 = vadd.f32 %v2217, %v2220
      %vm2222 = vweird.f32 %v2206
      %vm2223 = vweird.f32 %v2217
      %vm2224 = vmor %vm2222, %vm2223
      %v2225 = vsel %vm2224, %v2217, %v2221
      %v2226 = vand.u32 2147483647, %v2206
      %vm2227 = vcmp.eq.f32.partialorder %v2226, 8.507059e+37
      %v2228 = vand.u32 %v2206, 2147483648
      %v2229 = vor.u32 1.1754944e-38, %v2228
      %v2230 = vsel %vm2227, %v2229, %v2225
      %v2231 = vmul.f32 1.0, %v2230
      %v2232 = vrcp.pop %v2207
      %v2233 = vmul.f32 %v2207, %v2232
      %v2234 = vsub.f32 1.0, %v2233
      %v2235 = vmul.f32 %v2232, %v2234
      %v2236 = vadd.f32 %v2232, %v2235
      %vm2237 = vweird.f32 %v2207
      %vm2238 = vweird.f32 %v2232
      %vm2239 = vmor %vm2237, %vm2238
      %v2240 = vsel %vm2239, %v2232, %v2236
      %v2241 = vand.u32 2147483647, %v2207
      %vm2242 = vcmp.eq.f32.partialorder %v2241, 8.507059e+37
      %v2243 = vand.u32 %v2207, 2147483648
      %v2244 = vor.u32 1.1754944e-38, %v2243
      %v2245 = vsel %vm2242, %v2244, %v2240
      %v2246 = vmul.f32 1.0, %v2245
      %v2247 = vrcp.pop %v2208
      %v2248 = vmul.f32 %v2208, %v2247
      %v2249 = vsub.f32 1.0, %v2248
      %v2250 = vmul.f32 %v2247, %v2249
      %v2251 = vadd.f32 %v2247, %v2250
      %vm2252 = vweird.f32 %v2208
      %vm2253 = vweird.f32 %v2247
      %vm2254 = vmor %vm2252, %vm2253
      %v2255 = vsel %vm2254, %v2247, %v2251
      %v2256 = vand.u32 2147483647, %v2208
      %vm2257 = vcmp.eq.f32.partialorder %v2256, 8.507059e+37
      %v2258 = vand.u32 %v2208, 2147483648
      %v2259 = vor.u32 1.1754944e-38, %v2258
      %v2260 = vsel %vm2257, %v2259, %v2255
      %v2261 = vmul.f32 1.0, %v2260
      %v2262 = vrcp.pop %v2209
      %v2263 = vmul.f32 %v2209, %v2262
      %v2264 = vsub.f32 1.0, %v2263
      %v2265 = vmul.f32 %v2262, %v2264
      %v2266 = vadd.f32 %v2262, %v2265
      %vm2267 = vweird.f32 %v2209
      %vm2268 = vweird.f32 %v2262
      %vm2269 = vmor %vm2267, %vm2268
      %v2270 = vsel %vm2269, %v2262, %v2266
      %v2271 = vand.u32 2147483647, %v2209
      %vm2272 = vcmp.eq.f32.partialorder %v2271, 8.507059e+37
      %v2273 = vand.u32 %v2209, 2147483648
      %v2274 = vor.u32 1.1754944e-38, %v2273
      %v2275 = vsel %vm2272, %v2274, %v2270
      %v2276 = vmul.f32 1.0, %v2275
      %v2277 = vrcp.pop %v2210
      %v2278 = vmul.f32 %v2210, %v2277
      %v2279 = vsub.f32 1.0, %v2278
      %v2280 = vmul.f32 %v2277, %v2279
      %v2281 = vadd.f32 %v2277, %v2280
      %vm2282 = vweird.f32 %v2210
      %vm2283 = vweird.f32 %v2277
      %vm2284 = vmor %vm2282, %vm2283
      %v2285 = vsel %vm2284, %v2277, %v2281
      %v2286 = vand.u32 2147483647, %v2210
      %vm2287 = vcmp.eq.f32.partialorder %v2286, 8.507059e+37
      %v2288 = vand.u32 %v2210, 2147483648
      %v2289 = vor.u32 1.1754944e-38, %v2288
      %v2290 = vsel %vm2287, %v2289, %v2285
      %v2291 = vmul.f32 1.0, %v2290
      %v2292 = vrcp.pop %v2211
      %v2293 = vmul.f32 %v2211, %v2292
      %v2294 = vsub.f32 1.0, %v2293
      %v2295 = vmul.f32 %v2292, %v2294
      %v2296 = vadd.f32 %v2292, %v2295
      %vm2297 = vweird.f32 %v2211
      %vm2298 = vweird.f32 %v2292
      %vm2299 = vmor %vm2297, %vm2298
      %v2300 = vsel %vm2299, %v2292, %v2296
      %v2301 = vand.u32 2147483647, %v2211
      %vm2302 = vcmp.eq.f32.partialorder %v2301, 8.507059e+37
      %v2303 = vand.u32 %v2211, 2147483648
      %v2304 = vor.u32 1.1754944e-38, %v2303
      %v2305 = vsel %vm2302, %v2304, %v2300
      %v2306 = vmul.f32 1.0, %v2305
      %v2307 = vrcp.pop %v2212
      %v2308 = vmul.f32 %v2212, %v2307
      %v2309 = vsub.f32 1.0, %v2308
      %v2310 = vmul.f32 %v2307, %v2309
      %v2311 = vadd.f32 %v2307, %v2310
      %vm2312 = vweird.f32 %v2212
      %vm2313 = vweird.f32 %v2307
      %vm2314 = vmor %vm2312, %vm2313
      %v2315 = vsel %vm2314, %v2307, %v2311
      %v2316 = vand.u32 2147483647, %v2212
      %vm2317 = vcmp.eq.f32.partialorder %v2316, 8.507059e+37
      %v2318 = vand.u32 %v2212, 2147483648
      %v2319 = vor.u32 1.1754944e-38, %v2318
      %v2320 = vsel %vm2317, %v2319, %v2315
      %v2321 = vmul.f32 1.0, %v2320
      %v2322 = vrcp.pop %v2213
      %v2323 = vmul.f32 %v2213, %v2322
      %v2324 = vsub.f32 1.0, %v2323
      %v2325 = vmul.f32 %v2322, %v2324
      %v2326 = vadd.f32 %v2322, %v2325
      %vm2327 = vweird.f32 %v2213
      %vm2328 = vweird.f32 %v2322
      %vm2329 = vmor %vm2327, %vm2328
      %v2330 = vsel %vm2329, %v2322, %v2326
      %v2331 = vand.u32 2147483647, %v2213
      %vm2332 = vcmp.eq.f32.partialorder %v2331, 8.507059e+37
      %v2333 = vand.u32 %v2213, 2147483648
      %v2334 = vor.u32 1.1754944e-38, %v2333
      %v2335 = vsel %vm2332, %v2334, %v2330
      %v2336 = vmul.f32 1.0, %v2335
      %v2337 = vrcp.pop %v2214
      %v2338 = vmul.f32 %v2214, %v2337
      %v2339 = vsub.f32 1.0, %v2338
      %v2340 = vmul.f32 %v2337, %v2339
      %v2341 = vadd.f32 %v2337, %v2340
      %vm2342 = vweird.f32 %v2214
      %vm2343 = vweird.f32 %v2337
      %vm2344 = vmor %vm2342, %vm2343
      %v2345 = vsel %vm2344, %v2337, %v2341
      %v2346 = vand.u32 2147483647, %v2214
      %vm2347 = vcmp.eq.f32.partialorder %v2346, 8.507059e+37
      %v2348 = vand.u32 %v2214, 2147483648
      %v2349 = vor.u32 1.1754944e-38, %v2348
      %v2350 = vsel %vm2347, %v2349, %v2345
      %v2351 = vmul.f32 1.0, %v2350
      %v2352 = vrcp.pop %v2215
      %v2353 = vmul.f32 %v2215, %v2352
      %v2354 = vsub.f32 1.0, %v2353
      %v2355 = vmul.f32 %v2352, %v2354
      %v2356 = vadd.f32 %v2352, %v2355
      %vm2357 = vweird.f32 %v2215
      %vm2358 = vweird.f32 %v2352
      %vm2359 = vmor %vm2357, %vm2358
      %v2360 = vsel %vm2359, %v2352, %v2356
      %v2361 = vand.u32 2147483647, %v2215
      %vm2362 = vcmp.eq.f32.partialorder %v2361, 8.507059e+37
      %v2363 = vand.u32 %v2215, 2147483648
      %v2364 = vor.u32 1.1754944e-38, %v2363
      %v2365 = vsel %vm2362, %v2364, %v2360
      %v2366 = vmul.f32 1.0, %v2365
      %v2367 = vrcp.pop %v2216
      %v2368 = vmul.f32 %v2216, %v2367
      %v2369 = vsub.f32 1.0, %v2368
      %v2370 = vmul.f32 %v2367, %v2369
      %v2371 = vadd.f32 %v2367, %v2370
      %vm2372 = vweird.f32 %v2216
      %vm2373 = vweird.f32 %v2367
      %vm2374 = vmor %vm2372, %vm2373
      %v2375 = vsel %vm2374, %v2367, %v2371
      %v2376 = vand.u32 2147483647, %v2216
      %vm2377 = vcmp.eq.f32.partialorder %v2376, 8.507059e+37
      %v2378 = vand.u32 %v2216, 2147483648
      %v2379 = vor.u32 1.1754944e-38, %v2378
      %v2380 = vsel %vm2377, %v2379, %v2375
      %v2381 = vmul.f32 1.0, %v2380
      %v2382 = vadd.f32 %v1825, %v2231
      %v2383 = vadd.f32 %v1826, %v2246
      %v2384 = vadd.f32 %v1827, %v2261
      %v2385 = vadd.f32 %v1828, %v2276
      %v2386 = vadd.f32 %v1829, %v2291
      %v2387 = vadd.f32 %v1830, %v2306
      %v2388 = vadd.f32 %v1831, %v2321
      %v2389 = vadd.f32 %v1832, %v2336
      %v2390 = vadd.f32 %v1833, %v2351
      %v2391 = vadd.f32 %v1834, %v2366
      %v2392 = vadd.f32 %v1835, %v2381
      %v2393 = vmul.f32 %v2382, 0.5
      %v2394 = vmul.f32 %v2383, 0.5
      %v2395 = vmul.f32 %v2384, 0.5
      %v2396 = vmul.f32 %v2385, 0.5
      %v2397 = vmul.f32 %v2386, 0.5
      %v2398 = vmul.f32 %v2387, 0.5
      %v2399 = vmul.f32 %v2388, 0.5
      %v2400 = vmul.f32 %v2389, 0.5
      %v2401 = vmul.f32 %v2390, 0.5
      %v2402 = vmul.f32 %v2391, 0.5
      %v2403 = vmul.f32 %v2392, 0.5
      %v2404 = vmax.f32 %v2393, 0.0
      %v2405 = vmax.f32 %v2394, 0.0
      %v2406 = vmax.f32 %v2395, 0.0
      %v2407 = vmax.f32 %v2396, 0.0
      %v2408 = vmax.f32 %v2397, 0.0
      %v2409 = vmax.f32 %v2398, 0.0
      %v2410 = vmax.f32 %v2399, 0.0
      %v2411 = vmax.f32 %v2400, 0.0
      %v2412 = vmax.f32 %v2401, 0.0
      %v2413 = vmax.f32 %v2402, 0.0
      %v2414 = vmax.f32 %v2403, 0.0
      %v2415 = vmul.f32 %v2404, 0.9
      %v2416 = vmul.f32 %v2405, 0.9
      %v2417 = vmul.f32 %v2406, 0.9
      %v2418 = vmul.f32 %v2407, 0.9
      %v2419 = vmul.f32 %v2408, 0.9
      %v2420 = vmul.f32 %v2409, 0.9
      %v2421 = vmul.f32 %v2410, 0.9
      %v2422 = vmul.f32 %v2411, 0.9
      %v2423 = vmul.f32 %v2412, 0.9
      %v2424 = vmul.f32 %v2413, 0.9
      %v2425 = vmul.f32 %v2414, 0.9
      %v2426 = vmul.f32 %v1376, 0.1
      %v2427 = vmul.f32 %v1377, 0.1
      %v2428 = vmul.f32 %v1378, 0.1
      %v2429 = vmul.f32 %v1379, 0.1
      %v2430 = vmul.f32 %v1380, 0.1
      %v2431 = vmul.f32 %v1381, 0.1
      %v2432 = vmul.f32 %v1382, 0.1
      %v2433 = vmul.f32 %v1383, 0.1
      %v2434 = vmul.f32 %v1384, 0.1
      %v2435 = vmul.f32 %v1385, 0.1
      %v2436 = vmul.f32 %v1386, 0.1
      %v2437 = vadd.f32 %v2415, %v2426
      %v2438 = vadd.f32 %v2416, %v2427
      %v2439 = vadd.f32 %v2417, %v2428
      %v2440 = vadd.f32 %v2418, %v2429
      %v2441 = vadd.f32 %v2419, %v2430
      %v2442 = vadd.f32 %v2420, %v2431
      %v2443 = vadd.f32 %v2421, %v2432
      %v2444 = vadd.f32 %v2422, %v2433
      %v2445 = vadd.f32 %v2423, %v2434
      %v2446 = vadd.f32 %v2424, %v2435
      %v2447 = vadd.f32 %v2425, %v2436
      %v2448 = vmax.f32 %v2437, 0.0
      %v2449 = vmax.f32 %v2438, 0.0
      %v2450 = vmax.f32 %v2439, 0.0
      %v2451 = vmax.f32 %v2440, 0.0
      %v2452 = vmax.f32 %v2441, 0.0
      %v2453 = vmax.f32 %v2442, 0.0
      %v2454 = vmax.f32 %v2443, 0.0
      %v2455 = vmax.f32 %v2444, 0.0
      %v2456 = vmax.f32 %v2445, 0.0
      %v2457 = vmax.f32 %v2446, 0.0
      %v2458 = vmax.f32 %v2447, 0.0
      %v2459 = vld [vmem:[%s11] sm:$0xff]
      %v2460 = vld [vmem:[%s11 + $0x8] sm:$0xff]
      %v2461 = vld [vmem:[%s11 + $0x10] sm:$0xff]
      %v2462 = vld [vmem:[%s11 + $0x18] sm:$0xff]
      %v2463 = vld [vmem:[%s11 + $0x20] sm:$0xff]
      %v2464 = vld [vmem:[%s11 + $0x28] sm:$0xff]
      %v2465 = vld [vmem:[%s11 + $0x30] sm:$0xff]
      %v2466 = vld [vmem:[%s11 + $0x38] sm:$0xff]
      %v2467 = vld [vmem:[%s11 + $0x40] sm:$0xff]
      %v2468 = vld [vmem:[%s11 + $0x48] sm:$0xff]
      %v2469 = vld [vmem:[%s11 + $0x50] sm:$0xff]
      %v2470 = vld [vmem:[%s11 + $0x58] sm:$0xff]
      %s2471 = scalar_lea.vmem %s11, 96
      %v2472 = vld [vmem:[%s2471] sm:$0xff]
      %v2473 = vld [vmem:[%s2471 + $0x8] sm:$0xff]
      %v2474 = vld [vmem:[%s2471 + $0x10] sm:$0xff]
      %v2475 = vld [vmem:[%s2471 + $0x18] sm:$0xff]
      %v2476 = vld [vmem:[%s2471 + $0x20] sm:$0xff]
      %v2477 = vld [vmem:[%s2471 + $0x28] sm:$0xff]
      %v2478 = vld [vmem:[%s2471 + $0x30] sm:$0xff]
      %v2479 = vld [vmem:[%s2471 + $0x38] sm:$0xff]
      %v2480 = vld [vmem:[%s2471 + $0x40] sm:$0xff]
      %v2481 = vld [vmem:[%s2471 + $0x48] sm:$0xff]
      %v2482 = vld [vmem:[%s2471 + $0x50] sm:$0xff]
      %v2483 = vld [vmem:[%s2471 + $0x58] sm:$0xff]
      %s2484 = scalar_lea.vmem %s11, 192
      %v2485 = vld [vmem:[%s2484] sm:$0xff]
      %v2486 = vld [vmem:[%s2484 + $0x8] sm:$0xff]
      %v2487 = vld [vmem:[%s2484 + $0x10] sm:$0xff]
      %v2488 = vld [vmem:[%s2484 + $0x18] sm:$0xff]
      %v2489 = vld [vmem:[%s2484 + $0x20] sm:$0xff]
      %v2490 = vld [vmem:[%s2484 + $0x28] sm:$0xff]
      %v2491 = vld [vmem:[%s2484 + $0x30] sm:$0xff]
      %v2492 = vld [vmem:[%s2484 + $0x38] sm:$0xff]
      %v2493 = vld [vmem:[%s2484 + $0x40] sm:$0xff]
      %v2494 = vld [vmem:[%s2484 + $0x48] sm:$0xff]
      %v2495 = vld [vmem:[%s2484 + $0x50] sm:$0xff]
      %v2496 = vld [vmem:[%s2484 + $0x58] sm:$0xff]
      %v2498 = vsel %vm1919, %v1609, 0
      %v2501 = vsel %vm1919, %v1610, 0
      %2503 = vmatpush.msra.mxu0 0.0
      %2504 = vmatpush.msra.mxu0 0.0
      %2505 = vmatpush.msra.mxu0 0.0
      %2506 = vmatpush.msra.mxu0 0.0
      %2507 = vmatpush.msra.mxu0 0.0
      %2508 = vmatpush.msra.mxu0 0.0
      %2509 = vmatpush.msra.mxu0 0.0
      %2510 = vmatpush.msra.mxu0 0.0
      %2511 = vmatpush.msra.mxu0 0.0
      %2512 = vmatpush.msra.mxu0 0.0
      %2513 = vmatpush.msra.mxu0 0.0
      %2514 = vmatpush.msra.mxu0 0.0
      %2515 = vmatpush.msra.mxu0 0.0
      %2516 = vmatpush.msra.mxu0 0.0
      %2517 = vmatpush.msra.mxu0 %v1955
      %2518 = vmatpush.msra.mxu0 %v1574
      %2519 = vmatmul.f32.gmra.mxu0 %v2498
      %v2520 = vpop.f32.mrf.mxu0
      %v2521 = vadd.f32 0.0, %v2520
      %2522 = vmatmul.f32.gmra.mxu0 %v2501
      %v2523 = vpop.f32.mrf.mxu0
      %v2524 = vadd.f32 0.0, %v2523
      %2525 = vdwg.mxu0
      %v2527 = vsel %vm1741, %v2521, 0
      %v2530 = vsel %vm1741, %v2524, 0
      %2532 = vmatpush.msra.mxu0 0.0
      %2533 = vmatpush.msra.mxu0 0.0
      %2534 = vmatpush.msra.mxu0 0.0
      %2535 = vmatpush.msra.mxu0 0.0
      %2536 = vmatpush.msra.mxu0 %v2470
      %2537 = vmatpush.msra.mxu0 %v2469
      %2538 = vmatpush.msra.mxu0 %v2468
      %2539 = vmatpush.msra.mxu0 %v2467
      %2540 = vmatpush.msra.mxu0 %v2466
      %2541 = vmatpush.msra.mxu0 %v2465
      %2542 = vmatpush.msra.mxu0 %v2464
      %2543 = vmatpush.msra.mxu0 %v2463
      %2544 = vmatpush.msra.mxu0 %v2462
      %2545 = vmatpush.msra.mxu0 %v2461
      %2546 = vmatpush.msra.mxu0 %v2460
      %2547 = vmatpush.msra.mxu0 %v2459
      %2548 = vmatmul.f32.gmra.mxu0 %v2527
      %v2549 = vpop.f32.mrf.mxu0
      %v2550 = vadd.f32 0.0, %v2549
      %2551 = vmatmul.f32.gmra.mxu0 %v2530
      %v2552 = vpop.f32.mrf.mxu0
      %v2553 = vadd.f32 0.0, %v2552
      %2554 = vdwg.mxu0
      %v2555 = vmax.f32 %v2550, 0.0
      %v2556 = vmax.f32 %v2553, 0.0
      %v2558 = vsel %vm1919, %v1611, 0
      %v2561 = vsel %vm1919, %v1612, 0
      %2563 = vmatpush.msra.mxu0 0.0
      %2564 = vmatpush.msra.mxu0 0.0
      %2565 = vmatpush.msra.mxu0 0.0
      %2566 = vmatpush.msra.mxu0 0.0
      %2567 = vmatpush.msra.mxu0 0.0
      %2568 = vmatpush.msra.mxu0 0.0
      %2569 = vmatpush.msra.mxu0 0.0
      %2570 = vmatpush.msra.mxu0 0.0
      %2571 = vmatpush.msra.mxu0 0.0
      %2572 = vmatpush.msra.mxu0 0.0
      %2573 = vmatpush.msra.mxu0 0.0
      %2574 = vmatpush.msra.mxu0 0.0
      %2575 = vmatpush.msra.mxu0 0.0
      %2576 = vmatpush.msra.mxu0 0.0
      %2577 = vmatpush.msra.mxu0 %v1955
      %2578 = vmatpush.msra.mxu0 %v1574
      %2579 = vmatmul.f32.gmra.mxu0 %v2558
      %v2580 = vpop.f32.mrf.mxu0
      %v2581 = vadd.f32 0.0, %v2580
      %2582 = vmatmul.f32.gmra.mxu0 %v2561
      %v2583 = vpop.f32.mrf.mxu0
      %v2584 = vadd.f32 0.0, %v2583
      %2585 = vdwg.mxu0
      %v2587 = vsel %vm1653, %v1613, 0
      %v2590 = vsel %vm1653, %v1614, 0
      %v2593 = vsel %vm1687, %v2458, 0
      %2595 = vmatpush.msra.mxu0 0.0
      %2596 = vmatpush.msra.mxu0 0.0
      %2597 = vmatpush.msra.mxu0 0.0
      %2598 = vmatpush.msra.mxu0 0.0
      %2599 = vmatpush.msra.mxu0 0.0
      %2600 = vmatpush.msra.mxu0 %v2593
      %2601 = vmatpush.msra.mxu0 %v2457
      %2602 = vmatpush.msra.mxu0 %v2456
      %2603 = vmatpush.msra.mxu0 %v2455
      %2604 = vmatpush.msra.mxu0 %v2454
      %2605 = vmatpush.msra.mxu0 %v2453
      %2606 = vmatpush.msra.mxu0 %v2452
      %2607 = vmatpush.msra.mxu0 %v2451
      %2608 = vmatpush.msra.mxu0 %v2450
      %2609 = vmatpush.msra.mxu0 %v2449
      %2610 = vmatpush.msra.mxu0 %v2448
      %2611 = vmatmul.f32.gmra.mxu0 %v2587
      %v2612 = vpop.f32.mrf.mxu0
      %v2613 = vadd.f32 0.0, %v2612
      %2614 = vmatmul.f32.gmra.mxu0 %v2590
      %v2615 = vpop.f32.mrf.mxu0
      %v2616 = vadd.f32 0.0, %v2615
      %2617 = vdwg.mxu0
      %v2619 = vsel %vm1741, %v2613, 0
      %v2622 = vsel %vm1741, %v2616, 0
      %2624 = vmatpush.msra.mxu0 0.0
      %2625 = vmatpush.msra.mxu0 0.0
      %2626 = vmatpush.msra.mxu0 0.0
      %2627 = vmatpush.msra.mxu0 0.0
      %2628 = vmatpush.msra.mxu0 %v2496
      %2629 = vmatpush.msra.mxu0 %v2495
      %2630 = vmatpush.msra.mxu0 %v2494
      %2631 = vmatpush.msra.mxu0 %v2493
      %2632 = vmatpush.msra.mxu0 %v2492
      %2633 = vmatpush.msra.mxu0 %v2491
      %2634 = vmatpush.msra.mxu0 %v2490
      %2635 = vmatpush.msra.mxu0 %v2489
      %2636 = vmatpush.msra.mxu0 %v2488
      %2637 = vmatpush.msra.mxu0 %v2487
      %2638 = vmatpush.msra.mxu0 %v2486
      %2639 = vmatpush.msra.mxu0 %v2485
      %2640 = vmatmul.f32.gmra.mxu0 %v2619
      %v2641 = vpop.f32.mrf.mxu0
      %v2642 = vadd.f32 0.0, %v2641
      %2643 = vmatmul.f32.gmra.mxu0 %v2622
      %v2644 = vpop.f32.mrf.mxu0
      %v2645 = vadd.f32 0.0, %v2644
      %2646 = vdwg.mxu0
      %v2648 = vsel %vm1741, %v2581, 0
      %v2651 = vsel %vm1741, %v2584, 0
      %2653 = vmatpush.msra.mxu0 0.0
      %2654 = vmatpush.msra.mxu0 0.0
      %2655 = vmatpush.msra.mxu0 0.0
      %2656 = vmatpush.msra.mxu0 0.0
      %2657 = vmatpush.msra.mxu0 %v2483
      %2658 = vmatpush.msra.mxu0 %v2482
      %2659 = vmatpush.msra.mxu0 %v2481
      %2660 = vmatpush.msra.mxu0 %v2480
      %2661 = vmatpush.msra.mxu0 %v2479
      %2662 = vmatpush.msra.mxu0 %v2478
      %2663 = vmatpush.msra.mxu0 %v2477
      %2664 = vmatpush.msra.mxu0 %v2476
      %2665 = vmatpush.msra.mxu0 %v2475
      %2666 = vmatpush.msra.mxu0 %v2474
      %2667 = vmatpush.msra.mxu0 %v2473
      %2668 = vmatpush.msra.mxu0 %v2472
      %2669 = vmatmul.f32.gmra.mxu0 %v2648
      %v2670 = vpop.f32.mrf.mxu0
      %v2671 = vadd.f32 %v2642, %v2670
      %2672 = vmatmul.f32.gmra.mxu0 %v2651
      %v2673 = vpop.f32.mrf.mxu0
      %v2674 = vadd.f32 %v2645, %v2673
      %2675 = vdwg.mxu0
      %v2676 = vxor.u32 %v2671, 2147483648
      %v2677 = vxor.u32 %v2674, 2147483648
      %v2678 = vmul.f32 %v2676, 1.442695
      %v2679 = vpow.pop %v2678
      %v2680 = vmul.f32 %v2677, 1.442695
      %v2681 = vpow.pop %v2680
      %v2682 = vadd.f32 %v2679, 1.0
      %v2683 = vadd.f32 %v2681, 1.0
      %v2684 = vrcp.pop %v2682
      %v2685 = vmul.f32 %v2682, %v2684
      %v2686 = vsub.f32 1.0, %v2685
      %v2687 = vmul.f32 %v2684, %v2686
      %v2688 = vadd.f32 %v2684, %v2687
      %vm2689 = vweird.f32 %v2682
      %vm2690 = vweird.f32 %v2684
      %vm2691 = vmor %vm2689, %vm2690
      %v2692 = vsel %vm2691, %v2684, %v2688
      %v2693 = vand.u32 2147483647, %v2682
      %vm2694 = vcmp.eq.f32.partialorder %v2693, 8.507059e+37
      %v2695 = vand.u32 %v2682, 2147483648
      %v2696 = vor.u32 1.1754944e-38, %v2695
      %v2697 = vsel %vm2694, %v2696, %v2692
      %v2698 = vmul.f32 1.0, %v2697
      %v2699 = vrcp.pop %v2683
      %v2700 = vmul.f32 %v2683, %v2699
      %v2701 = vsub.f32 1.0, %v2700
      %v2702 = vmul.f32 %v2699, %v2701
      %v2703 = vadd.f32 %v2699, %v2702
      %vm2704 = vweird.f32 %v2683
      %vm2705 = vweird.f32 %v2699
      %vm2706 = vmor %vm2704, %vm2705
      %v2707 = vsel %vm2706, %v2699, %v2703
      %v2708 = vand.u32 2147483647, %v2683
      %vm2709 = vcmp.eq.f32.partialorder %v2708, 8.507059e+37
      %v2710 = vand.u32 %v2683, 2147483648
      %v2711 = vor.u32 1.1754944e-38, %v2710
      %v2712 = vsel %vm2709, %v2711, %v2707
      %v2713 = vmul.f32 1.0, %v2712
      %v2714 = vadd.f32 %v2555, %v2698
      %v2715 = vadd.f32 %v2556, %v2713
      %v2716 = vmul.f32 %v2714, 0.5
      %v2717 = vmul.f32 %v2715, 0.5
      %v2718 = vmax.f32 %v2716, 0.0
      %v2719 = vmax.f32 %v2717, 0.0
      %v2720 = vmul.f32 %v2718, 0.9
      %v2721 = vmul.f32 %v2719, 0.9
      %v2722 = vmul.f32 %v1574, 0.1
      %v2723 = vmul.f32 %v1575, 0.1
      %v2724 = vadd.f32 %v2720, %v2722
      %v2725 = vadd.f32 %v2721, %v2723
      %v2726 = vmax.f32 %v2724, 0.0
      %v2727 = vmax.f32 %v2725, 0.0
      %s2728 = scalar_lea.vmem %s10, 288
      %v2729 = vld [vmem:[%s2728] sm:$0xff]
      %v2730 = vld [vmem:[%s2728 + $0x8] sm:$0xff]
      %v2731 = vld [vmem:[%s2728 + $0x10] sm:$0xff]
      %v2732 = vld [vmem:[%s2728 + $0x18] sm:$0xff]
      %v2733 = vld [vmem:[%s2728 + $0x20] sm:$0xff]
      %v2734 = vld [vmem:[%s2728 + $0x28] sm:$0xff]
      %v2735 = vld [vmem:[%s2728 + $0x30] sm:$0xff]
      %v2736 = vld [vmem:[%s2728 + $0x38] sm:$0xff]
      %v2737 = vld [vmem:[%s2728 + $0x40] sm:$0xff]
      %v2738 = vld [vmem:[%s2728 + $0x48] sm:$0xff]
      %v2739 = vld [vmem:[%s2728 + $0x50] sm:$0xff]
      %v2740 = vld [vmem:[%s2728 + $0x58] sm:$0xff]
      %s2741 = scalar_lea.vmem %s10, 384
      %v2742 = vld [vmem:[%s2741] sm:$0xff]
      %v2743 = vld [vmem:[%s2741 + $0x8] sm:$0xff]
      %v2744 = vld [vmem:[%s2741 + $0x10] sm:$0xff]
      %v2745 = vld [vmem:[%s2741 + $0x18] sm:$0xff]
      %v2746 = vld [vmem:[%s2741 + $0x20] sm:$0xff]
      %v2747 = vld [vmem:[%s2741 + $0x28] sm:$0xff]
      %v2748 = vld [vmem:[%s2741 + $0x30] sm:$0xff]
      %v2749 = vld [vmem:[%s2741 + $0x38] sm:$0xff]
      %v2750 = vld [vmem:[%s2741 + $0x40] sm:$0xff]
      %v2751 = vld [vmem:[%s2741 + $0x48] sm:$0xff]
      %v2752 = vld [vmem:[%s2741 + $0x50] sm:$0xff]
      %v2753 = vld [vmem:[%s2741 + $0x58] sm:$0xff]
      %s2754 = scalar_lea.vmem %s10, 480
      %v2755 = vld [vmem:[%s2754] sm:$0xff]
      %v2756 = vld [vmem:[%s2754 + $0x8] sm:$0xff]
      %v2757 = vld [vmem:[%s2754 + $0x10] sm:$0xff]
      %v2758 = vld [vmem:[%s2754 + $0x18] sm:$0xff]
      %v2759 = vld [vmem:[%s2754 + $0x20] sm:$0xff]
      %v2760 = vld [vmem:[%s2754 + $0x28] sm:$0xff]
      %v2761 = vld [vmem:[%s2754 + $0x30] sm:$0xff]
      %v2762 = vld [vmem:[%s2754 + $0x38] sm:$0xff]
      %v2763 = vld [vmem:[%s2754 + $0x40] sm:$0xff]
      %v2764 = vld [vmem:[%s2754 + $0x48] sm:$0xff]
      %v2765 = vld [vmem:[%s2754 + $0x50] sm:$0xff]
      %v2766 = vld [vmem:[%s2754 + $0x58] sm:$0xff]
      %2767 = vmatpush.msra.mxu0 0.0
      %2768 = vmatpush.msra.mxu0 0.0
      %2769 = vmatpush.msra.mxu0 0.0
      %2770 = vmatpush.msra.mxu0 0.0
      %2771 = vmatpush.msra.mxu0 0.0
      %2772 = vmatpush.msra.mxu0 %v2593
      %2773 = vmatpush.msra.mxu0 %v2457
      %2774 = vmatpush.msra.mxu0 %v2456
      %2775 = vmatpush.msra.mxu0 %v2455
      %2776 = vmatpush.msra.mxu0 %v2454
      %2777 = vmatpush.msra.mxu0 %v2453
      %2778 = vmatpush.msra.mxu0 %v2452
      %2779 = vmatpush.msra.mxu0 %v2451
      %2780 = vmatpush.msra.mxu0 %v2450
      %2781 = vmatpush.msra.mxu0 %v2449
      %2782 = vmatpush.msra.mxu0 %v2448
      %2783 = vmatmul.f32.gmra.mxu0 %v1655
      %v2784 = vpop.f32.mrf.mxu0
      %v2785 = vadd.f32 0.0, %v2784
      %2786 = vmatmul.f32.gmra.mxu0 %v1658
      %v2787 = vpop.f32.mrf.mxu0
      %v2788 = vadd.f32 0.0, %v2787
      %2789 = vmatmul.f32.gmra.mxu0 %v1661
      %v2790 = vpop.f32.mrf.mxu0
      %v2791 = vadd.f32 0.0, %v2790
      %2792 = vmatmul.f32.gmra.mxu0 %v1664
      %v2793 = vpop.f32.mrf.mxu0
      %v2794 = vadd.f32 0.0, %v2793
      %2795 = vmatmul.f32.gmra.mxu0 %v1667
      %v2796 = vpop.f32.mrf.mxu0
      %v2797 = vadd.f32 0.0, %v2796
      %2798 = vmatmul.f32.gmra.mxu0 %v1670
      %v2799 = vpop.f32.mrf.mxu0
      %v2800 = vadd.f32 0.0, %v2799
      %2801 = vmatmul.f32.gmra.mxu0 %v1673
      %v2802 = vpop.f32.mrf.mxu0
      %v2803 = vadd.f32 0.0, %v2802
      %2804 = vmatmul.f32.gmra.mxu0 %v1676
      %v2805 = vpop.f32.mrf.mxu0
      %v2806 = vadd.f32 0.0, %v2805
      %2807 = vmatmul.f32.gmra.mxu0 %v1679
      %v2808 = vpop.f32.mrf.mxu0
      %v2809 = vadd.f32 0.0, %v2808
      %2810 = vmatmul.f32.gmra.mxu0 %v1682
      %v2811 = vpop.f32.mrf.mxu0
      %v2812 = vadd.f32 0.0, %v2811
      %2813 = vmatmul.f32.gmra.mxu0 %v1685
      %v2814 = vpop.f32.mrf.mxu0
      %v2815 = vadd.f32 0.0, %v2814
      %2816 = vdwg.mxu0
      %v2818 = vsel %vm1741, %v2785, 0
      %v2821 = vsel %vm1741, %v2788, 0
      %v2824 = vsel %vm1741, %v2791, 0
      %v2827 = vsel %vm1741, %v2794, 0
      %v2830 = vsel %vm1741, %v2797, 0
      %v2833 = vsel %vm1741, %v2800, 0
      %v2836 = vsel %vm1741, %v2803, 0
      %v2839 = vsel %vm1741, %v2806, 0
      %v2842 = vsel %vm1741, %v2809, 0
      %v2845 = vsel %vm1741, %v2812, 0
      %v2848 = vsel %vm1741, %v2815, 0
      %2850 = vmatpush.msra.mxu0 0.0
      %2851 = vmatpush.msra.mxu0 0.0
      %2852 = vmatpush.msra.mxu0 0.0
      %2853 = vmatpush.msra.mxu0 0.0
      %2854 = vmatpush.msra.mxu0 %v2740
      %2855 = vmatpush.msra.mxu0 %v2739
      %2856 = vmatpush.msra.mxu0 %v2738
      %2857 = vmatpush.msra.mxu0 %v2737
      %2858 = vmatpush.msra.mxu0 %v2736
      %2859 = vmatpush.msra.mxu0 %v2735
      %2860 = vmatpush.msra.mxu0 %v2734
      %2861 = vmatpush.msra.mxu0 %v2733
      %2862 = vmatpush.msra.mxu0 %v2732
      %2863 = vmatpush.msra.mxu0 %v2731
      %2864 = vmatpush.msra.mxu0 %v2730
      %2865 = vmatpush.msra.mxu0 %v2729
      %2866 = vmatmul.f32.gmra.mxu0 %v2818
      %v2867 = vpop.f32.mrf.mxu0
      %v2868 = vadd.f32 0.0, %v2867
      %2869 = vmatmul.f32.gmra.mxu0 %v2821
      %v2870 = vpop.f32.mrf.mxu0
      %v2871 = vadd.f32 0.0, %v2870
      %2872 = vmatmul.f32.gmra.mxu0 %v2824
      %v2873 = vpop.f32.mrf.mxu0
      %v2874 = vadd.f32 0.0, %v2873
      %2875 = vmatmul.f32.gmra.mxu0 %v2827
      %v2876 = vpop.f32.mrf.mxu0
      %v2877 = vadd.f32 0.0, %v2876
      %2878 = vmatmul.f32.gmra.mxu0 %v2830
      %v2879 = vpop.f32.mrf.mxu0
      %v2880 = vadd.f32 0.0, %v2879
      %2881 = vmatmul.f32.gmra.mxu0 %v2833
      %v2882 = vpop.f32.mrf.mxu0
      %v2883 = vadd.f32 0.0, %v2882
      %2884 = vmatmul.f32.gmra.mxu0 %v2836
      %v2885 = vpop.f32.mrf.mxu0
      %v2886 = vadd.f32 0.0, %v2885
      %2887 = vmatmul.f32.gmra.mxu0 %v2839
      %v2888 = vpop.f32.mrf.mxu0
      %v2889 = vadd.f32 0.0, %v2888
      %2890 = vmatmul.f32.gmra.mxu0 %v2842
      %v2891 = vpop.f32.mrf.mxu0
      %v2892 = vadd.f32 0.0, %v2891
      %2893 = vmatmul.f32.gmra.mxu0 %v2845
      %v2894 = vpop.f32.mrf.mxu0
      %v2895 = vadd.f32 0.0, %v2894
      %2896 = vmatmul.f32.gmra.mxu0 %v2848
      %v2897 = vpop.f32.mrf.mxu0
      %v2898 = vadd.f32 0.0, %v2897
      %2899 = vdwg.mxu0
      %v2900 = vmax.f32 %v2868, 0.0
      %v2901 = vmax.f32 %v2871, 0.0
      %v2902 = vmax.f32 %v2874, 0.0
      %v2903 = vmax.f32 %v2877, 0.0
      %v2904 = vmax.f32 %v2880, 0.0
      %v2905 = vmax.f32 %v2883, 0.0
      %v2906 = vmax.f32 %v2886, 0.0
      %v2907 = vmax.f32 %v2889, 0.0
      %v2908 = vmax.f32 %v2892, 0.0
      %v2909 = vmax.f32 %v2895, 0.0
      %v2910 = vmax.f32 %v2898, 0.0
      %2911 = vmatpush.msra.mxu0 0.0
      %2912 = vmatpush.msra.mxu0 0.0
      %2913 = vmatpush.msra.mxu0 0.0
      %2914 = vmatpush.msra.mxu0 0.0
      %2915 = vmatpush.msra.mxu0 0.0
      %2916 = vmatpush.msra.mxu0 %v2593
      %2917 = vmatpush.msra.mxu0 %v2457
      %2918 = vmatpush.msra.mxu0 %v2456
      %2919 = vmatpush.msra.mxu0 %v2455
      %2920 = vmatpush.msra.mxu0 %v2454
      %2921 = vmatpush.msra.mxu0 %v2453
      %2922 = vmatpush.msra.mxu0 %v2452
      %2923 = vmatpush.msra.mxu0 %v2451
      %2924 = vmatpush.msra.mxu0 %v2450
      %2925 = vmatpush.msra.mxu0 %v2449
      %2926 = vmatpush.msra.mxu0 %v2448
      %2927 = vmatmul.f32.gmra.mxu0 %v1837
      %v2928 = vpop.f32.mrf.mxu0
      %v2929 = vadd.f32 0.0, %v2928
      %2930 = vmatmul.f32.gmra.mxu0 %v1840
      %v2931 = vpop.f32.mrf.mxu0
      %v2932 = vadd.f32 0.0, %v2931
      %2933 = vmatmul.f32.gmra.mxu0 %v1843
      %v2934 = vpop.f32.mrf.mxu0
      %v2935 = vadd.f32 0.0, %v2934
      %2936 = vmatmul.f32.gmra.mxu0 %v1846
      %v2937 = vpop.f32.mrf.mxu0
      %v2938 = vadd.f32 0.0, %v2937
      %2939 = vmatmul.f32.gmra.mxu0 %v1849
      %v2940 = vpop.f32.mrf.mxu0
      %v2941 = vadd.f32 0.0, %v2940
      %2942 = vmatmul.f32.gmra.mxu0 %v1852
      %v2943 = vpop.f32.mrf.mxu0
      %v2944 = vadd.f32 0.0, %v2943
      %2945 = vmatmul.f32.gmra.mxu0 %v1855
      %v2946 = vpop.f32.mrf.mxu0
      %v2947 = vadd.f32 0.0, %v2946
      %2948 = vmatmul.f32.gmra.mxu0 %v1858
      %v2949 = vpop.f32.mrf.mxu0
      %v2950 = vadd.f32 0.0, %v2949
      %2951 = vmatmul.f32.gmra.mxu0 %v1861
      %v2952 = vpop.f32.mrf.mxu0
      %v2953 = vadd.f32 0.0, %v2952
      %2954 = vmatmul.f32.gmra.mxu0 %v1864
      %v2955 = vpop.f32.mrf.mxu0
      %v2956 = vadd.f32 0.0, %v2955
      %2957 = vmatmul.f32.gmra.mxu0 %v1867
      %v2958 = vpop.f32.mrf.mxu0
      %v2959 = vadd.f32 0.0, %v2958
      %2960 = vdwg.mxu0
      %v2962 = vsel %vm1953, %v2727, 0
      %2964 = vmatpush.msra.mxu0 0.0
      %2965 = vmatpush.msra.mxu0 0.0
      %2966 = vmatpush.msra.mxu0 0.0
      %2967 = vmatpush.msra.mxu0 0.0
      %2968 = vmatpush.msra.mxu0 0.0
      %2969 = vmatpush.msra.mxu0 0.0
      %2970 = vmatpush.msra.mxu0 0.0
      %2971 = vmatpush.msra.mxu0 0.0
      %2972 = vmatpush.msra.mxu0 0.0
      %2973 = vmatpush.msra.mxu0 0.0
      %2974 = vmatpush.msra.mxu0 0.0
      %2975 = vmatpush.msra.mxu0 0.0
      %2976 = vmatpush.msra.mxu0 0.0
      %2977 = vmatpush.msra.mxu0 0.0
      %2978 = vmatpush.msra.mxu0 %v2962
      %2979 = vmatpush.msra.mxu0 %v2726
      %2980 = vmatmul.f32.gmra.mxu0 %v1921
      %v2981 = vpop.f32.mrf.mxu0
      %v2982 = vadd.f32 0.0, %v2981
      %2983 = vmatmul.f32.gmra.mxu0 %v1924
      %v2984 = vpop.f32.mrf.mxu0
      %v2985 = vadd.f32 0.0, %v2984
      %2986 = vmatmul.f32.gmra.mxu0 %v1927
      %v2987 = vpop.f32.mrf.mxu0
      %v2988 = vadd.f32 0.0, %v2987
      %2989 = vmatmul.f32.gmra.mxu0 %v1930
      %v2990 = vpop.f32.mrf.mxu0
      %v2991 = vadd.f32 0.0, %v2990
      %2992 = vmatmul.f32.gmra.mxu0 %v1933
      %v2993 = vpop.f32.mrf.mxu0
      %v2994 = vadd.f32 0.0, %v2993
      %2995 = vmatmul.f32.gmra.mxu0 %v1936
      %v2996 = vpop.f32.mrf.mxu0
      %v2997 = vadd.f32 0.0, %v2996
      %2998 = vmatmul.f32.gmra.mxu0 %v1939
      %v2999 = vpop.f32.mrf.mxu0
      %v3000 = vadd.f32 0.0, %v2999
      %3001 = vmatmul.f32.gmra.mxu0 %v1942
      %v3002 = vpop.f32.mrf.mxu0
      %v3003 = vadd.f32 0.0, %v3002
      %3004 = vmatmul.f32.gmra.mxu0 %v1945
      %v3005 = vpop.f32.mrf.mxu0
      %v3006 = vadd.f32 0.0, %v3005
      %3007 = vmatmul.f32.gmra.mxu0 %v1948
      %v3008 = vpop.f32.mrf.mxu0
      %v3009 = vadd.f32 0.0, %v3008
      %3010 = vmatmul.f32.gmra.mxu0 %v1951
      %v3011 = vpop.f32.mrf.mxu0
      %v3012 = vadd.f32 0.0, %v3011
      %3013 = vdwg.mxu0
      %v3015 = vsel %vm1741, %v2982, 0
      %v3018 = vsel %vm1741, %v2985, 0
      %v3021 = vsel %vm1741, %v2988, 0
      %v3024 = vsel %vm1741, %v2991, 0
      %v3027 = vsel %vm1741, %v2994, 0
      %v3030 = vsel %vm1741, %v2997, 0
      %v3033 = vsel %vm1741, %v3000, 0
      %v3036 = vsel %vm1741, %v3003, 0
      %v3039 = vsel %vm1741, %v3006, 0
      %v3042 = vsel %vm1741, %v3009, 0
      %v3045 = vsel %vm1741, %v3012, 0
      %3047 = vmatpush.msra.mxu0 0.0
      %3048 = vmatpush.msra.mxu0 0.0
      %3049 = vmatpush.msra.mxu0 0.0
      %3050 = vmatpush.msra.mxu0 0.0
      %3051 = vmatpush.msra.mxu0 %v2766
      %3052 = vmatpush.msra.mxu0 %v2765
      %3053 = vmatpush.msra.mxu0 %v2764
      %3054 = vmatpush.msra.mxu0 %v2763
      %3055 = vmatpush.msra.mxu0 %v2762
      %3056 = vmatpush.msra.mxu0 %v2761
      %3057 = vmatpush.msra.mxu0 %v2760
      %3058 = vmatpush.msra.mxu0 %v2759
      %3059 = vmatpush.msra.mxu0 %v2758
      %3060 = vmatpush.msra.mxu0 %v2757
      %3061 = vmatpush.msra.mxu0 %v2756
      %3062 = vmatpush.msra.mxu0 %v2755
      %3063 = vmatmul.f32.gmra.mxu0 %v3015
      %v3064 = vpop.f32.mrf.mxu0
      %v3065 = vadd.f32 0.0, %v3064
      %3066 = vmatmul.f32.gmra.mxu0 %v3018
      %v3067 = vpop.f32.mrf.mxu0
      %v3068 = vadd.f32 0.0, %v3067
      %3069 = vmatmul.f32.gmra.mxu0 %v3021
      %v3070 = vpop.f32.mrf.mxu0
      %v3071 = vadd.f32 0.0, %v3070
      %3072 = vmatmul.f32.gmra.mxu0 %v3024
      %v3073 = vpop.f32.mrf.mxu0
      %v3074 = vadd.f32 0.0, %v3073
      %3075 = vmatmul.f32.gmra.mxu0 %v3027
      %v3076 = vpop.f32.mrf.mxu0
      %v3077 = vadd.f32 0.0, %v3076
      %3078 = vmatmul.f32.gmra.mxu0 %v3030
      %v3079 = vpop.f32.mrf.mxu0
      %v3080 = vadd.f32 0.0, %v3079
      %3081 = vmatmul.f32.gmra.mxu0 %v3033
      %v3082 = vpop.f32.mrf.mxu0
      %v3083 = vadd.f32 0.0, %v3082
      %3084 = vmatmul.f32.gmra.mxu0 %v3036
      %v3085 = vpop.f32.mrf.mxu0
      %v3086 = vadd.f32 0.0, %v3085
      %3087 = vmatmul.f32.gmra.mxu0 %v3039
      %v3088 = vpop.f32.mrf.mxu0
      %v3089 = vadd.f32 0.0, %v3088
      %3090 = vmatmul.f32.gmra.mxu0 %v3042
      %v3091 = vpop.f32.mrf.mxu0
      %v3092 = vadd.f32 0.0, %v3091
      %3093 = vmatmul.f32.gmra.mxu0 %v3045
      %v3094 = vpop.f32.mrf.mxu0
      %v3095 = vadd.f32 0.0, %v3094
      %3096 = vdwg.mxu0
      %v3098 = vsel %vm1741, %v2929, 0
      %v3101 = vsel %vm1741, %v2932, 0
      %v3104 = vsel %vm1741, %v2935, 0
      %v3107 = vsel %vm1741, %v2938, 0
      %v3110 = vsel %vm1741, %v2941, 0
      %v3113 = vsel %vm1741, %v2944, 0
      %v3116 = vsel %vm1741, %v2947, 0
      %v3119 = vsel %vm1741, %v2950, 0
      %v3122 = vsel %vm1741, %v2953, 0
      %v3125 = vsel %vm1741, %v2956, 0
      %v3128 = vsel %vm1741, %v2959, 0
      %3130 = vmatpush.msra.mxu0 0.0
      %3131 = vmatpush.msra.mxu0 0.0
      %3132 = vmatpush.msra.mxu0 0.0
      %3133 = vmatpush.msra.mxu0 0.0
      %3134 = vmatpush.msra.mxu0 %v2753
      %3135 = vmatpush.msra.mxu0 %v2752
      %3136 = vmatpush.msra.mxu0 %v2751
      %3137 = vmatpush.msra.mxu0 %v2750
      %3138 = vmatpush.msra.mxu0 %v2749
      %3139 = vmatpush.msra.mxu0 %v2748
      %3140 = vmatpush.msra.mxu0 %v2747
      %3141 = vmatpush.msra.mxu0 %v2746
      %3142 = vmatpush.msra.mxu0 %v2745
      %3143 = vmatpush.msra.mxu0 %v2744
      %3144 = vmatpush.msra.mxu0 %v2743
      %3145 = vmatpush.msra.mxu0 %v2742
      %3146 = vmatmul.f32.gmra.mxu0 %v3098
      %v3147 = vpop.f32.mrf.mxu0
      %v3148 = vadd.f32 %v3065, %v3147
      %3149 = vmatmul.f32.gmra.mxu0 %v3101
      %v3150 = vpop.f32.mrf.mxu0
      %v3151 = vadd.f32 %v3068, %v3150
      %3152 = vmatmul.f32.gmra.mxu0 %v3104
      %v3153 = vpop.f32.mrf.mxu0
      %v3154 = vadd.f32 %v3071, %v3153
      %3155 = vmatmul.f32.gmra.mxu0 %v3107
      %v3156 = vpop.f32.mrf.mxu0
      %v3157 = vadd.f32 %v3074, %v3156
      %3158 = vmatmul.f32.gmra.mxu0 %v3110
      %v3159 = vpop.f32.mrf.mxu0
      %v3160 = vadd.f32 %v3077, %v3159
      %3161 = vmatmul.f32.gmra.mxu0 %v3113
      %v3162 = vpop.f32.mrf.mxu0
      %v3163 = vadd.f32 %v3080, %v3162
      %3164 = vmatmul.f32.gmra.mxu0 %v3116
      %v3165 = vpop.f32.mrf.mxu0
      %v3166 = vadd.f32 %v3083, %v3165
      %3167 = vmatmul.f32.gmra.mxu0 %v3119
      %v3168 = vpop.f32.mrf.mxu0
      %v3169 = vadd.f32 %v3086, %v3168
      %3170 = vmatmul.f32.gmra.mxu0 %v3122
      %v3171 = vpop.f32.mrf.mxu0
      %v3172 = vadd.f32 %v3089, %v3171
      %3173 = vmatmul.f32.gmra.mxu0 %v3125
      %v3174 = vpop.f32.mrf.mxu0
      %v3175 = vadd.f32 %v3092, %v3174
      %3176 = vmatmul.f32.gmra.mxu0 %v3128
      %v3177 = vpop.f32.mrf.mxu0
      %v3178 = vadd.f32 %v3095, %v3177
      %3179 = vdwg.mxu0
      %v3180 = vxor.u32 %v3148, 2147483648
      %v3181 = vxor.u32 %v3151, 2147483648
      %v3182 = vxor.u32 %v3154, 2147483648
      %v3183 = vxor.u32 %v3157, 2147483648
      %v3184 = vxor.u32 %v3160, 2147483648
      %v3185 = vxor.u32 %v3163, 2147483648
      %v3186 = vxor.u32 %v3166, 2147483648
      %v3187 = vxor.u32 %v3169, 2147483648
      %v3188 = vxor.u32 %v3172, 2147483648
      %v3189 = vxor.u32 %v3175, 2147483648
      %v3190 = vxor.u32 %v3178, 2147483648
      %v3191 = vmul.f32 %v3180, 1.442695
      %v3192 = vpow.pop %v3191
      %v3193 = vmul.f32 %v3181, 1.442695
      %v3194 = vpow.pop %v3193
      %v3195 = vmul.f32 %v3182, 1.442695
      %v3196 = vpow.pop %v3195
      %v3197 = vmul.f32 %v3183, 1.442695
      %v3198 = vpow.pop %v3197
      %v3199 = vmul.f32 %v3184, 1.442695
      %v3200 = vpow.pop %v3199
      %v3201 = vmul.f32 %v3185, 1.442695
      %v3202 = vpow.pop %v3201
      %v3203 = vmul.f32 %v3186, 1.442695
      %v3204 = vpow.pop %v3203
      %v3205 = vmul.f32 %v3187, 1.442695
      %v3206 = vpow.pop %v3205
      %v3207 = vmul.f32 %v3188, 1.442695
      %v3208 = vpow.pop %v3207
      %v3209 = vmul.f32 %v3189, 1.442695
      %v3210 = vpow.pop %v3209
      %v3211 = vmul.f32 %v3190, 1.442695
      %v3212 = vpow.pop %v3211
      %v3213 = vadd.f32 %v3192, 1.0
      %v3214 = vadd.f32 %v3194, 1.0
      %v3215 = vadd.f32 %v3196, 1.0
      %v3216 = vadd.f32 %v3198, 1.0
      %v3217 = vadd.f32 %v3200, 1.0
      %v3218 = vadd.f32 %v3202, 1.0
      %v3219 = vadd.f32 %v3204, 1.0
      %v3220 = vadd.f32 %v3206, 1.0
      %v3221 = vadd.f32 %v3208, 1.0
      %v3222 = vadd.f32 %v3210, 1.0
      %v3223 = vadd.f32 %v3212, 1.0
      %v3224 = vrcp.pop %v3213
      %v3225 = vmul.f32 %v3213, %v3224
      %v3226 = vsub.f32 1.0, %v3225
      %v3227 = vmul.f32 %v3224, %v3226
      %v3228 = vadd.f32 %v3224, %v3227
      %vm3229 = vweird.f32 %v3213
      %vm3230 = vweird.f32 %v3224
      %vm3231 = vmor %vm3229, %vm3230
      %v3232 = vsel %vm3231, %v3224, %v3228
      %v3233 = vand.u32 2147483647, %v3213
      %vm3234 = vcmp.eq.f32.partialorder %v3233, 8.507059e+37
      %v3235 = vand.u32 %v3213, 2147483648
      %v3236 = vor.u32 1.1754944e-38, %v3235
      %v3237 = vsel %vm3234, %v3236, %v3232
      %v3238 = vmul.f32 1.0, %v3237
      %v3239 = vrcp.pop %v3214
      %v3240 = vmul.f32 %v3214, %v3239
      %v3241 = vsub.f32 1.0, %v3240
      %v3242 = vmul.f32 %v3239, %v3241
      %v3243 = vadd.f32 %v3239, %v3242
      %vm3244 = vweird.f32 %v3214
      %vm3245 = vweird.f32 %v3239
      %vm3246 = vmor %vm3244, %vm3245
      %v3247 = vsel %vm3246, %v3239, %v3243
      %v3248 = vand.u32 2147483647, %v3214
      %vm3249 = vcmp.eq.f32.partialorder %v3248, 8.507059e+37
      %v3250 = vand.u32 %v3214, 2147483648
      %v3251 = vor.u32 1.1754944e-38, %v3250
      %v3252 = vsel %vm3249, %v3251, %v3247
      %v3253 = vmul.f32 1.0, %v3252
      %v3254 = vrcp.pop %v3215
      %v3255 = vmul.f32 %v3215, %v3254
      %v3256 = vsub.f32 1.0, %v3255
      %v3257 = vmul.f32 %v3254, %v3256
      %v3258 = vadd.f32 %v3254, %v3257
      %vm3259 = vweird.f32 %v3215
      %vm3260 = vweird.f32 %v3254
      %vm3261 = vmor %vm3259, %vm3260
      %v3262 = vsel %vm3261, %v3254, %v3258
      %v3263 = vand.u32 2147483647, %v3215
      %vm3264 = vcmp.eq.f32.partialorder %v3263, 8.507059e+37
      %v3265 = vand.u32 %v3215, 2147483648
      %v3266 = vor.u32 1.1754944e-38, %v3265
      %v3267 = vsel %vm3264, %v3266, %v3262
      %v3268 = vmul.f32 1.0, %v3267
      %v3269 = vrcp.pop %v3216
      %v3270 = vmul.f32 %v3216, %v3269
      %v3271 = vsub.f32 1.0, %v3270
      %v3272 = vmul.f32 %v3269, %v3271
      %v3273 = vadd.f32 %v3269, %v3272
      %vm3274 = vweird.f32 %v3216
      %vm3275 = vweird.f32 %v3269
      %vm3276 = vmor %vm3274, %vm3275
      %v3277 = vsel %vm3276, %v3269, %v3273
      %v3278 = vand.u32 2147483647, %v3216
      %vm3279 = vcmp.eq.f32.partialorder %v3278, 8.507059e+37
      %v3280 = vand.u32 %v3216, 2147483648
      %v3281 = vor.u32 1.1754944e-38, %v3280
      %v3282 = vsel %vm3279, %v3281, %v3277
      %v3283 = vmul.f32 1.0, %v3282
      %v3284 = vrcp.pop %v3217
      %v3285 = vmul.f32 %v3217, %v3284
      %v3286 = vsub.f32 1.0, %v3285
      %v3287 = vmul.f32 %v3284, %v3286
      %v3288 = vadd.f32 %v3284, %v3287
      %vm3289 = vweird.f32 %v3217
      %vm3290 = vweird.f32 %v3284
      %vm3291 = vmor %vm3289, %vm3290
      %v3292 = vsel %vm3291, %v3284, %v3288
      %v3293 = vand.u32 2147483647, %v3217
      %vm3294 = vcmp.eq.f32.partialorder %v3293, 8.507059e+37
      %v3295 = vand.u32 %v3217, 2147483648
      %v3296 = vor.u32 1.1754944e-38, %v3295
      %v3297 = vsel %vm3294, %v3296, %v3292
      %v3298 = vmul.f32 1.0, %v3297
      %v3299 = vrcp.pop %v3218
      %v3300 = vmul.f32 %v3218, %v3299
      %v3301 = vsub.f32 1.0, %v3300
      %v3302 = vmul.f32 %v3299, %v3301
      %v3303 = vadd.f32 %v3299, %v3302
      %vm3304 = vweird.f32 %v3218
      %vm3305 = vweird.f32 %v3299
      %vm3306 = vmor %vm3304, %vm3305
      %v3307 = vsel %vm3306, %v3299, %v3303
      %v3308 = vand.u32 2147483647, %v3218
      %vm3309 = vcmp.eq.f32.partialorder %v3308, 8.507059e+37
      %v3310 = vand.u32 %v3218, 2147483648
      %v3311 = vor.u32 1.1754944e-38, %v3310
      %v3312 = vsel %vm3309, %v3311, %v3307
      %v3313 = vmul.f32 1.0, %v3312
      %v3314 = vrcp.pop %v3219
      %v3315 = vmul.f32 %v3219, %v3314
      %v3316 = vsub.f32 1.0, %v3315
      %v3317 = vmul.f32 %v3314, %v3316
      %v3318 = vadd.f32 %v3314, %v3317
      %vm3319 = vweird.f32 %v3219
      %vm3320 = vweird.f32 %v3314
      %vm3321 = vmor %vm3319, %vm3320
      %v3322 = vsel %vm3321, %v3314, %v3318
      %v3323 = vand.u32 2147483647, %v3219
      %vm3324 = vcmp.eq.f32.partialorder %v3323, 8.507059e+37
      %v3325 = vand.u32 %v3219, 2147483648
      %v3326 = vor.u32 1.1754944e-38, %v3325
      %v3327 = vsel %vm3324, %v3326, %v3322
      %v3328 = vmul.f32 1.0, %v3327
      %v3329 = vrcp.pop %v3220
      %v3330 = vmul.f32 %v3220, %v3329
      %v3331 = vsub.f32 1.0, %v3330
      %v3332 = vmul.f32 %v3329, %v3331
      %v3333 = vadd.f32 %v3329, %v3332
      %vm3334 = vweird.f32 %v3220
      %vm3335 = vweird.f32 %v3329
      %vm3336 = vmor %vm3334, %vm3335
      %v3337 = vsel %vm3336, %v3329, %v3333
      %v3338 = vand.u32 2147483647, %v3220
      %vm3339 = vcmp.eq.f32.partialorder %v3338, 8.507059e+37
      %v3340 = vand.u32 %v3220, 2147483648
      %v3341 = vor.u32 1.1754944e-38, %v3340
      %v3342 = vsel %vm3339, %v3341, %v3337
      %v3343 = vmul.f32 1.0, %v3342
      %v3344 = vrcp.pop %v3221
      %v3345 = vmul.f32 %v3221, %v3344
      %v3346 = vsub.f32 1.0, %v3345
      %v3347 = vmul.f32 %v3344, %v3346
      %v3348 = vadd.f32 %v3344, %v3347
      %vm3349 = vweird.f32 %v3221
      %vm3350 = vweird.f32 %v3344
      %vm3351 = vmor %vm3349, %vm3350
      %v3352 = vsel %vm3351, %v3344, %v3348
      %v3353 = vand.u32 2147483647, %v3221
      %vm3354 = vcmp.eq.f32.partialorder %v3353, 8.507059e+37
      %v3355 = vand.u32 %v3221, 2147483648
      %v3356 = vor.u32 1.1754944e-38, %v3355
      %v3357 = vsel %vm3354, %v3356, %v3352
      %v3358 = vmul.f32 1.0, %v3357
      %v3359 = vrcp.pop %v3222
      %v3360 = vmul.f32 %v3222, %v3359
      %v3361 = vsub.f32 1.0, %v3360
      %v3362 = vmul.f32 %v3359, %v3361
      %v3363 = vadd.f32 %v3359, %v3362
      %vm3364 = vweird.f32 %v3222
      %vm3365 = vweird.f32 %v3359
      %vm3366 = vmor %vm3364, %vm3365
      %v3367 = vsel %vm3366, %v3359, %v3363
      %v3368 = vand.u32 2147483647, %v3222
      %vm3369 = vcmp.eq.f32.partialorder %v3368, 8.507059e+37
      %v3370 = vand.u32 %v3222, 2147483648
      %v3371 = vor.u32 1.1754944e-38, %v3370
      %v3372 = vsel %vm3369, %v3371, %v3367
      %v3373 = vmul.f32 1.0, %v3372
      %v3374 = vrcp.pop %v3223
      %v3375 = vmul.f32 %v3223, %v3374
      %v3376 = vsub.f32 1.0, %v3375
      %v3377 = vmul.f32 %v3374, %v3376
      %v3378 = vadd.f32 %v3374, %v3377
      %vm3379 = vweird.f32 %v3223
      %vm3380 = vweird.f32 %v3374
      %vm3381 = vmor %vm3379, %vm3380
      %v3382 = vsel %vm3381, %v3374, %v3378
      %v3383 = vand.u32 2147483647, %v3223
      %vm3384 = vcmp.eq.f32.partialorder %v3383, 8.507059e+37
      %v3385 = vand.u32 %v3223, 2147483648
      %v3386 = vor.u32 1.1754944e-38, %v3385
      %v3387 = vsel %vm3384, %v3386, %v3382
      %v3388 = vmul.f32 1.0, %v3387
      %v3389 = vadd.f32 %v2900, %v3238
      %v3390 = vadd.f32 %v2901, %v3253
      %v3391 = vadd.f32 %v2902, %v3268
      %v3392 = vadd.f32 %v2903, %v3283
      %v3393 = vadd.f32 %v2904, %v3298
      %v3394 = vadd.f32 %v2905, %v3313
      %v3395 = vadd.f32 %v2906, %v3328
      %v3396 = vadd.f32 %v2907, %v3343
      %v3397 = vadd.f32 %v2908, %v3358
      %v3398 = vadd.f32 %v2909, %v3373
      %v3399 = vadd.f32 %v2910, %v3388
      %v3400 = vmul.f32 %v3389, 0.5
      %v3401 = vmul.f32 %v3390, 0.5
      %v3402 = vmul.f32 %v3391, 0.5
      %v3403 = vmul.f32 %v3392, 0.5
      %v3404 = vmul.f32 %v3393, 0.5
      %v3405 = vmul.f32 %v3394, 0.5
      %v3406 = vmul.f32 %v3395, 0.5
      %v3407 = vmul.f32 %v3396, 0.5
      %v3408 = vmul.f32 %v3397, 0.5
      %v3409 = vmul.f32 %v3398, 0.5
      %v3410 = vmul.f32 %v3399, 0.5
      %v3411 = vmax.f32 %v3400, 0.0
      %v3412 = vmax.f32 %v3401, 0.0
      %v3413 = vmax.f32 %v3402, 0.0
      %v3414 = vmax.f32 %v3403, 0.0
      %v3415 = vmax.f32 %v3404, 0.0
      %v3416 = vmax.f32 %v3405, 0.0
      %v3417 = vmax.f32 %v3406, 0.0
      %v3418 = vmax.f32 %v3407, 0.0
      %v3419 = vmax.f32 %v3408, 0.0
      %v3420 = vmax.f32 %v3409, 0.0
      %v3421 = vmax.f32 %v3410, 0.0
      %v3422 = vmul.f32 %v3411, 0.9
      %v3423 = vmul.f32 %v3412, 0.9
      %v3424 = vmul.f32 %v3413, 0.9
      %v3425 = vmul.f32 %v3414, 0.9
      %v3426 = vmul.f32 %v3415, 0.9
      %v3427 = vmul.f32 %v3416, 0.9
      %v3428 = vmul.f32 %v3417, 0.9
      %v3429 = vmul.f32 %v3418, 0.9
      %v3430 = vmul.f32 %v3419, 0.9
      %v3431 = vmul.f32 %v3420, 0.9
      %v3432 = vmul.f32 %v3421, 0.9
      %v3433 = vadd.f32 %v3422, %v2426
      %v3434 = vadd.f32 %v3423, %v2427
      %v3435 = vadd.f32 %v3424, %v2428
      %v3436 = vadd.f32 %v3425, %v2429
      %v3437 = vadd.f32 %v3426, %v2430
      %v3438 = vadd.f32 %v3427, %v2431
      %v3439 = vadd.f32 %v3428, %v2432
      %v3440 = vadd.f32 %v3429, %v2433
      %v3441 = vadd.f32 %v3430, %v2434
      %v3442 = vadd.f32 %v3431, %v2435
      %v3443 = vadd.f32 %v3432, %v2436
      %v3444 = vmax.f32 %v3433, 0.0
      %v3445 = vmax.f32 %v3434, 0.0
      %v3446 = vmax.f32 %v3435, 0.0
      %v3447 = vmax.f32 %v3436, 0.0
      %v3448 = vmax.f32 %v3437, 0.0
      %v3449 = vmax.f32 %v3438, 0.0
      %v3450 = vmax.f32 %v3439, 0.0
      %v3451 = vmax.f32 %v3440, 0.0
      %v3452 = vmax.f32 %v3441, 0.0
      %v3453 = vmax.f32 %v3442, 0.0
      %v3454 = vmax.f32 %v3443, 0.0
      %s3455 = scalar_lea.vmem %s11, 288
      %v3456 = vld [vmem:[%s3455] sm:$0xff]
      %v3457 = vld [vmem:[%s3455 + $0x8] sm:$0xff]
      %v3458 = vld [vmem:[%s3455 + $0x10] sm:$0xff]
      %v3459 = vld [vmem:[%s3455 + $0x18] sm:$0xff]
      %v3460 = vld [vmem:[%s3455 + $0x20] sm:$0xff]
      %v3461 = vld [vmem:[%s3455 + $0x28] sm:$0xff]
      %v3462 = vld [vmem:[%s3455 + $0x30] sm:$0xff]
      %v3463 = vld [vmem:[%s3455 + $0x38] sm:$0xff]
      %v3464 = vld [vmem:[%s3455 + $0x40] sm:$0xff]
      %v3465 = vld [vmem:[%s3455 + $0x48] sm:$0xff]
      %v3466 = vld [vmem:[%s3455 + $0x50] sm:$0xff]
      %v3467 = vld [vmem:[%s3455 + $0x58] sm:$0xff]
      %s3468 = scalar_lea.vmem %s11, 384
      %v3469 = vld [vmem:[%s3468] sm:$0xff]
      %v3470 = vld [vmem:[%s3468 + $0x8] sm:$0xff]
      %v3471 = vld [vmem:[%s3468 + $0x10] sm:$0xff]
      %v3472 = vld [vmem:[%s3468 + $0x18] sm:$0xff]
      %v3473 = vld [vmem:[%s3468 + $0x20] sm:$0xff]
      %v3474 = vld [vmem:[%s3468 + $0x28] sm:$0xff]
      %v3475 = vld [vmem:[%s3468 + $0x30] sm:$0xff]
      %v3476 = vld [vmem:[%s3468 + $0x38] sm:$0xff]
      %v3477 = vld [vmem:[%s3468 + $0x40] sm:$0xff]
      %v3478 = vld [vmem:[%s3468 + $0x48] sm:$0xff]
      %v3479 = vld [vmem:[%s3468 + $0x50] sm:$0xff]
      %v3480 = vld [vmem:[%s3468 + $0x58] sm:$0xff]
      %s3481 = scalar_lea.vmem %s11, 480
      %v3482 = vld [vmem:[%s3481] sm:$0xff]
      %v3483 = vld [vmem:[%s3481 + $0x8] sm:$0xff]
      %v3484 = vld [vmem:[%s3481 + $0x10] sm:$0xff]
      %v3485 = vld [vmem:[%s3481 + $0x18] sm:$0xff]
      %v3486 = vld [vmem:[%s3481 + $0x20] sm:$0xff]
      %v3487 = vld [vmem:[%s3481 + $0x28] sm:$0xff]
      %v3488 = vld [vmem:[%s3481 + $0x30] sm:$0xff]
      %v3489 = vld [vmem:[%s3481 + $0x38] sm:$0xff]
      %v3490 = vld [vmem:[%s3481 + $0x40] sm:$0xff]
      %v3491 = vld [vmem:[%s3481 + $0x48] sm:$0xff]
      %v3492 = vld [vmem:[%s3481 + $0x50] sm:$0xff]
      %v3493 = vld [vmem:[%s3481 + $0x58] sm:$0xff]
      %3494 = vmatpush.msra.mxu0 0.0
      %3495 = vmatpush.msra.mxu0 0.0
      %3496 = vmatpush.msra.mxu0 0.0
      %3497 = vmatpush.msra.mxu0 0.0
      %3498 = vmatpush.msra.mxu0 0.0
      %3499 = vmatpush.msra.mxu0 0.0
      %3500 = vmatpush.msra.mxu0 0.0
      %3501 = vmatpush.msra.mxu0 0.0
      %3502 = vmatpush.msra.mxu0 0.0
      %3503 = vmatpush.msra.mxu0 0.0
      %3504 = vmatpush.msra.mxu0 0.0
      %3505 = vmatpush.msra.mxu0 0.0
      %3506 = vmatpush.msra.mxu0 0.0
      %3507 = vmatpush.msra.mxu0 0.0
      %3508 = vmatpush.msra.mxu0 %v2962
      %3509 = vmatpush.msra.mxu0 %v2726
      %3510 = vmatmul.f32.gmra.mxu0 %v2498
      %v3511 = vpop.f32.mrf.mxu0
      %v3512 = vadd.f32 0.0, %v3511
      %3513 = vmatmul.f32.gmra.mxu0 %v2501
      %v3514 = vpop.f32.mrf.mxu0
      %v3515 = vadd.f32 0.0, %v3514
      %3516 = vdwg.mxu0
      %v3518 = vsel %vm1741, %v3512, 0
      %v3521 = vsel %vm1741, %v3515, 0
      %3523 = vmatpush.msra.mxu0 0.0
      %3524 = vmatpush.msra.mxu0 0.0
      %3525 = vmatpush.msra.mxu0 0.0
      %3526 = vmatpush.msra.mxu0 0.0
      %3527 = vmatpush.msra.mxu0 %v3467
      %3528 = vmatpush.msra.mxu0 %v3466
      %3529 = vmatpush.msra.mxu0 %v3465
      %3530 = vmatpush.msra.mxu0 %v3464
      %3531 = vmatpush.msra.mxu0 %v3463
      %3532 = vmatpush.msra.mxu0 %v3462
      %3533 = vmatpush.msra.mxu0 %v3461
      %3534 = vmatpush.msra.mxu0 %v3460
      %3535 = vmatpush.msra.mxu0 %v3459
      %3536 = vmatpush.msra.mxu0 %v3458
      %3537 = vmatpush.msra.mxu0 %v3457
      %3538 = vmatpush.msra.mxu0 %v3456
      %3539 = vmatmul.f32.gmra.mxu0 %v3518
      %v3540 = vpop.f32.mrf.mxu0
      %v3541 = vadd.f32 0.0, %v3540
      %3542 = vmatmul.f32.gmra.mxu0 %v3521
      %v3543 = vpop.f32.mrf.mxu0
      %v3544 = vadd.f32 0.0, %v3543
      %3545 = vdwg.mxu0
      %v3546 = vmax.f32 %v3541, 0.0
      %v3547 = vmax.f32 %v3544, 0.0
      %3548 = vmatpush.msra.mxu0 0.0
      %3549 = vmatpush.msra.mxu0 0.0
      %3550 = vmatpush.msra.mxu0 0.0
      %3551 = vmatpush.msra.mxu0 0.0
      %3552 = vmatpush.msra.mxu0 0.0
      %3553 = vmatpush.msra.mxu0 0.0
      %3554 = vmatpush.msra.mxu0 0.0
      %3555 = vmatpush.msra.mxu0 0.0
      %3556 = vmatpush.msra.mxu0 0.0
      %3557 = vmatpush.msra.mxu0 0.0
      %3558 = vmatpush.msra.mxu0 0.0
      %3559 = vmatpush.msra.mxu0 0.0
      %3560 = vmatpush.msra.mxu0 0.0
      %3561 = vmatpush.msra.mxu0 0.0
      %3562 = vmatpush.msra.mxu0 %v2962
      %3563 = vmatpush.msra.mxu0 %v2726
      %3564 = vmatmul.f32.gmra.mxu0 %v2558
      %v3565 = vpop.f32.mrf.mxu0
      %v3566 = vadd.f32 0.0, %v3565
      %3567 = vmatmul.f32.gmra.mxu0 %v2561
      %v3568 = vpop.f32.mrf.mxu0
      %v3569 = vadd.f32 0.0, %v3568
      %3570 = vdwg.mxu0
      %v3572 = vsel %vm1687, %v3454, 0
      %3574 = vmatpush.msra.mxu0 0.0
      %3575 = vmatpush.msra.mxu0 0.0
      %3576 = vmatpush.msra.mxu0 0.0
      %3577 = vmatpush.msra.mxu0 0.0
      %3578 = vmatpush.msra.mxu0 0.0
      %3579 = vmatpush.msra.mxu0 %v3572
      %3580 = vmatpush.msra.mxu0 %v3453
      %3581 = vmatpush.msra.mxu0 %v3452
      %3582 = vmatpush.msra.mxu0 %v3451
      %3583 = vmatpush.msra.mxu0 %v3450
      %3584 = vmatpush.msra.mxu0 %v3449
      %3585 = vmatpush.msra.mxu0 %v3448
      %3586 = vmatpush.msra.mxu0 %v3447
      %3587 = vmatpush.msra.mxu0 %v3446
      %3588 = vmatpush.msra.mxu0 %v3445
      %3589 = vmatpush.msra.mxu0 %v3444
      %3590 = vmatmul.f32.gmra.mxu0 %v2587
      %v3591 = vpop.f32.mrf.mxu0
      %v3592 = vadd.f32 0.0, %v3591
      %3593 = vmatmul.f32.gmra.mxu0 %v2590
      %v3594 = vpop.f32.mrf.mxu0
      %v3595 = vadd.f32 0.0, %v3594
      %3596 = vdwg.mxu0
      %v3598 = vsel %vm1741, %v3592, 0
      %v3601 = vsel %vm1741, %v3595, 0
      %3603 = vmatpush.msra.mxu0 0.0
      %3604 = vmatpush.msra.mxu0 0.0
      %3605 = vmatpush.msra.mxu0 0.0
      %3606 = vmatpush.msra.mxu0 0.0
      %3607 = vmatpush.msra.mxu0 %v3493
      %3608 = vmatpush.msra.mxu0 %v3492
      %3609 = vmatpush.msra.mxu0 %v3491
      %3610 = vmatpush.msra.mxu0 %v3490
      %3611 = vmatpush.msra.mxu0 %v3489
      %3612 = vmatpush.msra.mxu0 %v3488
      %3613 = vmatpush.msra.mxu0 %v3487
      %3614 = vmatpush.msra.mxu0 %v3486
      %3615 = vmatpush.msra.mxu0 %v3485
      %3616 = vmatpush.msra.mxu0 %v3484
      %3617 = vmatpush.msra.mxu0 %v3483
      %3618 = vmatpush.msra.mxu0 %v3482
      %3619 = vmatmul.f32.gmra.mxu0 %v3598
      %v3620 = vpop.f32.mrf.mxu0
      %v3621 = vadd.f32 0.0, %v3620
      %3622 = vmatmul.f32.gmra.mxu0 %v3601
      %v3623 = vpop.f32.mrf.mxu0
      %v3624 = vadd.f32 0.0, %v3623
      %3625 = vdwg.mxu0
      %v3627 = vsel %vm1741, %v3566, 0
      %v3630 = vsel %vm1741, %v3569, 0
      %3632 = vmatpush.msra.mxu0 0.0
      %3633 = vmatpush.msra.mxu0 0.0
      %3634 = vmatpush.msra.mxu0 0.0
      %3635 = vmatpush.msra.mxu0 0.0
      %3636 = vmatpush.msra.mxu0 %v3480
      %3637 = vmatpush.msra.mxu0 %v3479
      %3638 = vmatpush.msra.mxu0 %v3478
      %3639 = vmatpush.msra.mxu0 %v3477
      %3640 = vmatpush.msra.mxu0 %v3476
      %3641 = vmatpush.msra.mxu0 %v3475
      %3642 = vmatpush.msra.mxu0 %v3474
      %3643 = vmatpush.msra.mxu0 %v3473
      %3644 = vmatpush.msra.mxu0 %v3472
      %3645 = vmatpush.msra.mxu0 %v3471
      %3646 = vmatpush.msra.mxu0 %v3470
      %3647 = vmatpush.msra.mxu0 %v3469
      %3648 = vmatmul.f32.gmra.mxu0 %v3627
      %v3649 = vpop.f32.mrf.mxu0
      %v3650 = vadd.f32 %v3621, %v3649
      %3651 = vmatmul.f32.gmra.mxu0 %v3630
      %v3652 = vpop.f32.mrf.mxu0
      %v3653 = vadd.f32 %v3624, %v3652
      %3654 = vdwg.mxu0
      %v3655 = vxor.u32 %v3650, 2147483648
      %v3656 = vxor.u32 %v3653, 2147483648
      %v3657 = vmul.f32 %v3655, 1.442695
      %v3658 = vpow.pop %v3657
      %v3659 = vmul.f32 %v3656, 1.442695
      %v3660 = vpow.pop %v3659
      %v3661 = vadd.f32 %v3658, 1.0
      %v3662 = vadd.f32 %v3660, 1.0
      %v3663 = vrcp.pop %v3661
      %v3664 = vmul.f32 %v3661, %v3663
      %v3665 = vsub.f32 1.0, %v3664
      %v3666 = vmul.f32 %v3663, %v3665
      %v3667 = vadd.f32 %v3663, %v3666
      %vm3668 = vweird.f32 %v3661
      %vm3669 = vweird.f32 %v3663
      %vm3670 = vmor %vm3668, %vm3669
      %v3671 = vsel %vm3670, %v3663, %v3667
      %v3672 = vand.u32 2147483647, %v3661
      %vm3673 = vcmp.eq.f32.partialorder %v3672, 8.507059e+37
      %v3674 = vand.u32 %v3661, 2147483648
      %v3675 = vor.u32 1.1754944e-38, %v3674
      %v3676 = vsel %vm3673, %v3675, %v3671
      %v3677 = vmul.f32 1.0, %v3676
      %v3678 = vrcp.pop %v3662
      %v3679 = vmul.f32 %v3662, %v3678
      %v3680 = vsub.f32 1.0, %v3679
      %v3681 = vmul.f32 %v3678, %v3680
      %v3682 = vadd.f32 %v3678, %v3681
      %vm3683 = vweird.f32 %v3662
      %vm3684 = vweird.f32 %v3678
      %vm3685 = vmor %vm3683, %vm3684
      %v3686 = vsel %vm3685, %v3678, %v3682
      %v3687 = vand.u32 2147483647, %v3662
      %vm3688 = vcmp.eq.f32.partialorder %v3687, 8.507059e+37
      %v3689 = vand.u32 %v3662, 2147483648
      %v3690 = vor.u32 1.1754944e-38, %v3689
      %v3691 = vsel %vm3688, %v3690, %v3686
      %v3692 = vmul.f32 1.0, %v3691
      %v3693 = vadd.f32 %v3546, %v3677
      %v3694 = vadd.f32 %v3547, %v3692
      %v3695 = vmul.f32 %v3693, 0.5
      %v3696 = vmul.f32 %v3694, 0.5
      %v3697 = vmax.f32 %v3695, 0.0
      %v3698 = vmax.f32 %v3696, 0.0
      %v3699 = vmul.f32 %v3697, 0.9
      %v3700 = vmul.f32 %v3698, 0.9
      %v3701 = vadd.f32 %v3699, %v2722
      %v3702 = vadd.f32 %v3700, %v2723
      %v3703 = vmax.f32 %v3701, 0.0
      %v3704 = vmax.f32 %v3702, 0.0
      %s3705 = scalar_lea.vmem %s10, 576
      %v3706 = vld [vmem:[%s3705] sm:$0xff]
      %v3707 = vld [vmem:[%s3705 + $0x8] sm:$0xff]
      %v3708 = vld [vmem:[%s3705 + $0x10] sm:$0xff]
      %v3709 = vld [vmem:[%s3705 + $0x18] sm:$0xff]
      %v3710 = vld [vmem:[%s3705 + $0x20] sm:$0xff]
      %v3711 = vld [vmem:[%s3705 + $0x28] sm:$0xff]
      %v3712 = vld [vmem:[%s3705 + $0x30] sm:$0xff]
      %v3713 = vld [vmem:[%s3705 + $0x38] sm:$0xff]
      %v3714 = vld [vmem:[%s3705 + $0x40] sm:$0xff]
      %v3715 = vld [vmem:[%s3705 + $0x48] sm:$0xff]
      %v3716 = vld [vmem:[%s3705 + $0x50] sm:$0xff]
      %v3717 = vld [vmem:[%s3705 + $0x58] sm:$0xff]
      %s3718 = scalar_lea.vmem %s10, 672
      %v3719 = vld [vmem:[%s3718] sm:$0xff]
      %v3720 = vld [vmem:[%s3718 + $0x8] sm:$0xff]
      %v3721 = vld [vmem:[%s3718 + $0x10] sm:$0xff]
      %v3722 = vld [vmem:[%s3718 + $0x18] sm:$0xff]
      %v3723 = vld [vmem:[%s3718 + $0x20] sm:$0xff]
      %v3724 = vld [vmem:[%s3718 + $0x28] sm:$0xff]
      %v3725 = vld [vmem:[%s3718 + $0x30] sm:$0xff]
      %v3726 = vld [vmem:[%s3718 + $0x38] sm:$0xff]
      %v3727 = vld [vmem:[%s3718 + $0x40] sm:$0xff]
      %v3728 = vld [vmem:[%s3718 + $0x48] sm:$0xff]
      %v3729 = vld [vmem:[%s3718 + $0x50] sm:$0xff]
      %v3730 = vld [vmem:[%s3718 + $0x58] sm:$0xff]
      %s3731 = scalar_lea.vmem %s10, 768
      %v3732 = vld [vmem:[%s3731] sm:$0xff]
      %v3733 = vld [vmem:[%s3731 + $0x8] sm:$0xff]
      %v3734 = vld [vmem:[%s3731 + $0x10] sm:$0xff]
      %v3735 = vld [vmem:[%s3731 + $0x18] sm:$0xff]
      %v3736 = vld [vmem:[%s3731 + $0x20] sm:$0xff]
      %v3737 = vld [vmem:[%s3731 + $0x28] sm:$0xff]
      %v3738 = vld [vmem:[%s3731 + $0x30] sm:$0xff]
      %v3739 = vld [vmem:[%s3731 + $0x38] sm:$0xff]
      %v3740 = vld [vmem:[%s3731 + $0x40] sm:$0xff]
      %v3741 = vld [vmem:[%s3731 + $0x48] sm:$0xff]
      %v3742 = vld [vmem:[%s3731 + $0x50] sm:$0xff]
      %v3743 = vld [vmem:[%s3731 + $0x58] sm:$0xff]
      %3744 = vmatpush.msra.mxu0 0.0
      %3745 = vmatpush.msra.mxu0 0.0
      %3746 = vmatpush.msra.mxu0 0.0
      %3747 = vmatpush.msra.mxu0 0.0
      %3748 = vmatpush.msra.mxu0 0.0
      %3749 = vmatpush.msra.mxu0 %v3572
      %3750 = vmatpush.msra.mxu0 %v3453
      %3751 = vmatpush.msra.mxu0 %v3452
      %3752 = vmatpush.msra.mxu0 %v3451
      %3753 = vmatpush.msra.mxu0 %v3450
      %3754 = vmatpush.msra.mxu0 %v3449
      %3755 = vmatpush.msra.mxu0 %v3448
      %3756 = vmatpush.msra.mxu0 %v3447
      %3757 = vmatpush.msra.mxu0 %v3446
      %3758 = vmatpush.msra.mxu0 %v3445
      %3759 = vmatpush.msra.mxu0 %v3444
      %3760 = vmatmul.f32.gmra.mxu0 %v1655
      %v3761 = vpop.f32.mrf.mxu0
      %v3762 = vadd.f32 0.0, %v3761
      %3763 = vmatmul.f32.gmra.mxu0 %v1658
      %v3764 = vpop.f32.mrf.mxu0
      %v3765 = vadd.f32 0.0, %v3764
      %3766 = vmatmul.f32.gmra.mxu0 %v1661
      %v3767 = vpop.f32.mrf.mxu0
      %v3768 = vadd.f32 0.0, %v3767
      %3769 = vmatmul.f32.gmra.mxu0 %v1664
      %v3770 = vpop.f32.mrf.mxu0
      %v3771 = vadd.f32 0.0, %v3770
      %3772 = vmatmul.f32.gmra.mxu0 %v1667
      %v3773 = vpop.f32.mrf.mxu0
      %v3774 = vadd.f32 0.0, %v3773
      %3775 = vmatmul.f32.gmra.mxu0 %v1670
      %v3776 = vpop.f32.mrf.mxu0
      %v3777 = vadd.f32 0.0, %v3776
      %3778 = vmatmul.f32.gmra.mxu0 %v1673
      %v3779 = vpop.f32.mrf.mxu0
      %v3780 = vadd.f32 0.0, %v3779
      %3781 = vmatmul.f32.gmra.mxu0 %v1676
      %v3782 = vpop.f32.mrf.mxu0
      %v3783 = vadd.f32 0.0, %v3782
      %3784 = vmatmul.f32.gmra.mxu0 %v1679
      %v3785 = vpop.f32.mrf.mxu0
      %v3786 = vadd.f32 0.0, %v3785
      %3787 = vmatmul.f32.gmra.mxu0 %v1682
      %v3788 = vpop.f32.mrf.mxu0
      %v3789 = vadd.f32 0.0, %v3788
      %3790 = vmatmul.f32.gmra.mxu0 %v1685
      %v3791 = vpop.f32.mrf.mxu0
      %v3792 = vadd.f32 0.0, %v3791
      %3793 = vdwg.mxu0
      %v3795 = vsel %vm1741, %v3762, 0
      %v3798 = vsel %vm1741, %v3765, 0
      %v3801 = vsel %vm1741, %v3768, 0
      %v3804 = vsel %vm1741, %v3771, 0
      %v3807 = vsel %vm1741, %v3774, 0
      %v3810 = vsel %vm1741, %v3777, 0
      %v3813 = vsel %vm1741, %v3780, 0
      %v3816 = vsel %vm1741, %v3783, 0
      %v3819 = vsel %vm1741, %v3786, 0
      %v3822 = vsel %vm1741, %v3789, 0
      %v3825 = vsel %vm1741, %v3792, 0
      %3827 = vmatpush.msra.mxu0 0.0
      %3828 = vmatpush.msra.mxu0 0.0
      %3829 = vmatpush.msra.mxu0 0.0
      %3830 = vmatpush.msra.mxu0 0.0
      %3831 = vmatpush.msra.mxu0 %v3717
      %3832 = vmatpush.msra.mxu0 %v3716
      %3833 = vmatpush.msra.mxu0 %v3715
      %3834 = vmatpush.msra.mxu0 %v3714
      %3835 = vmatpush.msra.mxu0 %v3713
      %3836 = vmatpush.msra.mxu0 %v3712
      %3837 = vmatpush.msra.mxu0 %v3711
      %3838 = vmatpush.msra.mxu0 %v3710
      %3839 = vmatpush.msra.mxu0 %v3709
      %3840 = vmatpush.msra.mxu0 %v3708
      %3841 = vmatpush.msra.mxu0 %v3707
      %3842 = vmatpush.msra.mxu0 %v3706
      %3843 = vmatmul.f32.gmra.mxu0 %v3795
      %v3844 = vpop.f32.mrf.mxu0
      %v3845 = vadd.f32 0.0, %v3844
      %3846 = vmatmul.f32.gmra.mxu0 %v3798
      %v3847 = vpop.f32.mrf.mxu0
      %v3848 = vadd.f32 0.0, %v3847
      %3849 = vmatmul.f32.gmra.mxu0 %v3801
      %v3850 = vpop.f32.mrf.mxu0
      %v3851 = vadd.f32 0.0, %v3850
      %3852 = vmatmul.f32.gmra.mxu0 %v3804
      %v3853 = vpop.f32.mrf.mxu0
      %v3854 = vadd.f32 0.0, %v3853
      %3855 = vmatmul.f32.gmra.mxu0 %v3807
      %v3856 = vpop.f32.mrf.mxu0
      %v3857 = vadd.f32 0.0, %v3856
      %3858 = vmatmul.f32.gmra.mxu0 %v3810
      %v3859 = vpop.f32.mrf.mxu0
      %v3860 = vadd.f32 0.0, %v3859
      %3861 = vmatmul.f32.gmra.mxu0 %v3813
      %v3862 = vpop.f32.mrf.mxu0
      %v3863 = vadd.f32 0.0, %v3862
      %3864 = vmatmul.f32.gmra.mxu0 %v3816
      %v3865 = vpop.f32.mrf.mxu0
      %v3866 = vadd.f32 0.0, %v3865
      %3867 = vmatmul.f32.gmra.mxu0 %v3819
      %v3868 = vpop.f32.mrf.mxu0
      %v3869 = vadd.f32 0.0, %v3868
      %3870 = vmatmul.f32.gmra.mxu0 %v3822
      %v3871 = vpop.f32.mrf.mxu0
      %v3872 = vadd.f32 0.0, %v3871
      %3873 = vmatmul.f32.gmra.mxu0 %v3825
      %v3874 = vpop.f32.mrf.mxu0
      %v3875 = vadd.f32 0.0, %v3874
      %3876 = vdwg.mxu0
      %v3877 = vmax.f32 %v3845, 0.0
      %v3878 = vmax.f32 %v3848, 0.0
      %v3879 = vmax.f32 %v3851, 0.0
      %v3880 = vmax.f32 %v3854, 0.0
      %v3881 = vmax.f32 %v3857, 0.0
      %v3882 = vmax.f32 %v3860, 0.0
      %v3883 = vmax.f32 %v3863, 0.0
      %v3884 = vmax.f32 %v3866, 0.0
      %v3885 = vmax.f32 %v3869, 0.0
      %v3886 = vmax.f32 %v3872, 0.0
      %v3887 = vmax.f32 %v3875, 0.0
      %3888 = vmatpush.msra.mxu0 0.0
      %3889 = vmatpush.msra.mxu0 0.0
      %3890 = vmatpush.msra.mxu0 0.0
      %3891 = vmatpush.msra.mxu0 0.0
      %3892 = vmatpush.msra.mxu0 0.0
      %3893 = vmatpush.msra.mxu0 %v3572
      %3894 = vmatpush.msra.mxu0 %v3453
      %3895 = vmatpush.msra.mxu0 %v3452
      %3896 = vmatpush.msra.mxu0 %v3451
      %3897 = vmatpush.msra.mxu0 %v3450
      %3898 = vmatpush.msra.mxu0 %v3449
      %3899 = vmatpush.msra.mxu0 %v3448
      %3900 = vmatpush.msra.mxu0 %v3447
      %3901 = vmatpush.msra.mxu0 %v3446
      %3902 = vmatpush.msra.mxu0 %v3445
      %3903 = vmatpush.msra.mxu0 %v3444
      %3904 = vmatmul.f32.gmra.mxu0 %v1837
      %v3905 = vpop.f32.mrf.mxu0
      %v3906 = vadd.f32 0.0, %v3905
      %3907 = vmatmul.f32.gmra.mxu0 %v1840
      %v3908 = vpop.f32.mrf.mxu0
      %v3909 = vadd.f32 0.0, %v3908
      %3910 = vmatmul.f32.gmra.mxu0 %v1843
      %v3911 = vpop.f32.mrf.mxu0
      %v3912 = vadd.f32 0.0, %v3911
      %3913 = vmatmul.f32.gmra.mxu0 %v1846
      %v3914 = vpop.f32.mrf.mxu0
      %v3915 = vadd.f32 0.0, %v3914
      %3916 = vmatmul.f32.gmra.mxu0 %v1849
      %v3917 = vpop.f32.mrf.mxu0
      %v3918 = vadd.f32 0.0, %v3917
      %3919 = vmatmul.f32.gmra.mxu0 %v1852
      %v3920 = vpop.f32.mrf.mxu0
      %v3921 = vadd.f32 0.0, %v3920
      %3922 = vmatmul.f32.gmra.mxu0 %v1855
      %v3923 = vpop.f32.mrf.mxu0
      %v3924 = vadd.f32 0.0, %v3923
      %3925 = vmatmul.f32.gmra.mxu0 %v1858
      %v3926 = vpop.f32.mrf.mxu0
      %v3927 = vadd.f32 0.0, %v3926
      %3928 = vmatmul.f32.gmra.mxu0 %v1861
      %v3929 = vpop.f32.mrf.mxu0
      %v3930 = vadd.f32 0.0, %v3929
      %3931 = vmatmul.f32.gmra.mxu0 %v1864
      %v3932 = vpop.f32.mrf.mxu0
      %v3933 = vadd.f32 0.0, %v3932
      %3934 = vmatmul.f32.gmra.mxu0 %v1867
      %v3935 = vpop.f32.mrf.mxu0
      %v3936 = vadd.f32 0.0, %v3935
      %3937 = vdwg.mxu0
      %v3939 = vsel %vm1953, %v3704, 0
      %3941 = vmatpush.msra.mxu0 0.0
      %3942 = vmatpush.msra.mxu0 0.0
      %3943 = vmatpush.msra.mxu0 0.0
      %3944 = vmatpush.msra.mxu0 0.0
      %3945 = vmatpush.msra.mxu0 0.0
      %3946 = vmatpush.msra.mxu0 0.0
      %3947 = vmatpush.msra.mxu0 0.0
      %3948 = vmatpush.msra.mxu0 0.0
      %3949 = vmatpush.msra.mxu0 0.0
      %3950 = vmatpush.msra.mxu0 0.0
      %3951 = vmatpush.msra.mxu0 0.0
      %3952 = vmatpush.msra.mxu0 0.0
      %3953 = vmatpush.msra.mxu0 0.0
      %3954 = vmatpush.msra.mxu0 0.0
      %3955 = vmatpush.msra.mxu0 %v3939
      %3956 = vmatpush.msra.mxu0 %v3703
      %3957 = vmatmul.f32.gmra.mxu0 %v1921
      %v3958 = vpop.f32.mrf.mxu0
      %v3959 = vadd.f32 0.0, %v3958
      %3960 = vmatmul.f32.gmra.mxu0 %v1924
      %v3961 = vpop.f32.mrf.mxu0
      %v3962 = vadd.f32 0.0, %v3961
      %3963 = vmatmul.f32.gmra.mxu0 %v1927
      %v3964 = vpop.f32.mrf.mxu0
      %v3965 = vadd.f32 0.0, %v3964
      %3966 = vmatmul.f32.gmra.mxu0 %v1930
      %v3967 = vpop.f32.mrf.mxu0
      %v3968 = vadd.f32 0.0, %v3967
      %3969 = vmatmul.f32.gmra.mxu0 %v1933
      %v3970 = vpop.f32.mrf.mxu0
      %v3971 = vadd.f32 0.0, %v3970
      %3972 = vmatmul.f32.gmra.mxu0 %v1936
      %v3973 = vpop.f32.mrf.mxu0
      %v3974 = vadd.f32 0.0, %v3973
      %3975 = vmatmul.f32.gmra.mxu0 %v1939
      %v3976 = vpop.f32.mrf.mxu0
      %v3977 = vadd.f32 0.0, %v3976
      %3978 = vmatmul.f32.gmra.mxu0 %v1942
      %v3979 = vpop.f32.mrf.mxu0
      %v3980 = vadd.f32 0.0, %v3979
      %3981 = vmatmul.f32.gmra.mxu0 %v1945
      %v3982 = vpop.f32.mrf.mxu0
      %v3983 = vadd.f32 0.0, %v3982
      %3984 = vmatmul.f32.gmra.mxu0 %v1948
      %v3985 = vpop.f32.mrf.mxu0
      %v3986 = vadd.f32 0.0, %v3985
      %3987 = vmatmul.f32.gmra.mxu0 %v1951
      %v3988 = vpop.f32.mrf.mxu0
      %v3989 = vadd.f32 0.0, %v3988
      %3990 = vdwg.mxu0
      %v3992 = vsel %vm1741, %v3959, 0
      %v3995 = vsel %vm1741, %v3962, 0
      %v3998 = vsel %vm1741, %v3965, 0
      %v4001 = vsel %vm1741, %v3968, 0
      %v4004 = vsel %vm1741, %v3971, 0
      %v4007 = vsel %vm1741, %v3974, 0
      %v4010 = vsel %vm1741, %v3977, 0
      %v4013 = vsel %vm1741, %v3980, 0
      %v4016 = vsel %vm1741, %v3983, 0
      %v4019 = vsel %vm1741, %v3986, 0
      %v4022 = vsel %vm1741, %v3989, 0
      %4024 = vmatpush.msra.mxu0 0.0
      %4025 = vmatpush.msra.mxu0 0.0
      %4026 = vmatpush.msra.mxu0 0.0
      %4027 = vmatpush.msra.mxu0 0.0
      %4028 = vmatpush.msra.mxu0 %v3743
      %4029 = vmatpush.msra.mxu0 %v3742
      %4030 = vmatpush.msra.mxu0 %v3741
      %4031 = vmatpush.msra.mxu0 %v3740
      %4032 = vmatpush.msra.mxu0 %v3739
      %4033 = vmatpush.msra.mxu0 %v3738
      %4034 = vmatpush.msra.mxu0 %v3737
      %4035 = vmatpush.msra.mxu0 %v3736
      %4036 = vmatpush.msra.mxu0 %v3735
      %4037 = vmatpush.msra.mxu0 %v3734
      %4038 = vmatpush.msra.mxu0 %v3733
      %4039 = vmatpush.msra.mxu0 %v3732
      %4040 = vmatmul.f32.gmra.mxu0 %v3992
      %v4041 = vpop.f32.mrf.mxu0
      %v4042 = vadd.f32 0.0, %v4041
      %4043 = vmatmul.f32.gmra.mxu0 %v3995
      %v4044 = vpop.f32.mrf.mxu0
      %v4045 = vadd.f32 0.0, %v4044
      %4046 = vmatmul.f32.gmra.mxu0 %v3998
      %v4047 = vpop.f32.mrf.mxu0
      %v4048 = vadd.f32 0.0, %v4047
      %4049 = vmatmul.f32.gmra.mxu0 %v4001
      %v4050 = vpop.f32.mrf.mxu0
      %v4051 = vadd.f32 0.0, %v4050
      %4052 = vmatmul.f32.gmra.mxu0 %v4004
      %v4053 = vpop.f32.mrf.mxu0
      %v4054 = vadd.f32 0.0, %v4053
      %4055 = vmatmul.f32.gmra.mxu0 %v4007
      %v4056 = vpop.f32.mrf.mxu0
      %v4057 = vadd.f32 0.0, %v4056
      %4058 = vmatmul.f32.gmra.mxu0 %v4010
      %v4059 = vpop.f32.mrf.mxu0
      %v4060 = vadd.f32 0.0, %v4059
      %4061 = vmatmul.f32.gmra.mxu0 %v4013
      %v4062 = vpop.f32.mrf.mxu0
      %v4063 = vadd.f32 0.0, %v4062
      %4064 = vmatmul.f32.gmra.mxu0 %v4016
      %v4065 = vpop.f32.mrf.mxu0
      %v4066 = vadd.f32 0.0, %v4065
      %4067 = vmatmul.f32.gmra.mxu0 %v4019
      %v4068 = vpop.f32.mrf.mxu0
      %v4069 = vadd.f32 0.0, %v4068
      %4070 = vmatmul.f32.gmra.mxu0 %v4022
      %v4071 = vpop.f32.mrf.mxu0
      %v4072 = vadd.f32 0.0, %v4071
      %4073 = vdwg.mxu0
      %v4075 = vsel %vm1741, %v3906, 0
      %v4078 = vsel %vm1741, %v3909, 0
      %v4081 = vsel %vm1741, %v3912, 0
      %v4084 = vsel %vm1741, %v3915, 0
      %v4087 = vsel %vm1741, %v3918, 0
      %v4090 = vsel %vm1741, %v3921, 0
      %v4093 = vsel %vm1741, %v3924, 0
      %v4096 = vsel %vm1741, %v3927, 0
      %v4099 = vsel %vm1741, %v3930, 0
      %v4102 = vsel %vm1741, %v3933, 0
      %v4105 = vsel %vm1741, %v3936, 0
      %4107 = vmatpush.msra.mxu0 0.0
      %4108 = vmatpush.msra.mxu0 0.0
      %4109 = vmatpush.msra.mxu0 0.0
      %4110 = vmatpush.msra.mxu0 0.0
      %4111 = vmatpush.msra.mxu0 %v3730
      %4112 = vmatpush.msra.mxu0 %v3729
      %4113 = vmatpush.msra.mxu0 %v3728
      %4114 = vmatpush.msra.mxu0 %v3727
      %4115 = vmatpush.msra.mxu0 %v3726
      %4116 = vmatpush.msra.mxu0 %v3725
      %4117 = vmatpush.msra.mxu0 %v3724
      %4118 = vmatpush.msra.mxu0 %v3723
      %4119 = vmatpush.msra.mxu0 %v3722
      %4120 = vmatpush.msra.mxu0 %v3721
      %4121 = vmatpush.msra.mxu0 %v3720
      %4122 = vmatpush.msra.mxu0 %v3719
      %4123 = vmatmul.f32.gmra.mxu0 %v4075
      %v4124 = vpop.f32.mrf.mxu0
      %v4125 = vadd.f32 %v4042, %v4124
      %4126 = vmatmul.f32.gmra.mxu0 %v4078
      %v4127 = vpop.f32.mrf.mxu0
      %v4128 = vadd.f32 %v4045, %v4127
      %4129 = vmatmul.f32.gmra.mxu0 %v4081
      %v4130 = vpop.f32.mrf.mxu0
      %v4131 = vadd.f32 %v4048, %v4130
      %4132 = vmatmul.f32.gmra.mxu0 %v4084
      %v4133 = vpop.f32.mrf.mxu0
      %v4134 = vadd.f32 %v4051, %v4133
      %4135 = vmatmul.f32.gmra.mxu0 %v4087
      %v4136 = vpop.f32.mrf.mxu0
      %v4137 = vadd.f32 %v4054, %v4136
      %4138 = vmatmul.f32.gmra.mxu0 %v4090
      %v4139 = vpop.f32.mrf.mxu0
      %v4140 = vadd.f32 %v4057, %v4139
      %4141 = vmatmul.f32.gmra.mxu0 %v4093
      %v4142 = vpop.f32.mrf.mxu0
      %v4143 = vadd.f32 %v4060, %v4142
      %4144 = vmatmul.f32.gmra.mxu0 %v4096
      %v4145 = vpop.f32.mrf.mxu0
      %v4146 = vadd.f32 %v4063, %v4145
      %4147 = vmatmul.f32.gmra.mxu0 %v4099
      %v4148 = vpop.f32.mrf.mxu0
      %v4149 = vadd.f32 %v4066, %v4148
      %4150 = vmatmul.f32.gmra.mxu0 %v4102
      %v4151 = vpop.f32.mrf.mxu0
      %v4152 = vadd.f32 %v4069, %v4151
      %4153 = vmatmul.f32.gmra.mxu0 %v4105
      %v4154 = vpop.f32.mrf.mxu0
      %v4155 = vadd.f32 %v4072, %v4154
      %4156 = vdwg.mxu0
      %v4157 = vxor.u32 %v4125, 2147483648
      %v4158 = vxor.u32 %v4128, 2147483648
      %v4159 = vxor.u32 %v4131, 2147483648
      %v4160 = vxor.u32 %v4134, 2147483648
      %v4161 = vxor.u32 %v4137, 2147483648
      %v4162 = vxor.u32 %v4140, 2147483648
      %v4163 = vxor.u32 %v4143, 2147483648
      %v4164 = vxor.u32 %v4146, 2147483648
      %v4165 = vxor.u32 %v4149, 2147483648
      %v4166 = vxor.u32 %v4152, 2147483648
      %v4167 = vxor.u32 %v4155, 2147483648
      %v4168 = vmul.f32 %v4157, 1.442695
      %v4169 = vpow.pop %v4168
      %v4170 = vmul.f32 %v4158, 1.442695
      %v4171 = vpow.pop %v4170
      %v4172 = vmul.f32 %v4159, 1.442695
      %v4173 = vpow.pop %v4172
      %v4174 = vmul.f32 %v4160, 1.442695
      %v4175 = vpow.pop %v4174
      %v4176 = vmul.f32 %v4161, 1.442695
      %v4177 = vpow.pop %v4176
      %v4178 = vmul.f32 %v4162, 1.442695
      %v4179 = vpow.pop %v4178
      %v4180 = vmul.f32 %v4163, 1.442695
      %v4181 = vpow.pop %v4180
      %v4182 = vmul.f32 %v4164, 1.442695
      %v4183 = vpow.pop %v4182
      %v4184 = vmul.f32 %v4165, 1.442695
      %v4185 = vpow.pop %v4184
      %v4186 = vmul.f32 %v4166, 1.442695
      %v4187 = vpow.pop %v4186
      %v4188 = vmul.f32 %v4167, 1.442695
      %v4189 = vpow.pop %v4188
      %v4190 = vadd.f32 %v4169, 1.0
      %v4191 = vadd.f32 %v4171, 1.0
      %v4192 = vadd.f32 %v4173, 1.0
      %v4193 = vadd.f32 %v4175, 1.0
      %v4194 = vadd.f32 %v4177, 1.0
      %v4195 = vadd.f32 %v4179, 1.0
      %v4196 = vadd.f32 %v4181, 1.0
      %v4197 = vadd.f32 %v4183, 1.0
      %v4198 = vadd.f32 %v4185, 1.0
      %v4199 = vadd.f32 %v4187, 1.0
      %v4200 = vadd.f32 %v4189, 1.0
      %v4201 = vrcp.pop %v4190
      %v4202 = vmul.f32 %v4190, %v4201
      %v4203 = vsub.f32 1.0, %v4202
      %v4204 = vmul.f32 %v4201, %v4203
      %v4205 = vadd.f32 %v4201, %v4204
      %vm4206 = vweird.f32 %v4190
      %vm4207 = vweird.f32 %v4201
      %vm4208 = vmor %vm4206, %vm4207
      %v4209 = vsel %vm4208, %v4201, %v4205
      %v4210 = vand.u32 2147483647, %v4190
      %vm4211 = vcmp.eq.f32.partialorder %v4210, 8.507059e+37
      %v4212 = vand.u32 %v4190, 2147483648
      %v4213 = vor.u32 1.1754944e-38, %v4212
      %v4214 = vsel %vm4211, %v4213, %v4209
      %v4215 = vmul.f32 1.0, %v4214
      %v4216 = vrcp.pop %v4191
      %v4217 = vmul.f32 %v4191, %v4216
      %v4218 = vsub.f32 1.0, %v4217
      %v4219 = vmul.f32 %v4216, %v4218
      %v4220 = vadd.f32 %v4216, %v4219
      %vm4221 = vweird.f32 %v4191
      %vm4222 = vweird.f32 %v4216
      %vm4223 = vmor %vm4221, %vm4222
      %v4224 = vsel %vm4223, %v4216, %v4220
      %v4225 = vand.u32 2147483647, %v4191
      %vm4226 = vcmp.eq.f32.partialorder %v4225, 8.507059e+37
      %v4227 = vand.u32 %v4191, 2147483648
      %v4228 = vor.u32 1.1754944e-38, %v4227
      %v4229 = vsel %vm4226, %v4228, %v4224
      %v4230 = vmul.f32 1.0, %v4229
      %v4231 = vrcp.pop %v4192
      %v4232 = vmul.f32 %v4192, %v4231
      %v4233 = vsub.f32 1.0, %v4232
      %v4234 = vmul.f32 %v4231, %v4233
      %v4235 = vadd.f32 %v4231, %v4234
      %vm4236 = vweird.f32 %v4192
      %vm4237 = vweird.f32 %v4231
      %vm4238 = vmor %vm4236, %vm4237
      %v4239 = vsel %vm4238, %v4231, %v4235
      %v4240 = vand.u32 2147483647, %v4192
      %vm4241 = vcmp.eq.f32.partialorder %v4240, 8.507059e+37
      %v4242 = vand.u32 %v4192, 2147483648
      %v4243 = vor.u32 1.1754944e-38, %v4242
      %v4244 = vsel %vm4241, %v4243, %v4239
      %v4245 = vmul.f32 1.0, %v4244
      %v4246 = vrcp.pop %v4193
      %v4247 = vmul.f32 %v4193, %v4246
      %v4248 = vsub.f32 1.0, %v4247
      %v4249 = vmul.f32 %v4246, %v4248
      %v4250 = vadd.f32 %v4246, %v4249
      %vm4251 = vweird.f32 %v4193
      %vm4252 = vweird.f32 %v4246
      %vm4253 = vmor %vm4251, %vm4252
      %v4254 = vsel %vm4253, %v4246, %v4250
      %v4255 = vand.u32 2147483647, %v4193
      %vm4256 = vcmp.eq.f32.partialorder %v4255, 8.507059e+37
      %v4257 = vand.u32 %v4193, 2147483648
      %v4258 = vor.u32 1.1754944e-38, %v4257
      %v4259 = vsel %vm4256, %v4258, %v4254
      %v4260 = vmul.f32 1.0, %v4259
      %v4261 = vrcp.pop %v4194
      %v4262 = vmul.f32 %v4194, %v4261
      %v4263 = vsub.f32 1.0, %v4262
      %v4264 = vmul.f32 %v4261, %v4263
      %v4265 = vadd.f32 %v4261, %v4264
      %vm4266 = vweird.f32 %v4194
      %vm4267 = vweird.f32 %v4261
      %vm4268 = vmor %vm4266, %vm4267
      %v4269 = vsel %vm4268, %v4261, %v4265
      %v4270 = vand.u32 2147483647, %v4194
      %vm4271 = vcmp.eq.f32.partialorder %v4270, 8.507059e+37
      %v4272 = vand.u32 %v4194, 2147483648
      %v4273 = vor.u32 1.1754944e-38, %v4272
      %v4274 = vsel %vm4271, %v4273, %v4269
      %v4275 = vmul.f32 1.0, %v4274
      %v4276 = vrcp.pop %v4195
      %v4277 = vmul.f32 %v4195, %v4276
      %v4278 = vsub.f32 1.0, %v4277
      %v4279 = vmul.f32 %v4276, %v4278
      %v4280 = vadd.f32 %v4276, %v4279
      %vm4281 = vweird.f32 %v4195
      %vm4282 = vweird.f32 %v4276
      %vm4283 = vmor %vm4281, %vm4282
      %v4284 = vsel %vm4283, %v4276, %v4280
      %v4285 = vand.u32 2147483647, %v4195
      %vm4286 = vcmp.eq.f32.partialorder %v4285, 8.507059e+37
      %v4287 = vand.u32 %v4195, 2147483648
      %v4288 = vor.u32 1.1754944e-38, %v4287
      %v4289 = vsel %vm4286, %v4288, %v4284
      %v4290 = vmul.f32 1.0, %v4289
      %v4291 = vrcp.pop %v4196
      %v4292 = vmul.f32 %v4196, %v4291
      %v4293 = vsub.f32 1.0, %v4292
      %v4294 = vmul.f32 %v4291, %v4293
      %v4295 = vadd.f32 %v4291, %v4294
      %vm4296 = vweird.f32 %v4196
      %vm4297 = vweird.f32 %v4291
      %vm4298 = vmor %vm4296, %vm4297
      %v4299 = vsel %vm4298, %v4291, %v4295
      %v4300 = vand.u32 2147483647, %v4196
      %vm4301 = vcmp.eq.f32.partialorder %v4300, 8.507059e+37
      %v4302 = vand.u32 %v4196, 2147483648
      %v4303 = vor.u32 1.1754944e-38, %v4302
      %v4304 = vsel %vm4301, %v4303, %v4299
      %v4305 = vmul.f32 1.0, %v4304
      %v4306 = vrcp.pop %v4197
      %v4307 = vmul.f32 %v4197, %v4306
      %v4308 = vsub.f32 1.0, %v4307
      %v4309 = vmul.f32 %v4306, %v4308
      %v4310 = vadd.f32 %v4306, %v4309
      %vm4311 = vweird.f32 %v4197
      %vm4312 = vweird.f32 %v4306
      %vm4313 = vmor %vm4311, %vm4312
      %v4314 = vsel %vm4313, %v4306, %v4310
      %v4315 = vand.u32 2147483647, %v4197
      %vm4316 = vcmp.eq.f32.partialorder %v4315, 8.507059e+37
      %v4317 = vand.u32 %v4197, 2147483648
      %v4318 = vor.u32 1.1754944e-38, %v4317
      %v4319 = vsel %vm4316, %v4318, %v4314
      %v4320 = vmul.f32 1.0, %v4319
      %v4321 = vrcp.pop %v4198
      %v4322 = vmul.f32 %v4198, %v4321
      %v4323 = vsub.f32 1.0, %v4322
      %v4324 = vmul.f32 %v4321, %v4323
      %v4325 = vadd.f32 %v4321, %v4324
      %vm4326 = vweird.f32 %v4198
      %vm4327 = vweird.f32 %v4321
      %vm4328 = vmor %vm4326, %vm4327
      %v4329 = vsel %vm4328, %v4321, %v4325
      %v4330 = vand.u32 2147483647, %v4198
      %vm4331 = vcmp.eq.f32.partialorder %v4330, 8.507059e+37
      %v4332 = vand.u32 %v4198, 2147483648
      %v4333 = vor.u32 1.1754944e-38, %v4332
      %v4334 = vsel %vm4331, %v4333, %v4329
      %v4335 = vmul.f32 1.0, %v4334
      %v4336 = vrcp.pop %v4199
      %v4337 = vmul.f32 %v4199, %v4336
      %v4338 = vsub.f32 1.0, %v4337
      %v4339 = vmul.f32 %v4336, %v4338
      %v4340 = vadd.f32 %v4336, %v4339
      %vm4341 = vweird.f32 %v4199
      %vm4342 = vweird.f32 %v4336
      %vm4343 = vmor %vm4341, %vm4342
      %v4344 = vsel %vm4343, %v4336, %v4340
      %v4345 = vand.u32 2147483647, %v4199
      %vm4346 = vcmp.eq.f32.partialorder %v4345, 8.507059e+37
      %v4347 = vand.u32 %v4199, 2147483648
      %v4348 = vor.u32 1.1754944e-38, %v4347
      %v4349 = vsel %vm4346, %v4348, %v4344
      %v4350 = vmul.f32 1.0, %v4349
      %v4351 = vrcp.pop %v4200
      %v4352 = vmul.f32 %v4200, %v4351
      %v4353 = vsub.f32 1.0, %v4352
      %v4354 = vmul.f32 %v4351, %v4353
      %v4355 = vadd.f32 %v4351, %v4354
      %vm4356 = vweird.f32 %v4200
      %vm4357 = vweird.f32 %v4351
      %vm4358 = vmor %vm4356, %vm4357
      %v4359 = vsel %vm4358, %v4351, %v4355
      %v4360 = vand.u32 2147483647, %v4200
      %vm4361 = vcmp.eq.f32.partialorder %v4360, 8.507059e+37
      %v4362 = vand.u32 %v4200, 2147483648
      %v4363 = vor.u32 1.1754944e-38, %v4362
      %v4364 = vsel %vm4361, %v4363, %v4359
      %v4365 = vmul.f32 1.0, %v4364
      %v4366 = vadd.f32 %v3877, %v4215
      %v4367 = vadd.f32 %v3878, %v4230
      %v4368 = vadd.f32 %v3879, %v4245
      %v4369 = vadd.f32 %v3880, %v4260
      %v4370 = vadd.f32 %v3881, %v4275
      %v4371 = vadd.f32 %v3882, %v4290
      %v4372 = vadd.f32 %v3883, %v4305
      %v4373 = vadd.f32 %v3884, %v4320
      %v4374 = vadd.f32 %v3885, %v4335
      %v4375 = vadd.f32 %v3886, %v4350
      %v4376 = vadd.f32 %v3887, %v4365
      %v4377 = vmul.f32 %v4366, 0.5
      %v4378 = vmul.f32 %v4367, 0.5
      %v4379 = vmul.f32 %v4368, 0.5
      %v4380 = vmul.f32 %v4369, 0.5
      %v4381 = vmul.f32 %v4370, 0.5
      %v4382 = vmul.f32 %v4371, 0.5
      %v4383 = vmul.f32 %v4372, 0.5
      %v4384 = vmul.f32 %v4373, 0.5
      %v4385 = vmul.f32 %v4374, 0.5
      %v4386 = vmul.f32 %v4375, 0.5
      %v4387 = vmul.f32 %v4376, 0.5
      %v4388 = vmax.f32 %v4377, 0.0
      %v4389 = vmax.f32 %v4378, 0.0
      %v4390 = vmax.f32 %v4379, 0.0
      %v4391 = vmax.f32 %v4380, 0.0
      %v4392 = vmax.f32 %v4381, 0.0
      %v4393 = vmax.f32 %v4382, 0.0
      %v4394 = vmax.f32 %v4383, 0.0
      %v4395 = vmax.f32 %v4384, 0.0
      %v4396 = vmax.f32 %v4385, 0.0
      %v4397 = vmax.f32 %v4386, 0.0
      %v4398 = vmax.f32 %v4387, 0.0
      %v4399 = vmul.f32 %v4388, 0.9
      %v4400 = vmul.f32 %v4389, 0.9
      %v4401 = vmul.f32 %v4390, 0.9
      %v4402 = vmul.f32 %v4391, 0.9
      %v4403 = vmul.f32 %v4392, 0.9
      %v4404 = vmul.f32 %v4393, 0.9
      %v4405 = vmul.f32 %v4394, 0.9
      %v4406 = vmul.f32 %v4395, 0.9
      %v4407 = vmul.f32 %v4396, 0.9
      %v4408 = vmul.f32 %v4397, 0.9
      %v4409 = vmul.f32 %v4398, 0.9
      %v4410 = vadd.f32 %v4399, %v2426
      %v4411 = vadd.f32 %v4400, %v2427
      %v4412 = vadd.f32 %v4401, %v2428
      %v4413 = vadd.f32 %v4402, %v2429
      %v4414 = vadd.f32 %v4403, %v2430
      %v4415 = vadd.f32 %v4404, %v2431
      %v4416 = vadd.f32 %v4405, %v2432
      %v4417 = vadd.f32 %v4406, %v2433
      %v4418 = vadd.f32 %v4407, %v2434
      %v4419 = vadd.f32 %v4408, %v2435
      %v4420 = vadd.f32 %v4409, %v2436
      %v4421 = vmax.f32 %v4410, 0.0
      %v4422 = vmax.f32 %v4411, 0.0
      %v4423 = vmax.f32 %v4412, 0.0
      %v4424 = vmax.f32 %v4413, 0.0
      %v4425 = vmax.f32 %v4414, 0.0
      %v4426 = vmax.f32 %v4415, 0.0
      %v4427 = vmax.f32 %v4416, 0.0
      %v4428 = vmax.f32 %v4417, 0.0
      %v4429 = vmax.f32 %v4418, 0.0
      %v4430 = vmax.f32 %v4419, 0.0
      %v4431 = vmax.f32 %v4420, 0.0
      %s4432 = scalar_lea.vmem %s11, 576
      %v4433 = vld [vmem:[%s4432] sm:$0xff]
      %v4434 = vld [vmem:[%s4432 + $0x8] sm:$0xff]
      %v4435 = vld [vmem:[%s4432 + $0x10] sm:$0xff]
      %v4436 = vld [vmem:[%s4432 + $0x18] sm:$0xff]
      %v4437 = vld [vmem:[%s4432 + $0x20] sm:$0xff]
      %v4438 = vld [vmem:[%s4432 + $0x28] sm:$0xff]
      %v4439 = vld [vmem:[%s4432 + $0x30] sm:$0xff]
      %v4440 = vld [vmem:[%s4432 + $0x38] sm:$0xff]
      %v4441 = vld [vmem:[%s4432 + $0x40] sm:$0xff]
      %v4442 = vld [vmem:[%s4432 + $0x48] sm:$0xff]
      %v4443 = vld [vmem:[%s4432 + $0x50] sm:$0xff]
      %v4444 = vld [vmem:[%s4432 + $0x58] sm:$0xff]
      %s4445 = scalar_lea.vmem %s11, 672
      %v4446 = vld [vmem:[%s4445] sm:$0xff]
      %v4447 = vld [vmem:[%s4445 + $0x8] sm:$0xff]
      %v4448 = vld [vmem:[%s4445 + $0x10] sm:$0xff]
      %v4449 = vld [vmem:[%s4445 + $0x18] sm:$0xff]
      %v4450 = vld [vmem:[%s4445 + $0x20] sm:$0xff]
      %v4451 = vld [vmem:[%s4445 + $0x28] sm:$0xff]
      %v4452 = vld [vmem:[%s4445 + $0x30] sm:$0xff]
      %v4453 = vld [vmem:[%s4445 + $0x38] sm:$0xff]
      %v4454 = vld [vmem:[%s4445 + $0x40] sm:$0xff]
      %v4455 = vld [vmem:[%s4445 + $0x48] sm:$0xff]
      %v4456 = vld [vmem:[%s4445 + $0x50] sm:$0xff]
      %v4457 = vld [vmem:[%s4445 + $0x58] sm:$0xff]
      %s4458 = scalar_lea.vmem %s11, 768
      %v4459 = vld [vmem:[%s4458] sm:$0xff]
      %v4460 = vld [vmem:[%s4458 + $0x8] sm:$0xff]
      %v4461 = vld [vmem:[%s4458 + $0x10] sm:$0xff]
      %v4462 = vld [vmem:[%s4458 + $0x18] sm:$0xff]
      %v4463 = vld [vmem:[%s4458 + $0x20] sm:$0xff]
      %v4464 = vld [vmem:[%s4458 + $0x28] sm:$0xff]
      %v4465 = vld [vmem:[%s4458 + $0x30] sm:$0xff]
      %v4466 = vld [vmem:[%s4458 + $0x38] sm:$0xff]
      %v4467 = vld [vmem:[%s4458 + $0x40] sm:$0xff]
      %v4468 = vld [vmem:[%s4458 + $0x48] sm:$0xff]
      %v4469 = vld [vmem:[%s4458 + $0x50] sm:$0xff]
      %v4470 = vld [vmem:[%s4458 + $0x58] sm:$0xff]
      %4471 = vmatpush.msra.mxu0 0.0
      %4472 = vmatpush.msra.mxu0 0.0
      %4473 = vmatpush.msra.mxu0 0.0
      %4474 = vmatpush.msra.mxu0 0.0
      %4475 = vmatpush.msra.mxu0 0.0
      %4476 = vmatpush.msra.mxu0 0.0
      %4477 = vmatpush.msra.mxu0 0.0
      %4478 = vmatpush.msra.mxu0 0.0
      %4479 = vmatpush.msra.mxu0 0.0
      %4480 = vmatpush.msra.mxu0 0.0
      %4481 = vmatpush.msra.mxu0 0.0
      %4482 = vmatpush.msra.mxu0 0.0
      %4483 = vmatpush.msra.mxu0 0.0
      %4484 = vmatpush.msra.mxu0 0.0
      %4485 = vmatpush.msra.mxu0 %v3939
      %4486 = vmatpush.msra.mxu0 %v3703
      %4487 = vmatmul.f32.gmra.mxu0 %v2498
      %v4488 = vpop.f32.mrf.mxu0
      %v4489 = vadd.f32 0.0, %v4488
      %4490 = vmatmul.f32.gmra.mxu0 %v2501
      %v4491 = vpop.f32.mrf.mxu0
      %v4492 = vadd.f32 0.0, %v4491
      %4493 = vdwg.mxu0
      %v4495 = vsel %vm1741, %v4489, 0
      %v4498 = vsel %vm1741, %v4492, 0
      %4500 = vmatpush.msra.mxu0 0.0
      %4501 = vmatpush.msra.mxu0 0.0
      %4502 = vmatpush.msra.mxu0 0.0
      %4503 = vmatpush.msra.mxu0 0.0
      %4504 = vmatpush.msra.mxu0 %v4444
      %4505 = vmatpush.msra.mxu0 %v4443
      %4506 = vmatpush.msra.mxu0 %v4442
      %4507 = vmatpush.msra.mxu0 %v4441
      %4508 = vmatpush.msra.mxu0 %v4440
      %4509 = vmatpush.msra.mxu0 %v4439
      %4510 = vmatpush.msra.mxu0 %v4438
      %4511 = vmatpush.msra.mxu0 %v4437
      %4512 = vmatpush.msra.mxu0 %v4436
      %4513 = vmatpush.msra.mxu0 %v4435
      %4514 = vmatpush.msra.mxu0 %v4434
      %4515 = vmatpush.msra.mxu0 %v4433
      %4516 = vmatmul.f32.gmra.mxu0 %v4495
      %v4517 = vpop.f32.mrf.mxu0
      %v4518 = vadd.f32 0.0, %v4517
      %4519 = vmatmul.f32.gmra.mxu0 %v4498
      %v4520 = vpop.f32.mrf.mxu0
      %v4521 = vadd.f32 0.0, %v4520
      %4522 = vdwg.mxu0
      %v4523 = vmax.f32 %v4518, 0.0
      %v4524 = vmax.f32 %v4521, 0.0
      %4525 = vmatpush.msra.mxu0 0.0
      %4526 = vmatpush.msra.mxu0 0.0
      %4527 = vmatpush.msra.mxu0 0.0
      %4528 = vmatpush.msra.mxu0 0.0
      %4529 = vmatpush.msra.mxu0 0.0
      %4530 = vmatpush.msra.mxu0 0.0
      %4531 = vmatpush.msra.mxu0 0.0
      %4532 = vmatpush.msra.mxu0 0.0
      %4533 = vmatpush.msra.mxu0 0.0
      %4534 = vmatpush.msra.mxu0 0.0
      %4535 = vmatpush.msra.mxu0 0.0
      %4536 = vmatpush.msra.mxu0 0.0
      %4537 = vmatpush.msra.mxu0 0.0
      %4538 = vmatpush.msra.mxu0 0.0
      %4539 = vmatpush.msra.mxu0 %v3939
      %4540 = vmatpush.msra.mxu0 %v3703
      %4541 = vmatmul.f32.gmra.mxu0 %v2558
      %v4542 = vpop.f32.mrf.mxu0
      %v4543 = vadd.f32 0.0, %v4542
      %4544 = vmatmul.f32.gmra.mxu0 %v2561
      %v4545 = vpop.f32.mrf.mxu0
      %v4546 = vadd.f32 0.0, %v4545
      %4547 = vdwg.mxu0
      %v4549 = vsel %vm1687, %v4431, 0
      %4551 = vmatpush.msra.mxu0 0.0
      %4552 = vmatpush.msra.mxu0 0.0
      %4553 = vmatpush.msra.mxu0 0.0
      %4554 = vmatpush.msra.mxu0 0.0
      %4555 = vmatpush.msra.mxu0 0.0
      %4556 = vmatpush.msra.mxu0 %v4549
      %4557 = vmatpush.msra.mxu0 %v4430
      %4558 = vmatpush.msra.mxu0 %v4429
      %4559 = vmatpush.msra.mxu0 %v4428
      %4560 = vmatpush.msra.mxu0 %v4427
      %4561 = vmatpush.msra.mxu0 %v4426
      %4562 = vmatpush.msra.mxu0 %v4425
      %4563 = vmatpush.msra.mxu0 %v4424
      %4564 = vmatpush.msra.mxu0 %v4423
      %4565 = vmatpush.msra.mxu0 %v4422
      %4566 = vmatpush.msra.mxu0 %v4421
      %4567 = vmatmul.f32.gmra.mxu0 %v2587
      %v4568 = vpop.f32.mrf.mxu0
      %v4569 = vadd.f32 0.0, %v4568
      %4570 = vmatmul.f32.gmra.mxu0 %v2590
      %v4571 = vpop.f32.mrf.mxu0
      %v4572 = vadd.f32 0.0, %v4571
      %4573 = vdwg.mxu0
      %v4575 = vsel %vm1741, %v4569, 0
      %v4578 = vsel %vm1741, %v4572, 0
      %4580 = vmatpush.msra.mxu0 0.0
      %4581 = vmatpush.msra.mxu0 0.0
      %4582 = vmatpush.msra.mxu0 0.0
      %4583 = vmatpush.msra.mxu0 0.0
      %4584 = vmatpush.msra.mxu0 %v4470
      %4585 = vmatpush.msra.mxu0 %v4469
      %4586 = vmatpush.msra.mxu0 %v4468
      %4587 = vmatpush.msra.mxu0 %v4467
      %4588 = vmatpush.msra.mxu0 %v4466
      %4589 = vmatpush.msra.mxu0 %v4465
      %4590 = vmatpush.msra.mxu0 %v4464
      %4591 = vmatpush.msra.mxu0 %v4463
      %4592 = vmatpush.msra.mxu0 %v4462
      %4593 = vmatpush.msra.mxu0 %v4461
      %4594 = vmatpush.msra.mxu0 %v4460
      %4595 = vmatpush.msra.mxu0 %v4459
      %4596 = vmatmul.f32.gmra.mxu0 %v4575
      %v4597 = vpop.f32.mrf.mxu0
      %v4598 = vadd.f32 0.0, %v4597
      %4599 = vmatmul.f32.gmra.mxu0 %v4578
      %v4600 = vpop.f32.mrf.mxu0
      %v4601 = vadd.f32 0.0, %v4600
      %4602 = vdwg.mxu0
      %v4604 = vsel %vm1741, %v4543, 0
      %v4607 = vsel %vm1741, %v4546, 0
      %4609 = vmatpush.msra.mxu0 0.0
      %4610 = vmatpush.msra.mxu0 0.0
      %4611 = vmatpush.msra.mxu0 0.0
      %4612 = vmatpush.msra.mxu0 0.0
      %4613 = vmatpush.msra.mxu0 %v4457
      %4614 = vmatpush.msra.mxu0 %v4456
      %4615 = vmatpush.msra.mxu0 %v4455
      %4616 = vmatpush.msra.mxu0 %v4454
      %4617 = vmatpush.msra.mxu0 %v4453
      %4618 = vmatpush.msra.mxu0 %v4452
      %4619 = vmatpush.msra.mxu0 %v4451
      %4620 = vmatpush.msra.mxu0 %v4450
      %4621 = vmatpush.msra.mxu0 %v4449
      %4622 = vmatpush.msra.mxu0 %v4448
      %4623 = vmatpush.msra.mxu0 %v4447
      %4624 = vmatpush.msra.mxu0 %v4446
      %4625 = vmatmul.f32.gmra.mxu0 %v4604
      %v4626 = vpop.f32.mrf.mxu0
      %v4627 = vadd.f32 %v4598, %v4626
      %4628 = vmatmul.f32.gmra.mxu0 %v4607
      %v4629 = vpop.f32.mrf.mxu0
      %v4630 = vadd.f32 %v4601, %v4629
      %4631 = vdwg.mxu0
      %v4632 = vxor.u32 %v4627, 2147483648
      %v4633 = vxor.u32 %v4630, 2147483648
      %v4634 = vmul.f32 %v4632, 1.442695
      %v4635 = vpow.pop %v4634
      %v4636 = vmul.f32 %v4633, 1.442695
      %v4637 = vpow.pop %v4636
      %v4638 = vadd.f32 %v4635, 1.0
      %v4639 = vadd.f32 %v4637, 1.0
      %v4640 = vrcp.pop %v4638
      %v4641 = vmul.f32 %v4638, %v4640
      %v4642 = vsub.f32 1.0, %v4641
      %v4643 = vmul.f32 %v4640, %v4642
      %v4644 = vadd.f32 %v4640, %v4643
      %vm4645 = vweird.f32 %v4638
      %vm4646 = vweird.f32 %v4640
      %vm4647 = vmor %vm4645, %vm4646
      %v4648 = vsel %vm4647, %v4640, %v4644
      %v4649 = vand.u32 2147483647, %v4638
      %vm4650 = vcmp.eq.f32.partialorder %v4649, 8.507059e+37
      %v4651 = vand.u32 %v4638, 2147483648
      %v4652 = vor.u32 1.1754944e-38, %v4651
      %v4653 = vsel %vm4650, %v4652, %v4648
      %v4654 = vmul.f32 1.0, %v4653
      %v4655 = vrcp.pop %v4639
      %v4656 = vmul.f32 %v4639, %v4655
      %v4657 = vsub.f32 1.0, %v4656
      %v4658 = vmul.f32 %v4655, %v4657
      %v4659 = vadd.f32 %v4655, %v4658
      %vm4660 = vweird.f32 %v4639
      %vm4661 = vweird.f32 %v4655
      %vm4662 = vmor %vm4660, %vm4661
      %v4663 = vsel %vm4662, %v4655, %v4659
      %v4664 = vand.u32 2147483647, %v4639
      %vm4665 = vcmp.eq.f32.partialorder %v4664, 8.507059e+37
      %v4666 = vand.u32 %v4639, 2147483648
      %v4667 = vor.u32 1.1754944e-38, %v4666
      %v4668 = vsel %vm4665, %v4667, %v4663
      %v4669 = vmul.f32 1.0, %v4668
      %v4670 = vadd.f32 %v4523, %v4654
      %v4671 = vadd.f32 %v4524, %v4669
      %v4672 = vmul.f32 %v4670, 0.5
      %v4673 = vmul.f32 %v4671, 0.5
      %v4674 = vmax.f32 %v4672, 0.0
      %v4675 = vmax.f32 %v4673, 0.0
      %v4676 = vmul.f32 %v4674, 0.9
      %v4677 = vmul.f32 %v4675, 0.9
      %v4678 = vadd.f32 %v4676, %v2722
      %v4679 = vadd.f32 %v4677, %v2723
      %v4680 = vmax.f32 %v4678, 0.0
      %v4681 = vmax.f32 %v4679, 0.0
      %s4682 = scalar_lea.vmem %s10, 864
      %v4683 = vld [vmem:[%s4682] sm:$0xff]
      %v4684 = vld [vmem:[%s4682 + $0x8] sm:$0xff]
      %v4685 = vld [vmem:[%s4682 + $0x10] sm:$0xff]
      %v4686 = vld [vmem:[%s4682 + $0x18] sm:$0xff]
      %v4687 = vld [vmem:[%s4682 + $0x20] sm:$0xff]
      %v4688 = vld [vmem:[%s4682 + $0x28] sm:$0xff]
      %v4689 = vld [vmem:[%s4682 + $0x30] sm:$0xff]
      %v4690 = vld [vmem:[%s4682 + $0x38] sm:$0xff]
      %v4691 = vld [vmem:[%s4682 + $0x40] sm:$0xff]
      %v4692 = vld [vmem:[%s4682 + $0x48] sm:$0xff]
      %v4693 = vld [vmem:[%s4682 + $0x50] sm:$0xff]
      %v4694 = vld [vmem:[%s4682 + $0x58] sm:$0xff]
      %s4695 = scalar_lea.vmem %s10, 960
      %v4696 = vld [vmem:[%s4695] sm:$0xff]
      %v4697 = vld [vmem:[%s4695 + $0x8] sm:$0xff]
      %v4698 = vld [vmem:[%s4695 + $0x10] sm:$0xff]
      %v4699 = vld [vmem:[%s4695 + $0x18] sm:$0xff]
      %v4700 = vld [vmem:[%s4695 + $0x20] sm:$0xff]
      %v4701 = vld [vmem:[%s4695 + $0x28] sm:$0xff]
      %v4702 = vld [vmem:[%s4695 + $0x30] sm:$0xff]
      %v4703 = vld [vmem:[%s4695 + $0x38] sm:$0xff]
      %v4704 = vld [vmem:[%s4695 + $0x40] sm:$0xff]
      %v4705 = vld [vmem:[%s4695 + $0x48] sm:$0xff]
      %v4706 = vld [vmem:[%s4695 + $0x50] sm:$0xff]
      %v4707 = vld [vmem:[%s4695 + $0x58] sm:$0xff]
      %s4708 = scalar_lea.vmem %s10, 1056
      %v4709 = vld [vmem:[%s4708] sm:$0xff]
      %v4710 = vld [vmem:[%s4708 + $0x8] sm:$0xff]
      %v4711 = vld [vmem:[%s4708 + $0x10] sm:$0xff]
      %v4712 = vld [vmem:[%s4708 + $0x18] sm:$0xff]
      %v4713 = vld [vmem:[%s4708 + $0x20] sm:$0xff]
      %v4714 = vld [vmem:[%s4708 + $0x28] sm:$0xff]
      %v4715 = vld [vmem:[%s4708 + $0x30] sm:$0xff]
      %v4716 = vld [vmem:[%s4708 + $0x38] sm:$0xff]
      %v4717 = vld [vmem:[%s4708 + $0x40] sm:$0xff]
      %v4718 = vld [vmem:[%s4708 + $0x48] sm:$0xff]
      %v4719 = vld [vmem:[%s4708 + $0x50] sm:$0xff]
      %v4720 = vld [vmem:[%s4708 + $0x58] sm:$0xff]
      %4721 = vmatpush.msra.mxu0 0.0
      %4722 = vmatpush.msra.mxu0 0.0
      %4723 = vmatpush.msra.mxu0 0.0
      %4724 = vmatpush.msra.mxu0 0.0
      %4725 = vmatpush.msra.mxu0 0.0
      %4726 = vmatpush.msra.mxu0 %v4549
      %4727 = vmatpush.msra.mxu0 %v4430
      %4728 = vmatpush.msra.mxu0 %v4429
      %4729 = vmatpush.msra.mxu0 %v4428
      %4730 = vmatpush.msra.mxu0 %v4427
      %4731 = vmatpush.msra.mxu0 %v4426
      %4732 = vmatpush.msra.mxu0 %v4425
      %4733 = vmatpush.msra.mxu0 %v4424
      %4734 = vmatpush.msra.mxu0 %v4423
      %4735 = vmatpush.msra.mxu0 %v4422
      %4736 = vmatpush.msra.mxu0 %v4421
      %4737 = vmatmul.f32.gmra.mxu0 %v1655
      %v4738 = vpop.f32.mrf.mxu0
      %v4739 = vadd.f32 0.0, %v4738
      %4740 = vmatmul.f32.gmra.mxu0 %v1658
      %v4741 = vpop.f32.mrf.mxu0
      %v4742 = vadd.f32 0.0, %v4741
      %4743 = vmatmul.f32.gmra.mxu0 %v1661
      %v4744 = vpop.f32.mrf.mxu0
      %v4745 = vadd.f32 0.0, %v4744
      %4746 = vmatmul.f32.gmra.mxu0 %v1664
      %v4747 = vpop.f32.mrf.mxu0
      %v4748 = vadd.f32 0.0, %v4747
      %4749 = vmatmul.f32.gmra.mxu0 %v1667
      %v4750 = vpop.f32.mrf.mxu0
      %v4751 = vadd.f32 0.0, %v4750
      %4752 = vmatmul.f32.gmra.mxu0 %v1670
      %v4753 = vpop.f32.mrf.mxu0
      %v4754 = vadd.f32 0.0, %v4753
      %4755 = vmatmul.f32.gmra.mxu0 %v1673
      %v4756 = vpop.f32.mrf.mxu0
      %v4757 = vadd.f32 0.0, %v4756
      %4758 = vmatmul.f32.gmra.mxu0 %v1676
      %v4759 = vpop.f32.mrf.mxu0
      %v4760 = vadd.f32 0.0, %v4759
      %4761 = vmatmul.f32.gmra.mxu0 %v1679
      %v4762 = vpop.f32.mrf.mxu0
      %v4763 = vadd.f32 0.0, %v4762
      %4764 = vmatmul.f32.gmra.mxu0 %v1682
      %v4765 = vpop.f32.mrf.mxu0
      %v4766 = vadd.f32 0.0, %v4765
      %4767 = vmatmul.f32.gmra.mxu0 %v1685
      %v4768 = vpop.f32.mrf.mxu0
      %v4769 = vadd.f32 0.0, %v4768
      %4770 = vdwg.mxu0
      %v4772 = vsel %vm1741, %v4739, 0
      %v4775 = vsel %vm1741, %v4742, 0
      %v4778 = vsel %vm1741, %v4745, 0
      %v4781 = vsel %vm1741, %v4748, 0
      %v4784 = vsel %vm1741, %v4751, 0
      %v4787 = vsel %vm1741, %v4754, 0
      %v4790 = vsel %vm1741, %v4757, 0
      %v4793 = vsel %vm1741, %v4760, 0
      %v4796 = vsel %vm1741, %v4763, 0
      %v4799 = vsel %vm1741, %v4766, 0
      %v4802 = vsel %vm1741, %v4769, 0
      %4804 = vmatpush.msra.mxu0 0.0
      %4805 = vmatpush.msra.mxu0 0.0
      %4806 = vmatpush.msra.mxu0 0.0
      %4807 = vmatpush.msra.mxu0 0.0
      %4808 = vmatpush.msra.mxu0 %v4694
      %4809 = vmatpush.msra.mxu0 %v4693
      %4810 = vmatpush.msra.mxu0 %v4692
      %4811 = vmatpush.msra.mxu0 %v4691
      %4812 = vmatpush.msra.mxu0 %v4690
      %4813 = vmatpush.msra.mxu0 %v4689
      %4814 = vmatpush.msra.mxu0 %v4688
      %4815 = vmatpush.msra.mxu0 %v4687
      %4816 = vmatpush.msra.mxu0 %v4686
      %4817 = vmatpush.msra.mxu0 %v4685
      %4818 = vmatpush.msra.mxu0 %v4684
      %4819 = vmatpush.msra.mxu0 %v4683
      %4820 = vmatmul.f32.gmra.mxu0 %v4772
      %v4821 = vpop.f32.mrf.mxu0
      %v4822 = vadd.f32 0.0, %v4821
      %4823 = vmatmul.f32.gmra.mxu0 %v4775
      %v4824 = vpop.f32.mrf.mxu0
      %v4825 = vadd.f32 0.0, %v4824
      %4826 = vmatmul.f32.gmra.mxu0 %v4778
      %v4827 = vpop.f32.mrf.mxu0
      %v4828 = vadd.f32 0.0, %v4827
      %4829 = vmatmul.f32.gmra.mxu0 %v4781
      %v4830 = vpop.f32.mrf.mxu0
      %v4831 = vadd.f32 0.0, %v4830
      %4832 = vmatmul.f32.gmra.mxu0 %v4784
      %v4833 = vpop.f32.mrf.mxu0
      %v4834 = vadd.f32 0.0, %v4833
      %4835 = vmatmul.f32.gmra.mxu0 %v4787
      %v4836 = vpop.f32.mrf.mxu0
      %v4837 = vadd.f32 0.0, %v4836
      %4838 = vmatmul.f32.gmra.mxu0 %v4790
      %v4839 = vpop.f32.mrf.mxu0
      %v4840 = vadd.f32 0.0, %v4839
      %4841 = vmatmul.f32.gmra.mxu0 %v4793
      %v4842 = vpop.f32.mrf.mxu0
      %v4843 = vadd.f32 0.0, %v4842
      %4844 = vmatmul.f32.gmra.mxu0 %v4796
      %v4845 = vpop.f32.mrf.mxu0
      %v4846 = vadd.f32 0.0, %v4845
      %4847 = vmatmul.f32.gmra.mxu0 %v4799
      %v4848 = vpop.f32.mrf.mxu0
      %v4849 = vadd.f32 0.0, %v4848
      %4850 = vmatmul.f32.gmra.mxu0 %v4802
      %v4851 = vpop.f32.mrf.mxu0
      %v4852 = vadd.f32 0.0, %v4851
      %4853 = vdwg.mxu0
      %v4854 = vmax.f32 %v4822, 0.0
      %v4855 = vmax.f32 %v4825, 0.0
      %v4856 = vmax.f32 %v4828, 0.0
      %v4857 = vmax.f32 %v4831, 0.0
      %v4858 = vmax.f32 %v4834, 0.0
      %v4859 = vmax.f32 %v4837, 0.0
      %v4860 = vmax.f32 %v4840, 0.0
      %v4861 = vmax.f32 %v4843, 0.0
      %v4862 = vmax.f32 %v4846, 0.0
      %v4863 = vmax.f32 %v4849, 0.0
      %v4864 = vmax.f32 %v4852, 0.0
      %4865 = vmatpush.msra.mxu0 0.0
      %4866 = vmatpush.msra.mxu0 0.0
      %4867 = vmatpush.msra.mxu0 0.0
      %4868 = vmatpush.msra.mxu0 0.0
      %4869 = vmatpush.msra.mxu0 0.0
      %4870 = vmatpush.msra.mxu0 %v4549
      %4871 = vmatpush.msra.mxu0 %v4430
      %4872 = vmatpush.msra.mxu0 %v4429
      %4873 = vmatpush.msra.mxu0 %v4428
      %4874 = vmatpush.msra.mxu0 %v4427
      %4875 = vmatpush.msra.mxu0 %v4426
      %4876 = vmatpush.msra.mxu0 %v4425
      %4877 = vmatpush.msra.mxu0 %v4424
      %4878 = vmatpush.msra.mxu0 %v4423
      %4879 = vmatpush.msra.mxu0 %v4422
      %4880 = vmatpush.msra.mxu0 %v4421
      %4881 = vmatmul.f32.gmra.mxu0 %v1837
      %v4882 = vpop.f32.mrf.mxu0
      %v4883 = vadd.f32 0.0, %v4882
      %4884 = vmatmul.f32.gmra.mxu0 %v1840
      %v4885 = vpop.f32.mrf.mxu0
      %v4886 = vadd.f32 0.0, %v4885
      %4887 = vmatmul.f32.gmra.mxu0 %v1843
      %v4888 = vpop.f32.mrf.mxu0
      %v4889 = vadd.f32 0.0, %v4888
      %4890 = vmatmul.f32.gmra.mxu0 %v1846
      %v4891 = vpop.f32.mrf.mxu0
      %v4892 = vadd.f32 0.0, %v4891
      %4893 = vmatmul.f32.gmra.mxu0 %v1849
      %v4894 = vpop.f32.mrf.mxu0
      %v4895 = vadd.f32 0.0, %v4894
      %4896 = vmatmul.f32.gmra.mxu0 %v1852
      %v4897 = vpop.f32.mrf.mxu0
      %v4898 = vadd.f32 0.0, %v4897
      %4899 = vmatmul.f32.gmra.mxu0 %v1855
      %v4900 = vpop.f32.mrf.mxu0
      %v4901 = vadd.f32 0.0, %v4900
      %4902 = vmatmul.f32.gmra.mxu0 %v1858
      %v4903 = vpop.f32.mrf.mxu0
      %v4904 = vadd.f32 0.0, %v4903
      %4905 = vmatmul.f32.gmra.mxu0 %v1861
      %v4906 = vpop.f32.mrf.mxu0
      %v4907 = vadd.f32 0.0, %v4906
      %4908 = vmatmul.f32.gmra.mxu0 %v1864
      %v4909 = vpop.f32.mrf.mxu0
      %v4910 = vadd.f32 0.0, %v4909
      %4911 = vmatmul.f32.gmra.mxu0 %v1867
      %v4912 = vpop.f32.mrf.mxu0
      %v4913 = vadd.f32 0.0, %v4912
      %4914 = vdwg.mxu0
      %v4916 = vsel %vm1953, %v4681, 0
      %4918 = vmatpush.msra.mxu0 0.0
      %4919 = vmatpush.msra.mxu0 0.0
      %4920 = vmatpush.msra.mxu0 0.0
      %4921 = vmatpush.msra.mxu0 0.0
      %4922 = vmatpush.msra.mxu0 0.0
      %4923 = vmatpush.msra.mxu0 0.0
      %4924 = vmatpush.msra.mxu0 0.0
      %4925 = vmatpush.msra.mxu0 0.0
      %4926 = vmatpush.msra.mxu0 0.0
      %4927 = vmatpush.msra.mxu0 0.0
      %4928 = vmatpush.msra.mxu0 0.0
      %4929 = vmatpush.msra.mxu0 0.0
      %4930 = vmatpush.msra.mxu0 0.0
      %4931 = vmatpush.msra.mxu0 0.0
      %4932 = vmatpush.msra.mxu0 %v4916
      %4933 = vmatpush.msra.mxu0 %v4680
      %4934 = vmatmul.f32.gmra.mxu0 %v1921
      %v4935 = vpop.f32.mrf.mxu0
      %v4936 = vadd.f32 0.0, %v4935
      %4937 = vmatmul.f32.gmra.mxu0 %v1924
      %v4938 = vpop.f32.mrf.mxu0
      %v4939 = vadd.f32 0.0, %v4938
      %4940 = vmatmul.f32.gmra.mxu0 %v1927
      %v4941 = vpop.f32.mrf.mxu0
      %v4942 = vadd.f32 0.0, %v4941
      %4943 = vmatmul.f32.gmra.mxu0 %v1930
      %v4944 = vpop.f32.mrf.mxu0
      %v4945 = vadd.f32 0.0, %v4944
      %4946 = vmatmul.f32.gmra.mxu0 %v1933
      %v4947 = vpop.f32.mrf.mxu0
      %v4948 = vadd.f32 0.0, %v4947
      %4949 = vmatmul.f32.gmra.mxu0 %v1936
      %v4950 = vpop.f32.mrf.mxu0
      %v4951 = vadd.f32 0.0, %v4950
      %4952 = vmatmul.f32.gmra.mxu0 %v1939
      %v4953 = vpop.f32.mrf.mxu0
      %v4954 = vadd.f32 0.0, %v4953
      %4955 = vmatmul.f32.gmra.mxu0 %v1942
      %v4956 = vpop.f32.mrf.mxu0
      %v4957 = vadd.f32 0.0, %v4956
      %4958 = vmatmul.f32.gmra.mxu0 %v1945
      %v4959 = vpop.f32.mrf.mxu0
      %v4960 = vadd.f32 0.0, %v4959
      %4961 = vmatmul.f32.gmra.mxu0 %v1948
      %v4962 = vpop.f32.mrf.mxu0
      %v4963 = vadd.f32 0.0, %v4962
      %4964 = vmatmul.f32.gmra.mxu0 %v1951
      %v4965 = vpop.f32.mrf.mxu0
      %v4966 = vadd.f32 0.0, %v4965
      %4967 = vdwg.mxu0
      %v4969 = vsel %vm1741, %v4936, 0
      %v4972 = vsel %vm1741, %v4939, 0
      %v4975 = vsel %vm1741, %v4942, 0
      %v4978 = vsel %vm1741, %v4945, 0
      %v4981 = vsel %vm1741, %v4948, 0
      %v4984 = vsel %vm1741, %v4951, 0
      %v4987 = vsel %vm1741, %v4954, 0
      %v4990 = vsel %vm1741, %v4957, 0
      %v4993 = vsel %vm1741, %v4960, 0
      %v4996 = vsel %vm1741, %v4963, 0
      %v4999 = vsel %vm1741, %v4966, 0
      %5001 = vmatpush.msra.mxu0 0.0
      %5002 = vmatpush.msra.mxu0 0.0
      %5003 = vmatpush.msra.mxu0 0.0
      %5004 = vmatpush.msra.mxu0 0.0
      %5005 = vmatpush.msra.mxu0 %v4720
      %5006 = vmatpush.msra.mxu0 %v4719
      %5007 = vmatpush.msra.mxu0 %v4718
      %5008 = vmatpush.msra.mxu0 %v4717
      %5009 = vmatpush.msra.mxu0 %v4716
      %5010 = vmatpush.msra.mxu0 %v4715
      %5011 = vmatpush.msra.mxu0 %v4714
      %5012 = vmatpush.msra.mxu0 %v4713
      %5013 = vmatpush.msra.mxu0 %v4712
      %5014 = vmatpush.msra.mxu0 %v4711
      %5015 = vmatpush.msra.mxu0 %v4710
      %5016 = vmatpush.msra.mxu0 %v4709
      %5017 = vmatmul.f32.gmra.mxu0 %v4969
      %v5018 = vpop.f32.mrf.mxu0
      %v5019 = vadd.f32 0.0, %v5018
      %5020 = vmatmul.f32.gmra.mxu0 %v4972
      %v5021 = vpop.f32.mrf.mxu0
      %v5022 = vadd.f32 0.0, %v5021
      %5023 = vmatmul.f32.gmra.mxu0 %v4975
      %v5024 = vpop.f32.mrf.mxu0
      %v5025 = vadd.f32 0.0, %v5024
      %5026 = vmatmul.f32.gmra.mxu0 %v4978
      %v5027 = vpop.f32.mrf.mxu0
      %v5028 = vadd.f32 0.0, %v5027
      %5029 = vmatmul.f32.gmra.mxu0 %v4981
      %v5030 = vpop.f32.mrf.mxu0
      %v5031 = vadd.f32 0.0, %v5030
      %5032 = vmatmul.f32.gmra.mxu0 %v4984
      %v5033 = vpop.f32.mrf.mxu0
      %v5034 = vadd.f32 0.0, %v5033
      %5035 = vmatmul.f32.gmra.mxu0 %v4987
      %v5036 = vpop.f32.mrf.mxu0
      %v5037 = vadd.f32 0.0, %v5036
      %5038 = vmatmul.f32.gmra.mxu0 %v4990
      %v5039 = vpop.f32.mrf.mxu0
      %v5040 = vadd.f32 0.0, %v5039
      %5041 = vmatmul.f32.gmra.mxu0 %v4993
      %v5042 = vpop.f32.mrf.mxu0
      %v5043 = vadd.f32 0.0, %v5042
      %5044 = vmatmul.f32.gmra.mxu0 %v4996
      %v5045 = vpop.f32.mrf.mxu0
      %v5046 = vadd.f32 0.0, %v5045
      %5047 = vmatmul.f32.gmra.mxu0 %v4999
      %v5048 = vpop.f32.mrf.mxu0
      %v5049 = vadd.f32 0.0, %v5048
      %5050 = vdwg.mxu0
      %v5052 = vsel %vm1741, %v4883, 0
      %v5055 = vsel %vm1741, %v4886, 0
      %v5058 = vsel %vm1741, %v4889, 0
      %v5061 = vsel %vm1741, %v4892, 0
      %v5064 = vsel %vm1741, %v4895, 0
      %v5067 = vsel %vm1741, %v4898, 0
      %v5070 = vsel %vm1741, %v4901, 0
      %v5073 = vsel %vm1741, %v4904, 0
      %v5076 = vsel %vm1741, %v4907, 0
      %v5079 = vsel %vm1741, %v4910, 0
      %v5082 = vsel %vm1741, %v4913, 0
      %5084 = vmatpush.msra.mxu0 0.0
      %5085 = vmatpush.msra.mxu0 0.0
      %5086 = vmatpush.msra.mxu0 0.0
      %5087 = vmatpush.msra.mxu0 0.0
      %5088 = vmatpush.msra.mxu0 %v4707
      %5089 = vmatpush.msra.mxu0 %v4706
      %5090 = vmatpush.msra.mxu0 %v4705
      %5091 = vmatpush.msra.mxu0 %v4704
      %5092 = vmatpush.msra.mxu0 %v4703
      %5093 = vmatpush.msra.mxu0 %v4702
      %5094 = vmatpush.msra.mxu0 %v4701
      %5095 = vmatpush.msra.mxu0 %v4700
      %5096 = vmatpush.msra.mxu0 %v4699
      %5097 = vmatpush.msra.mxu0 %v4698
      %5098 = vmatpush.msra.mxu0 %v4697
      %5099 = vmatpush.msra.mxu0 %v4696
      %5100 = vmatmul.f32.gmra.mxu0 %v5052
      %v5101 = vpop.f32.mrf.mxu0
      %v5102 = vadd.f32 %v5019, %v5101
      %5103 = vmatmul.f32.gmra.mxu0 %v5055
      %v5104 = vpop.f32.mrf.mxu0
      %v5105 = vadd.f32 %v5022, %v5104
      %5106 = vmatmul.f32.gmra.mxu0 %v5058
      %v5107 = vpop.f32.mrf.mxu0
      %v5108 = vadd.f32 %v5025, %v5107
      %5109 = vmatmul.f32.gmra.mxu0 %v5061
      %v5110 = vpop.f32.mrf.mxu0
      %v5111 = vadd.f32 %v5028, %v5110
      %5112 = vmatmul.f32.gmra.mxu0 %v5064
      %v5113 = vpop.f32.mrf.mxu0
      %v5114 = vadd.f32 %v5031, %v5113
      %5115 = vmatmul.f32.gmra.mxu0 %v5067
      %v5116 = vpop.f32.mrf.mxu0
      %v5117 = vadd.f32 %v5034, %v5116
      %5118 = vmatmul.f32.gmra.mxu0 %v5070
      %v5119 = vpop.f32.mrf.mxu0
      %v5120 = vadd.f32 %v5037, %v5119
      %5121 = vmatmul.f32.gmra.mxu0 %v5073
      %v5122 = vpop.f32.mrf.mxu0
      %v5123 = vadd.f32 %v5040, %v5122
      %5124 = vmatmul.f32.gmra.mxu0 %v5076
      %v5125 = vpop.f32.mrf.mxu0
      %v5126 = vadd.f32 %v5043, %v5125
      %5127 = vmatmul.f32.gmra.mxu0 %v5079
      %v5128 = vpop.f32.mrf.mxu0
      %v5129 = vadd.f32 %v5046, %v5128
      %5130 = vmatmul.f32.gmra.mxu0 %v5082
      %v5131 = vpop.f32.mrf.mxu0
      %v5132 = vadd.f32 %v5049, %v5131
      %5133 = vdwg.mxu0
      %v5134 = vxor.u32 %v5102, 2147483648
      %v5135 = vxor.u32 %v5105, 2147483648
      %v5136 = vxor.u32 %v5108, 2147483648
      %v5137 = vxor.u32 %v5111, 2147483648
      %v5138 = vxor.u32 %v5114, 2147483648
      %v5139 = vxor.u32 %v5117, 2147483648
      %v5140 = vxor.u32 %v5120, 2147483648
      %v5141 = vxor.u32 %v5123, 2147483648
      %v5142 = vxor.u32 %v5126, 2147483648
      %v5143 = vxor.u32 %v5129, 2147483648
      %v5144 = vxor.u32 %v5132, 2147483648
      %v5145 = vmul.f32 %v5134, 1.442695
      %v5146 = vpow.pop %v5145
      %v5147 = vmul.f32 %v5135, 1.442695
      %v5148 = vpow.pop %v5147
      %v5149 = vmul.f32 %v5136, 1.442695
      %v5150 = vpow.pop %v5149
      %v5151 = vmul.f32 %v5137, 1.442695
      %v5152 = vpow.pop %v5151
      %v5153 = vmul.f32 %v5138, 1.442695
      %v5154 = vpow.pop %v5153
      %v5155 = vmul.f32 %v5139, 1.442695
      %v5156 = vpow.pop %v5155
      %v5157 = vmul.f32 %v5140, 1.442695
      %v5158 = vpow.pop %v5157
      %v5159 = vmul.f32 %v5141, 1.442695
      %v5160 = vpow.pop %v5159
      %v5161 = vmul.f32 %v5142, 1.442695
      %v5162 = vpow.pop %v5161
      %v5163 = vmul.f32 %v5143, 1.442695
      %v5164 = vpow.pop %v5163
      %v5165 = vmul.f32 %v5144, 1.442695
      %v5166 = vpow.pop %v5165
      %v5167 = vadd.f32 %v5146, 1.0
      %v5168 = vadd.f32 %v5148, 1.0
      %v5169 = vadd.f32 %v5150, 1.0
      %v5170 = vadd.f32 %v5152, 1.0
      %v5171 = vadd.f32 %v5154, 1.0
      %v5172 = vadd.f32 %v5156, 1.0
      %v5173 = vadd.f32 %v5158, 1.0
      %v5174 = vadd.f32 %v5160, 1.0
      %v5175 = vadd.f32 %v5162, 1.0
      %v5176 = vadd.f32 %v5164, 1.0
      %v5177 = vadd.f32 %v5166, 1.0
      %v5178 = vrcp.pop %v5167
      %v5179 = vmul.f32 %v5167, %v5178
      %v5180 = vsub.f32 1.0, %v5179
      %v5181 = vmul.f32 %v5178, %v5180
      %v5182 = vadd.f32 %v5178, %v5181
      %vm5183 = vweird.f32 %v5167
      %vm5184 = vweird.f32 %v5178
      %vm5185 = vmor %vm5183, %vm5184
      %v5186 = vsel %vm5185, %v5178, %v5182
      %v5187 = vand.u32 2147483647, %v5167
      %vm5188 = vcmp.eq.f32.partialorder %v5187, 8.507059e+37
      %v5189 = vand.u32 %v5167, 2147483648
      %v5190 = vor.u32 1.1754944e-38, %v5189
      %v5191 = vsel %vm5188, %v5190, %v5186
      %v5192 = vmul.f32 1.0, %v5191
      %v5193 = vrcp.pop %v5168
      %v5194 = vmul.f32 %v5168, %v5193
      %v5195 = vsub.f32 1.0, %v5194
      %v5196 = vmul.f32 %v5193, %v5195
      %v5197 = vadd.f32 %v5193, %v5196
      %vm5198 = vweird.f32 %v5168
      %vm5199 = vweird.f32 %v5193
      %vm5200 = vmor %vm5198, %vm5199
      %v5201 = vsel %vm5200, %v5193, %v5197
      %v5202 = vand.u32 2147483647, %v5168
      %vm5203 = vcmp.eq.f32.partialorder %v5202, 8.507059e+37
      %v5204 = vand.u32 %v5168, 2147483648
      %v5205 = vor.u32 1.1754944e-38, %v5204
      %v5206 = vsel %vm5203, %v5205, %v5201
      %v5207 = vmul.f32 1.0, %v5206
      %v5208 = vrcp.pop %v5169
      %v5209 = vmul.f32 %v5169, %v5208
      %v5210 = vsub.f32 1.0, %v5209
      %v5211 = vmul.f32 %v5208, %v5210
      %v5212 = vadd.f32 %v5208, %v5211
      %vm5213 = vweird.f32 %v5169
      %vm5214 = vweird.f32 %v5208
      %vm5215 = vmor %vm5213, %vm5214
      %v5216 = vsel %vm5215, %v5208, %v5212
      %v5217 = vand.u32 2147483647, %v5169
      %vm5218 = vcmp.eq.f32.partialorder %v5217, 8.507059e+37
      %v5219 = vand.u32 %v5169, 2147483648
      %v5220 = vor.u32 1.1754944e-38, %v5219
      %v5221 = vsel %vm5218, %v5220, %v5216
      %v5222 = vmul.f32 1.0, %v5221
      %v5223 = vrcp.pop %v5170
      %v5224 = vmul.f32 %v5170, %v5223
      %v5225 = vsub.f32 1.0, %v5224
      %v5226 = vmul.f32 %v5223, %v5225
      %v5227 = vadd.f32 %v5223, %v5226
      %vm5228 = vweird.f32 %v5170
      %vm5229 = vweird.f32 %v5223
      %vm5230 = vmor %vm5228, %vm5229
      %v5231 = vsel %vm5230, %v5223, %v5227
      %v5232 = vand.u32 2147483647, %v5170
      %vm5233 = vcmp.eq.f32.partialorder %v5232, 8.507059e+37
      %v5234 = vand.u32 %v5170, 2147483648
      %v5235 = vor.u32 1.1754944e-38, %v5234
      %v5236 = vsel %vm5233, %v5235, %v5231
      %v5237 = vmul.f32 1.0, %v5236
      %v5238 = vrcp.pop %v5171
      %v5239 = vmul.f32 %v5171, %v5238
      %v5240 = vsub.f32 1.0, %v5239
      %v5241 = vmul.f32 %v5238, %v5240
      %v5242 = vadd.f32 %v5238, %v5241
      %vm5243 = vweird.f32 %v5171
      %vm5244 = vweird.f32 %v5238
      %vm5245 = vmor %vm5243, %vm5244
      %v5246 = vsel %vm5245, %v5238, %v5242
      %v5247 = vand.u32 2147483647, %v5171
      %vm5248 = vcmp.eq.f32.partialorder %v5247, 8.507059e+37
      %v5249 = vand.u32 %v5171, 2147483648
      %v5250 = vor.u32 1.1754944e-38, %v5249
      %v5251 = vsel %vm5248, %v5250, %v5246
      %v5252 = vmul.f32 1.0, %v5251
      %v5253 = vrcp.pop %v5172
      %v5254 = vmul.f32 %v5172, %v5253
      %v5255 = vsub.f32 1.0, %v5254
      %v5256 = vmul.f32 %v5253, %v5255
      %v5257 = vadd.f32 %v5253, %v5256
      %vm5258 = vweird.f32 %v5172
      %vm5259 = vweird.f32 %v5253
      %vm5260 = vmor %vm5258, %vm5259
      %v5261 = vsel %vm5260, %v5253, %v5257
      %v5262 = vand.u32 2147483647, %v5172
      %vm5263 = vcmp.eq.f32.partialorder %v5262, 8.507059e+37
      %v5264 = vand.u32 %v5172, 2147483648
      %v5265 = vor.u32 1.1754944e-38, %v5264
      %v5266 = vsel %vm5263, %v5265, %v5261
      %v5267 = vmul.f32 1.0, %v5266
      %v5268 = vrcp.pop %v5173
      %v5269 = vmul.f32 %v5173, %v5268
      %v5270 = vsub.f32 1.0, %v5269
      %v5271 = vmul.f32 %v5268, %v5270
      %v5272 = vadd.f32 %v5268, %v5271
      %vm5273 = vweird.f32 %v5173
      %vm5274 = vweird.f32 %v5268
      %vm5275 = vmor %vm5273, %vm5274
      %v5276 = vsel %vm5275, %v5268, %v5272
      %v5277 = vand.u32 2147483647, %v5173
      %vm5278 = vcmp.eq.f32.partialorder %v5277, 8.507059e+37
      %v5279 = vand.u32 %v5173, 2147483648
      %v5280 = vor.u32 1.1754944e-38, %v5279
      %v5281 = vsel %vm5278, %v5280, %v5276
      %v5282 = vmul.f32 1.0, %v5281
      %v5283 = vrcp.pop %v5174
      %v5284 = vmul.f32 %v5174, %v5283
      %v5285 = vsub.f32 1.0, %v5284
      %v5286 = vmul.f32 %v5283, %v5285
      %v5287 = vadd.f32 %v5283, %v5286
      %vm5288 = vweird.f32 %v5174
      %vm5289 = vweird.f32 %v5283
      %vm5290 = vmor %vm5288, %vm5289
      %v5291 = vsel %vm5290, %v5283, %v5287
      %v5292 = vand.u32 2147483647, %v5174
      %vm5293 = vcmp.eq.f32.partialorder %v5292, 8.507059e+37
      %v5294 = vand.u32 %v5174, 2147483648
      %v5295 = vor.u32 1.1754944e-38, %v5294
      %v5296 = vsel %vm5293, %v5295, %v5291
      %v5297 = vmul.f32 1.0, %v5296
      %v5298 = vrcp.pop %v5175
      %v5299 = vmul.f32 %v5175, %v5298
      %v5300 = vsub.f32 1.0, %v5299
      %v5301 = vmul.f32 %v5298, %v5300
      %v5302 = vadd.f32 %v5298, %v5301
      %vm5303 = vweird.f32 %v5175
      %vm5304 = vweird.f32 %v5298
      %vm5305 = vmor %vm5303, %vm5304
      %v5306 = vsel %vm5305, %v5298, %v5302
      %v5307 = vand.u32 2147483647, %v5175
      %vm5308 = vcmp.eq.f32.partialorder %v5307, 8.507059e+37
      %v5309 = vand.u32 %v5175, 2147483648
      %v5310 = vor.u32 1.1754944e-38, %v5309
      %v5311 = vsel %vm5308, %v5310, %v5306
      %v5312 = vmul.f32 1.0, %v5311
      %v5313 = vrcp.pop %v5176
      %v5314 = vmul.f32 %v5176, %v5313
      %v5315 = vsub.f32 1.0, %v5314
      %v5316 = vmul.f32 %v5313, %v5315
      %v5317 = vadd.f32 %v5313, %v5316
      %vm5318 = vweird.f32 %v5176
      %vm5319 = vweird.f32 %v5313
      %vm5320 = vmor %vm5318, %vm5319
      %v5321 = vsel %vm5320, %v5313, %v5317
      %v5322 = vand.u32 2147483647, %v5176
      %vm5323 = vcmp.eq.f32.partialorder %v5322, 8.507059e+37
      %v5324 = vand.u32 %v5176, 2147483648
      %v5325 = vor.u32 1.1754944e-38, %v5324
      %v5326 = vsel %vm5323, %v5325, %v5321
      %v5327 = vmul.f32 1.0, %v5326
      %v5328 = vrcp.pop %v5177
      %v5329 = vmul.f32 %v5177, %v5328
      %v5330 = vsub.f32 1.0, %v5329
      %v5331 = vmul.f32 %v5328, %v5330
      %v5332 = vadd.f32 %v5328, %v5331
      %vm5333 = vweird.f32 %v5177
      %vm5334 = vweird.f32 %v5328
      %vm5335 = vmor %vm5333, %vm5334
      %v5336 = vsel %vm5335, %v5328, %v5332
      %v5337 = vand.u32 2147483647, %v5177
      %vm5338 = vcmp.eq.f32.partialorder %v5337, 8.507059e+37
      %v5339 = vand.u32 %v5177, 2147483648
      %v5340 = vor.u32 1.1754944e-38, %v5339
      %v5341 = vsel %vm5338, %v5340, %v5336
      %v5342 = vmul.f32 1.0, %v5341
      %v5343 = vadd.f32 %v4854, %v5192
      %v5344 = vadd.f32 %v4855, %v5207
      %v5345 = vadd.f32 %v4856, %v5222
      %v5346 = vadd.f32 %v4857, %v5237
      %v5347 = vadd.f32 %v4858, %v5252
      %v5348 = vadd.f32 %v4859, %v5267
      %v5349 = vadd.f32 %v4860, %v5282
      %v5350 = vadd.f32 %v4861, %v5297
      %v5351 = vadd.f32 %v4862, %v5312
      %v5352 = vadd.f32 %v4863, %v5327
      %v5353 = vadd.f32 %v4864, %v5342
      %v5354 = vmul.f32 %v5343, 0.5
      %v5355 = vmul.f32 %v5344, 0.5
      %v5356 = vmul.f32 %v5345, 0.5
      %v5357 = vmul.f32 %v5346, 0.5
      %v5358 = vmul.f32 %v5347, 0.5
      %v5359 = vmul.f32 %v5348, 0.5
      %v5360 = vmul.f32 %v5349, 0.5
      %v5361 = vmul.f32 %v5350, 0.5
      %v5362 = vmul.f32 %v5351, 0.5
      %v5363 = vmul.f32 %v5352, 0.5
      %v5364 = vmul.f32 %v5353, 0.5
      %v5365 = vmax.f32 %v5354, 0.0
      %v5366 = vmax.f32 %v5355, 0.0
      %v5367 = vmax.f32 %v5356, 0.0
      %v5368 = vmax.f32 %v5357, 0.0
      %v5369 = vmax.f32 %v5358, 0.0
      %v5370 = vmax.f32 %v5359, 0.0
      %v5371 = vmax.f32 %v5360, 0.0
      %v5372 = vmax.f32 %v5361, 0.0
      %v5373 = vmax.f32 %v5362, 0.0
      %v5374 = vmax.f32 %v5363, 0.0
      %v5375 = vmax.f32 %v5364, 0.0
      %v5376 = vmul.f32 %v5365, 0.9
      %v5377 = vmul.f32 %v5366, 0.9
      %v5378 = vmul.f32 %v5367, 0.9
      %v5379 = vmul.f32 %v5368, 0.9
      %v5380 = vmul.f32 %v5369, 0.9
      %v5381 = vmul.f32 %v5370, 0.9
      %v5382 = vmul.f32 %v5371, 0.9
      %v5383 = vmul.f32 %v5372, 0.9
      %v5384 = vmul.f32 %v5373, 0.9
      %v5385 = vmul.f32 %v5374, 0.9
      %v5386 = vmul.f32 %v5375, 0.9
      %v5387 = vadd.f32 %v5376, %v2426
      %v5388 = vadd.f32 %v5377, %v2427
      %v5389 = vadd.f32 %v5378, %v2428
      %v5390 = vadd.f32 %v5379, %v2429
      %v5391 = vadd.f32 %v5380, %v2430
      %v5392 = vadd.f32 %v5381, %v2431
      %v5393 = vadd.f32 %v5382, %v2432
      %v5394 = vadd.f32 %v5383, %v2433
      %v5395 = vadd.f32 %v5384, %v2434
      %v5396 = vadd.f32 %v5385, %v2435
      %v5397 = vadd.f32 %v5386, %v2436
      %v5398 = vmax.f32 %v5387, 0.0
      %v5399 = vmax.f32 %v5388, 0.0
      %v5400 = vmax.f32 %v5389, 0.0
      %v5401 = vmax.f32 %v5390, 0.0
      %v5402 = vmax.f32 %v5391, 0.0
      %v5403 = vmax.f32 %v5392, 0.0
      %v5404 = vmax.f32 %v5393, 0.0
      %v5405 = vmax.f32 %v5394, 0.0
      %v5406 = vmax.f32 %v5395, 0.0
      %v5407 = vmax.f32 %v5396, 0.0
      %v5408 = vmax.f32 %v5397, 0.0
      %s5409 = scalar_lea.vmem %s11, 864
      %v5410 = vld [vmem:[%s5409] sm:$0xff]
      %v5411 = vld [vmem:[%s5409 + $0x8] sm:$0xff]
      %v5412 = vld [vmem:[%s5409 + $0x10] sm:$0xff]
      %v5413 = vld [vmem:[%s5409 + $0x18] sm:$0xff]
      %v5414 = vld [vmem:[%s5409 + $0x20] sm:$0xff]
      %v5415 = vld [vmem:[%s5409 + $0x28] sm:$0xff]
      %v5416 = vld [vmem:[%s5409 + $0x30] sm:$0xff]
      %v5417 = vld [vmem:[%s5409 + $0x38] sm:$0xff]
      %v5418 = vld [vmem:[%s5409 + $0x40] sm:$0xff]
      %v5419 = vld [vmem:[%s5409 + $0x48] sm:$0xff]
      %v5420 = vld [vmem:[%s5409 + $0x50] sm:$0xff]
      %v5421 = vld [vmem:[%s5409 + $0x58] sm:$0xff]
      %s5422 = scalar_lea.vmem %s11, 960
      %v5423 = vld [vmem:[%s5422] sm:$0xff]
      %v5424 = vld [vmem:[%s5422 + $0x8] sm:$0xff]
      %v5425 = vld [vmem:[%s5422 + $0x10] sm:$0xff]
      %v5426 = vld [vmem:[%s5422 + $0x18] sm:$0xff]
      %v5427 = vld [vmem:[%s5422 + $0x20] sm:$0xff]
      %v5428 = vld [vmem:[%s5422 + $0x28] sm:$0xff]
      %v5429 = vld [vmem:[%s5422 + $0x30] sm:$0xff]
      %v5430 = vld [vmem:[%s5422 + $0x38] sm:$0xff]
      %v5431 = vld [vmem:[%s5422 + $0x40] sm:$0xff]
      %v5432 = vld [vmem:[%s5422 + $0x48] sm:$0xff]
      %v5433 = vld [vmem:[%s5422 + $0x50] sm:$0xff]
      %v5434 = vld [vmem:[%s5422 + $0x58] sm:$0xff]
      %s5435 = scalar_lea.vmem %s11, 1056
      %v5436 = vld [vmem:[%s5435] sm:$0xff]
      %v5437 = vld [vmem:[%s5435 + $0x8] sm:$0xff]
      %v5438 = vld [vmem:[%s5435 + $0x10] sm:$0xff]
      %v5439 = vld [vmem:[%s5435 + $0x18] sm:$0xff]
      %v5440 = vld [vmem:[%s5435 + $0x20] sm:$0xff]
      %v5441 = vld [vmem:[%s5435 + $0x28] sm:$0xff]
      %v5442 = vld [vmem:[%s5435 + $0x30] sm:$0xff]
      %v5443 = vld [vmem:[%s5435 + $0x38] sm:$0xff]
      %v5444 = vld [vmem:[%s5435 + $0x40] sm:$0xff]
      %v5445 = vld [vmem:[%s5435 + $0x48] sm:$0xff]
      %v5446 = vld [vmem:[%s5435 + $0x50] sm:$0xff]
      %v5447 = vld [vmem:[%s5435 + $0x58] sm:$0xff]
      %5448 = vmatpush.msra.mxu0 0.0
      %5449 = vmatpush.msra.mxu0 0.0
      %5450 = vmatpush.msra.mxu0 0.0
      %5451 = vmatpush.msra.mxu0 0.0
      %5452 = vmatpush.msra.mxu0 0.0
      %5453 = vmatpush.msra.mxu0 0.0
      %5454 = vmatpush.msra.mxu0 0.0
      %5455 = vmatpush.msra.mxu0 0.0
      %5456 = vmatpush.msra.mxu0 0.0
      %5457 = vmatpush.msra.mxu0 0.0
      %5458 = vmatpush.msra.mxu0 0.0
      %5459 = vmatpush.msra.mxu0 0.0
      %5460 = vmatpush.msra.mxu0 0.0
      %5461 = vmatpush.msra.mxu0 0.0
      %5462 = vmatpush.msra.mxu0 %v4916
      %5463 = vmatpush.msra.mxu0 %v4680
      %5464 = vmatmul.f32.gmra.mxu0 %v2498
      %v5465 = vpop.f32.mrf.mxu0
      %v5466 = vadd.f32 0.0, %v5465
      %5467 = vmatmul.f32.gmra.mxu0 %v2501
      %v5468 = vpop.f32.mrf.mxu0
      %v5469 = vadd.f32 0.0, %v5468
      %5470 = vdwg.mxu0
      %v5472 = vsel %vm1741, %v5466, 0
      %v5475 = vsel %vm1741, %v5469, 0
      %5477 = vmatpush.msra.mxu0 0.0
      %5478 = vmatpush.msra.mxu0 0.0
      %5479 = vmatpush.msra.mxu0 0.0
      %5480 = vmatpush.msra.mxu0 0.0
      %5481 = vmatpush.msra.mxu0 %v5421
      %5482 = vmatpush.msra.mxu0 %v5420
      %5483 = vmatpush.msra.mxu0 %v5419
      %5484 = vmatpush.msra.mxu0 %v5418
      %5485 = vmatpush.msra.mxu0 %v5417
      %5486 = vmatpush.msra.mxu0 %v5416
      %5487 = vmatpush.msra.mxu0 %v5415
      %5488 = vmatpush.msra.mxu0 %v5414
      %5489 = vmatpush.msra.mxu0 %v5413
      %5490 = vmatpush.msra.mxu0 %v5412
      %5491 = vmatpush.msra.mxu0 %v5411
      %5492 = vmatpush.msra.mxu0 %v5410
      %5493 = vmatmul.f32.gmra.mxu0 %v5472
      %v5494 = vpop.f32.mrf.mxu0
      %v5495 = vadd.f32 0.0, %v5494
      %5496 = vmatmul.f32.gmra.mxu0 %v5475
      %v5497 = vpop.f32.mrf.mxu0
      %v5498 = vadd.f32 0.0, %v5497
      %5499 = vdwg.mxu0
      %v5500 = vmax.f32 %v5495, 0.0
      %v5501 = vmax.f32 %v5498, 0.0
      %5502 = vmatpush.msra.mxu0 0.0
      %5503 = vmatpush.msra.mxu0 0.0
      %5504 = vmatpush.msra.mxu0 0.0
      %5505 = vmatpush.msra.mxu0 0.0
      %5506 = vmatpush.msra.mxu0 0.0
      %5507 = vmatpush.msra.mxu0 0.0
      %5508 = vmatpush.msra.mxu0 0.0
      %5509 = vmatpush.msra.mxu0 0.0
      %5510 = vmatpush.msra.mxu0 0.0
      %5511 = vmatpush.msra.mxu0 0.0
      %5512 = vmatpush.msra.mxu0 0.0
      %5513 = vmatpush.msra.mxu0 0.0
      %5514 = vmatpush.msra.mxu0 0.0
      %5515 = vmatpush.msra.mxu0 0.0
      %5516 = vmatpush.msra.mxu0 %v4916
      %5517 = vmatpush.msra.mxu0 %v4680
      %5518 = vmatmul.f32.gmra.mxu0 %v2558
      %v5519 = vpop.f32.mrf.mxu0
      %v5520 = vadd.f32 0.0, %v5519
      %5521 = vmatmul.f32.gmra.mxu0 %v2561
      %v5522 = vpop.f32.mrf.mxu0
      %v5523 = vadd.f32 0.0, %v5522
      %5524 = vdwg.mxu0
      %v5526 = vsel %vm1687, %v5408, 0
      %5528 = vmatpush.msra.mxu0 0.0
      %5529 = vmatpush.msra.mxu0 0.0
      %5530 = vmatpush.msra.mxu0 0.0
      %5531 = vmatpush.msra.mxu0 0.0
      %5532 = vmatpush.msra.mxu0 0.0
      %5533 = vmatpush.msra.mxu0 %v5526
      %5534 = vmatpush.msra.mxu0 %v5407
      %5535 = vmatpush.msra.mxu0 %v5406
      %5536 = vmatpush.msra.mxu0 %v5405
      %5537 = vmatpush.msra.mxu0 %v5404
      %5538 = vmatpush.msra.mxu0 %v5403
      %5539 = vmatpush.msra.mxu0 %v5402
      %5540 = vmatpush.msra.mxu0 %v5401
      %5541 = vmatpush.msra.mxu0 %v5400
      %5542 = vmatpush.msra.mxu0 %v5399
      %5543 = vmatpush.msra.mxu0 %v5398
      %5544 = vmatmul.f32.gmra.mxu0 %v2587
      %v5545 = vpop.f32.mrf.mxu0
      %v5546 = vadd.f32 0.0, %v5545
      %5547 = vmatmul.f32.gmra.mxu0 %v2590
      %v5548 = vpop.f32.mrf.mxu0
      %v5549 = vadd.f32 0.0, %v5548
      %5550 = vdwg.mxu0
      %v5552 = vsel %vm1741, %v5546, 0
      %v5555 = vsel %vm1741, %v5549, 0
      %5557 = vmatpush.msra.mxu0 0.0
      %5558 = vmatpush.msra.mxu0 0.0
      %5559 = vmatpush.msra.mxu0 0.0
      %5560 = vmatpush.msra.mxu0 0.0
      %5561 = vmatpush.msra.mxu0 %v5447
      %5562 = vmatpush.msra.mxu0 %v5446
      %5563 = vmatpush.msra.mxu0 %v5445
      %5564 = vmatpush.msra.mxu0 %v5444
      %5565 = vmatpush.msra.mxu0 %v5443
      %5566 = vmatpush.msra.mxu0 %v5442
      %5567 = vmatpush.msra.mxu0 %v5441
      %5568 = vmatpush.msra.mxu0 %v5440
      %5569 = vmatpush.msra.mxu0 %v5439
      %5570 = vmatpush.msra.mxu0 %v5438
      %5571 = vmatpush.msra.mxu0 %v5437
      %5572 = vmatpush.msra.mxu0 %v5436
      %5573 = vmatmul.f32.gmra.mxu0 %v5552
      %v5574 = vpop.f32.mrf.mxu0
      %v5575 = vadd.f32 0.0, %v5574
      %5576 = vmatmul.f32.gmra.mxu0 %v5555
      %v5577 = vpop.f32.mrf.mxu0
      %v5578 = vadd.f32 0.0, %v5577
      %5579 = vdwg.mxu0
      %v5581 = vsel %vm1741, %v5520, 0
      %v5584 = vsel %vm1741, %v5523, 0
      %5586 = vmatpush.msra.mxu0 0.0
      %5587 = vmatpush.msra.mxu0 0.0
      %5588 = vmatpush.msra.mxu0 0.0
      %5589 = vmatpush.msra.mxu0 0.0
      %5590 = vmatpush.msra.mxu0 %v5434
      %5591 = vmatpush.msra.mxu0 %v5433
      %5592 = vmatpush.msra.mxu0 %v5432
      %5593 = vmatpush.msra.mxu0 %v5431
      %5594 = vmatpush.msra.mxu0 %v5430
      %5595 = vmatpush.msra.mxu0 %v5429
      %5596 = vmatpush.msra.mxu0 %v5428
      %5597 = vmatpush.msra.mxu0 %v5427
      %5598 = vmatpush.msra.mxu0 %v5426
      %5599 = vmatpush.msra.mxu0 %v5425
      %5600 = vmatpush.msra.mxu0 %v5424
      %5601 = vmatpush.msra.mxu0 %v5423
      %5602 = vmatmul.f32.gmra.mxu0 %v5581
      %v5603 = vpop.f32.mrf.mxu0
      %v5604 = vadd.f32 %v5575, %v5603
      %5605 = vmatmul.f32.gmra.mxu0 %v5584
      %v5606 = vpop.f32.mrf.mxu0
      %v5607 = vadd.f32 %v5578, %v5606
      %5608 = vdwg.mxu0
      %v5609 = vxor.u32 %v5604, 2147483648
      %v5610 = vxor.u32 %v5607, 2147483648
      %v5611 = vmul.f32 %v5609, 1.442695
      %v5612 = vpow.pop %v5611
      %v5613 = vmul.f32 %v5610, 1.442695
      %v5614 = vpow.pop %v5613
      %v5615 = vadd.f32 %v5612, 1.0
      %v5616 = vadd.f32 %v5614, 1.0
      %v5617 = vrcp.pop %v5615
      %v5618 = vmul.f32 %v5615, %v5617
      %v5619 = vsub.f32 1.0, %v5618
      %v5620 = vmul.f32 %v5617, %v5619
      %v5621 = vadd.f32 %v5617, %v5620
      %vm5622 = vweird.f32 %v5615
      %vm5623 = vweird.f32 %v5617
      %vm5624 = vmor %vm5622, %vm5623
      %v5625 = vsel %vm5624, %v5617, %v5621
      %v5626 = vand.u32 2147483647, %v5615
      %vm5627 = vcmp.eq.f32.partialorder %v5626, 8.507059e+37
      %v5628 = vand.u32 %v5615, 2147483648
      %v5629 = vor.u32 1.1754944e-38, %v5628
      %v5630 = vsel %vm5627, %v5629, %v5625
      %v5631 = vmul.f32 1.0, %v5630
      %v5632 = vrcp.pop %v5616
      %v5633 = vmul.f32 %v5616, %v5632
      %v5634 = vsub.f32 1.0, %v5633
      %v5635 = vmul.f32 %v5632, %v5634
      %v5636 = vadd.f32 %v5632, %v5635
      %vm5637 = vweird.f32 %v5616
      %vm5638 = vweird.f32 %v5632
      %vm5639 = vmor %vm5637, %vm5638
      %v5640 = vsel %vm5639, %v5632, %v5636
      %v5641 = vand.u32 2147483647, %v5616
      %vm5642 = vcmp.eq.f32.partialorder %v5641, 8.507059e+37
      %v5643 = vand.u32 %v5616, 2147483648
      %v5644 = vor.u32 1.1754944e-38, %v5643
      %v5645 = vsel %vm5642, %v5644, %v5640
      %v5646 = vmul.f32 1.0, %v5645
      %v5647 = vadd.f32 %v5500, %v5631
      %v5648 = vadd.f32 %v5501, %v5646
      %v5649 = vmul.f32 %v5647, 0.5
      %v5650 = vmul.f32 %v5648, 0.5
      %v5651 = vmax.f32 %v5649, 0.0
      %v5652 = vmax.f32 %v5650, 0.0
      %v5653 = vmul.f32 %v5651, 0.9
      %v5654 = vmul.f32 %v5652, 0.9
      %v5655 = vadd.f32 %v5653, %v2722
      %v5656 = vadd.f32 %v5654, %v2723
      %v5657 = vmax.f32 %v5655, 0.0
      %v5658 = vmax.f32 %v5656, 0.0
      %s5659 = scalar_lea.vmem %s10, 1152
      %v5660 = vld [vmem:[%s5659] sm:$0xff]
      %v5661 = vld [vmem:[%s5659 + $0x8] sm:$0xff]
      %v5662 = vld [vmem:[%s5659 + $0x10] sm:$0xff]
      %v5663 = vld [vmem:[%s5659 + $0x18] sm:$0xff]
      %v5664 = vld [vmem:[%s5659 + $0x20] sm:$0xff]
      %v5665 = vld [vmem:[%s5659 + $0x28] sm:$0xff]
      %v5666 = vld [vmem:[%s5659 + $0x30] sm:$0xff]
      %v5667 = vld [vmem:[%s5659 + $0x38] sm:$0xff]
      %v5668 = vld [vmem:[%s5659 + $0x40] sm:$0xff]
      %v5669 = vld [vmem:[%s5659 + $0x48] sm:$0xff]
      %v5670 = vld [vmem:[%s5659 + $0x50] sm:$0xff]
      %v5671 = vld [vmem:[%s5659 + $0x58] sm:$0xff]
      %s5672 = scalar_lea.vmem %s10, 1248
      %v5673 = vld [vmem:[%s5672] sm:$0xff]
      %v5674 = vld [vmem:[%s5672 + $0x8] sm:$0xff]
      %v5675 = vld [vmem:[%s5672 + $0x10] sm:$0xff]
      %v5676 = vld [vmem:[%s5672 + $0x18] sm:$0xff]
      %v5677 = vld [vmem:[%s5672 + $0x20] sm:$0xff]
      %v5678 = vld [vmem:[%s5672 + $0x28] sm:$0xff]
      %v5679 = vld [vmem:[%s5672 + $0x30] sm:$0xff]
      %v5680 = vld [vmem:[%s5672 + $0x38] sm:$0xff]
      %v5681 = vld [vmem:[%s5672 + $0x40] sm:$0xff]
      %v5682 = vld [vmem:[%s5672 + $0x48] sm:$0xff]
      %v5683 = vld [vmem:[%s5672 + $0x50] sm:$0xff]
      %v5684 = vld [vmem:[%s5672 + $0x58] sm:$0xff]
      %s5685 = scalar_lea.vmem %s10, 1344
      %v5686 = vld [vmem:[%s5685] sm:$0xff]
      %v5687 = vld [vmem:[%s5685 + $0x8] sm:$0xff]
      %v5688 = vld [vmem:[%s5685 + $0x10] sm:$0xff]
      %v5689 = vld [vmem:[%s5685 + $0x18] sm:$0xff]
      %v5690 = vld [vmem:[%s5685 + $0x20] sm:$0xff]
      %v5691 = vld [vmem:[%s5685 + $0x28] sm:$0xff]
      %v5692 = vld [vmem:[%s5685 + $0x30] sm:$0xff]
      %v5693 = vld [vmem:[%s5685 + $0x38] sm:$0xff]
      %v5694 = vld [vmem:[%s5685 + $0x40] sm:$0xff]
      %v5695 = vld [vmem:[%s5685 + $0x48] sm:$0xff]
      %v5696 = vld [vmem:[%s5685 + $0x50] sm:$0xff]
      %v5697 = vld [vmem:[%s5685 + $0x58] sm:$0xff]
      %5698 = vmatpush.msra.mxu0 0.0
      %5699 = vmatpush.msra.mxu0 0.0
      %5700 = vmatpush.msra.mxu0 0.0
      %5701 = vmatpush.msra.mxu0 0.0
      %5702 = vmatpush.msra.mxu0 0.0
      %5703 = vmatpush.msra.mxu0 %v5526
      %5704 = vmatpush.msra.mxu0 %v5407
      %5705 = vmatpush.msra.mxu0 %v5406
      %5706 = vmatpush.msra.mxu0 %v5405
      %5707 = vmatpush.msra.mxu0 %v5404
      %5708 = vmatpush.msra.mxu0 %v5403
      %5709 = vmatpush.msra.mxu0 %v5402
      %5710 = vmatpush.msra.mxu0 %v5401
      %5711 = vmatpush.msra.mxu0 %v5400
      %5712 = vmatpush.msra.mxu0 %v5399
      %5713 = vmatpush.msra.mxu0 %v5398
      %5714 = vmatmul.f32.gmra.mxu0 %v1655
      %v5715 = vpop.f32.mrf.mxu0
      %v5716 = vadd.f32 0.0, %v5715
      %5717 = vmatmul.f32.gmra.mxu0 %v1658
      %v5718 = vpop.f32.mrf.mxu0
      %v5719 = vadd.f32 0.0, %v5718
      %5720 = vmatmul.f32.gmra.mxu0 %v1661
      %v5721 = vpop.f32.mrf.mxu0
      %v5722 = vadd.f32 0.0, %v5721
      %5723 = vmatmul.f32.gmra.mxu0 %v1664
      %v5724 = vpop.f32.mrf.mxu0
      %v5725 = vadd.f32 0.0, %v5724
      %5726 = vmatmul.f32.gmra.mxu0 %v1667
      %v5727 = vpop.f32.mrf.mxu0
      %v5728 = vadd.f32 0.0, %v5727
      %5729 = vmatmul.f32.gmra.mxu0 %v1670
      %v5730 = vpop.f32.mrf.mxu0
      %v5731 = vadd.f32 0.0, %v5730
      %5732 = vmatmul.f32.gmra.mxu0 %v1673
      %v5733 = vpop.f32.mrf.mxu0
      %v5734 = vadd.f32 0.0, %v5733
      %5735 = vmatmul.f32.gmra.mxu0 %v1676
      %v5736 = vpop.f32.mrf.mxu0
      %v5737 = vadd.f32 0.0, %v5736
      %5738 = vmatmul.f32.gmra.mxu0 %v1679
      %v5739 = vpop.f32.mrf.mxu0
      %v5740 = vadd.f32 0.0, %v5739
      %5741 = vmatmul.f32.gmra.mxu0 %v1682
      %v5742 = vpop.f32.mrf.mxu0
      %v5743 = vadd.f32 0.0, %v5742
      %5744 = vmatmul.f32.gmra.mxu0 %v1685
      %v5745 = vpop.f32.mrf.mxu0
      %v5746 = vadd.f32 0.0, %v5745
      %5747 = vdwg.mxu0
      %v5749 = vsel %vm1741, %v5716, 0
      %v5752 = vsel %vm1741, %v5719, 0
      %v5755 = vsel %vm1741, %v5722, 0
      %v5758 = vsel %vm1741, %v5725, 0
      %v5761 = vsel %vm1741, %v5728, 0
      %v5764 = vsel %vm1741, %v5731, 0
      %v5767 = vsel %vm1741, %v5734, 0
      %v5770 = vsel %vm1741, %v5737, 0
      %v5773 = vsel %vm1741, %v5740, 0
      %v5776 = vsel %vm1741, %v5743, 0
      %v5779 = vsel %vm1741, %v5746, 0
      %5781 = vmatpush.msra.mxu0 0.0
      %5782 = vmatpush.msra.mxu0 0.0
      %5783 = vmatpush.msra.mxu0 0.0
      %5784 = vmatpush.msra.mxu0 0.0
      %5785 = vmatpush.msra.mxu0 %v5671
      %5786 = vmatpush.msra.mxu0 %v5670
      %5787 = vmatpush.msra.mxu0 %v5669
      %5788 = vmatpush.msra.mxu0 %v5668
      %5789 = vmatpush.msra.mxu0 %v5667
      %5790 = vmatpush.msra.mxu0 %v5666
      %5791 = vmatpush.msra.mxu0 %v5665
      %5792 = vmatpush.msra.mxu0 %v5664
      %5793 = vmatpush.msra.mxu0 %v5663
      %5794 = vmatpush.msra.mxu0 %v5662
      %5795 = vmatpush.msra.mxu0 %v5661
      %5796 = vmatpush.msra.mxu0 %v5660
      %5797 = vmatmul.f32.gmra.mxu0 %v5749
      %v5798 = vpop.f32.mrf.mxu0
      %v5799 = vadd.f32 0.0, %v5798
      %5800 = vmatmul.f32.gmra.mxu0 %v5752
      %v5801 = vpop.f32.mrf.mxu0
      %v5802 = vadd.f32 0.0, %v5801
      %5803 = vmatmul.f32.gmra.mxu0 %v5755
      %v5804 = vpop.f32.mrf.mxu0
      %v5805 = vadd.f32 0.0, %v5804
      %5806 = vmatmul.f32.gmra.mxu0 %v5758
      %v5807 = vpop.f32.mrf.mxu0
      %v5808 = vadd.f32 0.0, %v5807
      %5809 = vmatmul.f32.gmra.mxu0 %v5761
      %v5810 = vpop.f32.mrf.mxu0
      %v5811 = vadd.f32 0.0, %v5810
      %5812 = vmatmul.f32.gmra.mxu0 %v5764
      %v5813 = vpop.f32.mrf.mxu0
      %v5814 = vadd.f32 0.0, %v5813
      %5815 = vmatmul.f32.gmra.mxu0 %v5767
      %v5816 = vpop.f32.mrf.mxu0
      %v5817 = vadd.f32 0.0, %v5816
      %5818 = vmatmul.f32.gmra.mxu0 %v5770
      %v5819 = vpop.f32.mrf.mxu0
      %v5820 = vadd.f32 0.0, %v5819
      %5821 = vmatmul.f32.gmra.mxu0 %v5773
      %v5822 = vpop.f32.mrf.mxu0
      %v5823 = vadd.f32 0.0, %v5822
      %5824 = vmatmul.f32.gmra.mxu0 %v5776
      %v5825 = vpop.f32.mrf.mxu0
      %v5826 = vadd.f32 0.0, %v5825
      %5827 = vmatmul.f32.gmra.mxu0 %v5779
      %v5828 = vpop.f32.mrf.mxu0
      %v5829 = vadd.f32 0.0, %v5828
      %5830 = vdwg.mxu0
      %v5831 = vmax.f32 %v5799, 0.0
      %v5832 = vmax.f32 %v5802, 0.0
      %v5833 = vmax.f32 %v5805, 0.0
      %v5834 = vmax.f32 %v5808, 0.0
      %v5835 = vmax.f32 %v5811, 0.0
      %v5836 = vmax.f32 %v5814, 0.0
      %v5837 = vmax.f32 %v5817, 0.0
      %v5838 = vmax.f32 %v5820, 0.0
      %v5839 = vmax.f32 %v5823, 0.0
      %v5840 = vmax.f32 %v5826, 0.0
      %v5841 = vmax.f32 %v5829, 0.0
      %5842 = vmatpush.msra.mxu0 0.0
      %5843 = vmatpush.msra.mxu0 0.0
      %5844 = vmatpush.msra.mxu0 0.0
      %5845 = vmatpush.msra.mxu0 0.0
      %5846 = vmatpush.msra.mxu0 0.0
      %5847 = vmatpush.msra.mxu0 %v5526
      %5848 = vmatpush.msra.mxu0 %v5407
      %5849 = vmatpush.msra.mxu0 %v5406
      %5850 = vmatpush.msra.mxu0 %v5405
      %5851 = vmatpush.msra.mxu0 %v5404
      %5852 = vmatpush.msra.mxu0 %v5403
      %5853 = vmatpush.msra.mxu0 %v5402
      %5854 = vmatpush.msra.mxu0 %v5401
      %5855 = vmatpush.msra.mxu0 %v5400
      %5856 = vmatpush.msra.mxu0 %v5399
      %5857 = vmatpush.msra.mxu0 %v5398
      %5858 = vmatmul.f32.gmra.mxu0 %v1837
      %v5859 = vpop.f32.mrf.mxu0
      %v5860 = vadd.f32 0.0, %v5859
      %5861 = vmatmul.f32.gmra.mxu0 %v1840
      %v5862 = vpop.f32.mrf.mxu0
      %v5863 = vadd.f32 0.0, %v5862
      %5864 = vmatmul.f32.gmra.mxu0 %v1843
      %v5865 = vpop.f32.mrf.mxu0
      %v5866 = vadd.f32 0.0, %v5865
      %5867 = vmatmul.f32.gmra.mxu0 %v1846
      %v5868 = vpop.f32.mrf.mxu0
      %v5869 = vadd.f32 0.0, %v5868
      %5870 = vmatmul.f32.gmra.mxu0 %v1849
      %v5871 = vpop.f32.mrf.mxu0
      %v5872 = vadd.f32 0.0, %v5871
      %5873 = vmatmul.f32.gmra.mxu0 %v1852
      %v5874 = vpop.f32.mrf.mxu0
      %v5875 = vadd.f32 0.0, %v5874
      %5876 = vmatmul.f32.gmra.mxu0 %v1855
      %v5877 = vpop.f32.mrf.mxu0
      %v5878 = vadd.f32 0.0, %v5877
      %5879 = vmatmul.f32.gmra.mxu0 %v1858
      %v5880 = vpop.f32.mrf.mxu0
      %v5881 = vadd.f32 0.0, %v5880
      %5882 = vmatmul.f32.gmra.mxu0 %v1861
      %v5883 = vpop.f32.mrf.mxu0
      %v5884 = vadd.f32 0.0, %v5883
      %5885 = vmatmul.f32.gmra.mxu0 %v1864
      %v5886 = vpop.f32.mrf.mxu0
      %v5887 = vadd.f32 0.0, %v5886
      %5888 = vmatmul.f32.gmra.mxu0 %v1867
      %v5889 = vpop.f32.mrf.mxu0
      %v5890 = vadd.f32 0.0, %v5889
      %5891 = vdwg.mxu0
      %v5893 = vsel %vm1953, %v5658, 0
      %5895 = vmatpush.msra.mxu0 0.0
      %5896 = vmatpush.msra.mxu0 0.0
      %5897 = vmatpush.msra.mxu0 0.0
      %5898 = vmatpush.msra.mxu0 0.0
      %5899 = vmatpush.msra.mxu0 0.0
      %5900 = vmatpush.msra.mxu0 0.0
      %5901 = vmatpush.msra.mxu0 0.0
      %5902 = vmatpush.msra.mxu0 0.0
      %5903 = vmatpush.msra.mxu0 0.0
      %5904 = vmatpush.msra.mxu0 0.0
      %5905 = vmatpush.msra.mxu0 0.0
      %5906 = vmatpush.msra.mxu0 0.0
      %5907 = vmatpush.msra.mxu0 0.0
      %5908 = vmatpush.msra.mxu0 0.0
      %5909 = vmatpush.msra.mxu0 %v5893
      %5910 = vmatpush.msra.mxu0 %v5657
      %5911 = vmatmul.f32.gmra.mxu0 %v1921
      %v5912 = vpop.f32.mrf.mxu0
      %v5913 = vadd.f32 0.0, %v5912
      %5914 = vmatmul.f32.gmra.mxu0 %v1924
      %v5915 = vpop.f32.mrf.mxu0
      %v5916 = vadd.f32 0.0, %v5915
      %5917 = vmatmul.f32.gmra.mxu0 %v1927
      %v5918 = vpop.f32.mrf.mxu0
      %v5919 = vadd.f32 0.0, %v5918
      %5920 = vmatmul.f32.gmra.mxu0 %v1930
      %v5921 = vpop.f32.mrf.mxu0
      %v5922 = vadd.f32 0.0, %v5921
      %5923 = vmatmul.f32.gmra.mxu0 %v1933
      %v5924 = vpop.f32.mrf.mxu0
      %v5925 = vadd.f32 0.0, %v5924
      %5926 = vmatmul.f32.gmra.mxu0 %v1936
      %v5927 = vpop.f32.mrf.mxu0
      %v5928 = vadd.f32 0.0, %v5927
      %5929 = vmatmul.f32.gmra.mxu0 %v1939
      %v5930 = vpop.f32.mrf.mxu0
      %v5931 = vadd.f32 0.0, %v5930
      %5932 = vmatmul.f32.gmra.mxu0 %v1942
      %v5933 = vpop.f32.mrf.mxu0
      %v5934 = vadd.f32 0.0, %v5933
      %5935 = vmatmul.f32.gmra.mxu0 %v1945
      %v5936 = vpop.f32.mrf.mxu0
      %v5937 = vadd.f32 0.0, %v5936
      %5938 = vmatmul.f32.gmra.mxu0 %v1948
      %v5939 = vpop.f32.mrf.mxu0
      %v5940 = vadd.f32 0.0, %v5939
      %5941 = vmatmul.f32.gmra.mxu0 %v1951
      %v5942 = vpop.f32.mrf.mxu0
      %v5943 = vadd.f32 0.0, %v5942
      %5944 = vdwg.mxu0
      %v5946 = vsel %vm1741, %v5913, 0
      %v5949 = vsel %vm1741, %v5916, 0
      %v5952 = vsel %vm1741, %v5919, 0
      %v5955 = vsel %vm1741, %v5922, 0
      %v5958 = vsel %vm1741, %v5925, 0
      %v5961 = vsel %vm1741, %v5928, 0
      %v5964 = vsel %vm1741, %v5931, 0
      %v5967 = vsel %vm1741, %v5934, 0
      %v5970 = vsel %vm1741, %v5937, 0
      %v5973 = vsel %vm1741, %v5940, 0
      %v5976 = vsel %vm1741, %v5943, 0
      %5978 = vmatpush.msra.mxu0 0.0
      %5979 = vmatpush.msra.mxu0 0.0
      %5980 = vmatpush.msra.mxu0 0.0
      %5981 = vmatpush.msra.mxu0 0.0
      %5982 = vmatpush.msra.mxu0 %v5697
      %5983 = vmatpush.msra.mxu0 %v5696
      %5984 = vmatpush.msra.mxu0 %v5695
      %5985 = vmatpush.msra.mxu0 %v5694
      %5986 = vmatpush.msra.mxu0 %v5693
      %5987 = vmatpush.msra.mxu0 %v5692
      %5988 = vmatpush.msra.mxu0 %v5691
      %5989 = vmatpush.msra.mxu0 %v5690
      %5990 = vmatpush.msra.mxu0 %v5689
      %5991 = vmatpush.msra.mxu0 %v5688
      %5992 = vmatpush.msra.mxu0 %v5687
      %5993 = vmatpush.msra.mxu0 %v5686
      %5994 = vmatmul.f32.gmra.mxu0 %v5946
      %v5995 = vpop.f32.mrf.mxu0
      %v5996 = vadd.f32 0.0, %v5995
      %5997 = vmatmul.f32.gmra.mxu0 %v5949
      %v5998 = vpop.f32.mrf.mxu0
      %v5999 = vadd.f32 0.0, %v5998
      %6000 = vmatmul.f32.gmra.mxu0 %v5952
      %v6001 = vpop.f32.mrf.mxu0
      %v6002 = vadd.f32 0.0, %v6001
      %6003 = vmatmul.f32.gmra.mxu0 %v5955
      %v6004 = vpop.f32.mrf.mxu0
      %v6005 = vadd.f32 0.0, %v6004
      %6006 = vmatmul.f32.gmra.mxu0 %v5958
      %v6007 = vpop.f32.mrf.mxu0
      %v6008 = vadd.f32 0.0, %v6007
      %6009 = vmatmul.f32.gmra.mxu0 %v5961
      %v6010 = vpop.f32.mrf.mxu0
      %v6011 = vadd.f32 0.0, %v6010
      %6012 = vmatmul.f32.gmra.mxu0 %v5964
      %v6013 = vpop.f32.mrf.mxu0
      %v6014 = vadd.f32 0.0, %v6013
      %6015 = vmatmul.f32.gmra.mxu0 %v5967
      %v6016 = vpop.f32.mrf.mxu0
      %v6017 = vadd.f32 0.0, %v6016
      %6018 = vmatmul.f32.gmra.mxu0 %v5970
      %v6019 = vpop.f32.mrf.mxu0
      %v6020 = vadd.f32 0.0, %v6019
      %6021 = vmatmul.f32.gmra.mxu0 %v5973
      %v6022 = vpop.f32.mrf.mxu0
      %v6023 = vadd.f32 0.0, %v6022
      %6024 = vmatmul.f32.gmra.mxu0 %v5976
      %v6025 = vpop.f32.mrf.mxu0
      %v6026 = vadd.f32 0.0, %v6025
      %6027 = vdwg.mxu0
      %v6029 = vsel %vm1741, %v5860, 0
      %v6032 = vsel %vm1741, %v5863, 0
      %v6035 = vsel %vm1741, %v5866, 0
      %v6038 = vsel %vm1741, %v5869, 0
      %v6041 = vsel %vm1741, %v5872, 0
      %v6044 = vsel %vm1741, %v5875, 0
      %v6047 = vsel %vm1741, %v5878, 0
      %v6050 = vsel %vm1741, %v5881, 0
      %v6053 = vsel %vm1741, %v5884, 0
      %v6056 = vsel %vm1741, %v5887, 0
      %v6059 = vsel %vm1741, %v5890, 0
      %6061 = vmatpush.msra.mxu0 0.0
      %6062 = vmatpush.msra.mxu0 0.0
      %6063 = vmatpush.msra.mxu0 0.0
      %6064 = vmatpush.msra.mxu0 0.0
      %6065 = vmatpush.msra.mxu0 %v5684
      %6066 = vmatpush.msra.mxu0 %v5683
      %6067 = vmatpush.msra.mxu0 %v5682
      %6068 = vmatpush.msra.mxu0 %v5681
      %6069 = vmatpush.msra.mxu0 %v5680
      %6070 = vmatpush.msra.mxu0 %v5679
      %6071 = vmatpush.msra.mxu0 %v5678
      %6072 = vmatpush.msra.mxu0 %v5677
      %6073 = vmatpush.msra.mxu0 %v5676
      %6074 = vmatpush.msra.mxu0 %v5675
      %6075 = vmatpush.msra.mxu0 %v5674
      %6076 = vmatpush.msra.mxu0 %v5673
      %6077 = vmatmul.f32.gmra.mxu0 %v6029
      %v6078 = vpop.f32.mrf.mxu0
      %v6079 = vadd.f32 %v5996, %v6078
      %6080 = vmatmul.f32.gmra.mxu0 %v6032
      %v6081 = vpop.f32.mrf.mxu0
      %v6082 = vadd.f32 %v5999, %v6081
      %6083 = vmatmul.f32.gmra.mxu0 %v6035
      %v6084 = vpop.f32.mrf.mxu0
      %v6085 = vadd.f32 %v6002, %v6084
      %6086 = vmatmul.f32.gmra.mxu0 %v6038
      %v6087 = vpop.f32.mrf.mxu0
      %v6088 = vadd.f32 %v6005, %v6087
      %6089 = vmatmul.f32.gmra.mxu0 %v6041
      %v6090 = vpop.f32.mrf.mxu0
      %v6091 = vadd.f32 %v6008, %v6090
      %6092 = vmatmul.f32.gmra.mxu0 %v6044
      %v6093 = vpop.f32.mrf.mxu0
      %v6094 = vadd.f32 %v6011, %v6093
      %6095 = vmatmul.f32.gmra.mxu0 %v6047
      %v6096 = vpop.f32.mrf.mxu0
      %v6097 = vadd.f32 %v6014, %v6096
      %6098 = vmatmul.f32.gmra.mxu0 %v6050
      %v6099 = vpop.f32.mrf.mxu0
      %v6100 = vadd.f32 %v6017, %v6099
      %6101 = vmatmul.f32.gmra.mxu0 %v6053
      %v6102 = vpop.f32.mrf.mxu0
      %v6103 = vadd.f32 %v6020, %v6102
      %6104 = vmatmul.f32.gmra.mxu0 %v6056
      %v6105 = vpop.f32.mrf.mxu0
      %v6106 = vadd.f32 %v6023, %v6105
      %6107 = vmatmul.f32.gmra.mxu0 %v6059
      %v6108 = vpop.f32.mrf.mxu0
      %v6109 = vadd.f32 %v6026, %v6108
      %6110 = vdwg.mxu0
      %v6111 = vxor.u32 %v6079, 2147483648
      %v6112 = vxor.u32 %v6082, 2147483648
      %v6113 = vxor.u32 %v6085, 2147483648
      %v6114 = vxor.u32 %v6088, 2147483648
      %v6115 = vxor.u32 %v6091, 2147483648
      %v6116 = vxor.u32 %v6094, 2147483648
      %v6117 = vxor.u32 %v6097, 2147483648
      %v6118 = vxor.u32 %v6100, 2147483648
      %v6119 = vxor.u32 %v6103, 2147483648
      %v6120 = vxor.u32 %v6106, 2147483648
      %v6121 = vxor.u32 %v6109, 2147483648
      %v6122 = vmul.f32 %v6111, 1.442695
      %v6123 = vpow.pop %v6122
      %v6124 = vmul.f32 %v6112, 1.442695
      %v6125 = vpow.pop %v6124
      %v6126 = vmul.f32 %v6113, 1.442695
      %v6127 = vpow.pop %v6126
      %v6128 = vmul.f32 %v6114, 1.442695
      %v6129 = vpow.pop %v6128
      %v6130 = vmul.f32 %v6115, 1.442695
      %v6131 = vpow.pop %v6130
      %v6132 = vmul.f32 %v6116, 1.442695
      %v6133 = vpow.pop %v6132
      %v6134 = vmul.f32 %v6117, 1.442695
      %v6135 = vpow.pop %v6134
      %v6136 = vmul.f32 %v6118, 1.442695
      %v6137 = vpow.pop %v6136
      %v6138 = vmul.f32 %v6119, 1.442695
      %v6139 = vpow.pop %v6138
      %v6140 = vmul.f32 %v6120, 1.442695
      %v6141 = vpow.pop %v6140
      %v6142 = vmul.f32 %v6121, 1.442695
      %v6143 = vpow.pop %v6142
      %v6144 = vadd.f32 %v6123, 1.0
      %v6145 = vadd.f32 %v6125, 1.0
      %v6146 = vadd.f32 %v6127, 1.0
      %v6147 = vadd.f32 %v6129, 1.0
      %v6148 = vadd.f32 %v6131, 1.0
      %v6149 = vadd.f32 %v6133, 1.0
      %v6150 = vadd.f32 %v6135, 1.0
      %v6151 = vadd.f32 %v6137, 1.0
      %v6152 = vadd.f32 %v6139, 1.0
      %v6153 = vadd.f32 %v6141, 1.0
      %v6154 = vadd.f32 %v6143, 1.0
      %v6155 = vrcp.pop %v6144
      %v6156 = vmul.f32 %v6144, %v6155
      %v6157 = vsub.f32 1.0, %v6156
      %v6158 = vmul.f32 %v6155, %v6157
      %v6159 = vadd.f32 %v6155, %v6158
      %vm6160 = vweird.f32 %v6144
      %vm6161 = vweird.f32 %v6155
      %vm6162 = vmor %vm6160, %vm6161
      %v6163 = vsel %vm6162, %v6155, %v6159
      %v6164 = vand.u32 2147483647, %v6144
      %vm6165 = vcmp.eq.f32.partialorder %v6164, 8.507059e+37
      %v6166 = vand.u32 %v6144, 2147483648
      %v6167 = vor.u32 1.1754944e-38, %v6166
      %v6168 = vsel %vm6165, %v6167, %v6163
      %v6169 = vmul.f32 1.0, %v6168
      %v6170 = vrcp.pop %v6145
      %v6171 = vmul.f32 %v6145, %v6170
      %v6172 = vsub.f32 1.0, %v6171
      %v6173 = vmul.f32 %v6170, %v6172
      %v6174 = vadd.f32 %v6170, %v6173
      %vm6175 = vweird.f32 %v6145
      %vm6176 = vweird.f32 %v6170
      %vm6177 = vmor %vm6175, %vm6176
      %v6178 = vsel %vm6177, %v6170, %v6174
      %v6179 = vand.u32 2147483647, %v6145
      %vm6180 = vcmp.eq.f32.partialorder %v6179, 8.507059e+37
      %v6181 = vand.u32 %v6145, 2147483648
      %v6182 = vor.u32 1.1754944e-38, %v6181
      %v6183 = vsel %vm6180, %v6182, %v6178
      %v6184 = vmul.f32 1.0, %v6183
      %v6185 = vrcp.pop %v6146
      %v6186 = vmul.f32 %v6146, %v6185
      %v6187 = vsub.f32 1.0, %v6186
      %v6188 = vmul.f32 %v6185, %v6187
      %v6189 = vadd.f32 %v6185, %v6188
      %vm6190 = vweird.f32 %v6146
      %vm6191 = vweird.f32 %v6185
      %vm6192 = vmor %vm6190, %vm6191
      %v6193 = vsel %vm6192, %v6185, %v6189
      %v6194 = vand.u32 2147483647, %v6146
      %vm6195 = vcmp.eq.f32.partialorder %v6194, 8.507059e+37
      %v6196 = vand.u32 %v6146, 2147483648
      %v6197 = vor.u32 1.1754944e-38, %v6196
      %v6198 = vsel %vm6195, %v6197, %v6193
      %v6199 = vmul.f32 1.0, %v6198
      %v6200 = vrcp.pop %v6147
      %v6201 = vmul.f32 %v6147, %v6200
      %v6202 = vsub.f32 1.0, %v6201
      %v6203 = vmul.f32 %v6200, %v6202
      %v6204 = vadd.f32 %v6200, %v6203
      %vm6205 = vweird.f32 %v6147
      %vm6206 = vweird.f32 %v6200
      %vm6207 = vmor %vm6205, %vm6206
      %v6208 = vsel %vm6207, %v6200, %v6204
      %v6209 = vand.u32 2147483647, %v6147
      %vm6210 = vcmp.eq.f32.partialorder %v6209, 8.507059e+37
      %v6211 = vand.u32 %v6147, 2147483648
      %v6212 = vor.u32 1.1754944e-38, %v6211
      %v6213 = vsel %vm6210, %v6212, %v6208
      %v6214 = vmul.f32 1.0, %v6213
      %v6215 = vrcp.pop %v6148
      %v6216 = vmul.f32 %v6148, %v6215
      %v6217 = vsub.f32 1.0, %v6216
      %v6218 = vmul.f32 %v6215, %v6217
      %v6219 = vadd.f32 %v6215, %v6218
      %vm6220 = vweird.f32 %v6148
      %vm6221 = vweird.f32 %v6215
      %vm6222 = vmor %vm6220, %vm6221
      %v6223 = vsel %vm6222, %v6215, %v6219
      %v6224 = vand.u32 2147483647, %v6148
      %vm6225 = vcmp.eq.f32.partialorder %v6224, 8.507059e+37
      %v6226 = vand.u32 %v6148, 2147483648
      %v6227 = vor.u32 1.1754944e-38, %v6226
      %v6228 = vsel %vm6225, %v6227, %v6223
      %v6229 = vmul.f32 1.0, %v6228
      %v6230 = vrcp.pop %v6149
      %v6231 = vmul.f32 %v6149, %v6230
      %v6232 = vsub.f32 1.0, %v6231
      %v6233 = vmul.f32 %v6230, %v6232
      %v6234 = vadd.f32 %v6230, %v6233
      %vm6235 = vweird.f32 %v6149
      %vm6236 = vweird.f32 %v6230
      %vm6237 = vmor %vm6235, %vm6236
      %v6238 = vsel %vm6237, %v6230, %v6234
      %v6239 = vand.u32 2147483647, %v6149
      %vm6240 = vcmp.eq.f32.partialorder %v6239, 8.507059e+37
      %v6241 = vand.u32 %v6149, 2147483648
      %v6242 = vor.u32 1.1754944e-38, %v6241
      %v6243 = vsel %vm6240, %v6242, %v6238
      %v6244 = vmul.f32 1.0, %v6243
      %v6245 = vrcp.pop %v6150
      %v6246 = vmul.f32 %v6150, %v6245
      %v6247 = vsub.f32 1.0, %v6246
      %v6248 = vmul.f32 %v6245, %v6247
      %v6249 = vadd.f32 %v6245, %v6248
      %vm6250 = vweird.f32 %v6150
      %vm6251 = vweird.f32 %v6245
      %vm6252 = vmor %vm6250, %vm6251
      %v6253 = vsel %vm6252, %v6245, %v6249
      %v6254 = vand.u32 2147483647, %v6150
      %vm6255 = vcmp.eq.f32.partialorder %v6254, 8.507059e+37
      %v6256 = vand.u32 %v6150, 2147483648
      %v6257 = vor.u32 1.1754944e-38, %v6256
      %v6258 = vsel %vm6255, %v6257, %v6253
      %v6259 = vmul.f32 1.0, %v6258
      %v6260 = vrcp.pop %v6151
      %v6261 = vmul.f32 %v6151, %v6260
      %v6262 = vsub.f32 1.0, %v6261
      %v6263 = vmul.f32 %v6260, %v6262
      %v6264 = vadd.f32 %v6260, %v6263
      %vm6265 = vweird.f32 %v6151
      %vm6266 = vweird.f32 %v6260
      %vm6267 = vmor %vm6265, %vm6266
      %v6268 = vsel %vm6267, %v6260, %v6264
      %v6269 = vand.u32 2147483647, %v6151
      %vm6270 = vcmp.eq.f32.partialorder %v6269, 8.507059e+37
      %v6271 = vand.u32 %v6151, 2147483648
      %v6272 = vor.u32 1.1754944e-38, %v6271
      %v6273 = vsel %vm6270, %v6272, %v6268
      %v6274 = vmul.f32 1.0, %v6273
      %v6275 = vrcp.pop %v6152
      %v6276 = vmul.f32 %v6152, %v6275
      %v6277 = vsub.f32 1.0, %v6276
      %v6278 = vmul.f32 %v6275, %v6277
      %v6279 = vadd.f32 %v6275, %v6278
      %vm6280 = vweird.f32 %v6152
      %vm6281 = vweird.f32 %v6275
      %vm6282 = vmor %vm6280, %vm6281
      %v6283 = vsel %vm6282, %v6275, %v6279
      %v6284 = vand.u32 2147483647, %v6152
      %vm6285 = vcmp.eq.f32.partialorder %v6284, 8.507059e+37
      %v6286 = vand.u32 %v6152, 2147483648
      %v6287 = vor.u32 1.1754944e-38, %v6286
      %v6288 = vsel %vm6285, %v6287, %v6283
      %v6289 = vmul.f32 1.0, %v6288
      %v6290 = vrcp.pop %v6153
      %v6291 = vmul.f32 %v6153, %v6290
      %v6292 = vsub.f32 1.0, %v6291
      %v6293 = vmul.f32 %v6290, %v6292
      %v6294 = vadd.f32 %v6290, %v6293
      %vm6295 = vweird.f32 %v6153
      %vm6296 = vweird.f32 %v6290
      %vm6297 = vmor %vm6295, %vm6296
      %v6298 = vsel %vm6297, %v6290, %v6294
      %v6299 = vand.u32 2147483647, %v6153
      %vm6300 = vcmp.eq.f32.partialorder %v6299, 8.507059e+37
      %v6301 = vand.u32 %v6153, 2147483648
      %v6302 = vor.u32 1.1754944e-38, %v6301
      %v6303 = vsel %vm6300, %v6302, %v6298
      %v6304 = vmul.f32 1.0, %v6303
      %v6305 = vrcp.pop %v6154
      %v6306 = vmul.f32 %v6154, %v6305
      %v6307 = vsub.f32 1.0, %v6306
      %v6308 = vmul.f32 %v6305, %v6307
      %v6309 = vadd.f32 %v6305, %v6308
      %vm6310 = vweird.f32 %v6154
      %vm6311 = vweird.f32 %v6305
      %vm6312 = vmor %vm6310, %vm6311
      %v6313 = vsel %vm6312, %v6305, %v6309
      %v6314 = vand.u32 2147483647, %v6154
      %vm6315 = vcmp.eq.f32.partialorder %v6314, 8.507059e+37
      %v6316 = vand.u32 %v6154, 2147483648
      %v6317 = vor.u32 1.1754944e-38, %v6316
      %v6318 = vsel %vm6315, %v6317, %v6313
      %v6319 = vmul.f32 1.0, %v6318
      %v6320 = vadd.f32 %v5831, %v6169
      %v6321 = vadd.f32 %v5832, %v6184
      %v6322 = vadd.f32 %v5833, %v6199
      %v6323 = vadd.f32 %v5834, %v6214
      %v6324 = vadd.f32 %v5835, %v6229
      %v6325 = vadd.f32 %v5836, %v6244
      %v6326 = vadd.f32 %v5837, %v6259
      %v6327 = vadd.f32 %v5838, %v6274
      %v6328 = vadd.f32 %v5839, %v6289
      %v6329 = vadd.f32 %v5840, %v6304
      %v6330 = vadd.f32 %v5841, %v6319
      %v6331 = vmul.f32 %v6320, 0.5
      %v6332 = vmul.f32 %v6321, 0.5
      %v6333 = vmul.f32 %v6322, 0.5
      %v6334 = vmul.f32 %v6323, 0.5
      %v6335 = vmul.f32 %v6324, 0.5
      %v6336 = vmul.f32 %v6325, 0.5
      %v6337 = vmul.f32 %v6326, 0.5
      %v6338 = vmul.f32 %v6327, 0.5
      %v6339 = vmul.f32 %v6328, 0.5
      %v6340 = vmul.f32 %v6329, 0.5
      %v6341 = vmul.f32 %v6330, 0.5
      %v6342 = vmax.f32 %v6331, 0.0
      %v6343 = vmax.f32 %v6332, 0.0
      %v6344 = vmax.f32 %v6333, 0.0
      %v6345 = vmax.f32 %v6334, 0.0
      %v6346 = vmax.f32 %v6335, 0.0
      %v6347 = vmax.f32 %v6336, 0.0
      %v6348 = vmax.f32 %v6337, 0.0
      %v6349 = vmax.f32 %v6338, 0.0
      %v6350 = vmax.f32 %v6339, 0.0
      %v6351 = vmax.f32 %v6340, 0.0
      %v6352 = vmax.f32 %v6341, 0.0
      %v6353 = vmul.f32 %v6342, 0.9
      %v6354 = vmul.f32 %v6343, 0.9
      %v6355 = vmul.f32 %v6344, 0.9
      %v6356 = vmul.f32 %v6345, 0.9
      %v6357 = vmul.f32 %v6346, 0.9
      %v6358 = vmul.f32 %v6347, 0.9
      %v6359 = vmul.f32 %v6348, 0.9
      %v6360 = vmul.f32 %v6349, 0.9
      %v6361 = vmul.f32 %v6350, 0.9
      %v6362 = vmul.f32 %v6351, 0.9
      %v6363 = vmul.f32 %v6352, 0.9
      %v6364 = vadd.f32 %v6353, %v2426
      %v6365 = vadd.f32 %v6354, %v2427
      %v6366 = vadd.f32 %v6355, %v2428
      %v6367 = vadd.f32 %v6356, %v2429
      %v6368 = vadd.f32 %v6357, %v2430
      %v6369 = vadd.f32 %v6358, %v2431
      %v6370 = vadd.f32 %v6359, %v2432
      %v6371 = vadd.f32 %v6360, %v2433
      %v6372 = vadd.f32 %v6361, %v2434
      %v6373 = vadd.f32 %v6362, %v2435
      %v6374 = vadd.f32 %v6363, %v2436
      %v6375 = vmax.f32 %v6364, 0.0
      %v6376 = vmax.f32 %v6365, 0.0
      %v6377 = vmax.f32 %v6366, 0.0
      %v6378 = vmax.f32 %v6367, 0.0
      %v6379 = vmax.f32 %v6368, 0.0
      %v6380 = vmax.f32 %v6369, 0.0
      %v6381 = vmax.f32 %v6370, 0.0
      %v6382 = vmax.f32 %v6371, 0.0
      %v6383 = vmax.f32 %v6372, 0.0
      %v6384 = vmax.f32 %v6373, 0.0
      %v6385 = vmax.f32 %v6374, 0.0
      %s6386 = scalar_lea.vmem %s11, 1152
      %v6387 = vld [vmem:[%s6386] sm:$0xff]
      %v6388 = vld [vmem:[%s6386 + $0x8] sm:$0xff]
      %v6389 = vld [vmem:[%s6386 + $0x10] sm:$0xff]
      %v6390 = vld [vmem:[%s6386 + $0x18] sm:$0xff]
      %v6391 = vld [vmem:[%s6386 + $0x20] sm:$0xff]
      %v6392 = vld [vmem:[%s6386 + $0x28] sm:$0xff]
      %v6393 = vld [vmem:[%s6386 + $0x30] sm:$0xff]
      %v6394 = vld [vmem:[%s6386 + $0x38] sm:$0xff]
      %v6395 = vld [vmem:[%s6386 + $0x40] sm:$0xff]
      %v6396 = vld [vmem:[%s6386 + $0x48] sm:$0xff]
      %v6397 = vld [vmem:[%s6386 + $0x50] sm:$0xff]
      %v6398 = vld [vmem:[%s6386 + $0x58] sm:$0xff]
      %s6399 = scalar_lea.vmem %s11, 1248
      %v6400 = vld [vmem:[%s6399] sm:$0xff]
      %v6401 = vld [vmem:[%s6399 + $0x8] sm:$0xff]
      %v6402 = vld [vmem:[%s6399 + $0x10] sm:$0xff]
      %v6403 = vld [vmem:[%s6399 + $0x18] sm:$0xff]
      %v6404 = vld [vmem:[%s6399 + $0x20] sm:$0xff]
      %v6405 = vld [vmem:[%s6399 + $0x28] sm:$0xff]
      %v6406 = vld [vmem:[%s6399 + $0x30] sm:$0xff]
      %v6407 = vld [vmem:[%s6399 + $0x38] sm:$0xff]
      %v6408 = vld [vmem:[%s6399 + $0x40] sm:$0xff]
      %v6409 = vld [vmem:[%s6399 + $0x48] sm:$0xff]
      %v6410 = vld [vmem:[%s6399 + $0x50] sm:$0xff]
      %v6411 = vld [vmem:[%s6399 + $0x58] sm:$0xff]
      %s6412 = scalar_lea.vmem %s11, 1344
      %v6413 = vld [vmem:[%s6412] sm:$0xff]
      %v6414 = vld [vmem:[%s6412 + $0x8] sm:$0xff]
      %v6415 = vld [vmem:[%s6412 + $0x10] sm:$0xff]
      %v6416 = vld [vmem:[%s6412 + $0x18] sm:$0xff]
      %v6417 = vld [vmem:[%s6412 + $0x20] sm:$0xff]
      %v6418 = vld [vmem:[%s6412 + $0x28] sm:$0xff]
      %v6419 = vld [vmem:[%s6412 + $0x30] sm:$0xff]
      %v6420 = vld [vmem:[%s6412 + $0x38] sm:$0xff]
      %v6421 = vld [vmem:[%s6412 + $0x40] sm:$0xff]
      %v6422 = vld [vmem:[%s6412 + $0x48] sm:$0xff]
      %v6423 = vld [vmem:[%s6412 + $0x50] sm:$0xff]
      %v6424 = vld [vmem:[%s6412 + $0x58] sm:$0xff]
      %6425 = vmatpush.msra.mxu0 0.0
      %6426 = vmatpush.msra.mxu0 0.0
      %6427 = vmatpush.msra.mxu0 0.0
      %6428 = vmatpush.msra.mxu0 0.0
      %6429 = vmatpush.msra.mxu0 0.0
      %6430 = vmatpush.msra.mxu0 0.0
      %6431 = vmatpush.msra.mxu0 0.0
      %6432 = vmatpush.msra.mxu0 0.0
      %6433 = vmatpush.msra.mxu0 0.0
      %6434 = vmatpush.msra.mxu0 0.0
      %6435 = vmatpush.msra.mxu0 0.0
      %6436 = vmatpush.msra.mxu0 0.0
      %6437 = vmatpush.msra.mxu0 0.0
      %6438 = vmatpush.msra.mxu0 0.0
      %6439 = vmatpush.msra.mxu0 %v5893
      %6440 = vmatpush.msra.mxu0 %v5657
      %6441 = vmatmul.f32.gmra.mxu0 %v2498
      %v6442 = vpop.f32.mrf.mxu0
      %v6443 = vadd.f32 0.0, %v6442
      %6444 = vmatmul.f32.gmra.mxu0 %v2501
      %v6445 = vpop.f32.mrf.mxu0
      %v6446 = vadd.f32 0.0, %v6445
      %6447 = vdwg.mxu0
      %v6449 = vsel %vm1741, %v6443, 0
      %v6452 = vsel %vm1741, %v6446, 0
      %6454 = vmatpush.msra.mxu0 0.0
      %6455 = vmatpush.msra.mxu0 0.0
      %6456 = vmatpush.msra.mxu0 0.0
      %6457 = vmatpush.msra.mxu0 0.0
      %6458 = vmatpush.msra.mxu0 %v6398
      %6459 = vmatpush.msra.mxu0 %v6397
      %6460 = vmatpush.msra.mxu0 %v6396
      %6461 = vmatpush.msra.mxu0 %v6395
      %6462 = vmatpush.msra.mxu0 %v6394
      %6463 = vmatpush.msra.mxu0 %v6393
      %6464 = vmatpush.msra.mxu0 %v6392
      %6465 = vmatpush.msra.mxu0 %v6391
      %6466 = vmatpush.msra.mxu0 %v6390
      %6467 = vmatpush.msra.mxu0 %v6389
      %6468 = vmatpush.msra.mxu0 %v6388
      %6469 = vmatpush.msra.mxu0 %v6387
      %6470 = vmatmul.f32.gmra.mxu0 %v6449
      %v6471 = vpop.f32.mrf.mxu0
      %v6472 = vadd.f32 0.0, %v6471
      %6473 = vmatmul.f32.gmra.mxu0 %v6452
      %v6474 = vpop.f32.mrf.mxu0
      %v6475 = vadd.f32 0.0, %v6474
      %6476 = vdwg.mxu0
      %v6477 = vmax.f32 %v6472, 0.0
      %v6478 = vmax.f32 %v6475, 0.0
      %6479 = vmatpush.msra.mxu0 0.0
      %6480 = vmatpush.msra.mxu0 0.0
      %6481 = vmatpush.msra.mxu0 0.0
      %6482 = vmatpush.msra.mxu0 0.0
      %6483 = vmatpush.msra.mxu0 0.0
      %6484 = vmatpush.msra.mxu0 0.0
      %6485 = vmatpush.msra.mxu0 0.0
      %6486 = vmatpush.msra.mxu0 0.0
      %6487 = vmatpush.msra.mxu0 0.0
      %6488 = vmatpush.msra.mxu0 0.0
      %6489 = vmatpush.msra.mxu0 0.0
      %6490 = vmatpush.msra.mxu0 0.0
      %6491 = vmatpush.msra.mxu0 0.0
      %6492 = vmatpush.msra.mxu0 0.0
      %6493 = vmatpush.msra.mxu0 %v5893
      %6494 = vmatpush.msra.mxu0 %v5657
      %6495 = vmatmul.f32.gmra.mxu0 %v2558
      %v6496 = vpop.f32.mrf.mxu0
      %v6497 = vadd.f32 0.0, %v6496
      %6498 = vmatmul.f32.gmra.mxu0 %v2561
      %v6499 = vpop.f32.mrf.mxu0
      %v6500 = vadd.f32 0.0, %v6499
      %6501 = vdwg.mxu0
      %v6503 = vsel %vm1687, %v6385, 0
      %6505 = vmatpush.msra.mxu0 0.0
      %6506 = vmatpush.msra.mxu0 0.0
      %6507 = vmatpush.msra.mxu0 0.0
      %6508 = vmatpush.msra.mxu0 0.0
      %6509 = vmatpush.msra.mxu0 0.0
      %6510 = vmatpush.msra.mxu0 %v6503
      %6511 = vmatpush.msra.mxu0 %v6384
      %6512 = vmatpush.msra.mxu0 %v6383
      %6513 = vmatpush.msra.mxu0 %v6382
      %6514 = vmatpush.msra.mxu0 %v6381
      %6515 = vmatpush.msra.mxu0 %v6380
      %6516 = vmatpush.msra.mxu0 %v6379
      %6517 = vmatpush.msra.mxu0 %v6378
      %6518 = vmatpush.msra.mxu0 %v6377
      %6519 = vmatpush.msra.mxu0 %v6376
      %6520 = vmatpush.msra.mxu0 %v6375
      %6521 = vmatmul.f32.gmra.mxu0 %v2587
      %v6522 = vpop.f32.mrf.mxu0
      %v6523 = vadd.f32 0.0, %v6522
      %6524 = vmatmul.f32.gmra.mxu0 %v2590
      %v6525 = vpop.f32.mrf.mxu0
      %v6526 = vadd.f32 0.0, %v6525
      %6527 = vdwg.mxu0
      %v6529 = vsel %vm1741, %v6523, 0
      %v6532 = vsel %vm1741, %v6526, 0
      %6534 = vmatpush.msra.mxu0 0.0
      %6535 = vmatpush.msra.mxu0 0.0
      %6536 = vmatpush.msra.mxu0 0.0
      %6537 = vmatpush.msra.mxu0 0.0
      %6538 = vmatpush.msra.mxu0 %v6424
      %6539 = vmatpush.msra.mxu0 %v6423
      %6540 = vmatpush.msra.mxu0 %v6422
      %6541 = vmatpush.msra.mxu0 %v6421
      %6542 = vmatpush.msra.mxu0 %v6420
      %6543 = vmatpush.msra.mxu0 %v6419
      %6544 = vmatpush.msra.mxu0 %v6418
      %6545 = vmatpush.msra.mxu0 %v6417
      %6546 = vmatpush.msra.mxu0 %v6416
      %6547 = vmatpush.msra.mxu0 %v6415
      %6548 = vmatpush.msra.mxu0 %v6414
      %6549 = vmatpush.msra.mxu0 %v6413
      %6550 = vmatmul.f32.gmra.mxu0 %v6529
      %v6551 = vpop.f32.mrf.mxu0
      %v6552 = vadd.f32 0.0, %v6551
      %6553 = vmatmul.f32.gmra.mxu0 %v6532
      %v6554 = vpop.f32.mrf.mxu0
      %v6555 = vadd.f32 0.0, %v6554
      %6556 = vdwg.mxu0
      %v6558 = vsel %vm1741, %v6497, 0
      %v6561 = vsel %vm1741, %v6500, 0
      %6563 = vmatpush.msra.mxu0 0.0
      %6564 = vmatpush.msra.mxu0 0.0
      %6565 = vmatpush.msra.mxu0 0.0
      %6566 = vmatpush.msra.mxu0 0.0
      %6567 = vmatpush.msra.mxu0 %v6411
      %6568 = vmatpush.msra.mxu0 %v6410
      %6569 = vmatpush.msra.mxu0 %v6409
      %6570 = vmatpush.msra.mxu0 %v6408
      %6571 = vmatpush.msra.mxu0 %v6407
      %6572 = vmatpush.msra.mxu0 %v6406
      %6573 = vmatpush.msra.mxu0 %v6405
      %6574 = vmatpush.msra.mxu0 %v6404
      %6575 = vmatpush.msra.mxu0 %v6403
      %6576 = vmatpush.msra.mxu0 %v6402
      %6577 = vmatpush.msra.mxu0 %v6401
      %6578 = vmatpush.msra.mxu0 %v6400
      %6579 = vmatmul.f32.gmra.mxu0 %v6558
      %v6580 = vpop.f32.mrf.mxu0
      %v6581 = vadd.f32 %v6552, %v6580
      %6582 = vmatmul.f32.gmra.mxu0 %v6561
      %v6583 = vpop.f32.mrf.mxu0
      %v6584 = vadd.f32 %v6555, %v6583
      %6585 = vdwg.mxu0
      %v6586 = vxor.u32 %v6581, 2147483648
      %v6587 = vxor.u32 %v6584, 2147483648
      %v6588 = vmul.f32 %v6586, 1.442695
      %v6589 = vpow.pop %v6588
      %v6590 = vmul.f32 %v6587, 1.442695
      %v6591 = vpow.pop %v6590
      %v6592 = vadd.f32 %v6589, 1.0
      %v6593 = vadd.f32 %v6591, 1.0
      %v6594 = vrcp.pop %v6592
      %v6595 = vmul.f32 %v6592, %v6594
      %v6596 = vsub.f32 1.0, %v6595
      %v6597 = vmul.f32 %v6594, %v6596
      %v6598 = vadd.f32 %v6594, %v6597
      %vm6599 = vweird.f32 %v6592
      %vm6600 = vweird.f32 %v6594
      %vm6601 = vmor %vm6599, %vm6600
      %v6602 = vsel %vm6601, %v6594, %v6598
      %v6603 = vand.u32 2147483647, %v6592
      %vm6604 = vcmp.eq.f32.partialorder %v6603, 8.507059e+37
      %v6605 = vand.u32 %v6592, 2147483648
      %v6606 = vor.u32 1.1754944e-38, %v6605
      %v6607 = vsel %vm6604, %v6606, %v6602
      %v6608 = vmul.f32 1.0, %v6607
      %v6609 = vrcp.pop %v6593
      %v6610 = vmul.f32 %v6593, %v6609
      %v6611 = vsub.f32 1.0, %v6610
      %v6612 = vmul.f32 %v6609, %v6611
      %v6613 = vadd.f32 %v6609, %v6612
      %vm6614 = vweird.f32 %v6593
      %vm6615 = vweird.f32 %v6609
      %vm6616 = vmor %vm6614, %vm6615
      %v6617 = vsel %vm6616, %v6609, %v6613
      %v6618 = vand.u32 2147483647, %v6593
      %vm6619 = vcmp.eq.f32.partialorder %v6618, 8.507059e+37
      %v6620 = vand.u32 %v6593, 2147483648
      %v6621 = vor.u32 1.1754944e-38, %v6620
      %v6622 = vsel %vm6619, %v6621, %v6617
      %v6623 = vmul.f32 1.0, %v6622
      %v6624 = vadd.f32 %v6477, %v6608
      %v6625 = vadd.f32 %v6478, %v6623
      %v6626 = vmul.f32 %v6624, 0.5
      %v6627 = vmul.f32 %v6625, 0.5
      %v6628 = vmax.f32 %v6626, 0.0
      %v6629 = vmax.f32 %v6627, 0.0
      %v6630 = vmul.f32 %v6628, 0.9
      %v6631 = vmul.f32 %v6629, 0.9
      %v6632 = vadd.f32 %v6630, %v2722
      %v6633 = vadd.f32 %v6631, %v2723
      %v6634 = vmax.f32 %v6632, 0.0
      %v6635 = vmax.f32 %v6633, 0.0
      %v6636 = vld [vmem:[%s12] sm:$0xff]
      %v6637 = vld [vmem:[%s12 + $0x8] sm:$0xff]
      %v6638 = vld [vmem:[%s12 + $0x10] sm:$0xff]
      %v6639 = vld [vmem:[%s12 + $0x18] sm:$0xff]
      %v6640 = vld [vmem:[%s12 + $0x20] sm:$0xff]
      %v6641 = vld [vmem:[%s12 + $0x28] sm:$0xff]
      %v6642 = vld [vmem:[%s12 + $0x30] sm:$0xff]
      %v6643 = vld [vmem:[%s12 + $0x38] sm:$0xff]
      %v6644 = vld [vmem:[%s12 + $0x40] sm:$0xff]
      %v6645 = vld [vmem:[%s12 + $0x48] sm:$0xff]
      %v6646 = vld [vmem:[%s12 + $0x50] sm:$0xff]
      %v6647 = vld [vmem:[%s12 + $0x58] sm:$0xff]
      %v6648 = vld [vmem:[%s13] sm:$0xff]
      %v6649 = vld [vmem:[%s13 + $0x8] sm:$0xff]
      %v6650 = vld [vmem:[%s13 + $0x10] sm:$0xff]
      %v6651 = vld [vmem:[%s13 + $0x18] sm:$0xff]
      %v6652 = vld [vmem:[%s13 + $0x20] sm:$0xff]
      %v6653 = vld [vmem:[%s13 + $0x28] sm:$0xff]
      %v6654 = vld [vmem:[%s13 + $0x30] sm:$0xff]
      %v6655 = vld [vmem:[%s13 + $0x38] sm:$0xff]
      %v6656 = vld [vmem:[%s13 + $0x40] sm:$0xff]
      %v6657 = vld [vmem:[%s13 + $0x48] sm:$0xff]
      %v6658 = vld [vmem:[%s13 + $0x50] sm:$0xff]
      %v6659 = vld [vmem:[%s13 + $0x58] sm:$0xff]
      %v6660 = vld [vmem:[%s13 + $0x60] sm:$0xff]
      %v6661 = vld [vmem:[%s13 + $0x68] sm:$0xff]
      %v6662 = vld [vmem:[%s13 + $0x70] sm:$0xff]
      %v6663 = vld [vmem:[%s13 + $0x78] sm:$0xff]
      %v6664 = vld [vmem:[%s13 + $0x80] sm:$0xff]
      %v6665 = vld [vmem:[%s13 + $0x88] sm:$0xff]
      %v6666 = vld [vmem:[%s13 + $0x90] sm:$0xff]
      %v6667 = vld [vmem:[%s13 + $0x98] sm:$0xff]
      %v6668 = vld [vmem:[%s13 + $0xa0] sm:$0xff]
      %v6669 = vld [vmem:[%s13 + $0xa8] sm:$0xff]
      %v6670 = vld [vmem:[%s13 + $0xb0] sm:$0xff]
      %v6671 = vld [vmem:[%s13 + $0xb8] sm:$0xff]
      %v6672 = vld [vmem:[%s14] sm:$0x3]
      %v6674 = vsel %vm1741, %v6375, 0
      %v6677 = vsel %vm1741, %v6376, 0
      %v6680 = vsel %vm1741, %v6377, 0
      %v6683 = vsel %vm1741, %v6378, 0
      %v6686 = vsel %vm1741, %v6379, 0
      %v6689 = vsel %vm1741, %v6380, 0
      %v6692 = vsel %vm1741, %v6381, 0
      %v6695 = vsel %vm1741, %v6382, 0
      %v6698 = vsel %vm1741, %v6383, 0
      %v6701 = vsel %vm1741, %v6384, 0
      %v6703 = vsel %vm1741, %v6385, 0
      %6705 = vmatpush.msra.mxu0 0.0
      %6706 = vmatpush.msra.mxu0 0.0
      %6707 = vmatpush.msra.mxu0 0.0
      %6708 = vmatpush.msra.mxu0 0.0
      %6709 = vmatpush.msra.mxu0 %v6647
      %6710 = vmatpush.msra.mxu0 %v6646
      %6711 = vmatpush.msra.mxu0 %v6645
      %6712 = vmatpush.msra.mxu0 %v6644
      %6713 = vmatpush.msra.mxu0 %v6643
      %6714 = vmatpush.msra.mxu0 %v6642
      %6715 = vmatpush.msra.mxu0 %v6641
      %6716 = vmatpush.msra.mxu0 %v6640
      %6717 = vmatpush.msra.mxu0 %v6639
      %6718 = vmatpush.msra.mxu0 %v6638
      %6719 = vmatpush.msra.mxu0 %v6637
      %6720 = vmatpush.msra.mxu0 %v6636
      %6721 = vmatmul.f32.gmra.mxu0 %v6674
      %v6722 = vpop.f32.mrf.mxu0
      %v6723 = vadd.f32 0.0, %v6722
      %6724 = vmatmul.f32.gmra.mxu0 %v6677
      %v6725 = vpop.f32.mrf.mxu0
      %v6726 = vadd.f32 0.0, %v6725
      %6727 = vmatmul.f32.gmra.mxu0 %v6680
      %v6728 = vpop.f32.mrf.mxu0
      %v6729 = vadd.f32 0.0, %v6728
      %6730 = vmatmul.f32.gmra.mxu0 %v6683
      %v6731 = vpop.f32.mrf.mxu0
      %v6732 = vadd.f32 0.0, %v6731
      %6733 = vmatmul.f32.gmra.mxu0 %v6686
      %v6734 = vpop.f32.mrf.mxu0
      %v6735 = vadd.f32 0.0, %v6734
      %6736 = vmatmul.f32.gmra.mxu0 %v6689
      %v6737 = vpop.f32.mrf.mxu0
      %v6738 = vadd.f32 0.0, %v6737
      %6739 = vmatmul.f32.gmra.mxu0 %v6692
      %v6740 = vpop.f32.mrf.mxu0
      %v6741 = vadd.f32 0.0, %v6740
      %6742 = vmatmul.f32.gmra.mxu0 %v6695
      %v6743 = vpop.f32.mrf.mxu0
      %v6744 = vadd.f32 0.0, %v6743
      %6745 = vmatmul.f32.gmra.mxu0 %v6698
      %v6746 = vpop.f32.mrf.mxu0
      %v6747 = vadd.f32 0.0, %v6746
      %6748 = vmatmul.f32.gmra.mxu0 %v6701
      %v6749 = vpop.f32.mrf.mxu0
      %v6750 = vadd.f32 0.0, %v6749
      %6751 = vmatmul.f32.gmra.mxu0 %v6703
      %v6752 = vpop.f32.mrf.mxu0
      %v6753 = vadd.f32 0.0, %v6752
      %6754 = vdwg.mxu0
      %v6755 = vmax.f32 %v6723, 0.0
      %v6756 = vmax.f32 %v6726, 0.0
      %v6757 = vmax.f32 %v6729, 0.0
      %v6758 = vmax.f32 %v6732, 0.0
      %v6759 = vmax.f32 %v6735, 0.0
      %v6760 = vmax.f32 %v6738, 0.0
      %v6761 = vmax.f32 %v6741, 0.0
      %v6762 = vmax.f32 %v6744, 0.0
      %v6763 = vmax.f32 %v6747, 0.0
      %v6764 = vmax.f32 %v6750, 0.0
      %v6765 = vmax.f32 %v6753, 0.0
      %v6767 = vsel %vm1741, %v6634, 0
      %v6770 = vsel %vm1741, %v6635, 0
      %6772 = vmatpush.msra.mxu0 0.0
      %6773 = vmatpush.msra.mxu0 0.0
      %6774 = vmatpush.msra.mxu0 0.0
      %6775 = vmatpush.msra.mxu0 0.0
      %6776 = vmatpush.msra.mxu0 %v6647
      %6777 = vmatpush.msra.mxu0 %v6646
      %6778 = vmatpush.msra.mxu0 %v6645
      %6779 = vmatpush.msra.mxu0 %v6644
      %6780 = vmatpush.msra.mxu0 %v6643
      %6781 = vmatpush.msra.mxu0 %v6642
      %6782 = vmatpush.msra.mxu0 %v6641
      %6783 = vmatpush.msra.mxu0 %v6640
      %6784 = vmatpush.msra.mxu0 %v6639
      %6785 = vmatpush.msra.mxu0 %v6638
      %6786 = vmatpush.msra.mxu0 %v6637
      %6787 = vmatpush.msra.mxu0 %v6636
      %6788 = vmatmul.f32.gmra.mxu0 %v6767
      %v6789 = vpop.f32.mrf.mxu0
      %v6790 = vadd.f32 0.0, %v6789
      %6791 = vmatmul.f32.gmra.mxu0 %v6770
      %v6792 = vpop.f32.mrf.mxu0
      %v6793 = vadd.f32 0.0, %v6792
      %6794 = vdwg.mxu0
      %v6795 = vmax.f32 %v6790, 0.0
      %v6796 = vmax.f32 %v6793, 0.0
      %v6798 = vperm.slane %v6672, 0
      %v6799 = vperm.slane %v6672, 1
      %v6803 = vsel %vm1741, %v6755, 0
      %v6806 = vsel %vm1741, %v6756, 0
      %v6809 = vsel %vm1741, %v6757, 0
      %v6812 = vsel %vm1741, %v6758, 0
      %v6815 = vsel %vm1741, %v6759, 0
      %v6818 = vsel %vm1741, %v6760, 0
      %v6821 = vsel %vm1741, %v6761, 0
      %v6824 = vsel %vm1741, %v6762, 0
      %v6827 = vsel %vm1741, %v6763, 0
      %v6830 = vsel %vm1741, %v6764, 0
      %v6833 = vsel %vm1741, %v6765, 0
      %6835 = vmatpush.msra.mxu0 0.0
      %6836 = vmatpush.msra.mxu0 0.0
      %6837 = vmatpush.msra.mxu0 0.0
      %6838 = vmatpush.msra.mxu0 0.0
      %6839 = vmatpush.msra.mxu0 %v6670
      %6840 = vmatpush.msra.mxu0 %v6668
      %6841 = vmatpush.msra.mxu0 %v6666
      %6842 = vmatpush.msra.mxu0 %v6664
      %6843 = vmatpush.msra.mxu0 %v6662
      %6844 = vmatpush.msra.mxu0 %v6660
      %6845 = vmatpush.msra.mxu0 %v6658
      %6846 = vmatpush.msra.mxu0 %v6656
      %6847 = vmatpush.msra.mxu0 %v6654
      %6848 = vmatpush.msra.mxu0 %v6652
      %6849 = vmatpush.msra.mxu0 %v6650
      %6850 = vmatpush.msra.mxu0 %v6648
      %6851 = vmatmul.f32.gmra.mxu0 %v6803
      %v6852 = vpop.f32.mrf.mxu0
      %v6853 = vadd.f32 %v6798, %v6852
      %6854 = vmatmul.f32.gmra.mxu0 %v6806
      %v6855 = vpop.f32.mrf.mxu0
      %v6856 = vadd.f32 %v6798, %v6855
      %6857 = vmatmul.f32.gmra.mxu0 %v6809
      %v6858 = vpop.f32.mrf.mxu0
      %v6859 = vadd.f32 %v6798, %v6858
      %6860 = vmatmul.f32.gmra.mxu0 %v6812
      %v6861 = vpop.f32.mrf.mxu0
      %v6862 = vadd.f32 %v6798, %v6861
      %6863 = vmatmul.f32.gmra.mxu0 %v6815
      %v6864 = vpop.f32.mrf.mxu0
      %v6865 = vadd.f32 %v6798, %v6864
      %6866 = vmatmul.f32.gmra.mxu0 %v6818
      %v6867 = vpop.f32.mrf.mxu0
      %v6868 = vadd.f32 %v6798, %v6867
      %6869 = vmatmul.f32.gmra.mxu0 %v6821
      %v6870 = vpop.f32.mrf.mxu0
      %v6871 = vadd.f32 %v6798, %v6870
      %6872 = vmatmul.f32.gmra.mxu0 %v6824
      %v6873 = vpop.f32.mrf.mxu0
      %v6874 = vadd.f32 %v6798, %v6873
      %6875 = vmatmul.f32.gmra.mxu0 %v6827
      %v6876 = vpop.f32.mrf.mxu0
      %v6877 = vadd.f32 %v6798, %v6876
      %6878 = vmatmul.f32.gmra.mxu0 %v6830
      %v6879 = vpop.f32.mrf.mxu0
      %v6880 = vadd.f32 %v6798, %v6879
      %6881 = vmatmul.f32.gmra.mxu0 %v6833
      %v6882 = vpop.f32.mrf.mxu0
      %v6883 = vadd.f32 %v6798, %v6882
      %6884 = vdwg.mxu0
      %6885 = vmatpush.msra.mxu0 0.0
      %6886 = vmatpush.msra.mxu0 0.0
      %6887 = vmatpush.msra.mxu0 0.0
      %6888 = vmatpush.msra.mxu0 0.0
      %6889 = vmatpush.msra.mxu0 %v6671
      %6890 = vmatpush.msra.mxu0 %v6669
      %6891 = vmatpush.msra.mxu0 %v6667
      %6892 = vmatpush.msra.mxu0 %v6665
      %6893 = vmatpush.msra.mxu0 %v6663
      %6894 = vmatpush.msra.mxu0 %v6661
      %6895 = vmatpush.msra.mxu0 %v6659
      %6896 = vmatpush.msra.mxu0 %v6657
      %6897 = vmatpush.msra.mxu0 %v6655
      %6898 = vmatpush.msra.mxu0 %v6653
      %6899 = vmatpush.msra.mxu0 %v6651
      %6900 = vmatpush.msra.mxu0 %v6649
      %6901 = vmatmul.f32.gmra.mxu0 %v6803
      %v6902 = vpop.f32.mrf.mxu0
      %v6903 = vadd.f32 %v6799, %v6902
      %6904 = vmatmul.f32.gmra.mxu0 %v6806
      %v6905 = vpop.f32.mrf.mxu0
      %v6906 = vadd.f32 %v6799, %v6905
      %6907 = vmatmul.f32.gmra.mxu0 %v6809
      %v6908 = vpop.f32.mrf.mxu0
      %v6909 = vadd.f32 %v6799, %v6908
      %6910 = vmatmul.f32.gmra.mxu0 %v6812
      %v6911 = vpop.f32.mrf.mxu0
      %v6912 = vadd.f32 %v6799, %v6911
      %6913 = vmatmul.f32.gmra.mxu0 %v6815
      %v6914 = vpop.f32.mrf.mxu0
      %v6915 = vadd.f32 %v6799, %v6914
      %6916 = vmatmul.f32.gmra.mxu0 %v6818
      %v6917 = vpop.f32.mrf.mxu0
      %v6918 = vadd.f32 %v6799, %v6917
      %6919 = vmatmul.f32.gmra.mxu0 %v6821
      %v6920 = vpop.f32.mrf.mxu0
      %v6921 = vadd.f32 %v6799, %v6920
      %6922 = vmatmul.f32.gmra.mxu0 %v6824
      %v6923 = vpop.f32.mrf.mxu0
      %v6924 = vadd.f32 %v6799, %v6923
      %6925 = vmatmul.f32.gmra.mxu0 %v6827
      %v6926 = vpop.f32.mrf.mxu0
      %v6927 = vadd.f32 %v6799, %v6926
      %6928 = vmatmul.f32.gmra.mxu0 %v6830
      %v6929 = vpop.f32.mrf.mxu0
      %v6930 = vadd.f32 %v6799, %v6929
      %6931 = vmatmul.f32.gmra.mxu0 %v6833
      %v6932 = vpop.f32.mrf.mxu0
      %v6933 = vadd.f32 %v6799, %v6932
      %6934 = vdwg.mxu0
      %6946 = vrot.lane.b32.xlu0 %v6853, 64
      %v6947 = vpop.permute.xlu0 %6946
      %6948 = vrot.lane.b32.xlu0 %v6856, 64
      %v6949 = vpop.permute.xlu0 %6948
      %6950 = vrot.lane.b32.xlu0 %v6859, 64
      %v6951 = vpop.permute.xlu0 %6950
      %6952 = vrot.lane.b32.xlu0 %v6862, 64
      %v6953 = vpop.permute.xlu0 %6952
      %6954 = vrot.lane.b32.xlu0 %v6865, 64
      %v6955 = vpop.permute.xlu0 %6954
      %6956 = vrot.lane.b32.xlu0 %v6868, 64
      %v6957 = vpop.permute.xlu0 %6956
      %6958 = vrot.lane.b32.xlu0 %v6871, 64
      %v6959 = vpop.permute.xlu0 %6958
      %6960 = vrot.lane.b32.xlu0 %v6874, 64
      %v6961 = vpop.permute.xlu0 %6960
      %6962 = vrot.lane.b32.xlu0 %v6877, 64
      %v6963 = vpop.permute.xlu0 %6962
      %6964 = vrot.lane.b32.xlu0 %v6880, 64
      %v6965 = vpop.permute.xlu0 %6964
      %6966 = vrot.lane.b32.xlu0 %v6883, 64
      %v6967 = vpop.permute.xlu0 %6966
      %v6979 = vadd.f32 %v6853, %v6947
      %v6980 = vadd.f32 %v6856, %v6949
      %v6981 = vadd.f32 %v6859, %v6951
      %v6982 = vadd.f32 %v6862, %v6953
      %v6983 = vadd.f32 %v6865, %v6955
      %v6984 = vadd.f32 %v6868, %v6957
      %v6985 = vadd.f32 %v6871, %v6959
      %v6986 = vadd.f32 %v6874, %v6961
      %v6987 = vadd.f32 %v6877, %v6963
      %v6988 = vadd.f32 %v6880, %v6965
      %v6989 = vadd.f32 %v6883, %v6967
      %v6990 = vxor.u32 %v6903, 2147483648
      %v6991 = vxor.u32 %v6906, 2147483648
      %v6992 = vxor.u32 %v6909, 2147483648
      %v6993 = vxor.u32 %v6912, 2147483648
      %v6994 = vxor.u32 %v6915, 2147483648
      %v6995 = vxor.u32 %v6918, 2147483648
      %v6996 = vxor.u32 %v6921, 2147483648
      %v6997 = vxor.u32 %v6924, 2147483648
      %v6998 = vxor.u32 %v6927, 2147483648
      %v6999 = vxor.u32 %v6930, 2147483648
      %v7000 = vxor.u32 %v6933, 2147483648
      %v7001 = vmul.f32 %v6990, 1.442695
      %v7002 = vpow.pop %v7001
      %v7003 = vmul.f32 %v6991, 1.442695
      %v7004 = vpow.pop %v7003
      %v7005 = vmul.f32 %v6992, 1.442695
      %v7006 = vpow.pop %v7005
      %v7007 = vmul.f32 %v6993, 1.442695
      %v7008 = vpow.pop %v7007
      %v7009 = vmul.f32 %v6994, 1.442695
      %v7010 = vpow.pop %v7009
      %v7011 = vmul.f32 %v6995, 1.442695
      %v7012 = vpow.pop %v7011
      %v7013 = vmul.f32 %v6996, 1.442695
      %v7014 = vpow.pop %v7013
      %v7015 = vmul.f32 %v6997, 1.442695
      %v7016 = vpow.pop %v7015
      %v7017 = vmul.f32 %v6998, 1.442695
      %v7018 = vpow.pop %v7017
      %v7019 = vmul.f32 %v6999, 1.442695
      %v7020 = vpow.pop %v7019
      %v7021 = vmul.f32 %v7000, 1.442695
      %v7022 = vpow.pop %v7021
      %v7023 = vadd.f32 %v7002, 1.0
      %v7024 = vadd.f32 %v7004, 1.0
      %v7025 = vadd.f32 %v7006, 1.0
      %v7026 = vadd.f32 %v7008, 1.0
      %v7027 = vadd.f32 %v7010, 1.0
      %v7028 = vadd.f32 %v7012, 1.0
      %v7029 = vadd.f32 %v7014, 1.0
      %v7030 = vadd.f32 %v7016, 1.0
      %v7031 = vadd.f32 %v7018, 1.0
      %v7032 = vadd.f32 %v7020, 1.0
      %v7033 = vadd.f32 %v7022, 1.0
      %v7034 = vrcp.pop %v7023
      %v7035 = vmul.f32 %v7023, %v7034
      %v7036 = vsub.f32 1.0, %v7035
      %v7037 = vmul.f32 %v7034, %v7036
      %v7038 = vadd.f32 %v7034, %v7037
      %vm7039 = vweird.f32 %v7023
      %vm7040 = vweird.f32 %v7034
      %vm7041 = vmor %vm7039, %vm7040
      %v7042 = vsel %vm7041, %v7034, %v7038
      %v7043 = vand.u32 2147483647, %v7023
      %vm7044 = vcmp.eq.f32.partialorder %v7043, 8.507059e+37
      %v7045 = vand.u32 %v7023, 2147483648
      %v7046 = vor.u32 1.1754944e-38, %v7045
      %v7047 = vsel %vm7044, %v7046, %v7042
      %v7048 = vmul.f32 1.0, %v7047
      %v7049 = vrcp.pop %v7024
      %v7050 = vmul.f32 %v7024, %v7049
      %v7051 = vsub.f32 1.0, %v7050
      %v7052 = vmul.f32 %v7049, %v7051
      %v7053 = vadd.f32 %v7049, %v7052
      %vm7054 = vweird.f32 %v7024
      %vm7055 = vweird.f32 %v7049
      %vm7056 = vmor %vm7054, %vm7055
      %v7057 = vsel %vm7056, %v7049, %v7053
      %v7058 = vand.u32 2147483647, %v7024
      %vm7059 = vcmp.eq.f32.partialorder %v7058, 8.507059e+37
      %v7060 = vand.u32 %v7024, 2147483648
      %v7061 = vor.u32 1.1754944e-38, %v7060
      %v7062 = vsel %vm7059, %v7061, %v7057
      %v7063 = vmul.f32 1.0, %v7062
      %v7064 = vrcp.pop %v7025
      %v7065 = vmul.f32 %v7025, %v7064
      %v7066 = vsub.f32 1.0, %v7065
      %v7067 = vmul.f32 %v7064, %v7066
      %v7068 = vadd.f32 %v7064, %v7067
      %vm7069 = vweird.f32 %v7025
      %vm7070 = vweird.f32 %v7064
      %vm7071 = vmor %vm7069, %vm7070
      %v7072 = vsel %vm7071, %v7064, %v7068
      %v7073 = vand.u32 2147483647, %v7025
      %vm7074 = vcmp.eq.f32.partialorder %v7073, 8.507059e+37
      %v7075 = vand.u32 %v7025, 2147483648
      %v7076 = vor.u32 1.1754944e-38, %v7075
      %v7077 = vsel %vm7074, %v7076, %v7072
      %v7078 = vmul.f32 1.0, %v7077
      %v7079 = vrcp.pop %v7026
      %v7080 = vmul.f32 %v7026, %v7079
      %v7081 = vsub.f32 1.0, %v7080
      %v7082 = vmul.f32 %v7079, %v7081
      %v7083 = vadd.f32 %v7079, %v7082
      %vm7084 = vweird.f32 %v7026
      %vm7085 = vweird.f32 %v7079
      %vm7086 = vmor %vm7084, %vm7085
      %v7087 = vsel %vm7086, %v7079, %v7083
      %v7088 = vand.u32 2147483647, %v7026
      %vm7089 = vcmp.eq.f32.partialorder %v7088, 8.507059e+37
      %v7090 = vand.u32 %v7026, 2147483648
      %v7091 = vor.u32 1.1754944e-38, %v7090
      %v7092 = vsel %vm7089, %v7091, %v7087
      %v7093 = vmul.f32 1.0, %v7092
      %v7094 = vrcp.pop %v7027
      %v7095 = vmul.f32 %v7027, %v7094
      %v7096 = vsub.f32 1.0, %v7095
      %v7097 = vmul.f32 %v7094, %v7096
      %v7098 = vadd.f32 %v7094, %v7097
      %vm7099 = vweird.f32 %v7027
      %vm7100 = vweird.f32 %v7094
      %vm7101 = vmor %vm7099, %vm7100
      %v7102 = vsel %vm7101, %v7094, %v7098
      %v7103 = vand.u32 2147483647, %v7027
      %vm7104 = vcmp.eq.f32.partialorder %v7103, 8.507059e+37
      %v7105 = vand.u32 %v7027, 2147483648
      %v7106 = vor.u32 1.1754944e-38, %v7105
      %v7107 = vsel %vm7104, %v7106, %v7102
      %v7108 = vmul.f32 1.0, %v7107
      %v7109 = vrcp.pop %v7028
      %v7110 = vmul.f32 %v7028, %v7109
      %v7111 = vsub.f32 1.0, %v7110
      %v7112 = vmul.f32 %v7109, %v7111
      %v7113 = vadd.f32 %v7109, %v7112
      %vm7114 = vweird.f32 %v7028
      %vm7115 = vweird.f32 %v7109
      %vm7116 = vmor %vm7114, %vm7115
      %v7117 = vsel %vm7116, %v7109, %v7113
      %v7118 = vand.u32 2147483647, %v7028
      %vm7119 = vcmp.eq.f32.partialorder %v7118, 8.507059e+37
      %v7120 = vand.u32 %v7028, 2147483648
      %v7121 = vor.u32 1.1754944e-38, %v7120
      %v7122 = vsel %vm7119, %v7121, %v7117
      %v7123 = vmul.f32 1.0, %v7122
      %v7124 = vrcp.pop %v7029
      %v7125 = vmul.f32 %v7029, %v7124
      %v7126 = vsub.f32 1.0, %v7125
      %v7127 = vmul.f32 %v7124, %v7126
      %v7128 = vadd.f32 %v7124, %v7127
      %vm7129 = vweird.f32 %v7029
      %vm7130 = vweird.f32 %v7124
      %vm7131 = vmor %vm7129, %vm7130
      %v7132 = vsel %vm7131, %v7124, %v7128
      %v7133 = vand.u32 2147483647, %v7029
      %vm7134 = vcmp.eq.f32.partialorder %v7133, 8.507059e+37
      %v7135 = vand.u32 %v7029, 2147483648
      %v7136 = vor.u32 1.1754944e-38, %v7135
      %v7137 = vsel %vm7134, %v7136, %v7132
      %v7138 = vmul.f32 1.0, %v7137
      %v7139 = vrcp.pop %v7030
      %v7140 = vmul.f32 %v7030, %v7139
      %v7141 = vsub.f32 1.0, %v7140
      %v7142 = vmul.f32 %v7139, %v7141
      %v7143 = vadd.f32 %v7139, %v7142
      %vm7144 = vweird.f32 %v7030
      %vm7145 = vweird.f32 %v7139
      %vm7146 = vmor %vm7144, %vm7145
      %v7147 = vsel %vm7146, %v7139, %v7143
      %v7148 = vand.u32 2147483647, %v7030
      %vm7149 = vcmp.eq.f32.partialorder %v7148, 8.507059e+37
      %v7150 = vand.u32 %v7030, 2147483648
      %v7151 = vor.u32 1.1754944e-38, %v7150
      %v7152 = vsel %vm7149, %v7151, %v7147
      %v7153 = vmul.f32 1.0, %v7152
      %v7154 = vrcp.pop %v7031
      %v7155 = vmul.f32 %v7031, %v7154
      %v7156 = vsub.f32 1.0, %v7155
      %v7157 = vmul.f32 %v7154, %v7156
      %v7158 = vadd.f32 %v7154, %v7157
      %vm7159 = vweird.f32 %v7031
      %vm7160 = vweird.f32 %v7154
      %vm7161 = vmor %vm7159, %vm7160
      %v7162 = vsel %vm7161, %v7154, %v7158
      %v7163 = vand.u32 2147483647, %v7031
      %vm7164 = vcmp.eq.f32.partialorder %v7163, 8.507059e+37
      %v7165 = vand.u32 %v7031, 2147483648
      %v7166 = vor.u32 1.1754944e-38, %v7165
      %v7167 = vsel %vm7164, %v7166, %v7162
      %v7168 = vmul.f32 1.0, %v7167
      %v7169 = vrcp.pop %v7032
      %v7170 = vmul.f32 %v7032, %v7169
      %v7171 = vsub.f32 1.0, %v7170
      %v7172 = vmul.f32 %v7169, %v7171
      %v7173 = vadd.f32 %v7169, %v7172
      %vm7174 = vweird.f32 %v7032
      %vm7175 = vweird.f32 %v7169
      %vm7176 = vmor %vm7174, %vm7175
      %v7177 = vsel %vm7176, %v7169, %v7173
      %v7178 = vand.u32 2147483647, %v7032
      %vm7179 = vcmp.eq.f32.partialorder %v7178, 8.507059e+37
      %v7180 = vand.u32 %v7032, 2147483648
      %v7181 = vor.u32 1.1754944e-38, %v7180
      %v7182 = vsel %vm7179, %v7181, %v7177
      %v7183 = vmul.f32 1.0, %v7182
      %v7184 = vrcp.pop %v7033
      %v7185 = vmul.f32 %v7033, %v7184
      %v7186 = vsub.f32 1.0, %v7185
      %v7187 = vmul.f32 %v7184, %v7186
      %v7188 = vadd.f32 %v7184, %v7187
      %vm7189 = vweird.f32 %v7033
      %vm7190 = vweird.f32 %v7184
      %vm7191 = vmor %vm7189, %vm7190
      %v7192 = vsel %vm7191, %v7184, %v7188
      %v7193 = vand.u32 2147483647, %v7033
      %vm7194 = vcmp.eq.f32.partialorder %v7193, 8.507059e+37
      %v7195 = vand.u32 %v7033, 2147483648
      %v7196 = vor.u32 1.1754944e-38, %v7195
      %v7197 = vsel %vm7194, %v7196, %v7192
      %v7198 = vmul.f32 1.0, %v7197
      %v7199 = vmul.f32 %v6979, %v7048
      %v7200 = vmul.f32 %v6980, %v7063
      %v7201 = vmul.f32 %v6981, %v7078
      %v7202 = vmul.f32 %v6982, %v7093
      %v7203 = vmul.f32 %v6983, %v7108
      %v7204 = vmul.f32 %v6984, %v7123
      %v7205 = vmul.f32 %v6985, %v7138
      %v7206 = vmul.f32 %v6986, %v7153
      %v7207 = vmul.f32 %v6987, %v7168
      %v7208 = vmul.f32 %v6988, %v7183
      %v7209 = vmul.f32 %v6989, %v7198
      %7210 = vst.msk [vmem:[%s549] sm:$0xff] %vm1353, %v7199
      %7211 = vst.msk [vmem:[%s549 + $0x8] sm:$0xff] %vm1353, %v7200
      %7212 = vst.msk [vmem:[%s549 + $0x10] sm:$0xff] %vm1353, %v7201
      %7213 = vst.msk [vmem:[%s549 + $0x18] sm:$0xff] %vm1353, %v7202
      %7214 = vst.msk [vmem:[%s549 + $0x20] sm:$0xff] %vm1353, %v7203
      %7215 = vst.msk [vmem:[%s549 + $0x28] sm:$0xff] %vm1353, %v7204
      %7216 = vst.msk [vmem:[%s549 + $0x30] sm:$0xff] %vm1353, %v7205
      %7217 = vst.msk [vmem:[%s549 + $0x38] sm:$0xff] %vm1353, %v7206
      %7218 = vst.msk [vmem:[%s549 + $0x40] sm:$0xff] %vm1353, %v7207
      %7219 = vst.msk [vmem:[%s549 + $0x48] sm:$0xff] %vm1353, %v7208
      %vm7220 = vcmask 516096
      %7221 = vst.msk [vmem:[%s549 + $0x50] sm:$0x1] %vm7220, %v7209
      %v7223 = vsel %vm1741, %v6795, 0
      %v7226 = vsel %vm1741, %v6796, 0
      %7228 = vmatpush.msra.mxu0 0.0
      %7229 = vmatpush.msra.mxu0 0.0
      %7230 = vmatpush.msra.mxu0 0.0
      %7231 = vmatpush.msra.mxu0 0.0
      %7232 = vmatpush.msra.mxu0 %v6670
      %7233 = vmatpush.msra.mxu0 %v6668
      %7234 = vmatpush.msra.mxu0 %v6666
      %7235 = vmatpush.msra.mxu0 %v6664
      %7236 = vmatpush.msra.mxu0 %v6662
      %7237 = vmatpush.msra.mxu0 %v6660
      %7238 = vmatpush.msra.mxu0 %v6658
      %7239 = vmatpush.msra.mxu0 %v6656
      %7240 = vmatpush.msra.mxu0 %v6654
      %7241 = vmatpush.msra.mxu0 %v6652
      %7242 = vmatpush.msra.mxu0 %v6650
      %7243 = vmatpush.msra.mxu0 %v6648
      %7244 = vmatmul.f32.gmra.mxu0 %v7223
      %v7245 = vpop.f32.mrf.mxu0
      %v7246 = vadd.f32 %v6798, %v7245
      %7247 = vmatmul.f32.gmra.mxu0 %v7226
      %v7248 = vpop.f32.mrf.mxu0
      %v7249 = vadd.f32 %v6798, %v7248
      %7250 = vdwg.mxu0
      %7251 = vmatpush.msra.mxu0 0.0
      %7252 = vmatpush.msra.mxu0 0.0
      %7253 = vmatpush.msra.mxu0 0.0
      %7254 = vmatpush.msra.mxu0 0.0
      %7255 = vmatpush.msra.mxu0 %v6671
      %7256 = vmatpush.msra.mxu0 %v6669
      %7257 = vmatpush.msra.mxu0 %v6667
      %7258 = vmatpush.msra.mxu0 %v6665
      %7259 = vmatpush.msra.mxu0 %v6663
      %7260 = vmatpush.msra.mxu0 %v6661
      %7261 = vmatpush.msra.mxu0 %v6659
      %7262 = vmatpush.msra.mxu0 %v6657
      %7263 = vmatpush.msra.mxu0 %v6655
      %7264 = vmatpush.msra.mxu0 %v6653
      %7265 = vmatpush.msra.mxu0 %v6651
      %7266 = vmatpush.msra.mxu0 %v6649
      %7267 = vmatmul.f32.gmra.mxu0 %v7223
      %v7268 = vpop.f32.mrf.mxu0
      %v7269 = vadd.f32 %v6799, %v7268
      %7270 = vmatmul.f32.gmra.mxu0 %v7226
      %v7271 = vpop.f32.mrf.mxu0
      %v7272 = vadd.f32 %v6799, %v7271
      %7273 = vdwg.mxu0
      %7276 = vrot.lane.b32.xlu0 %v7246, 64
      %v7277 = vpop.permute.xlu0 %7276
      %7278 = vrot.lane.b32.xlu0 %v7249, 64
      %v7279 = vpop.permute.xlu0 %7278
      %v7282 = vadd.f32 %v7246, %v7277
      %v7283 = vadd.f32 %v7249, %v7279
      %v7284 = vxor.u32 %v7269, 2147483648
      %v7285 = vxor.u32 %v7272, 2147483648
      %v7286 = vmul.f32 %v7284, 1.442695
      %v7287 = vpow.pop %v7286
      %v7288 = vmul.f32 %v7285, 1.442695
      %v7289 = vpow.pop %v7288
      %v7290 = vadd.f32 %v7287, 1.0
      %v7291 = vadd.f32 %v7289, 1.0
      %v7292 = vrcp.pop %v7290
      %v7293 = vmul.f32 %v7290, %v7292
      %v7294 = vsub.f32 1.0, %v7293
      %v7295 = vmul.f32 %v7292, %v7294
      %v7296 = vadd.f32 %v7292, %v7295
      %vm7297 = vweird.f32 %v7290
      %vm7298 = vweird.f32 %v7292
      %vm7299 = vmor %vm7297, %vm7298
      %v7300 = vsel %vm7299, %v7292, %v7296
      %v7301 = vand.u32 2147483647, %v7290
      %vm7302 = vcmp.eq.f32.partialorder %v7301, 8.507059e+37
      %v7303 = vand.u32 %v7290, 2147483648
      %v7304 = vor.u32 1.1754944e-38, %v7303
      %v7305 = vsel %vm7302, %v7304, %v7300
      %v7306 = vmul.f32 1.0, %v7305
      %v7307 = vrcp.pop %v7291
      %v7308 = vmul.f32 %v7291, %v7307
      %v7309 = vsub.f32 1.0, %v7308
      %v7310 = vmul.f32 %v7307, %v7309
      %v7311 = vadd.f32 %v7307, %v7310
      %vm7312 = vweird.f32 %v7291
      %vm7313 = vweird.f32 %v7307
      %vm7314 = vmor %vm7312, %vm7313
      %v7315 = vsel %vm7314, %v7307, %v7311
      %v7316 = vand.u32 2147483647, %v7291
      %vm7317 = vcmp.eq.f32.partialorder %v7316, 8.507059e+37
      %v7318 = vand.u32 %v7291, 2147483648
      %v7319 = vor.u32 1.1754944e-38, %v7318
      %v7320 = vsel %vm7317, %v7319, %v7315
      %v7321 = vmul.f32 1.0, %v7320
      %v7322 = vmul.f32 %v7282, %v7306
      %v7323 = vmul.f32 %v7283, %v7321
      %7324 = vst.msk [vmem:[%s554] sm:$0xff] %vm1353, %v7322
      %vm7325 = vcmask 522240
      %7326 = vst.msk [vmem:[%s554 + $0x8] sm:$0x7f] %vm7325, %v7323
      %p7327 = scmp.lt.s32.totalorder %s28, 1
      %s7328 = scalar_select %p7327, %s28, 1
      %s7329 = smul.addr %s7328, 11
      %s7330 = smul.addr %s7329, 8
      %s7331 = scalar_lea.vmem %s15, %s7330
      %p7332 = scmp.lt.s32.totalorder %s28, 1
      %s7333 = scalar_select %p7332, %s28, 1
      %s7334 = smul.addr %s7333, 2
      %s7335 = smul.addr %s7334, 8
      %s7336 = scalar_lea.vmem %s16, %s7335
      // Predicated region
      $region81: #{_lambda_.2} parent=79 // pred_check
        %p7337 = pneg %p371
      $region82: #{_lambda_.2} parent=79 // pred_check_branch
        %7339 = sbr.rel (%p7337) target = $region84
      $region83: #{_lambda_.2} parent=79 // pred_region
        _
      $region84: #{_lambda_.2} parent=79 // pred_fallthru
        _
      // Predicated region
      $region85: #{_lambda_.2} parent=79 // pred_check
        %p7340 = pneg %p397
      $region86: #{_lambda_.2} parent=79 // pred_check_branch
        %7342 = sbr.rel (%p7340) target = $region88
      $region87: #{_lambda_.2} parent=79 // pred_region
        _
      $region88: #{_lambda_.2} parent=79 // pred_fallthru
        _
    $region80: #{_lambda_.2} parent=5 // pred_fallthru
      _
    %p7343 = scmp.le.s32.totalorder 2, %s23
    // Predicated region
    $region89: #{_lambda_.2} parent=5 // pred_check
      %p7344 = pneg %p7343
    $region90: #{_lambda_.2} parent=5 // pred_check_branch
      %7346 = sbr.rel (%p7344) target = $region92
    $region91: #{_lambda_.2} parent=5 // pred_region
      %s7347 = ssub.s32 %s23, 2
      // Predicated region
      $region93: #{_lambda_.2} parent=91 // pred_check
        %p7348 = pneg %p377
      $region94: #{_lambda_.2} parent=91 // pred_check_branch
        %7350 = sbr.rel (%p7348) target = $region96
      $region95: #{_lambda_.2} parent=91 // pred_region
        %p7351 = scmp.lt.s32.totalorder %s29, 1
        %s7352 = scalar_select %p7351, %s29, 1
        %s7353 = smul.addr %s7352, 11
        %s7354 = smul.addr %s7353, 8
        %s7355 = scalar_lea.vmem %s15, %s7354
      $region96: #{_lambda_.2} parent=91 // pred_fallthru
        _
      // Predicated region
      $region97: #{_lambda_.2} parent=91 // pred_check
        %p7356 = pneg %p403
      $region98: #{_lambda_.2} parent=91 // pred_check_branch
        %7358 = sbr.rel (%p7356) target = $region100
      $region99: #{_lambda_.2} parent=91 // pred_region
        %p7359 = scmp.lt.s32.totalorder %s29, 1
        %s7360 = scalar_select %p7359, %s29, 1
        %s7361 = smul.addr %s7360, 2
        %s7362 = smul.addr %s7361, 8
        %s7363 = scalar_lea.vmem %s16, %s7362
      $region100: #{_lambda_.2} parent=91 // pred_fallthru
        _
    $region92: #{_lambda_.2} parent=5 // pred_fallthru
      _
  $region6: #{_lambda_.2} parent=0 // loop_footer
    %s27 = sadd.s32 1, %s23
  $region7: #{_lambda_.2} parent=0 // loop_footer_branch
    %22 = sbr.rel target = $region3
  $region8: #{_lambda_.2} parent=0 // loop_exit
    _

</llo_original>
